<compile_context>
chip_gen: v7x
topology: tpu7x:2x2x1
jax: 0.10.0
libtpu: 0.0.40
codegen_flags: <defaults>
</compile_context>

<pallas_src>
import functools

import numpy as np
import jax
import jax.numpy as jnp
from jax import lax
from jax.experimental import pallas as pl
from jax.experimental.pallas import tpu as pltpu

_BN_EPS = 1e-5   # PyTorch BatchNorm2d default eps
_C = 64          # every layer of the module outputs 64 channels
_B_TILE = 8      # images per grid step (multiple of 8 => batch axis is sublane-tile aligned)


# ---------------------------------------------------------------------------
# Kernel: all four layers fused, B_TILE images per grid step.
# ---------------------------------------------------------------------------
def _encoder_kernel(x_ref, w1_ref, b1_ref, w2_ref, b2_ref, w3_ref, b3_ref,
                    w4_ref, b4_ref, o_ref, *, dims):
    (hc1, hp1), (hc2, hp2) = dims

    def conv(a, r_out, w_ref, b_ref):
        # a: (r_in, B, K).  Three accumulating MXU dots (one per kh tap), M = r_out*B.
        bsz, k = a.shape[1], a.shape[2]
        n = w_ref.shape[-1]
        acc = jnp.zeros((r_out * bsz, n), jnp.float32)
        for kh in range(3):
            lhs = a[kh:kh + r_out].reshape(r_out * bsz, k).astype(w_ref.dtype)
            acc = acc + jnp.dot(lhs, w_ref[kh], preferred_element_type=jnp.float32)
        y = jnp.maximum(acc + b_ref[...], 0.0)           # folded-BN bias + ReLU
        return y.reshape(r_out, bsz, n)

    def pool(a, h2):
        # 2x2 / stride-2 max pool.  Width: lane-shifted max; pooled column q stays at lane
        # block 2q (compaction folded into the next layer's Toeplitz weight).  Height:
        # outer-dim pairing (layout-preserving reshape) + max.
        wp = jnp.maximum(a[:, :, :-_C], a[:, :, _C:])
        blk = wp[:2 * h2].reshape(h2, 2, wp.shape[1], wp.shape[2])
        return jnp.maximum(blk[:, 0], blk[:, 1])

    def pad_rows(a):
        # 'same' conv: only the kh (row) zero-ring is needed; kw ring is inside the weight.
        z = jnp.zeros((1,) + a.shape[1:], a.dtype)
        return jnp.concatenate([z, a, z], axis=0)

    a = x_ref[...].astype(jnp.float32)                   # (H, B, W*3)
    a = conv(a, hc1, w1_ref, b1_ref)                     # layer1 conv (valid)
    a = pool(a, hp1)                                     # layer1 pool
    a = conv(a, hc2, w2_ref, b2_ref)                     # layer2 conv (valid)
    a = pool(a, hp2)                                     # layer2 pool
    a = conv(pad_rows(a), hp2, w3_ref, b3_ref)           # layer3 conv ('same')
    a = conv(pad_rows(a), hp2, w4_ref, b4_ref)           # layer4 conv ('same')
    o_ref[...] = a                                       # lane-dense (hp2, B, wp2*64) store


# ---------------------------------------------------------------------------
# One-time weight preparation (run once per checkpoint, outside the hot path).
# ---------------------------------------------------------------------------
def _geometry(h, w):
    hc1, wc1 = h - 2, w - 2              # layer1 valid conv
    hp1, wp1 = hc1 // 2, wc1 // 2        # layer1 pool
    hc2, wc2 = hp1 - 2, wp1 - 2          # layer2 valid conv
    hp2, wp2 = hc2 // 2, wc2 // 2        # layer2 pool
    assert hp1 >= 3 and wp1 >= 3 and hp2 >= 1 and wp2 >= 1, (
        f"input {h}x{w} too small for RelationEncoder")
    return hc1, wc1, hp1, wp1, hc2, wc2, hp2, wp2


def _fold_bn(w, gamma, beta, mean, var):
    # TODO(synk): eval-mode BatchNorm only (running stats folded into the conv); train-mode
    # per-batch statistics are not implemented.
    scale = gamma / jnp.sqrt(var + _BN_EPS)
    return w * scale[None, None, None, :], beta - mean * scale


def _conv_taps(w_hwio, n_in_cols, n_out_cols, n_in_blocks, *, stride, pad, dtype):
    """Per-kh Toeplitz slabs (3, n_in_blocks*cin, n_out_cols*cout).

    taps[kh][m*cin+ci, j*cout+co] = w[kh, kw, ci, co] when m == stride*(j+kw-pad) and
    0 <= j+kw-pad < n_in_cols, else 0.  stride=2 folds the "keep even lane blocks" pooling
    compaction into the weight; pad=1 bakes in the kw zero-ring of 'same' convs.
    Exact 0/1 placement (at most one term per output entry), so no precision loss.
    """
    cin, cout = w_hwio.shape[2], w_hwio.shape[3]
    place = np.zeros((3, n_in_blocks, n_out_cols), np.float32)
    for kw in range(3):
        for j in range(n_out_cols):
            c = j + kw - pad
            if 0 <= c < n_in_cols:
                place[kw, stride * c, j] = 1.0
    taps = jnp.einsum("kmj,hkio->hmijo", jnp.asarray(place),
                      w_hwio.astype(jnp.float32), precision=lax.Precision.HIGHEST)
    return taps.reshape(3, n_in_blocks * cin, n_out_cols * cout).astype(dtype)


def prepare_params(params, h, w, dtype=jnp.float32):
    """BN-fold + Toeplitz-expand the four conv layers.  dtype=jnp.bfloat16 gives bf16 MXU
    operands (v6e/v7x; needs a looser numeric tolerance)."""
    hc1, wc1, hp1, wp1, hc2, wc2, hp2, wp2 = _geometry(h, w)
    cfgs = [
        # (n_in_cols, n_out_cols, n_in_blocks, stride, pad)
        (w,   wc1, w,       1, 0),   # layer1: valid conv on the raw image
        (wp1, wc2, wc1 - 1, 2, 0),   # layer2: valid conv on uncompacted pool1 output
        (wp2, wp2, wc2 - 1, 2, 1),   # layer3: 'same' conv on uncompacted pool2 output
        (wp2, wp2, wp2,     1, 1),   # layer4: 'same' conv on compact layer3 output
    ]
    prepped = []
    for layer_params, (nic, noc, nib, stride, pad) in zip(params, cfgs):
        wz, gamma, beta, mean, var = layer_params
        wf, bf = _fold_bn(wz.astype(jnp.float32), gamma, beta, mean, var)
        taps = _conv_taps(wf, nic, noc, nib, stride=stride, pad=pad, dtype=dtype)
        bias = jnp.tile(bf, (noc,)).reshape(1, noc * bf.shape[0]).astype(jnp.float32)
        prepped.append((taps, bias))
    return tuple(prepped)


# ---------------------------------------------------------------------------
# Forward pass.
# ---------------------------------------------------------------------------
def relation_encoder(x_nchw, prepped, b_tile=_B_TILE):
    """RelationEncoder forward.  Input NCHW (N,3,H,W); output NCHW (N,64,H',W')."""
    n, cin, h, w = x_nchw.shape
    assert cin == 3, cin
    assert b_tile % 8 == 0, b_tile
    hc1, wc1, hp1, wp1, hc2, wc2, hp2, wp2 = _geometry(h, w)
    (w1, b1), (w2, b2), (w3, b3), (w4, b4) = prepped

    n_pad = -(-n // b_tile) * b_tile
    # NCHW -> (H, N_pad, W*3): rows outermost, batch on sublanes, channels fastest on lanes.
    x2d = jnp.transpose(x_nchw.astype(jnp.float32), (2, 0, 3, 1)).reshape(h, n, w * 3)
    if n_pad != n:
        x2d = jnp.pad(x2d, ((0, 0), (0, n_pad - n), (0, 0)))

    kernel = functools.partial(_encoder_kernel, dims=((hc1, hp1), (hc2, hp2)))

    def _full(arr):
        nd = arr.ndim
        return pl.BlockSpec(arr.shape, lambda i, _nd=nd: (0,) * _nd)

    out = pl.pallas_call(
        kernel,
        out_shape=jax.ShapeDtypeStruct((hp2, n_pad, wp2 * _C), jnp.float32),
        grid_spec=pltpu.PrefetchScalarGridSpec(
            num_scalar_prefetch=0,
            grid=(n_pad // b_tile,),
            in_specs=[
                pl.BlockSpec((h, b_tile, w * 3), lambda i: (0, i, 0)),
                _full(w1), _full(b1), _full(w2), _full(b2),
                _full(w3), _full(b3), _full(w4), _full(b4),
            ],
            out_specs=pl.BlockSpec((hp2, b_tile, wp2 * _C), lambda i: (0, i, 0)),
        ),
        compiler_params=pltpu.CompilerParams(
            dimension_semantics=("parallel",),            # v7x: >=2 steps -> both TCs busy
            vmem_limit_bytes=32 * 1024 * 1024),
    )(x2d, w1, b1, w2, b2, w3, b3, w4, b4)

    # (hp2, N_pad, wp2*64) lane-dense -> NCHW (N, 64, hp2, wp2).
    out = out.reshape(hp2, n_pad, wp2, _C)
    return jnp.transpose(out, (1, 3, 0, 2))[:n]


# ---------------------------------------------------------------------------
# Deterministic synthetic parameters + pure-JAX reference for the correctness check.
# ---------------------------------------------------------------------------
def init_params(key):
    """Deterministic synthetic parameters matching RelationEncoder.__init__ shapes."""
    specs = [(3, 64), (64, 64), (64, 64), (64, 64)]
    params = []
    for idx, (cin, cout) in enumerate(specs):
        k = jax.random.fold_in(key, idx)
        kw_, kg, kb, km, kv = jax.random.split(k, 5)
        w = jax.random.normal(kw_, (3, 3, cin, cout), jnp.float32) / jnp.sqrt(9.0 * cin)
        gamma = 1.0 + 0.1 * jax.random.normal(kg, (cout,), jnp.float32)
        beta = 0.1 * jax.random.normal(kb, (cout,), jnp.float32)
        mean = 0.1 * jax.random.normal(km, (cout,), jnp.float32)
        var = 1.0 + jnp.abs(jax.random.normal(kv, (cout,), jnp.float32))
        params.append((w, gamma, beta, mean, var))
    return params


def reference(x_nchw, params):
    """Pure-JAX/XLA reference (conv + eval-mode folded BN + ReLU + pool)."""
    x = jnp.transpose(x_nchw.astype(jnp.float32), (0, 2, 3, 1))
    for i, (w, g, b, m, v) in enumerate(params):
        pad = "SAME" if i >= 2 else "VALID"
        x = lax.conv_general_dilated(
            x, w, (1, 1), pad,
            dimension_numbers=("NHWC", "HWIO", "NHWC"),
            precision=lax.Precision.HIGHEST)
        scale = g / jnp.sqrt(v + _BN_EPS)
        x = jnp.maximum(x * scale + (b - m * scale), 0.0)
        if i < 2:
            x = lax.reduce_window(x, -jnp.inf, lax.max,
                                  (1, 2, 2, 1), (1, 2, 2, 1), "VALID")
    return jnp.transpose(x, (0, 3, 1, 2))


if __name__ == "__main__":
    key = jax.random.PRNGKey(0)
    kx, kp = jax.random.split(key)
    # batch=10 (exercises batch-tile padding: grid of 2 steps of 8), 3 channels, 16x16 (NCHW).
    x = jax.random.normal(kx, (10, 3, 16, 16), jnp.float32)
    params = init_params(kp)

    prepped = prepare_params(params, 16, 16)       # once per checkpoint, not per forward call
    fwd = jax.jit(relation_encoder)
    out = jax.block_until_ready(fwd(x, prepped))
    ref = jax.block_until_ready(reference(x, params))

    assert out.shape == (10, 64, 2, 2), out.shape
    max_err = float(jnp.max(jnp.abs(out - ref)))
    assert jnp.allclose(out, ref, rtol=1e-4, atol=1e-4), max_err
    print("KERNEL_OK")
</pallas_src>

<mosaic_0001>
module attributes {stable_mosaic.version = 11 : i64} {
  func.func @_encoder_kernel(%arg0: i32, %arg1: memref<16x8x48xf32, #tpu.memory_space<vmem>>, %arg2: memref<3x48x896xf32, #tpu.memory_space<vmem>>, %arg3: memref<1x896xf32, #tpu.memory_space<vmem>>, %arg4: memref<3x832x320xf32, #tpu.memory_space<vmem>>, %arg5: memref<1x320xf32, #tpu.memory_space<vmem>>, %arg6: memref<3x256x128xf32, #tpu.memory_space<vmem>>, %arg7: memref<1x128xf32, #tpu.memory_space<vmem>>, %arg8: memref<3x128x128xf32, #tpu.memory_space<vmem>>, %arg9: memref<1x128xf32, #tpu.memory_space<vmem>>, %arg10: memref<2x8x128xf32, #tpu.memory_space<vmem>>) attributes {dimension_semantics = [#tpu.dimension_semantics<parallel>], iteration_bounds = array<i64: 2>, scalar_prefetch = 0 : i64, scratch_operands = 0 : i64, tpu.core_type = #tpu.core_type<tc>, window_params = [{transform_indices = @transform_0, window_bounds = array<i64: 16, 8, 48>}, {pipeline_mode = #tpu.pipeline_mode<synchronous>, transform_indices = @transform_1, window_bounds = array<i64: 3, 48, 896>}, {pipeline_mode = #tpu.pipeline_mode<synchronous>, transform_indices = @transform_2, window_bounds = array<i64: 1, 896>}, {pipeline_mode = #tpu.pipeline_mode<synchronous>, transform_indices = @transform_3, window_bounds = array<i64: 3, 832, 320>}, {pipeline_mode = #tpu.pipeline_mode<synchronous>, transform_indices = @transform_4, window_bounds = array<i64: 1, 320>}, {pipeline_mode = #tpu.pipeline_mode<synchronous>, transform_indices = @transform_5, window_bounds = array<i64: 3, 256, 128>}, {pipeline_mode = #tpu.pipeline_mode<synchronous>, transform_indices = @transform_6, window_bounds = array<i64: 1, 128>}, {pipeline_mode = #tpu.pipeline_mode<synchronous>, transform_indices = @transform_7, window_bounds = array<i64: 3, 128, 128>}, {pipeline_mode = #tpu.pipeline_mode<synchronous>, transform_indices = @transform_8, window_bounds = array<i64: 1, 128>}, {transform_indices = @transform_9, window_bounds = array<i64: 2, 8, 128>}]} {
    %c0 = arith.constant 0 : index
    %c0_0 = arith.constant 0 : index
    %c0_1 = arith.constant 0 : index
    %0 = vector.load %arg1[%c0, %c0_0, %c0_1] : memref<16x8x48xf32, #tpu.memory_space<vmem>>, vector<16x8x48xf32>
    %cst = arith.constant 0.000000e+00 : f32
    %1 = vector.broadcast %cst : f32 to vector<112x896xf32>
    %2 = vector.extract_strided_slice %0 {offsets = [0, 0, 0], sizes = [14, 8, 48], strides = [1, 1, 1]} : vector<16x8x48xf32> to vector<14x8x48xf32>
    %3 = vector.shape_cast %2 : vector<14x8x48xf32> to vector<112x48xf32>
    %c0_2 = arith.constant 0 : index
    %c0_3 = arith.constant 0 : index
    %c0_4 = arith.constant 0 : index
    %4 = vector.load %arg2[%c0_2, %c0_3, %c0_4] : memref<3x48x896xf32, #tpu.memory_space<vmem>>, vector<1x48x896xf32>
    %5 = vector.shape_cast %4 : vector<1x48x896xf32> to vector<48x896xf32>
    %cst_5 = arith.constant dense<0.000000e+00> : vector<112x896xf32>
    %6 = tpu.matmul %3, %5, %cst_5 {dimension_numbers = #tpu.dot_dimension_numbers<[1], [0], [0], [1], [0, 0, 1, 1], [], []>} : vector<112x48xf32>, vector<48x896xf32>, vector<112x896xf32> -> vector<112x896xf32>
    %7 = arith.addf %1, %6 : vector<112x896xf32>
    %8 = vector.extract_strided_slice %0 {offsets = [1, 0, 0], sizes = [14, 8, 48], strides = [1, 1, 1]} : vector<16x8x48xf32> to vector<14x8x48xf32>
    %9 = vector.shape_cast %8 : vector<14x8x48xf32> to vector<112x48xf32>
    %c1 = arith.constant 1 : index
    %c0_6 = arith.constant 0 : index
    %c0_7 = arith.constant 0 : index
    %10 = vector.load %arg2[%c1, %c0_6, %c0_7] : memref<3x48x896xf32, #tpu.memory_space<vmem>>, vector<1x48x896xf32>
    %11 = vector.shape_cast %10 : vector<1x48x896xf32> to vector<48x896xf32>
    %cst_8 = arith.constant dense<0.000000e+00> : vector<112x896xf32>
    %12 = tpu.matmul %9, %11, %cst_8 {dimension_numbers = #tpu.dot_dimension_numbers<[1], [0], [0], [1], [0, 0, 1, 1], [], []>} : vector<112x48xf32>, vector<48x896xf32>, vector<112x896xf32> -> vector<112x896xf32>
    %13 = arith.addf %7, %12 : vector<112x896xf32>
    %14 = vector.extract_strided_slice %0 {offsets = [2, 0, 0], sizes = [14, 8, 48], strides = [1, 1, 1]} : vector<16x8x48xf32> to vector<14x8x48xf32>
    %15 = vector.shape_cast %14 : vector<14x8x48xf32> to vector<112x48xf32>
    %c2 = arith.constant 2 : index
    %c0_9 = arith.constant 0 : index
    %c0_10 = arith.constant 0 : index
    %16 = vector.load %arg2[%c2, %c0_9, %c0_10] : memref<3x48x896xf32, #tpu.memory_space<vmem>>, vector<1x48x896xf32>
    %17 = vector.shape_cast %16 : vector<1x48x896xf32> to vector<48x896xf32>
    %cst_11 = arith.constant dense<0.000000e+00> : vector<112x896xf32>
    %18 = tpu.matmul %15, %17, %cst_11 {dimension_numbers = #tpu.dot_dimension_numbers<[1], [0], [0], [1], [0, 0, 1, 1], [], []>} : vector<112x48xf32>, vector<48x896xf32>, vector<112x896xf32> -> vector<112x896xf32>
    %19 = arith.addf %13, %18 : vector<112x896xf32>
    %c0_12 = arith.constant 0 : index
    %c0_13 = arith.constant 0 : index
    %20 = vector.load %arg3[%c0_12, %c0_13] : memref<1x896xf32, #tpu.memory_space<vmem>>, vector<1x896xf32>
    %21 = vector.broadcast %20 : vector<1x896xf32> to vector<112x896xf32>
    %22 = arith.addf %19, %21 : vector<112x896xf32>
    %cst_14 = arith.constant 0.000000e+00 : f32
    %23 = vector.broadcast %cst_14 : f32 to vector<112x896xf32>
    %24 = arith.maximumf %22, %23 : vector<112x896xf32>
    %25 = vector.shape_cast %24 : vector<112x896xf32> to vector<14x8x896xf32>
    %26 = vector.extract_strided_slice %25 {offsets = [0, 0, 0], sizes = [14, 8, 832], strides = [1, 1, 1]} : vector<14x8x896xf32> to vector<14x8x832xf32>
    %27 = vector.extract_strided_slice %25 {offsets = [0, 0, 64], sizes = [14, 8, 832], strides = [1, 1, 1]} : vector<14x8x896xf32> to vector<14x8x832xf32>
    %28 = arith.maximumf %26, %27 : vector<14x8x832xf32>
    %29 = vector.shape_cast %28 : vector<14x8x832xf32> to vector<7x2x8x832xf32>
    %30 = vector.extract_strided_slice %29 {offsets = [0, 0, 0, 0], sizes = [7, 1, 8, 832], strides = [1, 1, 1, 1]} : vector<7x2x8x832xf32> to vector<7x1x8x832xf32>
    %31 = vector.shape_cast %30 : vector<7x1x8x832xf32> to vector<7x8x832xf32>
    %32 = vector.extract_strided_slice %29 {offsets = [0, 1, 0, 0], sizes = [7, 1, 8, 832], strides = [1, 1, 1, 1]} : vector<7x2x8x832xf32> to vector<7x1x8x832xf32>
    %33 = vector.shape_cast %32 : vector<7x1x8x832xf32> to vector<7x8x832xf32>
    %34 = arith.maximumf %31, %33 : vector<7x8x832xf32>
    %cst_15 = arith.constant 0.000000e+00 : f32
    %35 = vector.broadcast %cst_15 : f32 to vector<40x320xf32>
    %36 = vector.extract_strided_slice %34 {offsets = [0, 0, 0], sizes = [5, 8, 832], strides = [1, 1, 1]} : vector<7x8x832xf32> to vector<5x8x832xf32>
    %37 = vector.shape_cast %36 : vector<5x8x832xf32> to vector<40x832xf32>
    %c0_16 = arith.constant 0 : index
    %c0_17 = arith.constant 0 : index
    %c0_18 = arith.constant 0 : index
    %38 = vector.load %arg4[%c0_16, %c0_17, %c0_18] : memref<3x832x320xf32, #tpu.memory_space<vmem>>, vector<1x832x320xf32>
    %39 = vector.shape_cast %38 : vector<1x832x320xf32> to vector<832x320xf32>
    %cst_19 = arith.constant dense<0.000000e+00> : vector<40x320xf32>
    %40 = tpu.matmul %37, %39, %cst_19 {dimension_numbers = #tpu.dot_dimension_numbers<[1], [0], [0], [1], [0, 0, 1, 1], [], []>} : vector<40x832xf32>, vector<832x320xf32>, vector<40x320xf32> -> vector<40x320xf32>
    %41 = arith.addf %35, %40 : vector<40x320xf32>
    %42 = vector.extract_strided_slice %34 {offsets = [1, 0, 0], sizes = [5, 8, 832], strides = [1, 1, 1]} : vector<7x8x832xf32> to vector<5x8x832xf32>
    %43 = vector.shape_cast %42 : vector<5x8x832xf32> to vector<40x832xf32>
    %c1_20 = arith.constant 1 : index
    %c0_21 = arith.constant 0 : index
    %c0_22 = arith.constant 0 : index
    %44 = vector.load %arg4[%c1_20, %c0_21, %c0_22] : memref<3x832x320xf32, #tpu.memory_space<vmem>>, vector<1x832x320xf32>
    %45 = vector.shape_cast %44 : vector<1x832x320xf32> to vector<832x320xf32>
    %cst_23 = arith.constant dense<0.000000e+00> : vector<40x320xf32>
    %46 = tpu.matmul %43, %45, %cst_23 {dimension_numbers = #tpu.dot_dimension_numbers<[1], [0], [0], [1], [0, 0, 1, 1], [], []>} : vector<40x832xf32>, vector<832x320xf32>, vector<40x320xf32> -> vector<40x320xf32>
    %47 = arith.addf %41, %46 : vector<40x320xf32>
    %48 = vector.extract_strided_slice %34 {offsets = [2, 0, 0], sizes = [5, 8, 832], strides = [1, 1, 1]} : vector<7x8x832xf32> to vector<5x8x832xf32>
    %49 = vector.shape_cast %48 : vector<5x8x832xf32> to vector<40x832xf32>
    %c2_24 = arith.constant 2 : index
    %c0_25 = arith.constant 0 : index
    %c0_26 = arith.constant 0 : index
    %50 = vector.load %arg4[%c2_24, %c0_25, %c0_26] : memref<3x832x320xf32, #tpu.memory_space<vmem>>, vector<1x832x320xf32>
    %51 = vector.shape_cast %50 : vector<1x832x320xf32> to vector<832x320xf32>
    %cst_27 = arith.constant dense<0.000000e+00> : vector<40x320xf32>
    %52 = tpu.matmul %49, %51, %cst_27 {dimension_numbers = #tpu.dot_dimension_numbers<[1], [0], [0], [1], [0, 0, 1, 1], [], []>} : vector<40x832xf32>, vector<832x320xf32>, vector<40x320xf32> -> vector<40x320xf32>
    %53 = arith.addf %47, %52 : vector<40x320xf32>
    %c0_28 = arith.constant 0 : index
    %c0_29 = arith.constant 0 : index
    %54 = vector.load %arg5[%c0_28, %c0_29] : memref<1x320xf32, #tpu.memory_space<vmem>>, vector<1x320xf32>
    %55 = vector.broadcast %54 : vector<1x320xf32> to vector<40x320xf32>
    %56 = arith.addf %53, %55 : vector<40x320xf32>
    %cst_30 = arith.constant 0.000000e+00 : f32
    %57 = vector.broadcast %cst_30 : f32 to vector<40x320xf32>
    %58 = arith.maximumf %56, %57 : vector<40x320xf32>
    %59 = vector.shape_cast %58 : vector<40x320xf32> to vector<5x8x320xf32>
    %60 = vector.extract_strided_slice %59 {offsets = [0, 0, 0], sizes = [5, 8, 256], strides = [1, 1, 1]} : vector<5x8x320xf32> to vector<5x8x256xf32>
    %61 = vector.extract_strided_slice %59 {offsets = [0, 0, 64], sizes = [5, 8, 256], strides = [1, 1, 1]} : vector<5x8x320xf32> to vector<5x8x256xf32>
    %62 = arith.maximumf %60, %61 : vector<5x8x256xf32>
    %63 = vector.extract_strided_slice %62 {offsets = [0, 0, 0], sizes = [4, 8, 256], strides = [1, 1, 1]} : vector<5x8x256xf32> to vector<4x8x256xf32>
    %64 = vector.shape_cast %63 : vector<4x8x256xf32> to vector<2x2x8x256xf32>
    %65 = vector.extract_strided_slice %64 {offsets = [0, 0, 0, 0], sizes = [2, 1, 8, 256], strides = [1, 1, 1, 1]} : vector<2x2x8x256xf32> to vector<2x1x8x256xf32>
    %66 = vector.shape_cast %65 : vector<2x1x8x256xf32> to vector<2x8x256xf32>
    %67 = vector.extract_strided_slice %64 {offsets = [0, 1, 0, 0], sizes = [2, 1, 8, 256], strides = [1, 1, 1, 1]} : vector<2x2x8x256xf32> to vector<2x1x8x256xf32>
    %68 = vector.shape_cast %67 : vector<2x1x8x256xf32> to vector<2x8x256xf32>
    %69 = arith.maximumf %66, %68 : vector<2x8x256xf32>
    %cst_31 = arith.constant 0.000000e+00 : f32
    %70 = vector.broadcast %cst_31 : f32 to vector<1x8x256xf32>
    %71 = tpu.concatenate %70, %69, %70 in 0 : vector<1x8x256xf32>, vector<2x8x256xf32>, vector<1x8x256xf32> -> vector<4x8x256xf32>
    %cst_32 = arith.constant 0.000000e+00 : f32
    %72 = vector.broadcast %cst_32 : f32 to vector<16x128xf32>
    %73 = vector.extract_strided_slice %71 {offsets = [0, 0, 0], sizes = [2, 8, 256], strides = [1, 1, 1]} : vector<4x8x256xf32> to vector<2x8x256xf32>
    %74 = vector.shape_cast %73 : vector<2x8x256xf32> to vector<16x256xf32>
    %c0_33 = arith.constant 0 : index
    %c0_34 = arith.constant 0 : index
    %c0_35 = arith.constant 0 : index
    %75 = vector.load %arg6[%c0_33, %c0_34, %c0_35] : memref<3x256x128xf32, #tpu.memory_space<vmem>>, vector<1x256x128xf32>
    %76 = vector.shape_cast %75 : vector<1x256x128xf32> to vector<256x128xf32>
    %cst_36 = arith.constant dense<0.000000e+00> : vector<16x128xf32>
    %77 = tpu.matmul %74, %76, %cst_36 {dimension_numbers = #tpu.dot_dimension_numbers<[1], [0], [0], [1], [0, 0, 1, 1], [], []>} : vector<16x256xf32>, vector<256x128xf32>, vector<16x128xf32> -> vector<16x128xf32>
    %78 = arith.addf %72, %77 : vector<16x128xf32>
    %79 = vector.extract_strided_slice %71 {offsets = [1, 0, 0], sizes = [2, 8, 256], strides = [1, 1, 1]} : vector<4x8x256xf32> to vector<2x8x256xf32>
    %80 = vector.shape_cast %79 : vector<2x8x256xf32> to vector<16x256xf32>
    %c1_37 = arith.constant 1 : index
    %c0_38 = arith.constant 0 : index
    %c0_39 = arith.constant 0 : index
    %81 = vector.load %arg6[%c1_37, %c0_38, %c0_39] : memref<3x256x128xf32, #tpu.memory_space<vmem>>, vector<1x256x128xf32>
    %82 = vector.shape_cast %81 : vector<1x256x128xf32> to vector<256x128xf32>
    %cst_40 = arith.constant dense<0.000000e+00> : vector<16x128xf32>
    %83 = tpu.matmul %80, %82, %cst_40 {dimension_numbers = #tpu.dot_dimension_numbers<[1], [0], [0], [1], [0, 0, 1, 1], [], []>} : vector<16x256xf32>, vector<256x128xf32>, vector<16x128xf32> -> vector<16x128xf32>
    %84 = arith.addf %78, %83 : vector<16x128xf32>
    %85 = vector.extract_strided_slice %71 {offsets = [2, 0, 0], sizes = [2, 8, 256], strides = [1, 1, 1]} : vector<4x8x256xf32> to vector<2x8x256xf32>
    %86 = vector.shape_cast %85 : vector<2x8x256xf32> to vector<16x256xf32>
    %c2_41 = arith.constant 2 : index
    %c0_42 = arith.constant 0 : index
    %c0_43 = arith.constant 0 : index
    %87 = vector.load %arg6[%c2_41, %c0_42, %c0_43] : memref<3x256x128xf32, #tpu.memory_space<vmem>>, vector<1x256x128xf32>
    %88 = vector.shape_cast %87 : vector<1x256x128xf32> to vector<256x128xf32>
    %cst_44 = arith.constant dense<0.000000e+00> : vector<16x128xf32>
    %89 = tpu.matmul %86, %88, %cst_44 {dimension_numbers = #tpu.dot_dimension_numbers<[1], [0], [0], [1], [0, 0, 1, 1], [], []>} : vector<16x256xf32>, vector<256x128xf32>, vector<16x128xf32> -> vector<16x128xf32>
    %90 = arith.addf %84, %89 : vector<16x128xf32>
    %c0_45 = arith.constant 0 : index
    %c0_46 = arith.constant 0 : index
    %91 = vector.load %arg7[%c0_45, %c0_46] : memref<1x128xf32, #tpu.memory_space<vmem>>, vector<1x128xf32>
    %92 = vector.broadcast %91 : vector<1x128xf32> to vector<16x128xf32>
    %93 = arith.addf %90, %92 : vector<16x128xf32>
    %cst_47 = arith.constant 0.000000e+00 : f32
    %94 = vector.broadcast %cst_47 : f32 to vector<16x128xf32>
    %95 = arith.maximumf %93, %94 : vector<16x128xf32>
    %96 = vector.shape_cast %95 : vector<16x128xf32> to vector<2x8x128xf32>
    %cst_48 = arith.constant 0.000000e+00 : f32
    %97 = vector.broadcast %cst_48 : f32 to vector<1x8x128xf32>
    %98 = tpu.concatenate %97, %96, %97 in 0 : vector<1x8x128xf32>, vector<2x8x128xf32>, vector<1x8x128xf32> -> vector<4x8x128xf32>
    %cst_49 = arith.constant 0.000000e+00 : f32
    %99 = vector.broadcast %cst_49 : f32 to vector<16x128xf32>
    %100 = vector.extract_strided_slice %98 {offsets = [0, 0, 0], sizes = [2, 8, 128], strides = [1, 1, 1]} : vector<4x8x128xf32> to vector<2x8x128xf32>
    %101 = vector.shape_cast %100 : vector<2x8x128xf32> to vector<16x128xf32>
    %c0_50 = arith.constant 0 : index
    %c0_51 = arith.constant 0 : index
    %c0_52 = arith.constant 0 : index
    %102 = vector.load %arg8[%c0_50, %c0_51, %c0_52] : memref<3x128x128xf32, #tpu.memory_space<vmem>>, vector<1x128x128xf32>
    %103 = vector.shape_cast %102 : vector<1x128x128xf32> to vector<128x128xf32>
    %cst_53 = arith.constant dense<0.000000e+00> : vector<16x128xf32>
    %104 = tpu.matmul %101, %103, %cst_53 {dimension_numbers = #tpu.dot_dimension_numbers<[1], [0], [0], [1], [0, 0, 1, 1], [], []>} : vector<16x128xf32>, vector<128x128xf32>, vector<16x128xf32> -> vector<16x128xf32>
    %105 = arith.addf %99, %104 : vector<16x128xf32>
    %106 = vector.extract_strided_slice %98 {offsets = [1, 0, 0], sizes = [2, 8, 128], strides = [1, 1, 1]} : vector<4x8x128xf32> to vector<2x8x128xf32>
    %107 = vector.shape_cast %106 : vector<2x8x128xf32> to vector<16x128xf32>
    %c1_54 = arith.constant 1 : index
    %c0_55 = arith.constant 0 : index
    %c0_56 = arith.constant 0 : index
    %108 = vector.load %arg8[%c1_54, %c0_55, %c0_56] : memref<3x128x128xf32, #tpu.memory_space<vmem>>, vector<1x128x128xf32>
    %109 = vector.shape_cast %108 : vector<1x128x128xf32> to vector<128x128xf32>
    %cst_57 = arith.constant dense<0.000000e+00> : vector<16x128xf32>
    %110 = tpu.matmul %107, %109, %cst_57 {dimension_numbers = #tpu.dot_dimension_numbers<[1], [0], [0], [1], [0, 0, 1, 1], [], []>} : vector<16x128xf32>, vector<128x128xf32>, vector<16x128xf32> -> vector<16x128xf32>
    %111 = arith.addf %105, %110 : vector<16x128xf32>
    %112 = vector.extract_strided_slice %98 {offsets = [2, 0, 0], sizes = [2, 8, 128], strides = [1, 1, 1]} : vector<4x8x128xf32> to vector<2x8x128xf32>
    %113 = vector.shape_cast %112 : vector<2x8x128xf32> to vector<16x128xf32>
    %c2_58 = arith.constant 2 : index
    %c0_59 = arith.constant 0 : index
    %c0_60 = arith.constant 0 : index
    %114 = vector.load %arg8[%c2_58, %c0_59, %c0_60] : memref<3x128x128xf32, #tpu.memory_space<vmem>>, vector<1x128x128xf32>
    %115 = vector.shape_cast %114 : vector<1x128x128xf32> to vector<128x128xf32>
    %cst_61 = arith.constant dense<0.000000e+00> : vector<16x128xf32>
    %116 = tpu.matmul %113, %115, %cst_61 {dimension_numbers = #tpu.dot_dimension_numbers<[1], [0], [0], [1], [0, 0, 1, 1], [], []>} : vector<16x128xf32>, vector<128x128xf32>, vector<16x128xf32> -> vector<16x128xf32>
    %117 = arith.addf %111, %116 : vector<16x128xf32>
    %c0_62 = arith.constant 0 : index
    %c0_63 = arith.constant 0 : index
    %118 = vector.load %arg9[%c0_62, %c0_63] : memref<1x128xf32, #tpu.memory_space<vmem>>, vector<1x128xf32>
    %119 = vector.broadcast %118 : vector<1x128xf32> to vector<16x128xf32>
    %120 = arith.addf %117, %119 : vector<16x128xf32>
    %cst_64 = arith.constant 0.000000e+00 : f32
    %121 = vector.broadcast %cst_64 : f32 to vector<16x128xf32>
    %122 = arith.maximumf %120, %121 : vector<16x128xf32>
    %123 = vector.shape_cast %122 : vector<16x128xf32> to vector<2x8x128xf32>
    %c0_65 = arith.constant 0 : index
    %c0_66 = arith.constant 0 : index
    %c0_67 = arith.constant 0 : index
    %124 = vector.load %arg10[%c0_65, %c0_66, %c0_67] : memref<2x8x128xf32, #tpu.memory_space<vmem>>, vector<2x8x128xf32>
    tpu.vector_store %arg10[%c0_65, %c0_66, %c0_67], %123 {strides = array<i32>} : memref<2x8x128xf32, #tpu.memory_space<vmem>>, vector<2x8x128xf32>,
    return
  }
  func.func @transform_0(%arg0: i32) -> (i32, i32, i32) {
    %c0_i32 = arith.constant 0 : i32
    %c0_i32_0 = arith.constant 0 : i32
    %c0_i32_1 = arith.constant 0 : i32
    return %c0_i32, %arg0, %c0_i32_0 : i32, i32, i32
  }
  func.func @transform_1(%arg0: i32) -> (i32, i32, i32) {
    %c0_i32 = arith.constant 0 : i32
    %c0_i32_0 = arith.constant 0 : i32
    %c0_i32_1 = arith.constant 0 : i32
    %c0_i32_2 = arith.constant 0 : i32
    return %c0_i32, %c0_i32_0, %c0_i32_1 : i32, i32, i32
  }
  func.func @transform_2(%arg0: i32) -> (i32, i32) {
    %c0_i32 = arith.constant 0 : i32
    %c0_i32_0 = arith.constant 0 : i32
    %c0_i32_1 = arith.constant 0 : i32
    return %c0_i32, %c0_i32_0 : i32, i32
  }
  func.func @transform_3(%arg0: i32) -> (i32, i32, i32) {
    %c0_i32 = arith.constant 0 : i32
    %c0_i32_0 = arith.constant 0 : i32
    %c0_i32_1 = arith.constant 0 : i32
    %c0_i32_2 = arith.constant 0 : i32
    return %c0_i32, %c0_i32_0, %c0_i32_1 : i32, i32, i32
  }
  func.func @transform_4(%arg0: i32) -> (i32, i32) {
    %c0_i32 = arith.constant 0 : i32
    %c0_i32_0 = arith.constant 0 : i32
    %c0_i32_1 = arith.constant 0 : i32
    return %c0_i32, %c0_i32_0 : i32, i32
  }
  func.func @transform_5(%arg0: i32) -> (i32, i32, i32) {
    %c0_i32 = arith.constant 0 : i32
    %c0_i32_0 = arith.constant 0 : i32
    %c0_i32_1 = arith.constant 0 : i32
    %c0_i32_2 = arith.constant 0 : i32
    return %c0_i32, %c0_i32_0, %c0_i32_1 : i32, i32, i32
  }
  func.func @transform_6(%arg0: i32) -> (i32, i32) {
    %c0_i32 = arith.constant 0 : i32
    %c0_i32_0 = arith.constant 0 : i32
    %c0_i32_1 = arith.constant 0 : i32
    return %c0_i32, %c0_i32_0 : i32, i32
  }
  func.func @transform_7(%arg0: i32) -> (i32, i32, i32) {
    %c0_i32 = arith.constant 0 : i32
    %c0_i32_0 = arith.constant 0 : i32
    %c0_i32_1 = arith.constant 0 : i32
    %c0_i32_2 = arith.constant 0 : i32
    return %c0_i32, %c0_i32_0, %c0_i32_1 : i32, i32, i32
  }
  func.func @transform_8(%arg0: i32) -> (i32, i32) {
    %c0_i32 = arith.constant 0 : i32
    %c0_i32_0 = arith.constant 0 : i32
    %c0_i32_1 = arith.constant 0 : i32
    return %c0_i32, %c0_i32_0 : i32, i32
  }
  func.func @transform_9(%arg0: i32) -> (i32, i32, i32) {
    %c0_i32 = arith.constant 0 : i32
    %c0_i32_0 = arith.constant 0 : i32
    %c0_i32_1 = arith.constant 0 : i32
    return %c0_i32, %arg0, %c0_i32_0 : i32, i32, i32
  }
}

</mosaic_0001>

<llo_original>
// kernel: relation_encoder.1
$region0: #{relation_encoder.1}
  #allocation0 [shape = 'u32[]', space=smem, size = 0x4, offset = 0x4, fixed_abs, tag = 'smem constant byte address 0x4 - core index']
  #allocation1 [shape = 'u32[144,128]{1,0:T(1,128)}', space=vmem, size = 0x12000, scoped, tag = 'internal scratch']
  %s0 = inlined_call_operand.vmem [shape: f32[16,16,48], index: 0, kind: input, shape index: {}]
  %s1 = inlined_call_operand.vmem [shape: f32[3,48,896], index: 1, kind: input, shape index: {}]
  %s2 = inlined_call_operand.vmem [shape: f32[1,896], index: 2, kind: input, shape index: {}]
  %s3 = inlined_call_operand.vmem [shape: f32[3,832,320], index: 3, kind: input, shape index: {}]
  %s4 = inlined_call_operand.vmem [shape: f32[1,320], index: 4, kind: input, shape index: {}]
  %s5 = inlined_call_operand.vmem [shape: f32[3,256,128], index: 5, kind: input, shape index: {}]
  %s6 = inlined_call_operand.vmem [shape: f32[1,128], index: 6, kind: input, shape index: {}]
  %s7 = inlined_call_operand.vmem [shape: f32[3,128,128], index: 7, kind: input, shape index: {}]
  %s8 = inlined_call_operand.vmem [shape: f32[1,128], index: 8, kind: input, shape index: {}]
  %s9 = inlined_call_operand.vmem [shape: f32[2,16,128], index: 9, kind: output, shape index: {}]
  %s10 = sld [smem:[#allocation0]]
  $region141: #{relation_encoder.1} parent=0
    _
  %s12 = ssub.s32 1, %s10
  %s13 = scalar_select 0, %s12, %s10
  $region1: #{relation_encoder.1} parent=0
    #allocation2 [shape = 'u8[131072]{0}', space=vmem, size = 0x20000, scoped, tag = 'input window, operand 0']
    #allocation3 [shape = 'u8[16384]{0}', space=vmem, size = 0x4000, scoped, tag = 'output window, operand 0']
    loop: start=0, step=1, limit=4
    $region2: #{relation_encoder.1} parent=1 // loop_pre_header
      _
    $region3: #{relation_encoder.1} parent=1 // loop_header
      %s15 = sphi 0, %s19
      %p16 = scmp.ge.s32.totalorder %s15, 4
      %s25 = sphi 0, %s27
      %s28 = sphi 0, %s25
      %s29 = sphi 0, %s28
      %s45 = sphi 0, %s29
      %s49 = sphi 0, %s49
      %s51 = sphi 0, %s49
      %s52 = sphi 0, %s51
      %s66 = sphi 0, %s52
      %s70 = sphi 0, %s70
      %s72 = sphi 0, %s70
      %s73 = sphi 0, %s72
      %s87 = sphi 0, %s73
      %s91 = sphi 0, %s91
      %s93 = sphi 0, %s91
      %s94 = sphi 0, %s93
      %s108 = sphi 0, %s94
      %s112 = sphi 0, %s112
      %s114 = sphi 0, %s112
      %s115 = sphi 0, %s114
      %s129 = sphi 0, %s115
      %s133 = sphi 0, %s133
      %s135 = sphi 0, %s133
      %s136 = sphi 0, %s135
      %s150 = sphi 0, %s136
      %s154 = sphi 0, %s154
      %s156 = sphi 0, %s154
      %s157 = sphi 0, %s156
      %s171 = sphi 0, %s157
      %s175 = sphi 0, %s175
      %s177 = sphi 0, %s175
      %s178 = sphi 0, %s177
      %s192 = sphi 0, %s178
      %s196 = sphi 0, %s196
      %s198 = sphi 0, %s196
      %s199 = sphi 0, %s198
      %s213 = sphi 0, %s199
      %s219 = sphi 0, %s221
      %s222 = sphi 0, %s219
      %s223 = sphi 0, %s222
      %s239 = sphi 0, %s223
    $region4: #{relation_encoder.1} parent=1 // loop_header_branch
      %18 = sbr.rel (%p16) target = $region8
    $region5: #{relation_encoder.1} parent=1 // loop_body
      %s20 = ssub.s32 %s15, 1
      %s21 = ssub.s32 %s15, 2
      %s22 = sadd.s32 %s15, 1
      %s23 = ssub.s32 %s15, %s22
      %p24 = scmp.eq.s32.totalorder %s23, 0
      %s26 = sadd.s32 %s25, 1
      %s27 = scalar_select %p24, %s25, %s26
      %p30 = pneg %p24
      %p31 = scmp.eq.s32.totalorder %s15, 1
      %p32 = por %p30, %p31
      %p33 = scmp.ne.s32.totalorder %s25, %s28
      %p34 = scmp.eq.s32.totalorder %s15, 0
      %p35 = por %p33, %p34
      %p36 = scmp.ne.s32.totalorder %s25, %s28
      %p37 = scmp.eq.s32.totalorder %s20, 1
      %p38 = por %p36, %p37
      %p39 = scmp.ne.s32.totalorder %s28, %s29
      %p40 = scmp.eq.s32.totalorder %s20, 0
      %p41 = por %p39, %p40
      %p42 = scmp.ne.s32.totalorder %s28, %s29
      %p43 = scmp.eq.s32.totalorder %s21, 1
      %p44 = por %p42, %p43
      %p46 = scmp.ne.s32.totalorder %s29, %s45
      %p47 = scmp.eq.s32.totalorder %s21, 0
      %p48 = por %p46, %p47
      %s50 = sadd.s32 %s49, 1
      %p53 = scmp.eq.s32.totalorder %s15, 1
      %p54 = scmp.ne.s32.totalorder %s49, %s51
      %p55 = scmp.eq.s32.totalorder %s15, 0
      %p56 = por %p54, %p55
      %p57 = scmp.ne.s32.totalorder %s49, %s51
      %p58 = scmp.eq.s32.totalorder %s20, 1
      %p59 = por %p57, %p58
      %p60 = scmp.ne.s32.totalorder %s51, %s52
      %p61 = scmp.eq.s32.totalorder %s20, 0
      %p62 = por %p60, %p61
      %p63 = scmp.ne.s32.totalorder %s51, %s52
      %p64 = scmp.eq.s32.totalorder %s21, 1
      %p65 = por %p63, %p64
      %p67 = scmp.ne.s32.totalorder %s52, %s66
      %p68 = scmp.eq.s32.totalorder %s21, 0
      %p69 = por %p67, %p68
      %s71 = sadd.s32 %s70, 1
      %p74 = scmp.eq.s32.totalorder %s15, 1
      %p75 = scmp.ne.s32.totalorder %s70, %s72
      %p76 = scmp.eq.s32.totalorder %s15, 0
      %p77 = por %p75, %p76
      %p78 = scmp.ne.s32.totalorder %s70, %s72
      %p79 = scmp.eq.s32.totalorder %s20, 1
      %p80 = por %p78, %p79
      %p81 = scmp.ne.s32.totalorder %s72, %s73
      %p82 = scmp.eq.s32.totalorder %s20, 0
      %p83 = por %p81, %p82
      %p84 = scmp.ne.s32.totalorder %s72, %s73
      %p85 = scmp.eq.s32.totalorder %s21, 1
      %p86 = por %p84, %p85
      %p88 = scmp.ne.s32.totalorder %s73, %s87
      %p89 = scmp.eq.s32.totalorder %s21, 0
      %p90 = por %p88, %p89
      %s92 = sadd.s32 %s91, 1
      %p95 = scmp.eq.s32.totalorder %s15, 1
      %p96 = scmp.ne.s32.totalorder %s91, %s93
      %p97 = scmp.eq.s32.totalorder %s15, 0
      %p98 = por %p96, %p97
      %p99 = scmp.ne.s32.totalorder %s91, %s93
      %p100 = scmp.eq.s32.totalorder %s20, 1
      %p101 = por %p99, %p100
      %p102 = scmp.ne.s32.totalorder %s93, %s94
      %p103 = scmp.eq.s32.totalorder %s20, 0
      %p104 = por %p102, %p103
      %p105 = scmp.ne.s32.totalorder %s93, %s94
      %p106 = scmp.eq.s32.totalorder %s21, 1
      %p107 = por %p105, %p106
      %p109 = scmp.ne.s32.totalorder %s94, %s108
      %p110 = scmp.eq.s32.totalorder %s21, 0
      %p111 = por %p109, %p110
      %s113 = sadd.s32 %s112, 1
      %p116 = scmp.eq.s32.totalorder %s15, 1
      %p117 = scmp.ne.s32.totalorder %s112, %s114
      %p118 = scmp.eq.s32.totalorder %s15, 0
      %p119 = por %p117, %p118
      %p120 = scmp.ne.s32.totalorder %s112, %s114
      %p121 = scmp.eq.s32.totalorder %s20, 1
      %p122 = por %p120, %p121
      %p123 = scmp.ne.s32.totalorder %s114, %s115
      %p124 = scmp.eq.s32.totalorder %s20, 0
      %p125 = por %p123, %p124
      %p126 = scmp.ne.s32.totalorder %s114, %s115
      %p127 = scmp.eq.s32.totalorder %s21, 1
      %p128 = por %p126, %p127
      %p130 = scmp.ne.s32.totalorder %s115, %s129
      %p131 = scmp.eq.s32.totalorder %s21, 0
      %p132 = por %p130, %p131
      %s134 = sadd.s32 %s133, 1
      %p137 = scmp.eq.s32.totalorder %s15, 1
      %p138 = scmp.ne.s32.totalorder %s133, %s135
      %p139 = scmp.eq.s32.totalorder %s15, 0
      %p140 = por %p138, %p139
      %p141 = scmp.ne.s32.totalorder %s133, %s135
      %p142 = scmp.eq.s32.totalorder %s20, 1
      %p143 = por %p141, %p142
      %p144 = scmp.ne.s32.totalorder %s135, %s136
      %p145 = scmp.eq.s32.totalorder %s20, 0
      %p146 = por %p144, %p145
      %p147 = scmp.ne.s32.totalorder %s135, %s136
      %p148 = scmp.eq.s32.totalorder %s21, 1
      %p149 = por %p147, %p148
      %p151 = scmp.ne.s32.totalorder %s136, %s150
      %p152 = scmp.eq.s32.totalorder %s21, 0
      %p153 = por %p151, %p152
      %s155 = sadd.s32 %s154, 1
      %p158 = scmp.eq.s32.totalorder %s15, 1
      %p159 = scmp.ne.s32.totalorder %s154, %s156
      %p160 = scmp.eq.s32.totalorder %s15, 0
      %p161 = por %p159, %p160
      %p162 = scmp.ne.s32.totalorder %s154, %s156
      %p163 = scmp.eq.s32.totalorder %s20, 1
      %p164 = por %p162, %p163
      %p165 = scmp.ne.s32.totalorder %s156, %s157
      %p166 = scmp.eq.s32.totalorder %s20, 0
      %p167 = por %p165, %p166
      %p168 = scmp.ne.s32.totalorder %s156, %s157
      %p169 = scmp.eq.s32.totalorder %s21, 1
      %p170 = por %p168, %p169
      %p172 = scmp.ne.s32.totalorder %s157, %s171
      %p173 = scmp.eq.s32.totalorder %s21, 0
      %p174 = por %p172, %p173
      %s176 = sadd.s32 %s175, 1
      %p179 = scmp.eq.s32.totalorder %s15, 1
      %p180 = scmp.ne.s32.totalorder %s175, %s177
      %p181 = scmp.eq.s32.totalorder %s15, 0
      %p182 = por %p180, %p181
      %p183 = scmp.ne.s32.totalorder %s175, %s177
      %p184 = scmp.eq.s32.totalorder %s20, 1
      %p185 = por %p183, %p184
      %p186 = scmp.ne.s32.totalorder %s177, %s178
      %p187 = scmp.eq.s32.totalorder %s20, 0
      %p188 = por %p186, %p187
      %p189 = scmp.ne.s32.totalorder %s177, %s178
      %p190 = scmp.eq.s32.totalorder %s21, 1
      %p191 = por %p189, %p190
      %p193 = scmp.ne.s32.totalorder %s178, %s192
      %p194 = scmp.eq.s32.totalorder %s21, 0
      %p195 = por %p193, %p194
      %s197 = sadd.s32 %s196, 1
      %p200 = scmp.eq.s32.totalorder %s15, 1
      %p201 = scmp.ne.s32.totalorder %s196, %s198
      %p202 = scmp.eq.s32.totalorder %s15, 0
      %p203 = por %p201, %p202
      %p204 = scmp.ne.s32.totalorder %s196, %s198
      %p205 = scmp.eq.s32.totalorder %s20, 1
      %p206 = por %p204, %p205
      %p207 = scmp.ne.s32.totalorder %s198, %s199
      %p208 = scmp.eq.s32.totalorder %s20, 0
      %p209 = por %p207, %p208
      %p210 = scmp.ne.s32.totalorder %s198, %s199
      %p211 = scmp.eq.s32.totalorder %s21, 1
      %p212 = por %p210, %p211
      %p214 = scmp.ne.s32.totalorder %s199, %s213
      %p215 = scmp.eq.s32.totalorder %s21, 0
      %p216 = por %p214, %p215
      %s217 = ssub.s32 %s15, %s22
      %p218 = scmp.eq.s32.totalorder %s217, 0
      %s220 = sadd.s32 %s219, 1
      %s221 = scalar_select %p218, %s219, %s220
      %p224 = pneg %p218
      %p225 = scmp.eq.s32.totalorder %s15, 1
      %p226 = por %p224, %p225
      %p227 = scmp.ne.s32.totalorder %s219, %s222
      %p228 = scmp.eq.s32.totalorder %s15, 0
      %p229 = por %p227, %p228
      %p230 = scmp.ne.s32.totalorder %s219, %s222
      %p231 = scmp.eq.s32.totalorder %s20, 1
      %p232 = por %p230, %p231
      %p233 = scmp.ne.s32.totalorder %s222, %s223
      %p234 = scmp.eq.s32.totalorder %s20, 0
      %p235 = por %p233, %p234
      %p236 = scmp.ne.s32.totalorder %s222, %s223
      %p237 = scmp.eq.s32.totalorder %s21, 1
      %p238 = por %p236, %p237
      %p240 = scmp.ne.s32.totalorder %s223, %s239
      %p241 = scmp.eq.s32.totalorder %s21, 0
      %p242 = por %p240, %p241
      %p243 = scmp.le.s32.totalorder 1, %s15
      %p244 = scmp.lt.s32.totalorder %s15, 3
      %p245 = pnand %p243, %p244
      %p246 = pneg %p245
      // Predicated region
      $region9: #{relation_encoder.1} parent=5 // pred_check
        _
      $region10: #{relation_encoder.1} parent=5 // pred_check_branch
        %248 = sbr.rel (%p245) target = $region12
      $region11: #{relation_encoder.1} parent=5 // pred_region
        %s249 = ssub.s32 %s15, 1
        // Predicated region
        $region13: #{relation_encoder.1} parent=11 // pred_check
          %p250 = pneg %p62
        $region14: #{relation_encoder.1} parent=11 // pred_check_branch
          %252 = sbr.rel (%p250) target = $region16
        $region15: #{relation_encoder.1} parent=11 // pred_region
          _
        $region16: #{relation_encoder.1} parent=11 // pred_fallthru
          _
        // Predicated region
        $region17: #{relation_encoder.1} parent=11 // pred_check
          %p253 = pneg %p83
        $region18: #{relation_encoder.1} parent=11 // pred_check_branch
          %255 = sbr.rel (%p253) target = $region20
        $region19: #{relation_encoder.1} parent=11 // pred_region
          _
        $region20: #{relation_encoder.1} parent=11 // pred_fallthru
          _
        // Predicated region
        $region21: #{relation_encoder.1} parent=11 // pred_check
          %p256 = pneg %p104
        $region22: #{relation_encoder.1} parent=11 // pred_check_branch
          %258 = sbr.rel (%p256) target = $region24
        $region23: #{relation_encoder.1} parent=11 // pred_region
          _
        $region24: #{relation_encoder.1} parent=11 // pred_fallthru
          _
        // Predicated region
        $region25: #{relation_encoder.1} parent=11 // pred_check
          %p259 = pneg %p125
        $region26: #{relation_encoder.1} parent=11 // pred_check_branch
          %261 = sbr.rel (%p259) target = $region28
        $region27: #{relation_encoder.1} parent=11 // pred_region
          _
        $region28: #{relation_encoder.1} parent=11 // pred_fallthru
          _
        // Predicated region
        $region29: #{relation_encoder.1} parent=11 // pred_check
          %p262 = pneg %p146
        $region30: #{relation_encoder.1} parent=11 // pred_check_branch
          %264 = sbr.rel (%p262) target = $region32
        $region31: #{relation_encoder.1} parent=11 // pred_region
          _
        $region32: #{relation_encoder.1} parent=11 // pred_fallthru
          _
        // Predicated region
        $region33: #{relation_encoder.1} parent=11 // pred_check
          %p265 = pneg %p167
        $region34: #{relation_encoder.1} parent=11 // pred_check_branch
          %267 = sbr.rel (%p265) target = $region36
        $region35: #{relation_encoder.1} parent=11 // pred_region
          _
        $region36: #{relation_encoder.1} parent=11 // pred_fallthru
          _
        // Predicated region
        $region37: #{relation_encoder.1} parent=11 // pred_check
          %p268 = pneg %p188
        $region38: #{relation_encoder.1} parent=11 // pred_check_branch
          %270 = sbr.rel (%p268) target = $region40
        $region39: #{relation_encoder.1} parent=11 // pred_region
          _
        $region40: #{relation_encoder.1} parent=11 // pred_fallthru
          _
        // Predicated region
        $region41: #{relation_encoder.1} parent=11 // pred_check
          %p271 = pneg %p209
        $region42: #{relation_encoder.1} parent=11 // pred_check_branch
          %273 = sbr.rel (%p271) target = $region44
        $region43: #{relation_encoder.1} parent=11 // pred_region
          _
        $region44: #{relation_encoder.1} parent=11 // pred_fallthru
          _
      $region12: #{relation_encoder.1} parent=5 // pred_fallthru
        _
      %p274 = scmp.lt.s32.totalorder %s15, 2
      // Predicated region
      $region45: #{relation_encoder.1} parent=5 // pred_check
        %p275 = pneg %p274
      $region46: #{relation_encoder.1} parent=5 // pred_check_branch
        %277 = sbr.rel (%p275) target = $region48
      $region47: #{relation_encoder.1} parent=5 // pred_region
        // Predicated region
        $region49: #{relation_encoder.1} parent=47 // pred_check
          %p278 = pneg %p35
        $region50: #{relation_encoder.1} parent=47 // pred_check_branch
          %280 = sbr.rel (%p278) target = $region52
        $region51: #{relation_encoder.1} parent=47 // pred_region
          %s281 = sand.u32 %s25, 1
          %s282 = sand.u32 %s25, 1
          %s283 = smul.addr %s282, 128
          %s284 = scalar_lea.vmem [#allocation2], %s283
          %s285 = smul.addr %s15, 8
          %s286 = scalar_lea.vmem %s0, %s285
          // Predicated region
          $region53: #{relation_encoder.1} parent=51 // pred_check
            _
          $region54: #{relation_encoder.1} parent=51 // pred_check_branch
            %288 = sbr.rel (0) target = $region56
          $region55: #{relation_encoder.1} parent=51 // pred_region
            // Predicated region
            $region57: #{relation_encoder.1} parent=55 // pred_check
              _
            $region58: #{relation_encoder.1} parent=55 // pred_check_branch
              %290 = sbr.rel (0) target = $region60
            $region59: #{relation_encoder.1} parent=55 // pred_region
              // Predicated region
              $region72: #{relation_encoder.1} parent=59 // pred_check
                _
              $region73: #{relation_encoder.1} parent=59 // pred_check_branch
                %335 = sbr.rel (0) target = $region75
              $region74: #{relation_encoder.1} parent=59 // pred_region
                loop: start=0, step=1, limit=1
                $region76: #{relation_encoder.1} parent=74 // loop_pre_header
                  _
                $region77: #{relation_encoder.1} parent=74 // loop_header
                  %s337 = sphi 0, %s341
                  %p338 = scmp.ge.s32.totalorder %s337, 1
                  %s342 = sphi %s286, %s286
                  %s343 = sphi %s284, %s284
                $region78: #{relation_encoder.1} parent=74 // loop_header_branch
                  %340 = sbr.rel (%p338) target = $region82
                $region79: #{relation_encoder.1} parent=74 // loop_body
                  %v344 = vld [vmem:[%s342] sm:$0xff]
                  %345 = vst [vmem:[%s343] sm:$0xff] %v344
                  %v346 = vld [vmem:[%s342 + $0x10] sm:$0xff]
                  %347 = vst [vmem:[%s343 + $0x8] sm:$0xff] %v346
                  %v348 = vld [vmem:[%s342 + $0x20] sm:$0xff]
                  %349 = vst [vmem:[%s343 + $0x10] sm:$0xff] %v348
                  %v350 = vld [vmem:[%s342 + $0x30] sm:$0xff]
                  %351 = vst [vmem:[%s343 + $0x18] sm:$0xff] %v350
                  %v352 = vld [vmem:[%s342 + $0x40] sm:$0xff]
                  %353 = vst [vmem:[%s343 + $0x20] sm:$0xff] %v352
                  %v354 = vld [vmem:[%s342 + $0x50] sm:$0xff]
                  %355 = vst [vmem:[%s343 + $0x28] sm:$0xff] %v354
                  %v356 = vld [vmem:[%s342 + $0x60] sm:$0xff]
                  %357 = vst [vmem:[%s343 + $0x30] sm:$0xff] %v356
                  %v358 = vld [vmem:[%s342 + $0x70] sm:$0xff]
                  %359 = vst [vmem:[%s343 + $0x38] sm:$0xff] %v358
                  %v360 = vld [vmem:[%s342 + $0x80] sm:$0xff]
                  %361 = vst [vmem:[%s343 + $0x40] sm:$0xff] %v360
                  %v362 = vld [vmem:[%s342 + $0x90] sm:$0xff]
                  %363 = vst [vmem:[%s343 + $0x48] sm:$0xff] %v362
                  %v364 = vld [vmem:[%s342 + $0xa0] sm:$0xff]
                  %365 = vst [vmem:[%s343 + $0x50] sm:$0xff] %v364
                  %v366 = vld [vmem:[%s342 + $0xb0] sm:$0xff]
                  %367 = vst [vmem:[%s343 + $0x58] sm:$0xff] %v366
                  %v368 = vld [vmem:[%s342 + $0xc0] sm:$0xff]
                  %369 = vst [vmem:[%s343 + $0x60] sm:$0xff] %v368
                  %v370 = vld [vmem:[%s342 + $0xd0] sm:$0xff]
                  %371 = vst [vmem:[%s343 + $0x68] sm:$0xff] %v370
                  %v372 = vld [vmem:[%s342 + $0xe0] sm:$0xff]
                  %373 = vst [vmem:[%s343 + $0x70] sm:$0xff] %v372
                  %v374 = vld [vmem:[%s342 + $0xf0] sm:$0xff]
                  %375 = vst [vmem:[%s343 + $0x78] sm:$0xff] %v374
                $region80: #{relation_encoder.1} parent=74 // loop_footer
                  %s341 = sadd.s32 1, %s337
                $region81: #{relation_encoder.1} parent=74 // loop_footer_branch
                  %336 = sbr.rel target = $region77
                $region82: #{relation_encoder.1} parent=74 // loop_exit
                  _
              $region75: #{relation_encoder.1} parent=59 // pred_fallthru
                _
              // Predicated region
              $region83: #{relation_encoder.1} parent=59 // pred_check
                _
              $region84: #{relation_encoder.1} parent=59 // pred_check_branch
                %377 = sbr.rel target = $region86
              $region85: #{relation_encoder.1} parent=59 // pred_region
                _
              $region86: #{relation_encoder.1} parent=59 // pred_fallthru
                _
            $region60: #{relation_encoder.1} parent=55 // pred_fallthru
              _
            // Predicated region
            $region61: #{relation_encoder.1} parent=55 // pred_check
              _
            $region62: #{relation_encoder.1} parent=55 // pred_check_branch
              %292 = sbr.rel target = $region64
            $region63: #{relation_encoder.1} parent=55 // pred_region
              loop: start=0, step=1, limit=1
              $region65: #{relation_encoder.1} parent=63 // loop_pre_header
                _
              $region66: #{relation_encoder.1} parent=63 // loop_header
                %s295 = sphi 0, %s299
                %p296 = scmp.ge.s32.totalorder %s295, 1
                %s300 = sphi %s286, %s286
                %s301 = sphi %s284, %s284
              $region67: #{relation_encoder.1} parent=63 // loop_header_branch
                %298 = sbr.rel (%p296) target = $region71
              $region68: #{relation_encoder.1} parent=63 // loop_body
                %v302 = vld [vmem:[%s300] sm:$0xff]
                %303 = vst [vmem:[%s301] sm:$0xff] %v302
                %v304 = vld [vmem:[%s300 + $0x10] sm:$0xff]
                %305 = vst [vmem:[%s301 + $0x8] sm:$0xff] %v304
                %v306 = vld [vmem:[%s300 + $0x20] sm:$0xff]
                %307 = vst [vmem:[%s301 + $0x10] sm:$0xff] %v306
                %v308 = vld [vmem:[%s300 + $0x30] sm:$0xff]
                %309 = vst [vmem:[%s301 + $0x18] sm:$0xff] %v308
                %v310 = vld [vmem:[%s300 + $0x40] sm:$0xff]
                %311 = vst [vmem:[%s301 + $0x20] sm:$0xff] %v310
                %v312 = vld [vmem:[%s300 + $0x50] sm:$0xff]
                %313 = vst [vmem:[%s301 + $0x28] sm:$0xff] %v312
                %v314 = vld [vmem:[%s300 + $0x60] sm:$0xff]
                %315 = vst [vmem:[%s301 + $0x30] sm:$0xff] %v314
                %v316 = vld [vmem:[%s300 + $0x70] sm:$0xff]
                %317 = vst [vmem:[%s301 + $0x38] sm:$0xff] %v316
                %v318 = vld [vmem:[%s300 + $0x80] sm:$0xff]
                %319 = vst [vmem:[%s301 + $0x40] sm:$0xff] %v318
                %v320 = vld [vmem:[%s300 + $0x90] sm:$0xff]
                %321 = vst [vmem:[%s301 + $0x48] sm:$0xff] %v320
                %v322 = vld [vmem:[%s300 + $0xa0] sm:$0xff]
                %323 = vst [vmem:[%s301 + $0x50] sm:$0xff] %v322
                %v324 = vld [vmem:[%s300 + $0xb0] sm:$0xff]
                %325 = vst [vmem:[%s301 + $0x58] sm:$0xff] %v324
                %v326 = vld [vmem:[%s300 + $0xc0] sm:$0xff]
                %327 = vst [vmem:[%s301 + $0x60] sm:$0xff] %v326
                %v328 = vld [vmem:[%s300 + $0xd0] sm:$0xff]
                %329 = vst [vmem:[%s301 + $0x68] sm:$0xff] %v328
                %v330 = vld [vmem:[%s300 + $0xe0] sm:$0xff]
                %331 = vst [vmem:[%s301 + $0x70] sm:$0xff] %v330
                %v332 = vld [vmem:[%s300 + $0xf0] sm:$0xff]
                %333 = vst [vmem:[%s301 + $0x78] sm:$0xff] %v332
              $region69: #{relation_encoder.1} parent=63 // loop_footer
                %s299 = sadd.s32 1, %s295
              $region70: #{relation_encoder.1} parent=63 // loop_footer_branch
                %294 = sbr.rel target = $region66
              $region71: #{relation_encoder.1} parent=63 // loop_exit
                _
            $region64: #{relation_encoder.1} parent=55 // pred_fallthru
              _
          $region56: #{relation_encoder.1} parent=51 // pred_fallthru
            _
          %378 = vnop
        $region52: #{relation_encoder.1} parent=47 // pred_fallthru
          _
      $region48: #{relation_encoder.1} parent=5 // pred_fallthru
        _
      %p379 = scmp.le.s32.totalorder 1, %s15
      %p380 = scmp.lt.s32.totalorder %s15, 3
      %p381 = pnand %p379, %p380
      %p382 = pneg %p381
      // Predicated region
      $region87: #{relation_encoder.1} parent=5 // pred_check
        _
      $region88: #{relation_encoder.1} parent=5 // pred_check_branch
        %384 = sbr.rel (%p381) target = $region90
      $region89: #{relation_encoder.1} parent=5 // pred_region
        %s385 = ssub.s32 %s15, 1
        %s386 = sand.u32 %s28, 1
        %s387 = sand.u32 %s28, 1
        %s388 = smul.addr %s387, 128
        %s389 = scalar_lea.vmem [#allocation2], %s388
        // Predicated region
        $region91: #{relation_encoder.1} parent=89 // pred_check
          %p390 = pneg %p41
        $region92: #{relation_encoder.1} parent=89 // pred_check_branch
          %392 = sbr.rel (%p390) target = $region94
        $region93: #{relation_encoder.1} parent=89 // pred_region
          _
        $region94: #{relation_encoder.1} parent=89 // pred_fallthru
          _
        %s393 = sand.u32 %s28, 1
        %s394 = sand.u32 %s28, 1
        %s395 = smul.addr %s394, 128
        %s396 = scalar_lea.vmem [#allocation2], %s395
        %p397 = pneg %p41
        %p398 = pneg %p38
        %p399 = pneg %p62
        %p400 = pneg %p59
        %p401 = pneg %p83
        %p402 = pneg %p80
        %p403 = pneg %p104
        %p404 = pneg %p101
        %p405 = pneg %p125
        %p406 = pneg %p122
        %p407 = pneg %p146
        %p408 = pneg %p143
        %p409 = pneg %p167
        %p410 = pneg %p164
        %p411 = pneg %p188
        %p412 = pneg %p185
        %p413 = pneg %p209
        %p414 = pneg %p206
        %p415 = pneg %p235
        %p416 = pneg %p232
        %s417 = sand.u32 %s222, 1
        %s418 = sand.u32 %s222, 1
        %s419 = smul.addr %s418, 16
        %s420 = scalar_lea.vmem [#allocation3], %s419
        %v421 = vld [vmem:[%s389] sm:$0xff]
        %v422 = vld [vmem:[%s389 + $0x8] sm:$0xff]
        %v423 = vld [vmem:[%s389 + $0x10] sm:$0xff]
        %v424 = vld [vmem:[%s389 + $0x18] sm:$0xff]
        %v425 = vld [vmem:[%s389 + $0x20] sm:$0xff]
        %v426 = vld [vmem:[%s389 + $0x28] sm:$0xff]
        %v427 = vld [vmem:[%s389 + $0x30] sm:$0xff]
        %v428 = vld [vmem:[%s389 + $0x38] sm:$0xff]
        %v429 = vld [vmem:[%s389 + $0x40] sm:$0xff]
        %v430 = vld [vmem:[%s389 + $0x48] sm:$0xff]
        %v431 = vld [vmem:[%s389 + $0x50] sm:$0xff]
        %v432 = vld [vmem:[%s389 + $0x58] sm:$0xff]
        %v433 = vld [vmem:[%s389 + $0x60] sm:$0xff]
        %v434 = vld [vmem:[%s389 + $0x68] sm:$0xff]
        %v435 = vld [vmem:[%s389 + $0x70] sm:$0xff]
        %v436 = vld [vmem:[%s389 + $0x78] sm:$0xff]
        %v437 = vld [vmem:[%s1] sm:$0xff]
        %v438 = vld [vmem:[%s1 + $0x8] sm:$0xff]
        %v439 = vld [vmem:[%s1 + $0x10] sm:$0xff]
        %v440 = vld [vmem:[%s1 + $0x18] sm:$0xff]
        %v441 = vld [vmem:[%s1 + $0x20] sm:$0xff]
        %v442 = vld [vmem:[%s1 + $0x28] sm:$0xff]
        %v443 = vld [vmem:[%s1 + $0x30] sm:$0xff]
        %v444 = vld [vmem:[%s1 + $0x38] sm:$0xff]
        %v445 = vld [vmem:[%s1 + $0x40] sm:$0xff]
        %v446 = vld [vmem:[%s1 + $0x48] sm:$0xff]
        %v447 = vld [vmem:[%s1 + $0x50] sm:$0xff]
        %v448 = vld [vmem:[%s1 + $0x58] sm:$0xff]
        %v449 = vld [vmem:[%s1 + $0x60] sm:$0xff]
        %v450 = vld [vmem:[%s1 + $0x68] sm:$0xff]
        %v451 = vld [vmem:[%s1 + $0x70] sm:$0xff]
        %v452 = vld [vmem:[%s1 + $0x78] sm:$0xff]
        %v453 = vld [vmem:[%s1 + $0x80] sm:$0xff]
        %v454 = vld [vmem:[%s1 + $0x88] sm:$0xff]
        %v455 = vld [vmem:[%s1 + $0x90] sm:$0xff]
        %v456 = vld [vmem:[%s1 + $0x98] sm:$0xff]
        %v457 = vld [vmem:[%s1 + $0xa0] sm:$0xff]
        %v458 = vld [vmem:[%s1 + $0xa8] sm:$0xff]
        %v459 = vld [vmem:[%s1 + $0xb0] sm:$0xff]
        %v460 = vld [vmem:[%s1 + $0xb8] sm:$0xff]
        %v461 = vld [vmem:[%s1 + $0xc0] sm:$0xff]
        %v462 = vld [vmem:[%s1 + $0xc8] sm:$0xff]
        %v463 = vld [vmem:[%s1 + $0xd0] sm:$0xff]
        %v464 = vld [vmem:[%s1 + $0xd8] sm:$0xff]
        %v465 = vld [vmem:[%s1 + $0xe0] sm:$0xff]
        %v466 = vld [vmem:[%s1 + $0xe8] sm:$0xff]
        %v467 = vld [vmem:[%s1 + $0xf0] sm:$0xff]
        %v468 = vld [vmem:[%s1 + $0xf8] sm:$0xff]
        %v469 = vld [vmem:[%s1 + $0x100] sm:$0xff]
        %v470 = vld [vmem:[%s1 + $0x108] sm:$0xff]
        %v471 = vld [vmem:[%s1 + $0x110] sm:$0xff]
        %v472 = vld [vmem:[%s1 + $0x118] sm:$0xff]
        %v473 = vld [vmem:[%s1 + $0x120] sm:$0xff]
        %v474 = vld [vmem:[%s1 + $0x128] sm:$0xff]
        %v475 = vld [vmem:[%s1 + $0x130] sm:$0xff]
        %v476 = vld [vmem:[%s1 + $0x138] sm:$0xff]
        %v477 = vld [vmem:[%s1 + $0x140] sm:$0xff]
        %v478 = vld [vmem:[%s1 + $0x148] sm:$0xff]
        %s479 = scalar_lea.vmem %s1, 336
        %v480 = vld [vmem:[%s479] sm:$0xff]
        %v481 = vld [vmem:[%s479 + $0x8] sm:$0xff]
        %v482 = vld [vmem:[%s479 + $0x10] sm:$0xff]
        %v483 = vld [vmem:[%s479 + $0x18] sm:$0xff]
        %v484 = vld [vmem:[%s479 + $0x20] sm:$0xff]
        %v485 = vld [vmem:[%s479 + $0x28] sm:$0xff]
        %v486 = vld [vmem:[%s479 + $0x30] sm:$0xff]
        %v487 = vld [vmem:[%s479 + $0x38] sm:$0xff]
        %v488 = vld [vmem:[%s479 + $0x40] sm:$0xff]
        %v489 = vld [vmem:[%s479 + $0x48] sm:$0xff]
        %v490 = vld [vmem:[%s479 + $0x50] sm:$0xff]
        %v491 = vld [vmem:[%s479 + $0x58] sm:$0xff]
        %v492 = vld [vmem:[%s479 + $0x60] sm:$0xff]
        %v493 = vld [vmem:[%s479 + $0x68] sm:$0xff]
        %v494 = vld [vmem:[%s479 + $0x70] sm:$0xff]
        %v495 = vld [vmem:[%s479 + $0x78] sm:$0xff]
        %v496 = vld [vmem:[%s479 + $0x80] sm:$0xff]
        %v497 = vld [vmem:[%s479 + $0x88] sm:$0xff]
        %v498 = vld [vmem:[%s479 + $0x90] sm:$0xff]
        %v499 = vld [vmem:[%s479 + $0x98] sm:$0xff]
        %v500 = vld [vmem:[%s479 + $0xa0] sm:$0xff]
        %v501 = vld [vmem:[%s479 + $0xa8] sm:$0xff]
        %v502 = vld [vmem:[%s479 + $0xb0] sm:$0xff]
        %v503 = vld [vmem:[%s479 + $0xb8] sm:$0xff]
        %v504 = vld [vmem:[%s479 + $0xc0] sm:$0xff]
        %v505 = vld [vmem:[%s479 + $0xc8] sm:$0xff]
        %v506 = vld [vmem:[%s479 + $0xd0] sm:$0xff]
        %v507 = vld [vmem:[%s479 + $0xd8] sm:$0xff]
        %v508 = vld [vmem:[%s479 + $0xe0] sm:$0xff]
        %v509 = vld [vmem:[%s479 + $0xe8] sm:$0xff]
        %v510 = vld [vmem:[%s479 + $0xf0] sm:$0xff]
        %v511 = vld [vmem:[%s479 + $0xf8] sm:$0xff]
        %v512 = vld [vmem:[%s479 + $0x100] sm:$0xff]
        %v513 = vld [vmem:[%s479 + $0x108] sm:$0xff]
        %v514 = vld [vmem:[%s479 + $0x110] sm:$0xff]
        %v515 = vld [vmem:[%s479 + $0x118] sm:$0xff]
        %v516 = vld [vmem:[%s479 + $0x120] sm:$0xff]
        %v517 = vld [vmem:[%s479 + $0x128] sm:$0xff]
        %v518 = vld [vmem:[%s479 + $0x130] sm:$0xff]
        %v519 = vld [vmem:[%s479 + $0x138] sm:$0xff]
        %v520 = vld [vmem:[%s479 + $0x140] sm:$0xff]
        %v521 = vld [vmem:[%s479 + $0x148] sm:$0xff]
        %vm522 = vcmask 392192
        %v524 = vsel %vm522, %v422, 0
        %v527 = vsel %vm522, %v423, 0
        %v530 = vsel %vm522, %v424, 0
        %v533 = vsel %vm522, %v425, 0
        %v536 = vsel %vm522, %v426, 0
        %v539 = vsel %vm522, %v427, 0
        %v542 = vsel %vm522, %v428, 0
        %v545 = vsel %vm522, %v429, 0
        %v548 = vsel %vm522, %v430, 0
        %v551 = vsel %vm522, %v431, 0
        %v554 = vsel %vm522, %v432, 0
        %v557 = vsel %vm522, %v433, 0
        %v560 = vsel %vm522, %v434, 0
        %v563 = vsel %vm522, %v435, 0
        %565 = vmatprep.subr.mxu0 %v481
        %566 = vmatpush1.msra.mxu0 %v480
        %567 = vmatprep.subr.mxu0 %v488
        %568 = vmatpush1.msra.mxu0 %v487
        %569 = vmatprep.subr.mxu0 %v495
        %570 = vmatpush1.msra.mxu0 %v494
        %571 = vmatprep.subr.mxu0 %v502
        %572 = vmatpush1.msra.mxu0 %v501
        %573 = vmatprep.subr.mxu0 %v509
        %574 = vmatpush1.msra.mxu0 %v508
        %575 = vmatprep.subr.mxu0 %v516
        %576 = vmatpush1.msra.mxu0 %v515
        %577 = vmatprep.subr.mxu0 0.0
        %578 = vmatpush1.msra.mxu0 0.0
        %579 = vmatprep.subr.mxu0 0.0
        %580 = vmatpush1.msra.mxu0 0.0
        %581 = vmatprep.subr.mxu0 0.0
        %582 = vmatpush1.msra.mxu0 0.0
        %583 = vmatprep.subr.mxu0 0.0
        %584 = vmatpush1.msra.mxu0 0.0
        %585 = vmatprep.subr.mxu0 0.0
        %586 = vmatpush1.msra.mxu0 0.0
        %587 = vmatprep.subr.mxu0 0.0
        %588 = vmatpush1.msra.mxu0 0.0
        %589 = vmatprep.subr.mxu0 0.0
        %590 = vmatpush1.msra.mxu0 0.0
        %591 = vmatprep.subr.mxu0 0.0
        %592 = vmatpush1.msra.mxu0 0.0
        %593 = vmatprep.subr.mxu0 0.0
        %594 = vmatpush1.msra.mxu0 0.0
        %595 = vmatprep.subr.mxu0 0.0
        %596 = vmatpush1.msra.mxu0 0.0
        %597 = vmatprep.subr.mxu0 0.0
        %598 = vmatpush1.msra.mxu0 0.0
        %599 = vmatprep.subr.mxu0 0.0
        %600 = vmatpush1.msra.mxu0 0.0
        %601 = vmatprep.subr.mxu0 0.0
        %602 = vmatpush1.msra.mxu0 0.0
        %603 = vmatprep.subr.mxu0 0.0
        %604 = vmatpush1.msra.mxu0 0.0
        %605 = vmatprep.subr.mxu0 0.0
        %606 = vmatpush1.msra.mxu0 0.0
        %607 = vmatprep.subr.mxu0 0.0
        %608 = vmatpush1.msra.mxu0 0.0
        %609 = vmatprep.subr.mxu0 0.0
        %610 = vmatpush1.msra.mxu0 0.0
        %611 = vmatprep.subr.mxu0 0.0
        %612 = vmatpush1.msra.mxu0 0.0
        %613 = vmatprep.subr.mxu0 0.0
        %614 = vmatpush1.msra.mxu0 0.0
        %615 = vmatprep.subr.mxu0 0.0
        %616 = vmatpush1.msra.mxu0 0.0
        %617 = vmatprep.subr.mxu0 0.0
        %618 = vmatpush1.msra.mxu0 0.0
        %619 = vmatprep.subr.mxu0 0.0
        %620 = vmatpush1.msra.mxu0 0.0
        %621 = vmatprep.subr.mxu0 0.0
        %622 = vmatpush1.msra.mxu0 0.0
        %623 = vmatprep.subr.mxu0 0.0
        %624 = vmatpush1.msra.mxu0 0.0
        %625 = vmatprep.subr.mxu0 0.0
        %626 = vmatpush1.msra.mxu0 0.0
        %627 = vmatprep.subr.mxu0 0.0
        %628 = vmatpush1.msra.mxu0 0.0
        %629 = vmatprep.mubr.f32.mxu0 0.0
        %630 = vmatmul.mubr.f32.gmra.mrb[0].mxu0 %v524
        %v631 = vpop.f32.mrb[0].mxu0
        %v632 = vadd.f32 0.0, %v631
        %v633 = vpop.f32.mrb[0].mxu0
        %v634 = vadd.f32 0.0, %v633
        %635 = vmatprep.mubr.f32.mxu0 0.0
        %636 = vmatmul.mubr.f32.gmra.mrb[0].mxu0 %v527
        %v637 = vpop.f32.mrb[0].mxu0
        %v638 = vadd.f32 0.0, %v637
        %v639 = vpop.f32.mrb[0].mxu0
        %v640 = vadd.f32 0.0, %v639
        %641 = vmatprep.mubr.f32.mxu0 0.0
        %642 = vmatmul.mubr.f32.gmra.mrb[0].mxu0 %v530
        %v643 = vpop.f32.mrb[0].mxu0
        %v644 = vadd.f32 0.0, %v643
        %v645 = vpop.f32.mrb[0].mxu0
        %v646 = vadd.f32 0.0, %v645
        %647 = vmatprep.mubr.f32.mxu0 0.0
        %648 = vmatmul.mubr.f32.gmra.mrb[0].mxu0 %v533
        %v649 = vpop.f32.mrb[0].mxu0
        %v650 = vadd.f32 0.0, %v649
        %v651 = vpop.f32.mrb[0].mxu0
        %v652 = vadd.f32 0.0, %v651
        %653 = vmatprep.mubr.f32.mxu0 0.0
        %654 = vmatmul.mubr.f32.gmra.mrb[0].mxu0 %v536
        %v655 = vpop.f32.mrb[0].mxu0
        %v656 = vadd.f32 0.0, %v655
        %v657 = vpop.f32.mrb[0].mxu0
        %v658 = vadd.f32 0.0, %v657
        %659 = vmatprep.mubr.f32.mxu0 0.0
        %660 = vmatmul.mubr.f32.gmra.mrb[0].mxu0 %v539
        %v661 = vpop.f32.mrb[0].mxu0
        %v662 = vadd.f32 0.0, %v661
        %v663 = vpop.f32.mrb[0].mxu0
        %v664 = vadd.f32 0.0, %v663
        %665 = vmatprep.mubr.f32.mxu0 0.0
        %666 = vmatmul.mubr.f32.gmra.mrb[0].mxu0 %v542
        %v667 = vpop.f32.mrb[0].mxu0
        %v668 = vadd.f32 0.0, %v667
        %v669 = vpop.f32.mrb[0].mxu0
        %v670 = vadd.f32 0.0, %v669
        %671 = vmatprep.mubr.f32.mxu0 0.0
        %672 = vmatmul.mubr.f32.gmra.mrb[0].mxu0 %v545
        %v673 = vpop.f32.mrb[0].mxu0
        %v674 = vadd.f32 0.0, %v673
        %v675 = vpop.f32.mrb[0].mxu0
        %v676 = vadd.f32 0.0, %v675
        %677 = vmatprep.mubr.f32.mxu0 0.0
        %678 = vmatmul.mubr.f32.gmra.mrb[0].mxu0 %v548
        %v679 = vpop.f32.mrb[0].mxu0
        %v680 = vadd.f32 0.0, %v679
        %v681 = vpop.f32.mrb[0].mxu0
        %v682 = vadd.f32 0.0, %v681
        %683 = vmatprep.mubr.f32.mxu0 0.0
        %684 = vmatmul.mubr.f32.gmra.mrb[0].mxu0 %v551
        %v685 = vpop.f32.mrb[0].mxu0
        %v686 = vadd.f32 0.0, %v685
        %v687 = vpop.f32.mrb[0].mxu0
        %v688 = vadd.f32 0.0, %v687
        %689 = vmatprep.mubr.f32.mxu0 0.0
        %690 = vmatmul.mubr.f32.gmra.mrb[0].mxu0 %v554
        %v691 = vpop.f32.mrb[0].mxu0
        %v692 = vadd.f32 0.0, %v691
        %v693 = vpop.f32.mrb[0].mxu0
        %v694 = vadd.f32 0.0, %v693
        %695 = vmatprep.mubr.f32.mxu0 0.0
        %696 = vmatmul.mubr.f32.gmra.mrb[0].mxu0 %v557
        %v697 = vpop.f32.mrb[0].mxu0
        %v698 = vadd.f32 0.0, %v697
        %v699 = vpop.f32.mrb[0].mxu0
        %v700 = vadd.f32 0.0, %v699
        %701 = vmatprep.mubr.f32.mxu0 0.0
        %702 = vmatmul.mubr.f32.gmra.mrb[0].mxu0 %v560
        %v703 = vpop.f32.mrb[0].mxu0
        %v704 = vadd.f32 0.0, %v703
        %v705 = vpop.f32.mrb[0].mxu0
        %v706 = vadd.f32 0.0, %v705
        %707 = vmatprep.mubr.f32.mxu0 0.0
        %708 = vmatmul.mubr.f32.gmra.mrb[0].mxu0 %v563
        %v709 = vpop.f32.mrb[0].mxu0
        %v710 = vadd.f32 0.0, %v709
        %v711 = vpop.f32.mrb[0].mxu0
        %v712 = vadd.f32 0.0, %v711
        %713 = vdwg.mxu0
        %714 = vmatprep.subr.mxu0 %v483
        %715 = vmatpush1.msra.mxu0 %v482
        %716 = vmatprep.subr.mxu0 %v490
        %717 = vmatpush1.msra.mxu0 %v489
        %718 = vmatprep.subr.mxu0 %v497
        %719 = vmatpush1.msra.mxu0 %v496
        %720 = vmatprep.subr.mxu0 %v504
        %721 = vmatpush1.msra.mxu0 %v503
        %722 = vmatprep.subr.mxu0 %v511
        %723 = vmatpush1.msra.mxu0 %v510
        %724 = vmatprep.subr.mxu0 %v518
        %725 = vmatpush1.msra.mxu0 %v517
        %726 = vmatprep.subr.mxu0 0.0
        %727 = vmatpush1.msra.mxu0 0.0
        %728 = vmatprep.subr.mxu0 0.0
        %729 = vmatpush1.msra.mxu0 0.0
        %730 = vmatprep.subr.mxu0 0.0
        %731 = vmatpush1.msra.mxu0 0.0
        %732 = vmatprep.subr.mxu0 0.0
        %733 = vmatpush1.msra.mxu0 0.0
        %734 = vmatprep.subr.mxu0 0.0
        %735 = vmatpush1.msra.mxu0 0.0
        %736 = vmatprep.subr.mxu0 0.0
        %737 = vmatpush1.msra.mxu0 0.0
        %738 = vmatprep.subr.mxu0 0.0
        %739 = vmatpush1.msra.mxu0 0.0
        %740 = vmatprep.subr.mxu0 0.0
        %741 = vmatpush1.msra.mxu0 0.0
        %742 = vmatprep.subr.mxu0 0.0
        %743 = vmatpush1.msra.mxu0 0.0
        %744 = vmatprep.subr.mxu0 0.0
        %745 = vmatpush1.msra.mxu0 0.0
        %746 = vmatprep.subr.mxu0 0.0
        %747 = vmatpush1.msra.mxu0 0.0
        %748 = vmatprep.subr.mxu0 0.0
        %749 = vmatpush1.msra.mxu0 0.0
        %750 = vmatprep.subr.mxu0 0.0
        %751 = vmatpush1.msra.mxu0 0.0
        %752 = vmatprep.subr.mxu0 0.0
        %753 = vmatpush1.msra.mxu0 0.0
        %754 = vmatprep.subr.mxu0 0.0
        %755 = vmatpush1.msra.mxu0 0.0
        %756 = vmatprep.subr.mxu0 0.0
        %757 = vmatpush1.msra.mxu0 0.0
        %758 = vmatprep.subr.mxu0 0.0
        %759 = vmatpush1.msra.mxu0 0.0
        %760 = vmatprep.subr.mxu0 0.0
        %761 = vmatpush1.msra.mxu0 0.0
        %762 = vmatprep.subr.mxu0 0.0
        %763 = vmatpush1.msra.mxu0 0.0
        %764 = vmatprep.subr.mxu0 0.0
        %765 = vmatpush1.msra.mxu0 0.0
        %766 = vmatprep.subr.mxu0 0.0
        %767 = vmatpush1.msra.mxu0 0.0
        %768 = vmatprep.subr.mxu0 0.0
        %769 = vmatpush1.msra.mxu0 0.0
        %770 = vmatprep.subr.mxu0 0.0
        %771 = vmatpush1.msra.mxu0 0.0
        %772 = vmatprep.subr.mxu0 0.0
        %773 = vmatpush1.msra.mxu0 0.0
        %774 = vmatprep.subr.mxu0 0.0
        %775 = vmatpush1.msra.mxu0 0.0
        %776 = vmatprep.subr.mxu0 0.0
        %777 = vmatpush1.msra.mxu0 0.0
        %778 = vmatprep.mubr.f32.mxu0 0.0
        %779 = vmatmul.mubr.f32.gmra.mrb[0].mxu0 %v524
        %v780 = vpop.f32.mrb[0].mxu0
        %v781 = vadd.f32 0.0, %v780
        %v782 = vpop.f32.mrb[0].mxu0
        %v783 = vadd.f32 0.0, %v782
        %784 = vmatprep.mubr.f32.mxu0 0.0
        %785 = vmatmul.mubr.f32.gmra.mrb[0].mxu0 %v527
        %v786 = vpop.f32.mrb[0].mxu0
        %v787 = vadd.f32 0.0, %v786
        %v788 = vpop.f32.mrb[0].mxu0
        %v789 = vadd.f32 0.0, %v788
        %790 = vmatprep.mubr.f32.mxu0 0.0
        %791 = vmatmul.mubr.f32.gmra.mrb[0].mxu0 %v530
        %v792 = vpop.f32.mrb[0].mxu0
        %v793 = vadd.f32 0.0, %v792
        %v794 = vpop.f32.mrb[0].mxu0
        %v795 = vadd.f32 0.0, %v794
        %796 = vmatprep.mubr.f32.mxu0 0.0
        %797 = vmatmul.mubr.f32.gmra.mrb[0].mxu0 %v533
        %v798 = vpop.f32.mrb[0].mxu0
        %v799 = vadd.f32 0.0, %v798
        %v800 = vpop.f32.mrb[0].mxu0
        %v801 = vadd.f32 0.0, %v800
        %802 = vmatprep.mubr.f32.mxu0 0.0
        %803 = vmatmul.mubr.f32.gmra.mrb[0].mxu0 %v536
        %v804 = vpop.f32.mrb[0].mxu0
        %v805 = vadd.f32 0.0, %v804
        %v806 = vpop.f32.mrb[0].mxu0
        %v807 = vadd.f32 0.0, %v806
        %808 = vmatprep.mubr.f32.mxu0 0.0
        %809 = vmatmul.mubr.f32.gmra.mrb[0].mxu0 %v539
        %v810 = vpop.f32.mrb[0].mxu0
        %v811 = vadd.f32 0.0, %v810
        %v812 = vpop.f32.mrb[0].mxu0
        %v813 = vadd.f32 0.0, %v812
        %814 = vmatprep.mubr.f32.mxu0 0.0
        %815 = vmatmul.mubr.f32.gmra.mrb[0].mxu0 %v542
        %v816 = vpop.f32.mrb[0].mxu0
        %v817 = vadd.f32 0.0, %v816
        %v818 = vpop.f32.mrb[0].mxu0
        %v819 = vadd.f32 0.0, %v818
        %820 = vmatprep.mubr.f32.mxu0 0.0
        %821 = vmatmul.mubr.f32.gmra.mrb[0].mxu0 %v545
        %v822 = vpop.f32.mrb[0].mxu0
        %v823 = vadd.f32 0.0, %v822
        %v824 = vpop.f32.mrb[0].mxu0
        %v825 = vadd.f32 0.0, %v824
        %826 = vmatprep.mubr.f32.mxu0 0.0
        %827 = vmatmul.mubr.f32.gmra.mrb[0].mxu0 %v548
        %v828 = vpop.f32.mrb[0].mxu0
        %v829 = vadd.f32 0.0, %v828
        %v830 = vpop.f32.mrb[0].mxu0
        %v831 = vadd.f32 0.0, %v830
        %832 = vmatprep.mubr.f32.mxu0 0.0
        %833 = vmatmul.mubr.f32.gmra.mrb[0].mxu0 %v551
        %v834 = vpop.f32.mrb[0].mxu0
        %v835 = vadd.f32 0.0, %v834
        %v836 = vpop.f32.mrb[0].mxu0
        %v837 = vadd.f32 0.0, %v836
        %838 = vmatprep.mubr.f32.mxu0 0.0
        %839 = vmatmul.mubr.f32.gmra.mrb[0].mxu0 %v554
        %v840 = vpop.f32.mrb[0].mxu0
        %v841 = vadd.f32 0.0, %v840
        %v842 = vpop.f32.mrb[0].mxu0
        %v843 = vadd.f32 0.0, %v842
        %844 = vmatprep.mubr.f32.mxu0 0.0
        %845 = vmatmul.mubr.f32.gmra.mrb[0].mxu0 %v557
        %v846 = vpop.f32.mrb[0].mxu0
        %v847 = vadd.f32 0.0, %v846
        %v848 = vpop.f32.mrb[0].mxu0
        %v849 = vadd.f32 0.0, %v848
        %850 = vmatprep.mubr.f32.mxu0 0.0
        %851 = vmatmul.mubr.f32.gmra.mrb[0].mxu0 %v560
        %v852 = vpop.f32.mrb[0].mxu0
        %v853 = vadd.f32 0.0, %v852
        %v854 = vpop.f32.mrb[0].mxu0
        %v855 = vadd.f32 0.0, %v854
        %856 = vmatprep.mubr.f32.mxu0 0.0
        %857 = vmatmul.mubr.f32.gmra.mrb[0].mxu0 %v563
        %v858 = vpop.f32.mrb[0].mxu0
        %v859 = vadd.f32 0.0, %v858
        %v860 = vpop.f32.mrb[0].mxu0
        %v861 = vadd.f32 0.0, %v860
        %862 = vdwg.mxu0
        %863 = vmatprep.subr.mxu0 %v485
        %864 = vmatpush1.msra.mxu0 %v484
        %865 = vmatprep.subr.mxu0 %v492
        %866 = vmatpush1.msra.mxu0 %v491
        %867 = vmatprep.subr.mxu0 %v499
        %868 = vmatpush1.msra.mxu0 %v498
        %869 = vmatprep.subr.mxu0 %v506
        %870 = vmatpush1.msra.mxu0 %v505
        %871 = vmatprep.subr.mxu0 %v513
        %872 = vmatpush1.msra.mxu0 %v512
        %873 = vmatprep.subr.mxu0 %v520
        %874 = vmatpush1.msra.mxu0 %v519
        %875 = vmatprep.subr.mxu0 0.0
        %876 = vmatpush1.msra.mxu0 0.0
        %877 = vmatprep.subr.mxu0 0.0
        %878 = vmatpush1.msra.mxu0 0.0
        %879 = vmatprep.subr.mxu0 0.0
        %880 = vmatpush1.msra.mxu0 0.0
        %881 = vmatprep.subr.mxu0 0.0
        %882 = vmatpush1.msra.mxu0 0.0
        %883 = vmatprep.subr.mxu0 0.0
        %884 = vmatpush1.msra.mxu0 0.0
        %885 = vmatprep.subr.mxu0 0.0
        %886 = vmatpush1.msra.mxu0 0.0
        %887 = vmatprep.subr.mxu0 0.0
        %888 = vmatpush1.msra.mxu0 0.0
        %889 = vmatprep.subr.mxu0 0.0
        %890 = vmatpush1.msra.mxu0 0.0
        %891 = vmatprep.subr.mxu0 0.0
        %892 = vmatpush1.msra.mxu0 0.0
        %893 = vmatprep.subr.mxu0 0.0
        %894 = vmatpush1.msra.mxu0 0.0
        %895 = vmatprep.subr.mxu0 0.0
        %896 = vmatpush1.msra.mxu0 0.0
        %897 = vmatprep.subr.mxu0 0.0
        %898 = vmatpush1.msra.mxu0 0.0
        %899 = vmatprep.subr.mxu0 0.0
        %900 = vmatpush1.msra.mxu0 0.0
        %901 = vmatprep.subr.mxu0 0.0
        %902 = vmatpush1.msra.mxu0 0.0
        %903 = vmatprep.subr.mxu0 0.0
        %904 = vmatpush1.msra.mxu0 0.0
        %905 = vmatprep.subr.mxu0 0.0
        %906 = vmatpush1.msra.mxu0 0.0
        %907 = vmatprep.subr.mxu0 0.0
        %908 = vmatpush1.msra.mxu0 0.0
        %909 = vmatprep.subr.mxu0 0.0
        %910 = vmatpush1.msra.mxu0 0.0
        %911 = vmatprep.subr.mxu0 0.0
        %912 = vmatpush1.msra.mxu0 0.0
        %913 = vmatprep.subr.mxu0 0.0
        %914 = vmatpush1.msra.mxu0 0.0
        %915 = vmatprep.subr.mxu0 0.0
        %916 = vmatpush1.msra.mxu0 0.0
        %917 = vmatprep.subr.mxu0 0.0
        %918 = vmatpush1.msra.mxu0 0.0
        %919 = vmatprep.subr.mxu0 0.0
        %920 = vmatpush1.msra.mxu0 0.0
        %921 = vmatprep.subr.mxu0 0.0
        %922 = vmatpush1.msra.mxu0 0.0
        %923 = vmatprep.subr.mxu0 0.0
        %924 = vmatpush1.msra.mxu0 0.0
        %925 = vmatprep.subr.mxu0 0.0
        %926 = vmatpush1.msra.mxu0 0.0
        %927 = vmatprep.mubr.f32.mxu0 0.0
        %928 = vmatmul.mubr.f32.gmra.mrb[0].mxu0 %v524
        %v929 = vpop.f32.mrb[0].mxu0
        %v930 = vadd.f32 0.0, %v929
        %v931 = vpop.f32.mrb[0].mxu0
        %v932 = vadd.f32 0.0, %v931
        %933 = vmatprep.mubr.f32.mxu0 0.0
        %934 = vmatmul.mubr.f32.gmra.mrb[0].mxu0 %v527
        %v935 = vpop.f32.mrb[0].mxu0
        %v936 = vadd.f32 0.0, %v935
        %v937 = vpop.f32.mrb[0].mxu0
        %v938 = vadd.f32 0.0, %v937
        %939 = vmatprep.mubr.f32.mxu0 0.0
        %940 = vmatmul.mubr.f32.gmra.mrb[0].mxu0 %v530
        %v941 = vpop.f32.mrb[0].mxu0
        %v942 = vadd.f32 0.0, %v941
        %v943 = vpop.f32.mrb[0].mxu0
        %v944 = vadd.f32 0.0, %v943
        %945 = vmatprep.mubr.f32.mxu0 0.0
        %946 = vmatmul.mubr.f32.gmra.mrb[0].mxu0 %v533
        %v947 = vpop.f32.mrb[0].mxu0
        %v948 = vadd.f32 0.0, %v947
        %v949 = vpop.f32.mrb[0].mxu0
        %v950 = vadd.f32 0.0, %v949
        %951 = vmatprep.mubr.f32.mxu0 0.0
        %952 = vmatmul.mubr.f32.gmra.mrb[0].mxu0 %v536
        %v953 = vpop.f32.mrb[0].mxu0
        %v954 = vadd.f32 0.0, %v953
        %v955 = vpop.f32.mrb[0].mxu0
        %v956 = vadd.f32 0.0, %v955
        %957 = vmatprep.mubr.f32.mxu0 0.0
        %958 = vmatmul.mubr.f32.gmra.mrb[0].mxu0 %v539
        %v959 = vpop.f32.mrb[0].mxu0
        %v960 = vadd.f32 0.0, %v959
        %v961 = vpop.f32.mrb[0].mxu0
        %v962 = vadd.f32 0.0, %v961
        %963 = vmatprep.mubr.f32.mxu0 0.0
        %964 = vmatmul.mubr.f32.gmra.mrb[0].mxu0 %v542
        %v965 = vpop.f32.mrb[0].mxu0
        %v966 = vadd.f32 0.0, %v965
        %v967 = vpop.f32.mrb[0].mxu0
        %v968 = vadd.f32 0.0, %v967
        %969 = vmatprep.mubr.f32.mxu0 0.0
        %970 = vmatmul.mubr.f32.gmra.mrb[0].mxu0 %v545
        %v971 = vpop.f32.mrb[0].mxu0
        %v972 = vadd.f32 0.0, %v971
        %v973 = vpop.f32.mrb[0].mxu0
        %v974 = vadd.f32 0.0, %v973
        %975 = vmatprep.mubr.f32.mxu0 0.0
        %976 = vmatmul.mubr.f32.gmra.mrb[0].mxu0 %v548
        %v977 = vpop.f32.mrb[0].mxu0
        %v978 = vadd.f32 0.0, %v977
        %v979 = vpop.f32.mrb[0].mxu0
        %v980 = vadd.f32 0.0, %v979
        %981 = vmatprep.mubr.f32.mxu0 0.0
        %982 = vmatmul.mubr.f32.gmra.mrb[0].mxu0 %v551
        %v983 = vpop.f32.mrb[0].mxu0
        %v984 = vadd.f32 0.0, %v983
        %v985 = vpop.f32.mrb[0].mxu0
        %v986 = vadd.f32 0.0, %v985
        %987 = vmatprep.mubr.f32.mxu0 0.0
        %988 = vmatmul.mubr.f32.gmra.mrb[0].mxu0 %v554
        %v989 = vpop.f32.mrb[0].mxu0
        %v990 = vadd.f32 0.0, %v989
        %v991 = vpop.f32.mrb[0].mxu0
        %v992 = vadd.f32 0.0, %v991
        %993 = vmatprep.mubr.f32.mxu0 0.0
        %994 = vmatmul.mubr.f32.gmra.mrb[0].mxu0 %v557
        %v995 = vpop.f32.mrb[0].mxu0
        %v996 = vadd.f32 0.0, %v995
        %v997 = vpop.f32.mrb[0].mxu0
        %v998 = vadd.f32 0.0, %v997
        %999 = vmatprep.mubr.f32.mxu0 0.0
        %1000 = vmatmul.mubr.f32.gmra.mrb[0].mxu0 %v560
        %v1001 = vpop.f32.mrb[0].mxu0
        %v1002 = vadd.f32 0.0, %v1001
        %v1003 = vpop.f32.mrb[0].mxu0
        %v1004 = vadd.f32 0.0, %v1003
        %1005 = vmatprep.mubr.f32.mxu0 0.0
        %1006 = vmatmul.mubr.f32.gmra.mrb[0].mxu0 %v563
        %v1007 = vpop.f32.mrb[0].mxu0
        %v1008 = vadd.f32 0.0, %v1007
        %v1009 = vpop.f32.mrb[0].mxu0
        %v1010 = vadd.f32 0.0, %v1009
        %1011 = vdwg.mxu0
        %1012 = vmatprep.subr.mxu0 0.0
        %1013 = vmatpush1.msra.mxu0 %v486
        %1014 = vmatprep.subr.mxu0 0.0
        %1015 = vmatpush1.msra.mxu0 %v493
        %1016 = vmatprep.subr.mxu0 0.0
        %1017 = vmatpush1.msra.mxu0 %v500
        %1018 = vmatprep.subr.mxu0 0.0
        %1019 = vmatpush1.msra.mxu0 %v507
        %1020 = vmatprep.subr.mxu0 0.0
        %1021 = vmatpush1.msra.mxu0 %v514
        %1022 = vmatprep.subr.mxu0 0.0
        %1023 = vmatpush1.msra.mxu0 %v521
        %1024 = vmatprep.subr.mxu0 0.0
        %1025 = vmatpush1.msra.mxu0 0.0
        %1026 = vmatprep.subr.mxu0 0.0
        %1027 = vmatpush1.msra.mxu0 0.0
        %1028 = vmatprep.subr.mxu0 0.0
        %1029 = vmatpush1.msra.mxu0 0.0
        %1030 = vmatprep.subr.mxu0 0.0
        %1031 = vmatpush1.msra.mxu0 0.0
        %1032 = vmatprep.subr.mxu0 0.0
        %1033 = vmatpush1.msra.mxu0 0.0
        %1034 = vmatprep.subr.mxu0 0.0
        %1035 = vmatpush1.msra.mxu0 0.0
        %1036 = vmatprep.subr.mxu0 0.0
        %1037 = vmatpush1.msra.mxu0 0.0
        %1038 = vmatprep.subr.mxu0 0.0
        %1039 = vmatpush1.msra.mxu0 0.0
        %1040 = vmatprep.subr.mxu0 0.0
        %1041 = vmatpush1.msra.mxu0 0.0
        %1042 = vmatprep.subr.mxu0 0.0
        %1043 = vmatpush1.msra.mxu0 0.0
        %1044 = vmatprep.subr.mxu0 0.0
        %1045 = vmatpush1.msra.mxu0 0.0
        %1046 = vmatprep.subr.mxu0 0.0
        %1047 = vmatpush1.msra.mxu0 0.0
        %1048 = vmatprep.subr.mxu0 0.0
        %1049 = vmatpush1.msra.mxu0 0.0
        %1050 = vmatprep.subr.mxu0 0.0
        %1051 = vmatpush1.msra.mxu0 0.0
        %1052 = vmatprep.subr.mxu0 0.0
        %1053 = vmatpush1.msra.mxu0 0.0
        %1054 = vmatprep.subr.mxu0 0.0
        %1055 = vmatpush1.msra.mxu0 0.0
        %1056 = vmatprep.subr.mxu0 0.0
        %1057 = vmatpush1.msra.mxu0 0.0
        %1058 = vmatprep.subr.mxu0 0.0
        %1059 = vmatpush1.msra.mxu0 0.0
        %1060 = vmatprep.subr.mxu0 0.0
        %1061 = vmatpush1.msra.mxu0 0.0
        %1062 = vmatprep.subr.mxu0 0.0
        %1063 = vmatpush1.msra.mxu0 0.0
        %1064 = vmatprep.subr.mxu0 0.0
        %1065 = vmatpush1.msra.mxu0 0.0
        %1066 = vmatprep.subr.mxu0 0.0
        %1067 = vmatpush1.msra.mxu0 0.0
        %1068 = vmatprep.subr.mxu0 0.0
        %1069 = vmatpush1.msra.mxu0 0.0
        %1070 = vmatprep.subr.mxu0 0.0
        %1071 = vmatpush1.msra.mxu0 0.0
        %1072 = vmatprep.subr.mxu0 0.0
        %1073 = vmatpush1.msra.mxu0 0.0
        %1074 = vmatprep.subr.mxu0 0.0
        %1075 = vmatpush1.msra.mxu0 0.0
        %1076 = vmatprep.mubr.f32.mxu0 0.0
        %1077 = vmatmul.mubr.f32.gmra.mrb[0].mxu0 %v524
        %v1078 = vpop.f32.mrb[0].mxu0
        %v1079 = vadd.f32 0.0, %v1078
        %v1080 = vpop.f32.mrb[0].mxu0
        %1081 = vmatprep.mubr.f32.mxu0 0.0
        %1082 = vmatmul.mubr.f32.gmra.mrb[0].mxu0 %v527
        %v1083 = vpop.f32.mrb[0].mxu0
        %v1084 = vadd.f32 0.0, %v1083
        %v1085 = vpop.f32.mrb[0].mxu0
        %1086 = vmatprep.mubr.f32.mxu0 0.0
        %1087 = vmatmul.mubr.f32.gmra.mrb[0].mxu0 %v530
        %v1088 = vpop.f32.mrb[0].mxu0
        %v1089 = vadd.f32 0.0, %v1088
        %v1090 = vpop.f32.mrb[0].mxu0
        %1091 = vmatprep.mubr.f32.mxu0 0.0
        %1092 = vmatmul.mubr.f32.gmra.mrb[0].mxu0 %v533
        %v1093 = vpop.f32.mrb[0].mxu0
        %v1094 = vadd.f32 0.0, %v1093
        %v1095 = vpop.f32.mrb[0].mxu0
        %1096 = vmatprep.mubr.f32.mxu0 0.0
        %1097 = vmatmul.mubr.f32.gmra.mrb[0].mxu0 %v536
        %v1098 = vpop.f32.mrb[0].mxu0
        %v1099 = vadd.f32 0.0, %v1098
        %v1100 = vpop.f32.mrb[0].mxu0
        %1101 = vmatprep.mubr.f32.mxu0 0.0
        %1102 = vmatmul.mubr.f32.gmra.mrb[0].mxu0 %v539
        %v1103 = vpop.f32.mrb[0].mxu0
        %v1104 = vadd.f32 0.0, %v1103
        %v1105 = vpop.f32.mrb[0].mxu0
        %1106 = vmatprep.mubr.f32.mxu0 0.0
        %1107 = vmatmul.mubr.f32.gmra.mrb[0].mxu0 %v542
        %v1108 = vpop.f32.mrb[0].mxu0
        %v1109 = vadd.f32 0.0, %v1108
        %v1110 = vpop.f32.mrb[0].mxu0
        %1111 = vmatprep.mubr.f32.mxu0 0.0
        %1112 = vmatmul.mubr.f32.gmra.mrb[0].mxu0 %v545
        %v1113 = vpop.f32.mrb[0].mxu0
        %v1114 = vadd.f32 0.0, %v1113
        %v1115 = vpop.f32.mrb[0].mxu0
        %1116 = vmatprep.mubr.f32.mxu0 0.0
        %1117 = vmatmul.mubr.f32.gmra.mrb[0].mxu0 %v548
        %v1118 = vpop.f32.mrb[0].mxu0
        %v1119 = vadd.f32 0.0, %v1118
        %v1120 = vpop.f32.mrb[0].mxu0
        %1121 = vmatprep.mubr.f32.mxu0 0.0
        %1122 = vmatmul.mubr.f32.gmra.mrb[0].mxu0 %v551
        %v1123 = vpop.f32.mrb[0].mxu0
        %v1124 = vadd.f32 0.0, %v1123
        %v1125 = vpop.f32.mrb[0].mxu0
        %1126 = vmatprep.mubr.f32.mxu0 0.0
        %1127 = vmatmul.mubr.f32.gmra.mrb[0].mxu0 %v554
        %v1128 = vpop.f32.mrb[0].mxu0
        %v1129 = vadd.f32 0.0, %v1128
        %v1130 = vpop.f32.mrb[0].mxu0
        %1131 = vmatprep.mubr.f32.mxu0 0.0
        %1132 = vmatmul.mubr.f32.gmra.mrb[0].mxu0 %v557
        %v1133 = vpop.f32.mrb[0].mxu0
        %v1134 = vadd.f32 0.0, %v1133
        %v1135 = vpop.f32.mrb[0].mxu0
        %1136 = vmatprep.mubr.f32.mxu0 0.0
        %1137 = vmatmul.mubr.f32.gmra.mrb[0].mxu0 %v560
        %v1138 = vpop.f32.mrb[0].mxu0
        %v1139 = vadd.f32 0.0, %v1138
        %v1140 = vpop.f32.mrb[0].mxu0
        %1141 = vmatprep.mubr.f32.mxu0 0.0
        %1142 = vmatmul.mubr.f32.gmra.mrb[0].mxu0 %v563
        %v1143 = vpop.f32.mrb[0].mxu0
        %v1144 = vadd.f32 0.0, %v1143
        %v1145 = vpop.f32.mrb[0].mxu0
        %1146 = vdwg.mxu0
        %v1148 = vsel %vm522, %v421, 0
        %1150 = vmatprep.subr.mxu0 %v438
        %1151 = vmatpush1.msra.mxu0 %v437
        %1152 = vmatprep.subr.mxu0 %v445
        %1153 = vmatpush1.msra.mxu0 %v444
        %1154 = vmatprep.subr.mxu0 %v452
        %1155 = vmatpush1.msra.mxu0 %v451
        %1156 = vmatprep.subr.mxu0 %v459
        %1157 = vmatpush1.msra.mxu0 %v458
        %1158 = vmatprep.subr.mxu0 %v466
        %1159 = vmatpush1.msra.mxu0 %v465
        %1160 = vmatprep.subr.mxu0 %v473
        %1161 = vmatpush1.msra.mxu0 %v472
        %1162 = vmatprep.subr.mxu0 0.0
        %1163 = vmatpush1.msra.mxu0 0.0
        %1164 = vmatprep.subr.mxu0 0.0
        %1165 = vmatpush1.msra.mxu0 0.0
        %1166 = vmatprep.subr.mxu0 0.0
        %1167 = vmatpush1.msra.mxu0 0.0
        %1168 = vmatprep.subr.mxu0 0.0
        %1169 = vmatpush1.msra.mxu0 0.0
        %1170 = vmatprep.subr.mxu0 0.0
        %1171 = vmatpush1.msra.mxu0 0.0
        %1172 = vmatprep.subr.mxu0 0.0
        %1173 = vmatpush1.msra.mxu0 0.0
        %1174 = vmatprep.subr.mxu0 0.0
        %1175 = vmatpush1.msra.mxu0 0.0
        %1176 = vmatprep.subr.mxu0 0.0
        %1177 = vmatpush1.msra.mxu0 0.0
        %1178 = vmatprep.subr.mxu0 0.0
        %1179 = vmatpush1.msra.mxu0 0.0
        %1180 = vmatprep.subr.mxu0 0.0
        %1181 = vmatpush1.msra.mxu0 0.0
        %1182 = vmatprep.subr.mxu0 0.0
        %1183 = vmatpush1.msra.mxu0 0.0
        %1184 = vmatprep.subr.mxu0 0.0
        %1185 = vmatpush1.msra.mxu0 0.0
        %1186 = vmatprep.subr.mxu0 0.0
        %1187 = vmatpush1.msra.mxu0 0.0
        %1188 = vmatprep.subr.mxu0 0.0
        %1189 = vmatpush1.msra.mxu0 0.0
        %1190 = vmatprep.subr.mxu0 0.0
        %1191 = vmatpush1.msra.mxu0 0.0
        %1192 = vmatprep.subr.mxu0 0.0
        %1193 = vmatpush1.msra.mxu0 0.0
        %1194 = vmatprep.subr.mxu0 0.0
        %1195 = vmatpush1.msra.mxu0 0.0
        %1196 = vmatprep.subr.mxu0 0.0
        %1197 = vmatpush1.msra.mxu0 0.0
        %1198 = vmatprep.subr.mxu0 0.0
        %1199 = vmatpush1.msra.mxu0 0.0
        %1200 = vmatprep.subr.mxu0 0.0
        %1201 = vmatpush1.msra.mxu0 0.0
        %1202 = vmatprep.subr.mxu0 0.0
        %1203 = vmatpush1.msra.mxu0 0.0
        %1204 = vmatprep.subr.mxu0 0.0
        %1205 = vmatpush1.msra.mxu0 0.0
        %1206 = vmatprep.subr.mxu0 0.0
        %1207 = vmatpush1.msra.mxu0 0.0
        %1208 = vmatprep.subr.mxu0 0.0
        %1209 = vmatpush1.msra.mxu0 0.0
        %1210 = vmatprep.subr.mxu0 0.0
        %1211 = vmatpush1.msra.mxu0 0.0
        %1212 = vmatprep.subr.mxu0 0.0
        %1213 = vmatpush1.msra.mxu0 0.0
        %1214 = vmatprep.mubr.f32.mxu0 0.0
        %1215 = vmatmul.mubr.f32.gmra.mrb[0].mxu0 %v1148
        %v1216 = vpop.f32.mrb[0].mxu0
        %v1217 = vadd.f32 %v632, %v1216
        %v1218 = vpop.f32.mrb[0].mxu0
        %v1219 = vadd.f32 %v634, %v1218
        %1220 = vmatprep.mubr.f32.mxu0 0.0
        %1221 = vmatmul.mubr.f32.gmra.mrb[0].mxu0 %v524
        %v1222 = vpop.f32.mrb[0].mxu0
        %v1223 = vadd.f32 %v638, %v1222
        %v1224 = vpop.f32.mrb[0].mxu0
        %v1225 = vadd.f32 %v640, %v1224
        %1226 = vmatprep.mubr.f32.mxu0 0.0
        %1227 = vmatmul.mubr.f32.gmra.mrb[0].mxu0 %v527
        %v1228 = vpop.f32.mrb[0].mxu0
        %v1229 = vadd.f32 %v644, %v1228
        %v1230 = vpop.f32.mrb[0].mxu0
        %v1231 = vadd.f32 %v646, %v1230
        %1232 = vmatprep.mubr.f32.mxu0 0.0
        %1233 = vmatmul.mubr.f32.gmra.mrb[0].mxu0 %v530
        %v1234 = vpop.f32.mrb[0].mxu0
        %v1235 = vadd.f32 %v650, %v1234
        %v1236 = vpop.f32.mrb[0].mxu0
        %v1237 = vadd.f32 %v652, %v1236
        %1238 = vmatprep.mubr.f32.mxu0 0.0
        %1239 = vmatmul.mubr.f32.gmra.mrb[0].mxu0 %v533
        %v1240 = vpop.f32.mrb[0].mxu0
        %v1241 = vadd.f32 %v656, %v1240
        %v1242 = vpop.f32.mrb[0].mxu0
        %v1243 = vadd.f32 %v658, %v1242
        %1244 = vmatprep.mubr.f32.mxu0 0.0
        %1245 = vmatmul.mubr.f32.gmra.mrb[0].mxu0 %v536
        %v1246 = vpop.f32.mrb[0].mxu0
        %v1247 = vadd.f32 %v662, %v1246
        %v1248 = vpop.f32.mrb[0].mxu0
        %v1249 = vadd.f32 %v664, %v1248
        %1250 = vmatprep.mubr.f32.mxu0 0.0
        %1251 = vmatmul.mubr.f32.gmra.mrb[0].mxu0 %v539
        %v1252 = vpop.f32.mrb[0].mxu0
        %v1253 = vadd.f32 %v668, %v1252
        %v1254 = vpop.f32.mrb[0].mxu0
        %v1255 = vadd.f32 %v670, %v1254
        %1256 = vmatprep.mubr.f32.mxu0 0.0
        %1257 = vmatmul.mubr.f32.gmra.mrb[0].mxu0 %v542
        %v1258 = vpop.f32.mrb[0].mxu0
        %v1259 = vadd.f32 %v674, %v1258
        %v1260 = vpop.f32.mrb[0].mxu0
        %v1261 = vadd.f32 %v676, %v1260
        %1262 = vmatprep.mubr.f32.mxu0 0.0
        %1263 = vmatmul.mubr.f32.gmra.mrb[0].mxu0 %v545
        %v1264 = vpop.f32.mrb[0].mxu0
        %v1265 = vadd.f32 %v680, %v1264
        %v1266 = vpop.f32.mrb[0].mxu0
        %v1267 = vadd.f32 %v682, %v1266
        %1268 = vmatprep.mubr.f32.mxu0 0.0
        %1269 = vmatmul.mubr.f32.gmra.mrb[0].mxu0 %v548
        %v1270 = vpop.f32.mrb[0].mxu0
        %v1271 = vadd.f32 %v686, %v1270
        %v1272 = vpop.f32.mrb[0].mxu0
        %v1273 = vadd.f32 %v688, %v1272
        %1274 = vmatprep.mubr.f32.mxu0 0.0
        %1275 = vmatmul.mubr.f32.gmra.mrb[0].mxu0 %v551
        %v1276 = vpop.f32.mrb[0].mxu0
        %v1277 = vadd.f32 %v692, %v1276
        %v1278 = vpop.f32.mrb[0].mxu0
        %v1279 = vadd.f32 %v694, %v1278
        %1280 = vmatprep.mubr.f32.mxu0 0.0
        %1281 = vmatmul.mubr.f32.gmra.mrb[0].mxu0 %v554
        %v1282 = vpop.f32.mrb[0].mxu0
        %v1283 = vadd.f32 %v698, %v1282
        %v1284 = vpop.f32.mrb[0].mxu0
        %v1285 = vadd.f32 %v700, %v1284
        %1286 = vmatprep.mubr.f32.mxu0 0.0
        %1287 = vmatmul.mubr.f32.gmra.mrb[0].mxu0 %v557
        %v1288 = vpop.f32.mrb[0].mxu0
        %v1289 = vadd.f32 %v704, %v1288
        %v1290 = vpop.f32.mrb[0].mxu0
        %v1291 = vadd.f32 %v706, %v1290
        %1292 = vmatprep.mubr.f32.mxu0 0.0
        %1293 = vmatmul.mubr.f32.gmra.mrb[0].mxu0 %v560
        %v1294 = vpop.f32.mrb[0].mxu0
        %v1295 = vadd.f32 %v710, %v1294
        %v1296 = vpop.f32.mrb[0].mxu0
        %v1297 = vadd.f32 %v712, %v1296
        %1298 = vdwg.mxu0
        %1299 = vmatprep.subr.mxu0 %v440
        %1300 = vmatpush1.msra.mxu0 %v439
        %1301 = vmatprep.subr.mxu0 %v447
        %1302 = vmatpush1.msra.mxu0 %v446
        %1303 = vmatprep.subr.mxu0 %v454
        %1304 = vmatpush1.msra.mxu0 %v453
        %1305 = vmatprep.subr.mxu0 %v461
        %1306 = vmatpush1.msra.mxu0 %v460
        %1307 = vmatprep.subr.mxu0 %v468
        %1308 = vmatpush1.msra.mxu0 %v467
        %1309 = vmatprep.subr.mxu0 %v475
        %1310 = vmatpush1.msra.mxu0 %v474
        %1311 = vmatprep.subr.mxu0 0.0
        %1312 = vmatpush1.msra.mxu0 0.0
        %1313 = vmatprep.subr.mxu0 0.0
        %1314 = vmatpush1.msra.mxu0 0.0
        %1315 = vmatprep.subr.mxu0 0.0
        %1316 = vmatpush1.msra.mxu0 0.0
        %1317 = vmatprep.subr.mxu0 0.0
        %1318 = vmatpush1.msra.mxu0 0.0
        %1319 = vmatprep.subr.mxu0 0.0
        %1320 = vmatpush1.msra.mxu0 0.0
        %1321 = vmatprep.subr.mxu0 0.0
        %1322 = vmatpush1.msra.mxu0 0.0
        %1323 = vmatprep.subr.mxu0 0.0
        %1324 = vmatpush1.msra.mxu0 0.0
        %1325 = vmatprep.subr.mxu0 0.0
        %1326 = vmatpush1.msra.mxu0 0.0
        %1327 = vmatprep.subr.mxu0 0.0
        %1328 = vmatpush1.msra.mxu0 0.0
        %1329 = vmatprep.subr.mxu0 0.0
        %1330 = vmatpush1.msra.mxu0 0.0
        %1331 = vmatprep.subr.mxu0 0.0
        %1332 = vmatpush1.msra.mxu0 0.0
        %1333 = vmatprep.subr.mxu0 0.0
        %1334 = vmatpush1.msra.mxu0 0.0
        %1335 = vmatprep.subr.mxu0 0.0
        %1336 = vmatpush1.msra.mxu0 0.0
        %1337 = vmatprep.subr.mxu0 0.0
        %1338 = vmatpush1.msra.mxu0 0.0
        %1339 = vmatprep.subr.mxu0 0.0
        %1340 = vmatpush1.msra.mxu0 0.0
        %1341 = vmatprep.subr.mxu0 0.0
        %1342 = vmatpush1.msra.mxu0 0.0
        %1343 = vmatprep.subr.mxu0 0.0
        %1344 = vmatpush1.msra.mxu0 0.0
        %1345 = vmatprep.subr.mxu0 0.0
        %1346 = vmatpush1.msra.mxu0 0.0
        %1347 = vmatprep.subr.mxu0 0.0
        %1348 = vmatpush1.msra.mxu0 0.0
        %1349 = vmatprep.subr.mxu0 0.0
        %1350 = vmatpush1.msra.mxu0 0.0
        %1351 = vmatprep.subr.mxu0 0.0
        %1352 = vmatpush1.msra.mxu0 0.0
        %1353 = vmatprep.subr.mxu0 0.0
        %1354 = vmatpush1.msra.mxu0 0.0
        %1355 = vmatprep.subr.mxu0 0.0
        %1356 = vmatpush1.msra.mxu0 0.0
        %1357 = vmatprep.subr.mxu0 0.0
        %1358 = vmatpush1.msra.mxu0 0.0
        %1359 = vmatprep.subr.mxu0 0.0
        %1360 = vmatpush1.msra.mxu0 0.0
        %1361 = vmatprep.subr.mxu0 0.0
        %1362 = vmatpush1.msra.mxu0 0.0
        %1363 = vmatprep.mubr.f32.mxu0 0.0
        %1364 = vmatmul.mubr.f32.gmra.mrb[0].mxu0 %v1148
        %v1365 = vpop.f32.mrb[0].mxu0
        %v1366 = vadd.f32 %v781, %v1365
        %v1367 = vpop.f32.mrb[0].mxu0
        %v1368 = vadd.f32 %v783, %v1367
        %1369 = vmatprep.mubr.f32.mxu0 0.0
        %1370 = vmatmul.mubr.f32.gmra.mrb[0].mxu0 %v524
        %v1371 = vpop.f32.mrb[0].mxu0
        %v1372 = vadd.f32 %v787, %v1371
        %v1373 = vpop.f32.mrb[0].mxu0
        %v1374 = vadd.f32 %v789, %v1373
        %1375 = vmatprep.mubr.f32.mxu0 0.0
        %1376 = vmatmul.mubr.f32.gmra.mrb[0].mxu0 %v527
        %v1377 = vpop.f32.mrb[0].mxu0
        %v1378 = vadd.f32 %v793, %v1377
        %v1379 = vpop.f32.mrb[0].mxu0
        %v1380 = vadd.f32 %v795, %v1379
        %1381 = vmatprep.mubr.f32.mxu0 0.0
        %1382 = vmatmul.mubr.f32.gmra.mrb[0].mxu0 %v530
        %v1383 = vpop.f32.mrb[0].mxu0
        %v1384 = vadd.f32 %v799, %v1383
        %v1385 = vpop.f32.mrb[0].mxu0
        %v1386 = vadd.f32 %v801, %v1385
        %1387 = vmatprep.mubr.f32.mxu0 0.0
        %1388 = vmatmul.mubr.f32.gmra.mrb[0].mxu0 %v533
        %v1389 = vpop.f32.mrb[0].mxu0
        %v1390 = vadd.f32 %v805, %v1389
        %v1391 = vpop.f32.mrb[0].mxu0
        %v1392 = vadd.f32 %v807, %v1391
        %1393 = vmatprep.mubr.f32.mxu0 0.0
        %1394 = vmatmul.mubr.f32.gmra.mrb[0].mxu0 %v536
        %v1395 = vpop.f32.mrb[0].mxu0
        %v1396 = vadd.f32 %v811, %v1395
        %v1397 = vpop.f32.mrb[0].mxu0
        %v1398 = vadd.f32 %v813, %v1397
        %1399 = vmatprep.mubr.f32.mxu0 0.0
        %1400 = vmatmul.mubr.f32.gmra.mrb[0].mxu0 %v539
        %v1401 = vpop.f32.mrb[0].mxu0
        %v1402 = vadd.f32 %v817, %v1401
        %v1403 = vpop.f32.mrb[0].mxu0
        %v1404 = vadd.f32 %v819, %v1403
        %1405 = vmatprep.mubr.f32.mxu0 0.0
        %1406 = vmatmul.mubr.f32.gmra.mrb[0].mxu0 %v542
        %v1407 = vpop.f32.mrb[0].mxu0
        %v1408 = vadd.f32 %v823, %v1407
        %v1409 = vpop.f32.mrb[0].mxu0
        %v1410 = vadd.f32 %v825, %v1409
        %1411 = vmatprep.mubr.f32.mxu0 0.0
        %1412 = vmatmul.mubr.f32.gmra.mrb[0].mxu0 %v545
        %v1413 = vpop.f32.mrb[0].mxu0
        %v1414 = vadd.f32 %v829, %v1413
        %v1415 = vpop.f32.mrb[0].mxu0
        %v1416 = vadd.f32 %v831, %v1415
        %1417 = vmatprep.mubr.f32.mxu0 0.0
        %1418 = vmatmul.mubr.f32.gmra.mrb[0].mxu0 %v548
        %v1419 = vpop.f32.mrb[0].mxu0
        %v1420 = vadd.f32 %v835, %v1419
        %v1421 = vpop.f32.mrb[0].mxu0
        %v1422 = vadd.f32 %v837, %v1421
        %1423 = vmatprep.mubr.f32.mxu0 0.0
        %1424 = vmatmul.mubr.f32.gmra.mrb[0].mxu0 %v551
        %v1425 = vpop.f32.mrb[0].mxu0
        %v1426 = vadd.f32 %v841, %v1425
        %v1427 = vpop.f32.mrb[0].mxu0
        %v1428 = vadd.f32 %v843, %v1427
        %1429 = vmatprep.mubr.f32.mxu0 0.0
        %1430 = vmatmul.mubr.f32.gmra.mrb[0].mxu0 %v554
        %v1431 = vpop.f32.mrb[0].mxu0
        %v1432 = vadd.f32 %v847, %v1431
        %v1433 = vpop.f32.mrb[0].mxu0
        %v1434 = vadd.f32 %v849, %v1433
        %1435 = vmatprep.mubr.f32.mxu0 0.0
        %1436 = vmatmul.mubr.f32.gmra.mrb[0].mxu0 %v557
        %v1437 = vpop.f32.mrb[0].mxu0
        %v1438 = vadd.f32 %v853, %v1437
        %v1439 = vpop.f32.mrb[0].mxu0
        %v1440 = vadd.f32 %v855, %v1439
        %1441 = vmatprep.mubr.f32.mxu0 0.0
        %1442 = vmatmul.mubr.f32.gmra.mrb[0].mxu0 %v560
        %v1443 = vpop.f32.mrb[0].mxu0
        %v1444 = vadd.f32 %v859, %v1443
        %v1445 = vpop.f32.mrb[0].mxu0
        %v1446 = vadd.f32 %v861, %v1445
        %1447 = vdwg.mxu0
        %1448 = vmatprep.subr.mxu0 %v442
        %1449 = vmatpush1.msra.mxu0 %v441
        %1450 = vmatprep.subr.mxu0 %v449
        %1451 = vmatpush1.msra.mxu0 %v448
        %1452 = vmatprep.subr.mxu0 %v456
        %1453 = vmatpush1.msra.mxu0 %v455
        %1454 = vmatprep.subr.mxu0 %v463
        %1455 = vmatpush1.msra.mxu0 %v462
        %1456 = vmatprep.subr.mxu0 %v470
        %1457 = vmatpush1.msra.mxu0 %v469
        %1458 = vmatprep.subr.mxu0 %v477
        %1459 = vmatpush1.msra.mxu0 %v476
        %1460 = vmatprep.subr.mxu0 0.0
        %1461 = vmatpush1.msra.mxu0 0.0
        %1462 = vmatprep.subr.mxu0 0.0
        %1463 = vmatpush1.msra.mxu0 0.0
        %1464 = vmatprep.subr.mxu0 0.0
        %1465 = vmatpush1.msra.mxu0 0.0
        %1466 = vmatprep.subr.mxu0 0.0
        %1467 = vmatpush1.msra.mxu0 0.0
        %1468 = vmatprep.subr.mxu0 0.0
        %1469 = vmatpush1.msra.mxu0 0.0
        %1470 = vmatprep.subr.mxu0 0.0
        %1471 = vmatpush1.msra.mxu0 0.0
        %1472 = vmatprep.subr.mxu0 0.0
        %1473 = vmatpush1.msra.mxu0 0.0
        %1474 = vmatprep.subr.mxu0 0.0
        %1475 = vmatpush1.msra.mxu0 0.0
        %1476 = vmatprep.subr.mxu0 0.0
        %1477 = vmatpush1.msra.mxu0 0.0
        %1478 = vmatprep.subr.mxu0 0.0
        %1479 = vmatpush1.msra.mxu0 0.0
        %1480 = vmatprep.subr.mxu0 0.0
        %1481 = vmatpush1.msra.mxu0 0.0
        %1482 = vmatprep.subr.mxu0 0.0
        %1483 = vmatpush1.msra.mxu0 0.0
        %1484 = vmatprep.subr.mxu0 0.0
        %1485 = vmatpush1.msra.mxu0 0.0
        %1486 = vmatprep.subr.mxu0 0.0
        %1487 = vmatpush1.msra.mxu0 0.0
        %1488 = vmatprep.subr.mxu0 0.0
        %1489 = vmatpush1.msra.mxu0 0.0
        %1490 = vmatprep.subr.mxu0 0.0
        %1491 = vmatpush1.msra.mxu0 0.0
        %1492 = vmatprep.subr.mxu0 0.0
        %1493 = vmatpush1.msra.mxu0 0.0
        %1494 = vmatprep.subr.mxu0 0.0
        %1495 = vmatpush1.msra.mxu0 0.0
        %1496 = vmatprep.subr.mxu0 0.0
        %1497 = vmatpush1.msra.mxu0 0.0
        %1498 = vmatprep.subr.mxu0 0.0
        %1499 = vmatpush1.msra.mxu0 0.0
        %1500 = vmatprep.subr.mxu0 0.0
        %1501 = vmatpush1.msra.mxu0 0.0
        %1502 = vmatprep.subr.mxu0 0.0
        %1503 = vmatpush1.msra.mxu0 0.0
        %1504 = vmatprep.subr.mxu0 0.0
        %1505 = vmatpush1.msra.mxu0 0.0
        %1506 = vmatprep.subr.mxu0 0.0
        %1507 = vmatpush1.msra.mxu0 0.0
        %1508 = vmatprep.subr.mxu0 0.0
        %1509 = vmatpush1.msra.mxu0 0.0
        %1510 = vmatprep.subr.mxu0 0.0
        %1511 = vmatpush1.msra.mxu0 0.0
        %1512 = vmatprep.mubr.f32.mxu0 0.0
        %1513 = vmatmul.mubr.f32.gmra.mrb[0].mxu0 %v1148
        %v1514 = vpop.f32.mrb[0].mxu0
        %v1515 = vadd.f32 %v930, %v1514
        %v1516 = vpop.f32.mrb[0].mxu0
        %v1517 = vadd.f32 %v932, %v1516
        %1518 = vmatprep.mubr.f32.mxu0 0.0
        %1519 = vmatmul.mubr.f32.gmra.mrb[0].mxu0 %v524
        %v1520 = vpop.f32.mrb[0].mxu0
        %v1521 = vadd.f32 %v936, %v1520
        %v1522 = vpop.f32.mrb[0].mxu0
        %v1523 = vadd.f32 %v938, %v1522
        %1524 = vmatprep.mubr.f32.mxu0 0.0
        %1525 = vmatmul.mubr.f32.gmra.mrb[0].mxu0 %v527
        %v1526 = vpop.f32.mrb[0].mxu0
        %v1527 = vadd.f32 %v942, %v1526
        %v1528 = vpop.f32.mrb[0].mxu0
        %v1529 = vadd.f32 %v944, %v1528
        %1530 = vmatprep.mubr.f32.mxu0 0.0
        %1531 = vmatmul.mubr.f32.gmra.mrb[0].mxu0 %v530
        %v1532 = vpop.f32.mrb[0].mxu0
        %v1533 = vadd.f32 %v948, %v1532
        %v1534 = vpop.f32.mrb[0].mxu0
        %v1535 = vadd.f32 %v950, %v1534
        %1536 = vmatprep.mubr.f32.mxu0 0.0
        %1537 = vmatmul.mubr.f32.gmra.mrb[0].mxu0 %v533
        %v1538 = vpop.f32.mrb[0].mxu0
        %v1539 = vadd.f32 %v954, %v1538
        %v1540 = vpop.f32.mrb[0].mxu0
        %v1541 = vadd.f32 %v956, %v1540
        %1542 = vmatprep.mubr.f32.mxu0 0.0
        %1543 = vmatmul.mubr.f32.gmra.mrb[0].mxu0 %v536
        %v1544 = vpop.f32.mrb[0].mxu0
        %v1545 = vadd.f32 %v960, %v1544
        %v1546 = vpop.f32.mrb[0].mxu0
        %v1547 = vadd.f32 %v962, %v1546
        %1548 = vmatprep.mubr.f32.mxu0 0.0
        %1549 = vmatmul.mubr.f32.gmra.mrb[0].mxu0 %v539
        %v1550 = vpop.f32.mrb[0].mxu0
        %v1551 = vadd.f32 %v966, %v1550
        %v1552 = vpop.f32.mrb[0].mxu0
        %v1553 = vadd.f32 %v968, %v1552
        %1554 = vmatprep.mubr.f32.mxu0 0.0
        %1555 = vmatmul.mubr.f32.gmra.mrb[0].mxu0 %v542
        %v1556 = vpop.f32.mrb[0].mxu0
        %v1557 = vadd.f32 %v972, %v1556
        %v1558 = vpop.f32.mrb[0].mxu0
        %v1559 = vadd.f32 %v974, %v1558
        %1560 = vmatprep.mubr.f32.mxu0 0.0
        %1561 = vmatmul.mubr.f32.gmra.mrb[0].mxu0 %v545
        %v1562 = vpop.f32.mrb[0].mxu0
        %v1563 = vadd.f32 %v978, %v1562
        %v1564 = vpop.f32.mrb[0].mxu0
        %v1565 = vadd.f32 %v980, %v1564
        %1566 = vmatprep.mubr.f32.mxu0 0.0
        %1567 = vmatmul.mubr.f32.gmra.mrb[0].mxu0 %v548
        %v1568 = vpop.f32.mrb[0].mxu0
        %v1569 = vadd.f32 %v984, %v1568
        %v1570 = vpop.f32.mrb[0].mxu0
        %v1571 = vadd.f32 %v986, %v1570
        %1572 = vmatprep.mubr.f32.mxu0 0.0
        %1573 = vmatmul.mubr.f32.gmra.mrb[0].mxu0 %v551
        %v1574 = vpop.f32.mrb[0].mxu0
        %v1575 = vadd.f32 %v990, %v1574
        %v1576 = vpop.f32.mrb[0].mxu0
        %v1577 = vadd.f32 %v992, %v1576
        %1578 = vmatprep.mubr.f32.mxu0 0.0
        %1579 = vmatmul.mubr.f32.gmra.mrb[0].mxu0 %v554
        %v1580 = vpop.f32.mrb[0].mxu0
        %v1581 = vadd.f32 %v996, %v1580
        %v1582 = vpop.f32.mrb[0].mxu0
        %v1583 = vadd.f32 %v998, %v1582
        %1584 = vmatprep.mubr.f32.mxu0 0.0
        %1585 = vmatmul.mubr.f32.gmra.mrb[0].mxu0 %v557
        %v1586 = vpop.f32.mrb[0].mxu0
        %v1587 = vadd.f32 %v1002, %v1586
        %v1588 = vpop.f32.mrb[0].mxu0
        %v1589 = vadd.f32 %v1004, %v1588
        %1590 = vmatprep.mubr.f32.mxu0 0.0
        %1591 = vmatmul.mubr.f32.gmra.mrb[0].mxu0 %v560
        %v1592 = vpop.f32.mrb[0].mxu0
        %v1593 = vadd.f32 %v1008, %v1592
        %v1594 = vpop.f32.mrb[0].mxu0
        %v1595 = vadd.f32 %v1010, %v1594
        %1596 = vdwg.mxu0
        %1597 = vmatprep.subr.mxu0 0.0
        %1598 = vmatpush1.msra.mxu0 %v443
        %1599 = vmatprep.subr.mxu0 0.0
        %1600 = vmatpush1.msra.mxu0 %v450
        %1601 = vmatprep.subr.mxu0 0.0
        %1602 = vmatpush1.msra.mxu0 %v457
        %1603 = vmatprep.subr.mxu0 0.0
        %1604 = vmatpush1.msra.mxu0 %v464
        %1605 = vmatprep.subr.mxu0 0.0
        %1606 = vmatpush1.msra.mxu0 %v471
        %1607 = vmatprep.subr.mxu0 0.0
        %1608 = vmatpush1.msra.mxu0 %v478
        %1609 = vmatprep.subr.mxu0 0.0
        %1610 = vmatpush1.msra.mxu0 0.0
        %1611 = vmatprep.subr.mxu0 0.0
        %1612 = vmatpush1.msra.mxu0 0.0
        %1613 = vmatprep.subr.mxu0 0.0
        %1614 = vmatpush1.msra.mxu0 0.0
        %1615 = vmatprep.subr.mxu0 0.0
        %1616 = vmatpush1.msra.mxu0 0.0
        %1617 = vmatprep.subr.mxu0 0.0
        %1618 = vmatpush1.msra.mxu0 0.0
        %1619 = vmatprep.subr.mxu0 0.0
        %1620 = vmatpush1.msra.mxu0 0.0
        %1621 = vmatprep.subr.mxu0 0.0
        %1622 = vmatpush1.msra.mxu0 0.0
        %1623 = vmatprep.subr.mxu0 0.0
        %1624 = vmatpush1.msra.mxu0 0.0
        %1625 = vmatprep.subr.mxu0 0.0
        %1626 = vmatpush1.msra.mxu0 0.0
        %1627 = vmatprep.subr.mxu0 0.0
        %1628 = vmatpush1.msra.mxu0 0.0
        %1629 = vmatprep.subr.mxu0 0.0
        %1630 = vmatpush1.msra.mxu0 0.0
        %1631 = vmatprep.subr.mxu0 0.0
        %1632 = vmatpush1.msra.mxu0 0.0
        %1633 = vmatprep.subr.mxu0 0.0
        %1634 = vmatpush1.msra.mxu0 0.0
        %1635 = vmatprep.subr.mxu0 0.0
        %1636 = vmatpush1.msra.mxu0 0.0
        %1637 = vmatprep.subr.mxu0 0.0
        %1638 = vmatpush1.msra.mxu0 0.0
        %1639 = vmatprep.subr.mxu0 0.0
        %1640 = vmatpush1.msra.mxu0 0.0
        %1641 = vmatprep.subr.mxu0 0.0
        %1642 = vmatpush1.msra.mxu0 0.0
        %1643 = vmatprep.subr.mxu0 0.0
        %1644 = vmatpush1.msra.mxu0 0.0
        %1645 = vmatprep.subr.mxu0 0.0
        %1646 = vmatpush1.msra.mxu0 0.0
        %1647 = vmatprep.subr.mxu0 0.0
        %1648 = vmatpush1.msra.mxu0 0.0
        %1649 = vmatprep.subr.mxu0 0.0
        %1650 = vmatpush1.msra.mxu0 0.0
        %1651 = vmatprep.subr.mxu0 0.0
        %1652 = vmatpush1.msra.mxu0 0.0
        %1653 = vmatprep.subr.mxu0 0.0
        %1654 = vmatpush1.msra.mxu0 0.0
        %1655 = vmatprep.subr.mxu0 0.0
        %1656 = vmatpush1.msra.mxu0 0.0
        %1657 = vmatprep.subr.mxu0 0.0
        %1658 = vmatpush1.msra.mxu0 0.0
        %1659 = vmatprep.subr.mxu0 0.0
        %1660 = vmatpush1.msra.mxu0 0.0
        %1661 = vmatprep.mubr.f32.mxu0 0.0
        %1662 = vmatmul.mubr.f32.gmra.mrb[0].mxu0 %v1148
        %v1663 = vpop.f32.mrb[0].mxu0
        %v1664 = vadd.f32 %v1079, %v1663
        %v1665 = vpop.f32.mrb[0].mxu0
        %1666 = vmatprep.mubr.f32.mxu0 0.0
        %1667 = vmatmul.mubr.f32.gmra.mrb[0].mxu0 %v524
        %v1668 = vpop.f32.mrb[0].mxu0
        %v1669 = vadd.f32 %v1084, %v1668
        %v1670 = vpop.f32.mrb[0].mxu0
        %1671 = vmatprep.mubr.f32.mxu0 0.0
        %1672 = vmatmul.mubr.f32.gmra.mrb[0].mxu0 %v527
        %v1673 = vpop.f32.mrb[0].mxu0
        %v1674 = vadd.f32 %v1089, %v1673
        %v1675 = vpop.f32.mrb[0].mxu0
        %1676 = vmatprep.mubr.f32.mxu0 0.0
        %1677 = vmatmul.mubr.f32.gmra.mrb[0].mxu0 %v530
        %v1678 = vpop.f32.mrb[0].mxu0
        %v1679 = vadd.f32 %v1094, %v1678
        %v1680 = vpop.f32.mrb[0].mxu0
        %1681 = vmatprep.mubr.f32.mxu0 0.0
        %1682 = vmatmul.mubr.f32.gmra.mrb[0].mxu0 %v533
        %v1683 = vpop.f32.mrb[0].mxu0
        %v1684 = vadd.f32 %v1099, %v1683
        %v1685 = vpop.f32.mrb[0].mxu0
        %1686 = vmatprep.mubr.f32.mxu0 0.0
        %1687 = vmatmul.mubr.f32.gmra.mrb[0].mxu0 %v536
        %v1688 = vpop.f32.mrb[0].mxu0
        %v1689 = vadd.f32 %v1104, %v1688
        %v1690 = vpop.f32.mrb[0].mxu0
        %1691 = vmatprep.mubr.f32.mxu0 0.0
        %1692 = vmatmul.mubr.f32.gmra.mrb[0].mxu0 %v539
        %v1693 = vpop.f32.mrb[0].mxu0
        %v1694 = vadd.f32 %v1109, %v1693
        %v1695 = vpop.f32.mrb[0].mxu0
        %1696 = vmatprep.mubr.f32.mxu0 0.0
        %1697 = vmatmul.mubr.f32.gmra.mrb[0].mxu0 %v542
        %v1698 = vpop.f32.mrb[0].mxu0
        %v1699 = vadd.f32 %v1114, %v1698
        %v1700 = vpop.f32.mrb[0].mxu0
        %1701 = vmatprep.mubr.f32.mxu0 0.0
        %1702 = vmatmul.mubr.f32.gmra.mrb[0].mxu0 %v545
        %v1703 = vpop.f32.mrb[0].mxu0
        %v1704 = vadd.f32 %v1119, %v1703
        %v1705 = vpop.f32.mrb[0].mxu0
        %1706 = vmatprep.mubr.f32.mxu0 0.0
        %1707 = vmatmul.mubr.f32.gmra.mrb[0].mxu0 %v548
        %v1708 = vpop.f32.mrb[0].mxu0
        %v1709 = vadd.f32 %v1124, %v1708
        %v1710 = vpop.f32.mrb[0].mxu0
        %1711 = vmatprep.mubr.f32.mxu0 0.0
        %1712 = vmatmul.mubr.f32.gmra.mrb[0].mxu0 %v551
        %v1713 = vpop.f32.mrb[0].mxu0
        %v1714 = vadd.f32 %v1129, %v1713
        %v1715 = vpop.f32.mrb[0].mxu0
        %1716 = vmatprep.mubr.f32.mxu0 0.0
        %1717 = vmatmul.mubr.f32.gmra.mrb[0].mxu0 %v554
        %v1718 = vpop.f32.mrb[0].mxu0
        %v1719 = vadd.f32 %v1134, %v1718
        %v1720 = vpop.f32.mrb[0].mxu0
        %1721 = vmatprep.mubr.f32.mxu0 0.0
        %1722 = vmatmul.mubr.f32.gmra.mrb[0].mxu0 %v557
        %v1723 = vpop.f32.mrb[0].mxu0
        %v1724 = vadd.f32 %v1139, %v1723
        %v1725 = vpop.f32.mrb[0].mxu0
        %1726 = vmatprep.mubr.f32.mxu0 0.0
        %1727 = vmatmul.mubr.f32.gmra.mrb[0].mxu0 %v560
        %v1728 = vpop.f32.mrb[0].mxu0
        %v1729 = vadd.f32 %v1144, %v1728
        %v1730 = vpop.f32.mrb[0].mxu0
        %1731 = vdwg.mxu0
        %s1732 = scalar_lea.vmem %s1, 672
        %v1733 = vld [vmem:[%s1732] sm:$0xff]
        %v1734 = vld [vmem:[%s1732 + $0x8] sm:$0xff]
        %v1735 = vld [vmem:[%s1732 + $0x10] sm:$0xff]
        %v1736 = vld [vmem:[%s1732 + $0x18] sm:$0xff]
        %v1737 = vld [vmem:[%s1732 + $0x20] sm:$0xff]
        %v1738 = vld [vmem:[%s1732 + $0x28] sm:$0xff]
        %v1739 = vld [vmem:[%s1732 + $0x30] sm:$0xff]
        %v1740 = vld [vmem:[%s1732 + $0x38] sm:$0xff]
        %v1741 = vld [vmem:[%s1732 + $0x40] sm:$0xff]
        %v1742 = vld [vmem:[%s1732 + $0x48] sm:$0xff]
        %v1743 = vld [vmem:[%s1732 + $0x50] sm:$0xff]
        %v1744 = vld [vmem:[%s1732 + $0x58] sm:$0xff]
        %v1745 = vld [vmem:[%s1732 + $0x60] sm:$0xff]
        %v1746 = vld [vmem:[%s1732 + $0x68] sm:$0xff]
        %v1747 = vld [vmem:[%s1732 + $0x70] sm:$0xff]
        %v1748 = vld [vmem:[%s1732 + $0x78] sm:$0xff]
        %v1749 = vld [vmem:[%s1732 + $0x80] sm:$0xff]
        %v1750 = vld [vmem:[%s1732 + $0x88] sm:$0xff]
        %v1751 = vld [vmem:[%s1732 + $0x90] sm:$0xff]
        %v1752 = vld [vmem:[%s1732 + $0x98] sm:$0xff]
        %v1753 = vld [vmem:[%s1732 + $0xa0] sm:$0xff]
        %v1754 = vld [vmem:[%s1732 + $0xa8] sm:$0xff]
        %v1755 = vld [vmem:[%s1732 + $0xb0] sm:$0xff]
        %v1756 = vld [vmem:[%s1732 + $0xb8] sm:$0xff]
        %v1757 = vld [vmem:[%s1732 + $0xc0] sm:$0xff]
        %v1758 = vld [vmem:[%s1732 + $0xc8] sm:$0xff]
        %v1759 = vld [vmem:[%s1732 + $0xd0] sm:$0xff]
        %v1760 = vld [vmem:[%s1732 + $0xd8] sm:$0xff]
        %v1761 = vld [vmem:[%s1732 + $0xe0] sm:$0xff]
        %v1762 = vld [vmem:[%s1732 + $0xe8] sm:$0xff]
        %v1763 = vld [vmem:[%s1732 + $0xf0] sm:$0xff]
        %v1764 = vld [vmem:[%s1732 + $0xf8] sm:$0xff]
        %v1765 = vld [vmem:[%s1732 + $0x100] sm:$0xff]
        %v1766 = vld [vmem:[%s1732 + $0x108] sm:$0xff]
        %v1767 = vld [vmem:[%s1732 + $0x110] sm:$0xff]
        %v1768 = vld [vmem:[%s1732 + $0x118] sm:$0xff]
        %v1769 = vld [vmem:[%s1732 + $0x120] sm:$0xff]
        %v1770 = vld [vmem:[%s1732 + $0x128] sm:$0xff]
        %v1771 = vld [vmem:[%s1732 + $0x130] sm:$0xff]
        %v1772 = vld [vmem:[%s1732 + $0x138] sm:$0xff]
        %v1773 = vld [vmem:[%s1732 + $0x140] sm:$0xff]
        %v1774 = vld [vmem:[%s1732 + $0x148] sm:$0xff]
        %v1776 = vsel %vm522, %v436, 0
        %1778 = vmatprep.subr.mxu0 %v1734
        %1779 = vmatpush1.msra.mxu0 %v1733
        %1780 = vmatprep.subr.mxu0 %v1741
        %1781 = vmatpush1.msra.mxu0 %v1740
        %1782 = vmatprep.subr.mxu0 %v1748
        %1783 = vmatpush1.msra.mxu0 %v1747
        %1784 = vmatprep.subr.mxu0 %v1755
        %1785 = vmatpush1.msra.mxu0 %v1754
        %1786 = vmatprep.subr.mxu0 %v1762
        %1787 = vmatpush1.msra.mxu0 %v1761
        %1788 = vmatprep.subr.mxu0 %v1769
        %1789 = vmatpush1.msra.mxu0 %v1768
        %1790 = vmatprep.subr.mxu0 0.0
        %1791 = vmatpush1.msra.mxu0 0.0
        %1792 = vmatprep.subr.mxu0 0.0
        %1793 = vmatpush1.msra.mxu0 0.0
        %1794 = vmatprep.subr.mxu0 0.0
        %1795 = vmatpush1.msra.mxu0 0.0
        %1796 = vmatprep.subr.mxu0 0.0
        %1797 = vmatpush1.msra.mxu0 0.0
        %1798 = vmatprep.subr.mxu0 0.0
        %1799 = vmatpush1.msra.mxu0 0.0
        %1800 = vmatprep.subr.mxu0 0.0
        %1801 = vmatpush1.msra.mxu0 0.0
        %1802 = vmatprep.subr.mxu0 0.0
        %1803 = vmatpush1.msra.mxu0 0.0
        %1804 = vmatprep.subr.mxu0 0.0
        %1805 = vmatpush1.msra.mxu0 0.0
        %1806 = vmatprep.subr.mxu0 0.0
        %1807 = vmatpush1.msra.mxu0 0.0
        %1808 = vmatprep.subr.mxu0 0.0
        %1809 = vmatpush1.msra.mxu0 0.0
        %1810 = vmatprep.subr.mxu0 0.0
        %1811 = vmatpush1.msra.mxu0 0.0
        %1812 = vmatprep.subr.mxu0 0.0
        %1813 = vmatpush1.msra.mxu0 0.0
        %1814 = vmatprep.subr.mxu0 0.0
        %1815 = vmatpush1.msra.mxu0 0.0
        %1816 = vmatprep.subr.mxu0 0.0
        %1817 = vmatpush1.msra.mxu0 0.0
        %1818 = vmatprep.subr.mxu0 0.0
        %1819 = vmatpush1.msra.mxu0 0.0
        %1820 = vmatprep.subr.mxu0 0.0
        %1821 = vmatpush1.msra.mxu0 0.0
        %1822 = vmatprep.subr.mxu0 0.0
        %1823 = vmatpush1.msra.mxu0 0.0
        %1824 = vmatprep.subr.mxu0 0.0
        %1825 = vmatpush1.msra.mxu0 0.0
        %1826 = vmatprep.subr.mxu0 0.0
        %1827 = vmatpush1.msra.mxu0 0.0
        %1828 = vmatprep.subr.mxu0 0.0
        %1829 = vmatpush1.msra.mxu0 0.0
        %1830 = vmatprep.subr.mxu0 0.0
        %1831 = vmatpush1.msra.mxu0 0.0
        %1832 = vmatprep.subr.mxu0 0.0
        %1833 = vmatpush1.msra.mxu0 0.0
        %1834 = vmatprep.subr.mxu0 0.0
        %1835 = vmatpush1.msra.mxu0 0.0
        %1836 = vmatprep.subr.mxu0 0.0
        %1837 = vmatpush1.msra.mxu0 0.0
        %1838 = vmatprep.subr.mxu0 0.0
        %1839 = vmatpush1.msra.mxu0 0.0
        %1840 = vmatprep.subr.mxu0 0.0
        %1841 = vmatpush1.msra.mxu0 0.0
        %1842 = vmatprep.mubr.f32.mxu0 0.0
        %1843 = vmatmul.mubr.f32.gmra.mrb[0].mxu0 %v527
        %v1844 = vpop.f32.mrb[0].mxu0
        %v1845 = vadd.f32 0.0, %v1844
        %v1846 = vpop.f32.mrb[0].mxu0
        %v1847 = vadd.f32 0.0, %v1846
        %1848 = vmatprep.mubr.f32.mxu0 0.0
        %1849 = vmatmul.mubr.f32.gmra.mrb[0].mxu0 %v530
        %v1850 = vpop.f32.mrb[0].mxu0
        %v1851 = vadd.f32 0.0, %v1850
        %v1852 = vpop.f32.mrb[0].mxu0
        %v1853 = vadd.f32 0.0, %v1852
        %1854 = vmatprep.mubr.f32.mxu0 0.0
        %1855 = vmatmul.mubr.f32.gmra.mrb[0].mxu0 %v533
        %v1856 = vpop.f32.mrb[0].mxu0
        %v1857 = vadd.f32 0.0, %v1856
        %v1858 = vpop.f32.mrb[0].mxu0
        %v1859 = vadd.f32 0.0, %v1858
        %1860 = vmatprep.mubr.f32.mxu0 0.0
        %1861 = vmatmul.mubr.f32.gmra.mrb[0].mxu0 %v536
        %v1862 = vpop.f32.mrb[0].mxu0
        %v1863 = vadd.f32 0.0, %v1862
        %v1864 = vpop.f32.mrb[0].mxu0
        %v1865 = vadd.f32 0.0, %v1864
        %1866 = vmatprep.mubr.f32.mxu0 0.0
        %1867 = vmatmul.mubr.f32.gmra.mrb[0].mxu0 %v539
        %v1868 = vpop.f32.mrb[0].mxu0
        %v1869 = vadd.f32 0.0, %v1868
        %v1870 = vpop.f32.mrb[0].mxu0
        %v1871 = vadd.f32 0.0, %v1870
        %1872 = vmatprep.mubr.f32.mxu0 0.0
        %1873 = vmatmul.mubr.f32.gmra.mrb[0].mxu0 %v542
        %v1874 = vpop.f32.mrb[0].mxu0
        %v1875 = vadd.f32 0.0, %v1874
        %v1876 = vpop.f32.mrb[0].mxu0
        %v1877 = vadd.f32 0.0, %v1876
        %1878 = vmatprep.mubr.f32.mxu0 0.0
        %1879 = vmatmul.mubr.f32.gmra.mrb[0].mxu0 %v545
        %v1880 = vpop.f32.mrb[0].mxu0
        %v1881 = vadd.f32 0.0, %v1880
        %v1882 = vpop.f32.mrb[0].mxu0
        %v1883 = vadd.f32 0.0, %v1882
        %1884 = vmatprep.mubr.f32.mxu0 0.0
        %1885 = vmatmul.mubr.f32.gmra.mrb[0].mxu0 %v548
        %v1886 = vpop.f32.mrb[0].mxu0
        %v1887 = vadd.f32 0.0, %v1886
        %v1888 = vpop.f32.mrb[0].mxu0
        %v1889 = vadd.f32 0.0, %v1888
        %1890 = vmatprep.mubr.f32.mxu0 0.0
        %1891 = vmatmul.mubr.f32.gmra.mrb[0].mxu0 %v551
        %v1892 = vpop.f32.mrb[0].mxu0
        %v1893 = vadd.f32 0.0, %v1892
        %v1894 = vpop.f32.mrb[0].mxu0
        %v1895 = vadd.f32 0.0, %v1894
        %1896 = vmatprep.mubr.f32.mxu0 0.0
        %1897 = vmatmul.mubr.f32.gmra.mrb[0].mxu0 %v554
        %v1898 = vpop.f32.mrb[0].mxu0
        %v1899 = vadd.f32 0.0, %v1898
        %v1900 = vpop.f32.mrb[0].mxu0
        %v1901 = vadd.f32 0.0, %v1900
        %1902 = vmatprep.mubr.f32.mxu0 0.0
        %1903 = vmatmul.mubr.f32.gmra.mrb[0].mxu0 %v557
        %v1904 = vpop.f32.mrb[0].mxu0
        %v1905 = vadd.f32 0.0, %v1904
        %v1906 = vpop.f32.mrb[0].mxu0
        %v1907 = vadd.f32 0.0, %v1906
        %1908 = vmatprep.mubr.f32.mxu0 0.0
        %1909 = vmatmul.mubr.f32.gmra.mrb[0].mxu0 %v560
        %v1910 = vpop.f32.mrb[0].mxu0
        %v1911 = vadd.f32 0.0, %v1910
        %v1912 = vpop.f32.mrb[0].mxu0
        %v1913 = vadd.f32 0.0, %v1912
        %1914 = vmatprep.mubr.f32.mxu0 0.0
        %1915 = vmatmul.mubr.f32.gmra.mrb[0].mxu0 %v563
        %v1916 = vpop.f32.mrb[0].mxu0
        %v1917 = vadd.f32 0.0, %v1916
        %v1918 = vpop.f32.mrb[0].mxu0
        %v1919 = vadd.f32 0.0, %v1918
        %1920 = vmatprep.mubr.f32.mxu0 0.0
        %1921 = vmatmul.mubr.f32.gmra.mrb[0].mxu0 %v1776
        %v1922 = vpop.f32.mrb[0].mxu0
        %v1923 = vadd.f32 0.0, %v1922
        %v1924 = vpop.f32.mrb[0].mxu0
        %v1925 = vadd.f32 0.0, %v1924
        %1926 = vdwg.mxu0
        %1927 = vmatprep.subr.mxu0 %v1736
        %1928 = vmatpush1.msra.mxu0 %v1735
        %1929 = vmatprep.subr.mxu0 %v1743
        %1930 = vmatpush1.msra.mxu0 %v1742
        %1931 = vmatprep.subr.mxu0 %v1750
        %1932 = vmatpush1.msra.mxu0 %v1749
        %1933 = vmatprep.subr.mxu0 %v1757
        %1934 = vmatpush1.msra.mxu0 %v1756
        %1935 = vmatprep.subr.mxu0 %v1764
        %1936 = vmatpush1.msra.mxu0 %v1763
        %1937 = vmatprep.subr.mxu0 %v1771
        %1938 = vmatpush1.msra.mxu0 %v1770
        %1939 = vmatprep.subr.mxu0 0.0
        %1940 = vmatpush1.msra.mxu0 0.0
        %1941 = vmatprep.subr.mxu0 0.0
        %1942 = vmatpush1.msra.mxu0 0.0
        %1943 = vmatprep.subr.mxu0 0.0
        %1944 = vmatpush1.msra.mxu0 0.0
        %1945 = vmatprep.subr.mxu0 0.0
        %1946 = vmatpush1.msra.mxu0 0.0
        %1947 = vmatprep.subr.mxu0 0.0
        %1948 = vmatpush1.msra.mxu0 0.0
        %1949 = vmatprep.subr.mxu0 0.0
        %1950 = vmatpush1.msra.mxu0 0.0
        %1951 = vmatprep.subr.mxu0 0.0
        %1952 = vmatpush1.msra.mxu0 0.0
        %1953 = vmatprep.subr.mxu0 0.0
        %1954 = vmatpush1.msra.mxu0 0.0
        %1955 = vmatprep.subr.mxu0 0.0
        %1956 = vmatpush1.msra.mxu0 0.0
        %1957 = vmatprep.subr.mxu0 0.0
        %1958 = vmatpush1.msra.mxu0 0.0
        %1959 = vmatprep.subr.mxu0 0.0
        %1960 = vmatpush1.msra.mxu0 0.0
        %1961 = vmatprep.subr.mxu0 0.0
        %1962 = vmatpush1.msra.mxu0 0.0
        %1963 = vmatprep.subr.mxu0 0.0
        %1964 = vmatpush1.msra.mxu0 0.0
        %1965 = vmatprep.subr.mxu0 0.0
        %1966 = vmatpush1.msra.mxu0 0.0
        %1967 = vmatprep.subr.mxu0 0.0
        %1968 = vmatpush1.msra.mxu0 0.0
        %1969 = vmatprep.subr.mxu0 0.0
        %1970 = vmatpush1.msra.mxu0 0.0
        %1971 = vmatprep.subr.mxu0 0.0
        %1972 = vmatpush1.msra.mxu0 0.0
        %1973 = vmatprep.subr.mxu0 0.0
        %1974 = vmatpush1.msra.mxu0 0.0
        %1975 = vmatprep.subr.mxu0 0.0
        %1976 = vmatpush1.msra.mxu0 0.0
        %1977 = vmatprep.subr.mxu0 0.0
        %1978 = vmatpush1.msra.mxu0 0.0
        %1979 = vmatprep.subr.mxu0 0.0
        %1980 = vmatpush1.msra.mxu0 0.0
        %1981 = vmatprep.subr.mxu0 0.0
        %1982 = vmatpush1.msra.mxu0 0.0
        %1983 = vmatprep.subr.mxu0 0.0
        %1984 = vmatpush1.msra.mxu0 0.0
        %1985 = vmatprep.subr.mxu0 0.0
        %1986 = vmatpush1.msra.mxu0 0.0
        %1987 = vmatprep.subr.mxu0 0.0
        %1988 = vmatpush1.msra.mxu0 0.0
        %1989 = vmatprep.subr.mxu0 0.0
        %1990 = vmatpush1.msra.mxu0 0.0
        %1991 = vmatprep.mubr.f32.mxu0 0.0
        %1992 = vmatmul.mubr.f32.gmra.mrb[0].mxu0 %v527
        %v1993 = vpop.f32.mrb[0].mxu0
        %v1994 = vadd.f32 0.0, %v1993
        %v1995 = vpop.f32.mrb[0].mxu0
        %v1996 = vadd.f32 0.0, %v1995
        %1997 = vmatprep.mubr.f32.mxu0 0.0
        %1998 = vmatmul.mubr.f32.gmra.mrb[0].mxu0 %v530
        %v1999 = vpop.f32.mrb[0].mxu0
        %v2000 = vadd.f32 0.0, %v1999
        %v2001 = vpop.f32.mrb[0].mxu0
        %v2002 = vadd.f32 0.0, %v2001
        %2003 = vmatprep.mubr.f32.mxu0 0.0
        %2004 = vmatmul.mubr.f32.gmra.mrb[0].mxu0 %v533
        %v2005 = vpop.f32.mrb[0].mxu0
        %v2006 = vadd.f32 0.0, %v2005
        %v2007 = vpop.f32.mrb[0].mxu0
        %v2008 = vadd.f32 0.0, %v2007
        %2009 = vmatprep.mubr.f32.mxu0 0.0
        %2010 = vmatmul.mubr.f32.gmra.mrb[0].mxu0 %v536
        %v2011 = vpop.f32.mrb[0].mxu0
        %v2012 = vadd.f32 0.0, %v2011
        %v2013 = vpop.f32.mrb[0].mxu0
        %v2014 = vadd.f32 0.0, %v2013
        %2015 = vmatprep.mubr.f32.mxu0 0.0
        %2016 = vmatmul.mubr.f32.gmra.mrb[0].mxu0 %v539
        %v2017 = vpop.f32.mrb[0].mxu0
        %v2018 = vadd.f32 0.0, %v2017
        %v2019 = vpop.f32.mrb[0].mxu0
        %v2020 = vadd.f32 0.0, %v2019
        %2021 = vmatprep.mubr.f32.mxu0 0.0
        %2022 = vmatmul.mubr.f32.gmra.mrb[0].mxu0 %v542
        %v2023 = vpop.f32.mrb[0].mxu0
        %v2024 = vadd.f32 0.0, %v2023
        %v2025 = vpop.f32.mrb[0].mxu0
        %v2026 = vadd.f32 0.0, %v2025
        %2027 = vmatprep.mubr.f32.mxu0 0.0
        %2028 = vmatmul.mubr.f32.gmra.mrb[0].mxu0 %v545
        %v2029 = vpop.f32.mrb[0].mxu0
        %v2030 = vadd.f32 0.0, %v2029
        %v2031 = vpop.f32.mrb[0].mxu0
        %v2032 = vadd.f32 0.0, %v2031
        %2033 = vmatprep.mubr.f32.mxu0 0.0
        %2034 = vmatmul.mubr.f32.gmra.mrb[0].mxu0 %v548
        %v2035 = vpop.f32.mrb[0].mxu0
        %v2036 = vadd.f32 0.0, %v2035
        %v2037 = vpop.f32.mrb[0].mxu0
        %v2038 = vadd.f32 0.0, %v2037
        %2039 = vmatprep.mubr.f32.mxu0 0.0
        %2040 = vmatmul.mubr.f32.gmra.mrb[0].mxu0 %v551
        %v2041 = vpop.f32.mrb[0].mxu0
        %v2042 = vadd.f32 0.0, %v2041
        %v2043 = vpop.f32.mrb[0].mxu0
        %v2044 = vadd.f32 0.0, %v2043
        %2045 = vmatprep.mubr.f32.mxu0 0.0
        %2046 = vmatmul.mubr.f32.gmra.mrb[0].mxu0 %v554
        %v2047 = vpop.f32.mrb[0].mxu0
        %v2048 = vadd.f32 0.0, %v2047
        %v2049 = vpop.f32.mrb[0].mxu0
        %v2050 = vadd.f32 0.0, %v2049
        %2051 = vmatprep.mubr.f32.mxu0 0.0
        %2052 = vmatmul.mubr.f32.gmra.mrb[0].mxu0 %v557
        %v2053 = vpop.f32.mrb[0].mxu0
        %v2054 = vadd.f32 0.0, %v2053
        %v2055 = vpop.f32.mrb[0].mxu0
        %v2056 = vadd.f32 0.0, %v2055
        %2057 = vmatprep.mubr.f32.mxu0 0.0
        %2058 = vmatmul.mubr.f32.gmra.mrb[0].mxu0 %v560
        %v2059 = vpop.f32.mrb[0].mxu0
        %v2060 = vadd.f32 0.0, %v2059
        %v2061 = vpop.f32.mrb[0].mxu0
        %v2062 = vadd.f32 0.0, %v2061
        %2063 = vmatprep.mubr.f32.mxu0 0.0
        %2064 = vmatmul.mubr.f32.gmra.mrb[0].mxu0 %v563
        %v2065 = vpop.f32.mrb[0].mxu0
        %v2066 = vadd.f32 0.0, %v2065
        %v2067 = vpop.f32.mrb[0].mxu0
        %v2068 = vadd.f32 0.0, %v2067
        %2069 = vmatprep.mubr.f32.mxu0 0.0
        %2070 = vmatmul.mubr.f32.gmra.mrb[0].mxu0 %v1776
        %v2071 = vpop.f32.mrb[0].mxu0
        %v2072 = vadd.f32 0.0, %v2071
        %v2073 = vpop.f32.mrb[0].mxu0
        %v2074 = vadd.f32 0.0, %v2073
        %2075 = vdwg.mxu0
        %2076 = vmatprep.subr.mxu0 %v1738
        %2077 = vmatpush1.msra.mxu0 %v1737
        %2078 = vmatprep.subr.mxu0 %v1745
        %2079 = vmatpush1.msra.mxu0 %v1744
        %2080 = vmatprep.subr.mxu0 %v1752
        %2081 = vmatpush1.msra.mxu0 %v1751
        %2082 = vmatprep.subr.mxu0 %v1759
        %2083 = vmatpush1.msra.mxu0 %v1758
        %2084 = vmatprep.subr.mxu0 %v1766
        %2085 = vmatpush1.msra.mxu0 %v1765
        %2086 = vmatprep.subr.mxu0 %v1773
        %2087 = vmatpush1.msra.mxu0 %v1772
        %2088 = vmatprep.subr.mxu0 0.0
        %2089 = vmatpush1.msra.mxu0 0.0
        %2090 = vmatprep.subr.mxu0 0.0
        %2091 = vmatpush1.msra.mxu0 0.0
        %2092 = vmatprep.subr.mxu0 0.0
        %2093 = vmatpush1.msra.mxu0 0.0
        %2094 = vmatprep.subr.mxu0 0.0
        %2095 = vmatpush1.msra.mxu0 0.0
        %2096 = vmatprep.subr.mxu0 0.0
        %2097 = vmatpush1.msra.mxu0 0.0
        %2098 = vmatprep.subr.mxu0 0.0
        %2099 = vmatpush1.msra.mxu0 0.0
        %2100 = vmatprep.subr.mxu0 0.0
        %2101 = vmatpush1.msra.mxu0 0.0
        %2102 = vmatprep.subr.mxu0 0.0
        %2103 = vmatpush1.msra.mxu0 0.0
        %2104 = vmatprep.subr.mxu0 0.0
        %2105 = vmatpush1.msra.mxu0 0.0
        %2106 = vmatprep.subr.mxu0 0.0
        %2107 = vmatpush1.msra.mxu0 0.0
        %2108 = vmatprep.subr.mxu0 0.0
        %2109 = vmatpush1.msra.mxu0 0.0
        %2110 = vmatprep.subr.mxu0 0.0
        %2111 = vmatpush1.msra.mxu0 0.0
        %2112 = vmatprep.subr.mxu0 0.0
        %2113 = vmatpush1.msra.mxu0 0.0
        %2114 = vmatprep.subr.mxu0 0.0
        %2115 = vmatpush1.msra.mxu0 0.0
        %2116 = vmatprep.subr.mxu0 0.0
        %2117 = vmatpush1.msra.mxu0 0.0
        %2118 = vmatprep.subr.mxu0 0.0
        %2119 = vmatpush1.msra.mxu0 0.0
        %2120 = vmatprep.subr.mxu0 0.0
        %2121 = vmatpush1.msra.mxu0 0.0
        %2122 = vmatprep.subr.mxu0 0.0
        %2123 = vmatpush1.msra.mxu0 0.0
        %2124 = vmatprep.subr.mxu0 0.0
        %2125 = vmatpush1.msra.mxu0 0.0
        %2126 = vmatprep.subr.mxu0 0.0
        %2127 = vmatpush1.msra.mxu0 0.0
        %2128 = vmatprep.subr.mxu0 0.0
        %2129 = vmatpush1.msra.mxu0 0.0
        %2130 = vmatprep.subr.mxu0 0.0
        %2131 = vmatpush1.msra.mxu0 0.0
        %2132 = vmatprep.subr.mxu0 0.0
        %2133 = vmatpush1.msra.mxu0 0.0
        %2134 = vmatprep.subr.mxu0 0.0
        %2135 = vmatpush1.msra.mxu0 0.0
        %2136 = vmatprep.subr.mxu0 0.0
        %2137 = vmatpush1.msra.mxu0 0.0
        %2138 = vmatprep.subr.mxu0 0.0
        %2139 = vmatpush1.msra.mxu0 0.0
        %2140 = vmatprep.mubr.f32.mxu0 0.0
        %2141 = vmatmul.mubr.f32.gmra.mrb[0].mxu0 %v527
        %v2142 = vpop.f32.mrb[0].mxu0
        %v2143 = vadd.f32 0.0, %v2142
        %v2144 = vpop.f32.mrb[0].mxu0
        %v2145 = vadd.f32 0.0, %v2144
        %2146 = vmatprep.mubr.f32.mxu0 0.0
        %2147 = vmatmul.mubr.f32.gmra.mrb[0].mxu0 %v530
        %v2148 = vpop.f32.mrb[0].mxu0
        %v2149 = vadd.f32 0.0, %v2148
        %v2150 = vpop.f32.mrb[0].mxu0
        %v2151 = vadd.f32 0.0, %v2150
        %2152 = vmatprep.mubr.f32.mxu0 0.0
        %2153 = vmatmul.mubr.f32.gmra.mrb[0].mxu0 %v533
        %v2154 = vpop.f32.mrb[0].mxu0
        %v2155 = vadd.f32 0.0, %v2154
        %v2156 = vpop.f32.mrb[0].mxu0
        %v2157 = vadd.f32 0.0, %v2156
        %2158 = vmatprep.mubr.f32.mxu0 0.0
        %2159 = vmatmul.mubr.f32.gmra.mrb[0].mxu0 %v536
        %v2160 = vpop.f32.mrb[0].mxu0
        %v2161 = vadd.f32 0.0, %v2160
        %v2162 = vpop.f32.mrb[0].mxu0
        %v2163 = vadd.f32 0.0, %v2162
        %2164 = vmatprep.mubr.f32.mxu0 0.0
        %2165 = vmatmul.mubr.f32.gmra.mrb[0].mxu0 %v539
        %v2166 = vpop.f32.mrb[0].mxu0
        %v2167 = vadd.f32 0.0, %v2166
        %v2168 = vpop.f32.mrb[0].mxu0
        %v2169 = vadd.f32 0.0, %v2168
        %2170 = vmatprep.mubr.f32.mxu0 0.0
        %2171 = vmatmul.mubr.f32.gmra.mrb[0].mxu0 %v542
        %v2172 = vpop.f32.mrb[0].mxu0
        %v2173 = vadd.f32 0.0, %v2172
        %v2174 = vpop.f32.mrb[0].mxu0
        %v2175 = vadd.f32 0.0, %v2174
        %2176 = vmatprep.mubr.f32.mxu0 0.0
        %2177 = vmatmul.mubr.f32.gmra.mrb[0].mxu0 %v545
        %v2178 = vpop.f32.mrb[0].mxu0
        %v2179 = vadd.f32 0.0, %v2178
        %v2180 = vpop.f32.mrb[0].mxu0
        %v2181 = vadd.f32 0.0, %v2180
        %2182 = vmatprep.mubr.f32.mxu0 0.0
        %2183 = vmatmul.mubr.f32.gmra.mrb[0].mxu0 %v548
        %v2184 = vpop.f32.mrb[0].mxu0
        %v2185 = vadd.f32 0.0, %v2184
        %v2186 = vpop.f32.mrb[0].mxu0
        %v2187 = vadd.f32 0.0, %v2186
        %2188 = vmatprep.mubr.f32.mxu0 0.0
        %2189 = vmatmul.mubr.f32.gmra.mrb[0].mxu0 %v551
        %v2190 = vpop.f32.mrb[0].mxu0
        %v2191 = vadd.f32 0.0, %v2190
        %v2192 = vpop.f32.mrb[0].mxu0
        %v2193 = vadd.f32 0.0, %v2192
        %2194 = vmatprep.mubr.f32.mxu0 0.0
        %2195 = vmatmul.mubr.f32.gmra.mrb[0].mxu0 %v554
        %v2196 = vpop.f32.mrb[0].mxu0
        %v2197 = vadd.f32 0.0, %v2196
        %v2198 = vpop.f32.mrb[0].mxu0
        %v2199 = vadd.f32 0.0, %v2198
        %2200 = vmatprep.mubr.f32.mxu0 0.0
        %2201 = vmatmul.mubr.f32.gmra.mrb[0].mxu0 %v557
        %v2202 = vpop.f32.mrb[0].mxu0
        %v2203 = vadd.f32 0.0, %v2202
        %v2204 = vpop.f32.mrb[0].mxu0
        %v2205 = vadd.f32 0.0, %v2204
        %2206 = vmatprep.mubr.f32.mxu0 0.0
        %2207 = vmatmul.mubr.f32.gmra.mrb[0].mxu0 %v560
        %v2208 = vpop.f32.mrb[0].mxu0
        %v2209 = vadd.f32 0.0, %v2208
        %v2210 = vpop.f32.mrb[0].mxu0
        %v2211 = vadd.f32 0.0, %v2210
        %2212 = vmatprep.mubr.f32.mxu0 0.0
        %2213 = vmatmul.mubr.f32.gmra.mrb[0].mxu0 %v563
        %v2214 = vpop.f32.mrb[0].mxu0
        %v2215 = vadd.f32 0.0, %v2214
        %v2216 = vpop.f32.mrb[0].mxu0
        %v2217 = vadd.f32 0.0, %v2216
        %2218 = vmatprep.mubr.f32.mxu0 0.0
        %2219 = vmatmul.mubr.f32.gmra.mrb[0].mxu0 %v1776
        %v2220 = vpop.f32.mrb[0].mxu0
        %v2221 = vadd.f32 0.0, %v2220
        %v2222 = vpop.f32.mrb[0].mxu0
        %v2223 = vadd.f32 0.0, %v2222
        %2224 = vdwg.mxu0
        %2225 = vmatprep.subr.mxu0 0.0
        %2226 = vmatpush1.msra.mxu0 %v1739
        %2227 = vmatprep.subr.mxu0 0.0
        %2228 = vmatpush1.msra.mxu0 %v1746
        %2229 = vmatprep.subr.mxu0 0.0
        %2230 = vmatpush1.msra.mxu0 %v1753
        %2231 = vmatprep.subr.mxu0 0.0
        %2232 = vmatpush1.msra.mxu0 %v1760
        %2233 = vmatprep.subr.mxu0 0.0
        %2234 = vmatpush1.msra.mxu0 %v1767
        %2235 = vmatprep.subr.mxu0 0.0
        %2236 = vmatpush1.msra.mxu0 %v1774
        %2237 = vmatprep.subr.mxu0 0.0
        %2238 = vmatpush1.msra.mxu0 0.0
        %2239 = vmatprep.subr.mxu0 0.0
        %2240 = vmatpush1.msra.mxu0 0.0
        %2241 = vmatprep.subr.mxu0 0.0
        %2242 = vmatpush1.msra.mxu0 0.0
        %2243 = vmatprep.subr.mxu0 0.0
        %2244 = vmatpush1.msra.mxu0 0.0
        %2245 = vmatprep.subr.mxu0 0.0
        %2246 = vmatpush1.msra.mxu0 0.0
        %2247 = vmatprep.subr.mxu0 0.0
        %2248 = vmatpush1.msra.mxu0 0.0
        %2249 = vmatprep.subr.mxu0 0.0
        %2250 = vmatpush1.msra.mxu0 0.0
        %2251 = vmatprep.subr.mxu0 0.0
        %2252 = vmatpush1.msra.mxu0 0.0
        %2253 = vmatprep.subr.mxu0 0.0
        %2254 = vmatpush1.msra.mxu0 0.0
        %2255 = vmatprep.subr.mxu0 0.0
        %2256 = vmatpush1.msra.mxu0 0.0
        %2257 = vmatprep.subr.mxu0 0.0
        %2258 = vmatpush1.msra.mxu0 0.0
        %2259 = vmatprep.subr.mxu0 0.0
        %2260 = vmatpush1.msra.mxu0 0.0
        %2261 = vmatprep.subr.mxu0 0.0
        %2262 = vmatpush1.msra.mxu0 0.0
        %2263 = vmatprep.subr.mxu0 0.0
        %2264 = vmatpush1.msra.mxu0 0.0
        %2265 = vmatprep.subr.mxu0 0.0
        %2266 = vmatpush1.msra.mxu0 0.0
        %2267 = vmatprep.subr.mxu0 0.0
        %2268 = vmatpush1.msra.mxu0 0.0
        %2269 = vmatprep.subr.mxu0 0.0
        %2270 = vmatpush1.msra.mxu0 0.0
        %2271 = vmatprep.subr.mxu0 0.0
        %2272 = vmatpush1.msra.mxu0 0.0
        %2273 = vmatprep.subr.mxu0 0.0
        %2274 = vmatpush1.msra.mxu0 0.0
        %2275 = vmatprep.subr.mxu0 0.0
        %2276 = vmatpush1.msra.mxu0 0.0
        %2277 = vmatprep.subr.mxu0 0.0
        %2278 = vmatpush1.msra.mxu0 0.0
        %2279 = vmatprep.subr.mxu0 0.0
        %2280 = vmatpush1.msra.mxu0 0.0
        %2281 = vmatprep.subr.mxu0 0.0
        %2282 = vmatpush1.msra.mxu0 0.0
        %2283 = vmatprep.subr.mxu0 0.0
        %2284 = vmatpush1.msra.mxu0 0.0
        %2285 = vmatprep.subr.mxu0 0.0
        %2286 = vmatpush1.msra.mxu0 0.0
        %2287 = vmatprep.subr.mxu0 0.0
        %2288 = vmatpush1.msra.mxu0 0.0
        %2289 = vmatprep.mubr.f32.mxu0 0.0
        %2290 = vmatmul.mubr.f32.gmra.mrb[0].mxu0 %v527
        %v2291 = vpop.f32.mrb[0].mxu0
        %v2292 = vadd.f32 0.0, %v2291
        %v2293 = vpop.f32.mrb[0].mxu0
        %2294 = vmatprep.mubr.f32.mxu0 0.0
        %2295 = vmatmul.mubr.f32.gmra.mrb[0].mxu0 %v530
        %v2296 = vpop.f32.mrb[0].mxu0
        %v2297 = vadd.f32 0.0, %v2296
        %v2298 = vpop.f32.mrb[0].mxu0
        %2299 = vmatprep.mubr.f32.mxu0 0.0
        %2300 = vmatmul.mubr.f32.gmra.mrb[0].mxu0 %v533
        %v2301 = vpop.f32.mrb[0].mxu0
        %v2302 = vadd.f32 0.0, %v2301
        %v2303 = vpop.f32.mrb[0].mxu0
        %2304 = vmatprep.mubr.f32.mxu0 0.0
        %2305 = vmatmul.mubr.f32.gmra.mrb[0].mxu0 %v536
        %v2306 = vpop.f32.mrb[0].mxu0
        %v2307 = vadd.f32 0.0, %v2306
        %v2308 = vpop.f32.mrb[0].mxu0
        %2309 = vmatprep.mubr.f32.mxu0 0.0
        %2310 = vmatmul.mubr.f32.gmra.mrb[0].mxu0 %v539
        %v2311 = vpop.f32.mrb[0].mxu0
        %v2312 = vadd.f32 0.0, %v2311
        %v2313 = vpop.f32.mrb[0].mxu0
        %2314 = vmatprep.mubr.f32.mxu0 0.0
        %2315 = vmatmul.mubr.f32.gmra.mrb[0].mxu0 %v542
        %v2316 = vpop.f32.mrb[0].mxu0
        %v2317 = vadd.f32 0.0, %v2316
        %v2318 = vpop.f32.mrb[0].mxu0
        %2319 = vmatprep.mubr.f32.mxu0 0.0
        %2320 = vmatmul.mubr.f32.gmra.mrb[0].mxu0 %v545
        %v2321 = vpop.f32.mrb[0].mxu0
        %v2322 = vadd.f32 0.0, %v2321
        %v2323 = vpop.f32.mrb[0].mxu0
        %2324 = vmatprep.mubr.f32.mxu0 0.0
        %2325 = vmatmul.mubr.f32.gmra.mrb[0].mxu0 %v548
        %v2326 = vpop.f32.mrb[0].mxu0
        %v2327 = vadd.f32 0.0, %v2326
        %v2328 = vpop.f32.mrb[0].mxu0
        %2329 = vmatprep.mubr.f32.mxu0 0.0
        %2330 = vmatmul.mubr.f32.gmra.mrb[0].mxu0 %v551
        %v2331 = vpop.f32.mrb[0].mxu0
        %v2332 = vadd.f32 0.0, %v2331
        %v2333 = vpop.f32.mrb[0].mxu0
        %2334 = vmatprep.mubr.f32.mxu0 0.0
        %2335 = vmatmul.mubr.f32.gmra.mrb[0].mxu0 %v554
        %v2336 = vpop.f32.mrb[0].mxu0
        %v2337 = vadd.f32 0.0, %v2336
        %v2338 = vpop.f32.mrb[0].mxu0
        %2339 = vmatprep.mubr.f32.mxu0 0.0
        %2340 = vmatmul.mubr.f32.gmra.mrb[0].mxu0 %v557
        %v2341 = vpop.f32.mrb[0].mxu0
        %v2342 = vadd.f32 0.0, %v2341
        %v2343 = vpop.f32.mrb[0].mxu0
        %2344 = vmatprep.mubr.f32.mxu0 0.0
        %2345 = vmatmul.mubr.f32.gmra.mrb[0].mxu0 %v560
        %v2346 = vpop.f32.mrb[0].mxu0
        %v2347 = vadd.f32 0.0, %v2346
        %v2348 = vpop.f32.mrb[0].mxu0
        %2349 = vmatprep.mubr.f32.mxu0 0.0
        %2350 = vmatmul.mubr.f32.gmra.mrb[0].mxu0 %v563
        %v2351 = vpop.f32.mrb[0].mxu0
        %v2352 = vadd.f32 0.0, %v2351
        %v2353 = vpop.f32.mrb[0].mxu0
        %2354 = vmatprep.mubr.f32.mxu0 0.0
        %2355 = vmatmul.mubr.f32.gmra.mrb[0].mxu0 %v1776
        %v2356 = vpop.f32.mrb[0].mxu0
        %v2357 = vadd.f32 0.0, %v2356
        %v2358 = vpop.f32.mrb[0].mxu0
        %2359 = vdwg.mxu0
        %v2360 = vadd.f32 %v1217, %v1845
        %v2361 = vadd.f32 %v1219, %v1847
        %v2362 = vadd.f32 %v1366, %v1994
        %v2363 = vadd.f32 %v1368, %v1996
        %v2364 = vadd.f32 %v1515, %v2143
        %v2365 = vadd.f32 %v1517, %v2145
        %v2366 = vadd.f32 %v1664, %v2292
        %v2367 = vadd.f32 %v1223, %v1851
        %v2368 = vadd.f32 %v1225, %v1853
        %v2369 = vadd.f32 %v1372, %v2000
        %v2370 = vadd.f32 %v1374, %v2002
        %v2371 = vadd.f32 %v1521, %v2149
        %v2372 = vadd.f32 %v1523, %v2151
        %v2373 = vadd.f32 %v1669, %v2297
        %v2374 = vadd.f32 %v1229, %v1857
        %v2375 = vadd.f32 %v1231, %v1859
        %v2376 = vadd.f32 %v1378, %v2006
        %v2377 = vadd.f32 %v1380, %v2008
        %v2378 = vadd.f32 %v1527, %v2155
        %v2379 = vadd.f32 %v1529, %v2157
        %v2380 = vadd.f32 %v1674, %v2302
        %v2381 = vadd.f32 %v1235, %v1863
        %v2382 = vadd.f32 %v1237, %v1865
        %v2383 = vadd.f32 %v1384, %v2012
        %v2384 = vadd.f32 %v1386, %v2014
        %v2385 = vadd.f32 %v1533, %v2161
        %v2386 = vadd.f32 %v1535, %v2163
        %v2387 = vadd.f32 %v1679, %v2307
        %v2388 = vadd.f32 %v1241, %v1869
        %v2389 = vadd.f32 %v1243, %v1871
        %v2390 = vadd.f32 %v1390, %v2018
        %v2391 = vadd.f32 %v1392, %v2020
        %v2392 = vadd.f32 %v1539, %v2167
        %v2393 = vadd.f32 %v1541, %v2169
        %v2394 = vadd.f32 %v1684, %v2312
        %v2395 = vadd.f32 %v1247, %v1875
        %v2396 = vadd.f32 %v1249, %v1877
        %v2397 = vadd.f32 %v1396, %v2024
        %v2398 = vadd.f32 %v1398, %v2026
        %v2399 = vadd.f32 %v1545, %v2173
        %v2400 = vadd.f32 %v1547, %v2175
        %v2401 = vadd.f32 %v1689, %v2317
        %v2402 = vadd.f32 %v1253, %v1881
        %v2403 = vadd.f32 %v1255, %v1883
        %v2404 = vadd.f32 %v1402, %v2030
        %v2405 = vadd.f32 %v1404, %v2032
        %v2406 = vadd.f32 %v1551, %v2179
        %v2407 = vadd.f32 %v1553, %v2181
        %v2408 = vadd.f32 %v1694, %v2322
        %v2409 = vadd.f32 %v1259, %v1887
        %v2410 = vadd.f32 %v1261, %v1889
        %v2411 = vadd.f32 %v1408, %v2036
        %v2412 = vadd.f32 %v1410, %v2038
        %v2413 = vadd.f32 %v1557, %v2185
        %v2414 = vadd.f32 %v1559, %v2187
        %v2415 = vadd.f32 %v1699, %v2327
        %v2416 = vadd.f32 %v1265, %v1893
        %v2417 = vadd.f32 %v1267, %v1895
        %v2418 = vadd.f32 %v1414, %v2042
        %v2419 = vadd.f32 %v1416, %v2044
        %v2420 = vadd.f32 %v1563, %v2191
        %v2421 = vadd.f32 %v1565, %v2193
        %v2422 = vadd.f32 %v1704, %v2332
        %v2423 = vadd.f32 %v1271, %v1899
        %v2424 = vadd.f32 %v1273, %v1901
        %v2425 = vadd.f32 %v1420, %v2048
        %v2426 = vadd.f32 %v1422, %v2050
        %v2427 = vadd.f32 %v1569, %v2197
        %v2428 = vadd.f32 %v1571, %v2199
        %v2429 = vadd.f32 %v1709, %v2337
        %v2430 = vadd.f32 %v1277, %v1905
        %v2431 = vadd.f32 %v1279, %v1907
        %v2432 = vadd.f32 %v1426, %v2054
        %v2433 = vadd.f32 %v1428, %v2056
        %v2434 = vadd.f32 %v1575, %v2203
        %v2435 = vadd.f32 %v1577, %v2205
        %v2436 = vadd.f32 %v1714, %v2342
        %v2437 = vadd.f32 %v1283, %v1911
        %v2438 = vadd.f32 %v1285, %v1913
        %v2439 = vadd.f32 %v1432, %v2060
        %v2440 = vadd.f32 %v1434, %v2062
        %v2441 = vadd.f32 %v1581, %v2209
        %v2442 = vadd.f32 %v1583, %v2211
        %v2443 = vadd.f32 %v1719, %v2347
        %v2444 = vadd.f32 %v1289, %v1917
        %v2445 = vadd.f32 %v1291, %v1919
        %v2446 = vadd.f32 %v1438, %v2066
        %v2447 = vadd.f32 %v1440, %v2068
        %v2448 = vadd.f32 %v1587, %v2215
        %v2449 = vadd.f32 %v1589, %v2217
        %v2450 = vadd.f32 %v1724, %v2352
        %v2451 = vadd.f32 %v1295, %v1923
        %v2452 = vadd.f32 %v1297, %v1925
        %v2453 = vadd.f32 %v1444, %v2072
        %v2454 = vadd.f32 %v1446, %v2074
        %v2455 = vadd.f32 %v1593, %v2221
        %v2456 = vadd.f32 %v1595, %v2223
        %v2457 = vadd.f32 %v1729, %v2357
        %v2458 = vld [vmem:[%s2] sm:$0xff]
        %v2460 = vlaneseq
        %v2461 = vshrl.u32 %v2460, 7
        %v2462 = vsub.s32 0, %v2461
        %v2463 = vrot.slane %v2458, %v2462
        %v2464 = vlaneseq
        %v2465 = vshrl.u32 %v2464, 7
        %v2466 = vsub.s32 1, %v2465
        %v2467 = vrot.slane %v2458, %v2466
        %v2468 = vlaneseq
        %v2469 = vshrl.u32 %v2468, 7
        %v2470 = vsub.s32 2, %v2469
        %v2471 = vrot.slane %v2458, %v2470
        %v2472 = vlaneseq
        %v2473 = vshrl.u32 %v2472, 7
        %v2474 = vsub.s32 3, %v2473
        %v2475 = vrot.slane %v2458, %v2474
        %v2476 = vlaneseq
        %v2477 = vshrl.u32 %v2476, 7
        %v2478 = vsub.s32 4, %v2477
        %v2479 = vrot.slane %v2458, %v2478
        %v2480 = vlaneseq
        %v2481 = vshrl.u32 %v2480, 7
        %v2482 = vsub.s32 5, %v2481
        %v2483 = vrot.slane %v2458, %v2482
        %v2484 = vlaneseq
        %v2485 = vshrl.u32 %v2484, 7
        %v2486 = vsub.s32 6, %v2485
        %v2487 = vrot.slane %v2458, %v2486
        %v2495 = vadd.f32 %v2360, %v2463
        %v2496 = vadd.f32 %v2361, %v2467
        %v2497 = vadd.f32 %v2362, %v2471
        %v2498 = vadd.f32 %v2363, %v2475
        %v2499 = vadd.f32 %v2364, %v2479
        %v2500 = vadd.f32 %v2365, %v2483
        %v2501 = vadd.f32 %v2366, %v2487
        %v2502 = vadd.f32 %v2367, %v2463
        %v2503 = vadd.f32 %v2368, %v2467
        %v2504 = vadd.f32 %v2369, %v2471
        %v2505 = vadd.f32 %v2370, %v2475
        %v2506 = vadd.f32 %v2371, %v2479
        %v2507 = vadd.f32 %v2372, %v2483
        %v2508 = vadd.f32 %v2373, %v2487
        %v2509 = vadd.f32 %v2374, %v2463
        %v2510 = vadd.f32 %v2375, %v2467
        %v2511 = vadd.f32 %v2376, %v2471
        %v2512 = vadd.f32 %v2377, %v2475
        %v2513 = vadd.f32 %v2378, %v2479
        %v2514 = vadd.f32 %v2379, %v2483
        %v2515 = vadd.f32 %v2380, %v2487
        %v2516 = vadd.f32 %v2381, %v2463
        %v2517 = vadd.f32 %v2382, %v2467
        %v2518 = vadd.f32 %v2383, %v2471
        %v2519 = vadd.f32 %v2384, %v2475
        %v2520 = vadd.f32 %v2385, %v2479
        %v2521 = vadd.f32 %v2386, %v2483
        %v2522 = vadd.f32 %v2387, %v2487
        %v2523 = vadd.f32 %v2388, %v2463
        %v2524 = vadd.f32 %v2389, %v2467
        %v2525 = vadd.f32 %v2390, %v2471
        %v2526 = vadd.f32 %v2391, %v2475
        %v2527 = vadd.f32 %v2392, %v2479
        %v2528 = vadd.f32 %v2393, %v2483
        %v2529 = vadd.f32 %v2394, %v2487
        %v2530 = vadd.f32 %v2395, %v2463
        %v2531 = vadd.f32 %v2396, %v2467
        %v2532 = vadd.f32 %v2397, %v2471
        %v2533 = vadd.f32 %v2398, %v2475
        %v2534 = vadd.f32 %v2399, %v2479
        %v2535 = vadd.f32 %v2400, %v2483
        %v2536 = vadd.f32 %v2401, %v2487
        %v2537 = vadd.f32 %v2402, %v2463
        %v2538 = vadd.f32 %v2403, %v2467
        %v2539 = vadd.f32 %v2404, %v2471
        %v2540 = vadd.f32 %v2405, %v2475
        %v2541 = vadd.f32 %v2406, %v2479
        %v2542 = vadd.f32 %v2407, %v2483
        %v2543 = vadd.f32 %v2408, %v2487
        %v2544 = vadd.f32 %v2409, %v2463
        %v2545 = vadd.f32 %v2410, %v2467
        %v2546 = vadd.f32 %v2411, %v2471
        %v2547 = vadd.f32 %v2412, %v2475
        %v2548 = vadd.f32 %v2413, %v2479
        %v2549 = vadd.f32 %v2414, %v2483
        %v2550 = vadd.f32 %v2415, %v2487
        %v2551 = vadd.f32 %v2416, %v2463
        %v2552 = vadd.f32 %v2417, %v2467
        %v2553 = vadd.f32 %v2418, %v2471
        %v2554 = vadd.f32 %v2419, %v2475
        %v2555 = vadd.f32 %v2420, %v2479
        %v2556 = vadd.f32 %v2421, %v2483
        %v2557 = vadd.f32 %v2422, %v2487
        %v2558 = vadd.f32 %v2423, %v2463
        %v2559 = vadd.f32 %v2424, %v2467
        %v2560 = vadd.f32 %v2425, %v2471
        %v2561 = vadd.f32 %v2426, %v2475
        %v2562 = vadd.f32 %v2427, %v2479
        %v2563 = vadd.f32 %v2428, %v2483
        %v2564 = vadd.f32 %v2429, %v2487
        %v2565 = vadd.f32 %v2430, %v2463
        %v2566 = vadd.f32 %v2431, %v2467
        %v2567 = vadd.f32 %v2432, %v2471
        %v2568 = vadd.f32 %v2433, %v2475
        %v2569 = vadd.f32 %v2434, %v2479
        %v2570 = vadd.f32 %v2435, %v2483
        %v2571 = vadd.f32 %v2436, %v2487
        %v2572 = vadd.f32 %v2437, %v2463
        %v2573 = vadd.f32 %v2438, %v2467
        %v2574 = vadd.f32 %v2439, %v2471
        %v2575 = vadd.f32 %v2440, %v2475
        %v2576 = vadd.f32 %v2441, %v2479
        %v2577 = vadd.f32 %v2442, %v2483
        %v2578 = vadd.f32 %v2443, %v2487
        %v2579 = vadd.f32 %v2444, %v2463
        %v2580 = vadd.f32 %v2445, %v2467
        %v2581 = vadd.f32 %v2446, %v2471
        %v2582 = vadd.f32 %v2447, %v2475
        %v2583 = vadd.f32 %v2448, %v2479
        %v2584 = vadd.f32 %v2449, %v2483
        %v2585 = vadd.f32 %v2450, %v2487
        %v2586 = vadd.f32 %v2451, %v2463
        %v2587 = vadd.f32 %v2452, %v2467
        %v2588 = vadd.f32 %v2453, %v2471
        %v2589 = vadd.f32 %v2454, %v2475
        %v2590 = vadd.f32 %v2455, %v2479
        %v2591 = vadd.f32 %v2456, %v2483
        %v2592 = vadd.f32 %v2457, %v2487
        %v2593 = vmax.f32 %v2495, 0.0
        %v2594 = vmax.f32 %v2496, 0.0
        %v2595 = vmax.f32 %v2497, 0.0
        %v2596 = vmax.f32 %v2498, 0.0
        %v2597 = vmax.f32 %v2499, 0.0
        %v2598 = vmax.f32 %v2500, 0.0
        %v2599 = vmax.f32 %v2501, 0.0
        %v2600 = vmax.f32 %v2502, 0.0
        %v2601 = vmax.f32 %v2503, 0.0
        %v2602 = vmax.f32 %v2504, 0.0
        %v2603 = vmax.f32 %v2505, 0.0
        %v2604 = vmax.f32 %v2506, 0.0
        %v2605 = vmax.f32 %v2507, 0.0
        %v2606 = vmax.f32 %v2508, 0.0
        %v2607 = vmax.f32 %v2509, 0.0
        %v2608 = vmax.f32 %v2510, 0.0
        %v2609 = vmax.f32 %v2511, 0.0
        %v2610 = vmax.f32 %v2512, 0.0
        %v2611 = vmax.f32 %v2513, 0.0
        %v2612 = vmax.f32 %v2514, 0.0
        %v2613 = vmax.f32 %v2515, 0.0
        %v2614 = vmax.f32 %v2516, 0.0
        %v2615 = vmax.f32 %v2517, 0.0
        %v2616 = vmax.f32 %v2518, 0.0
        %v2617 = vmax.f32 %v2519, 0.0
        %v2618 = vmax.f32 %v2520, 0.0
        %v2619 = vmax.f32 %v2521, 0.0
        %v2620 = vmax.f32 %v2522, 0.0
        %v2621 = vmax.f32 %v2523, 0.0
        %v2622 = vmax.f32 %v2524, 0.0
        %v2623 = vmax.f32 %v2525, 0.0
        %v2624 = vmax.f32 %v2526, 0.0
        %v2625 = vmax.f32 %v2527, 0.0
        %v2626 = vmax.f32 %v2528, 0.0
        %v2627 = vmax.f32 %v2529, 0.0
        %v2628 = vmax.f32 %v2530, 0.0
        %v2629 = vmax.f32 %v2531, 0.0
        %v2630 = vmax.f32 %v2532, 0.0
        %v2631 = vmax.f32 %v2533, 0.0
        %v2632 = vmax.f32 %v2534, 0.0
        %v2633 = vmax.f32 %v2535, 0.0
        %v2634 = vmax.f32 %v2536, 0.0
        %v2635 = vmax.f32 %v2537, 0.0
        %v2636 = vmax.f32 %v2538, 0.0
        %v2637 = vmax.f32 %v2539, 0.0
        %v2638 = vmax.f32 %v2540, 0.0
        %v2639 = vmax.f32 %v2541, 0.0
        %v2640 = vmax.f32 %v2542, 0.0
        %v2641 = vmax.f32 %v2543, 0.0
        %v2642 = vmax.f32 %v2544, 0.0
        %v2643 = vmax.f32 %v2545, 0.0
        %v2644 = vmax.f32 %v2546, 0.0
        %v2645 = vmax.f32 %v2547, 0.0
        %v2646 = vmax.f32 %v2548, 0.0
        %v2647 = vmax.f32 %v2549, 0.0
        %v2648 = vmax.f32 %v2550, 0.0
        %v2649 = vmax.f32 %v2551, 0.0
        %v2650 = vmax.f32 %v2552, 0.0
        %v2651 = vmax.f32 %v2553, 0.0
        %v2652 = vmax.f32 %v2554, 0.0
        %v2653 = vmax.f32 %v2555, 0.0
        %v2654 = vmax.f32 %v2556, 0.0
        %v2655 = vmax.f32 %v2557, 0.0
        %v2656 = vmax.f32 %v2558, 0.0
        %v2657 = vmax.f32 %v2559, 0.0
        %v2658 = vmax.f32 %v2560, 0.0
        %v2659 = vmax.f32 %v2561, 0.0
        %v2660 = vmax.f32 %v2562, 0.0
        %v2661 = vmax.f32 %v2563, 0.0
        %v2662 = vmax.f32 %v2564, 0.0
        %v2663 = vmax.f32 %v2565, 0.0
        %v2664 = vmax.f32 %v2566, 0.0
        %v2665 = vmax.f32 %v2567, 0.0
        %v2666 = vmax.f32 %v2568, 0.0
        %v2667 = vmax.f32 %v2569, 0.0
        %v2668 = vmax.f32 %v2570, 0.0
        %v2669 = vmax.f32 %v2571, 0.0
        %v2670 = vmax.f32 %v2572, 0.0
        %v2671 = vmax.f32 %v2573, 0.0
        %v2672 = vmax.f32 %v2574, 0.0
        %v2673 = vmax.f32 %v2575, 0.0
        %v2674 = vmax.f32 %v2576, 0.0
        %v2675 = vmax.f32 %v2577, 0.0
        %v2676 = vmax.f32 %v2578, 0.0
        %v2677 = vmax.f32 %v2579, 0.0
        %v2678 = vmax.f32 %v2580, 0.0
        %v2679 = vmax.f32 %v2581, 0.0
        %v2680 = vmax.f32 %v2582, 0.0
        %v2681 = vmax.f32 %v2583, 0.0
        %v2682 = vmax.f32 %v2584, 0.0
        %v2683 = vmax.f32 %v2585, 0.0
        %v2684 = vmax.f32 %v2586, 0.0
        %v2685 = vmax.f32 %v2587, 0.0
        %v2686 = vmax.f32 %v2588, 0.0
        %v2687 = vmax.f32 %v2589, 0.0
        %v2688 = vmax.f32 %v2590, 0.0
        %v2689 = vmax.f32 %v2591, 0.0
        %v2690 = vmax.f32 %v2592, 0.0
        %2789 = vrot.lane.b32.xlu0 %v2593, 64
        %v2790 = vpop.permute.xlu0 %2789
        %2791 = vrot.lane.b32.xlu0 %v2594, 64
        %v2792 = vpop.permute.xlu0 %2791
        %2793 = vrot.lane.b32.xlu0 %v2595, 64
        %v2794 = vpop.permute.xlu0 %2793
        %2795 = vrot.lane.b32.xlu0 %v2596, 64
        %v2796 = vpop.permute.xlu0 %2795
        %2797 = vrot.lane.b32.xlu0 %v2597, 64
        %v2798 = vpop.permute.xlu0 %2797
        %2799 = vrot.lane.b32.xlu0 %v2598, 64
        %v2800 = vpop.permute.xlu0 %2799
        %2801 = vrot.lane.b32.xlu0 %v2599, 64
        %v2802 = vpop.permute.xlu0 %2801
        %2803 = vrot.lane.b32.xlu0 %v2600, 64
        %v2804 = vpop.permute.xlu0 %2803
        %2805 = vrot.lane.b32.xlu0 %v2601, 64
        %v2806 = vpop.permute.xlu0 %2805
        %2807 = vrot.lane.b32.xlu0 %v2602, 64
        %v2808 = vpop.permute.xlu0 %2807
        %2809 = vrot.lane.b32.xlu0 %v2603, 64
        %v2810 = vpop.permute.xlu0 %2809
        %2811 = vrot.lane.b32.xlu0 %v2604, 64
        %v2812 = vpop.permute.xlu0 %2811
        %2813 = vrot.lane.b32.xlu0 %v2605, 64
        %v2814 = vpop.permute.xlu0 %2813
        %2815 = vrot.lane.b32.xlu0 %v2606, 64
        %v2816 = vpop.permute.xlu0 %2815
        %2817 = vrot.lane.b32.xlu0 %v2607, 64
        %v2818 = vpop.permute.xlu0 %2817
        %2819 = vrot.lane.b32.xlu0 %v2608, 64
        %v2820 = vpop.permute.xlu0 %2819
        %2821 = vrot.lane.b32.xlu0 %v2609, 64
        %v2822 = vpop.permute.xlu0 %2821
        %2823 = vrot.lane.b32.xlu0 %v2610, 64
        %v2824 = vpop.permute.xlu0 %2823
        %2825 = vrot.lane.b32.xlu0 %v2611, 64
        %v2826 = vpop.permute.xlu0 %2825
        %2827 = vrot.lane.b32.xlu0 %v2612, 64
        %v2828 = vpop.permute.xlu0 %2827
        %2829 = vrot.lane.b32.xlu0 %v2613, 64
        %v2830 = vpop.permute.xlu0 %2829
        %2831 = vrot.lane.b32.xlu0 %v2614, 64
        %v2832 = vpop.permute.xlu0 %2831
        %2833 = vrot.lane.b32.xlu0 %v2615, 64
        %v2834 = vpop.permute.xlu0 %2833
        %2835 = vrot.lane.b32.xlu0 %v2616, 64
        %v2836 = vpop.permute.xlu0 %2835
        %2837 = vrot.lane.b32.xlu0 %v2617, 64
        %v2838 = vpop.permute.xlu0 %2837
        %2839 = vrot.lane.b32.xlu0 %v2618, 64
        %v2840 = vpop.permute.xlu0 %2839
        %2841 = vrot.lane.b32.xlu0 %v2619, 64
        %v2842 = vpop.permute.xlu0 %2841
        %2843 = vrot.lane.b32.xlu0 %v2620, 64
        %v2844 = vpop.permute.xlu0 %2843
        %2845 = vrot.lane.b32.xlu0 %v2621, 64
        %v2846 = vpop.permute.xlu0 %2845
        %2847 = vrot.lane.b32.xlu0 %v2622, 64
        %v2848 = vpop.permute.xlu0 %2847
        %2849 = vrot.lane.b32.xlu0 %v2623, 64
        %v2850 = vpop.permute.xlu0 %2849
        %2851 = vrot.lane.b32.xlu0 %v2624, 64
        %v2852 = vpop.permute.xlu0 %2851
        %2853 = vrot.lane.b32.xlu0 %v2625, 64
        %v2854 = vpop.permute.xlu0 %2853
        %2855 = vrot.lane.b32.xlu0 %v2626, 64
        %v2856 = vpop.permute.xlu0 %2855
        %2857 = vrot.lane.b32.xlu0 %v2627, 64
        %v2858 = vpop.permute.xlu0 %2857
        %2859 = vrot.lane.b32.xlu0 %v2628, 64
        %v2860 = vpop.permute.xlu0 %2859
        %2861 = vrot.lane.b32.xlu0 %v2629, 64
        %v2862 = vpop.permute.xlu0 %2861
        %2863 = vrot.lane.b32.xlu0 %v2630, 64
        %v2864 = vpop.permute.xlu0 %2863
        %2865 = vrot.lane.b32.xlu0 %v2631, 64
        %v2866 = vpop.permute.xlu0 %2865
        %2867 = vrot.lane.b32.xlu0 %v2632, 64
        %v2868 = vpop.permute.xlu0 %2867
        %2869 = vrot.lane.b32.xlu0 %v2633, 64
        %v2870 = vpop.permute.xlu0 %2869
        %2871 = vrot.lane.b32.xlu0 %v2634, 64
        %v2872 = vpop.permute.xlu0 %2871
        %2873 = vrot.lane.b32.xlu0 %v2635, 64
        %v2874 = vpop.permute.xlu0 %2873
        %2875 = vrot.lane.b32.xlu0 %v2636, 64
        %v2876 = vpop.permute.xlu0 %2875
        %2877 = vrot.lane.b32.xlu0 %v2637, 64
        %v2878 = vpop.permute.xlu0 %2877
        %2879 = vrot.lane.b32.xlu0 %v2638, 64
        %v2880 = vpop.permute.xlu0 %2879
        %2881 = vrot.lane.b32.xlu0 %v2639, 64
        %v2882 = vpop.permute.xlu0 %2881
        %2883 = vrot.lane.b32.xlu0 %v2640, 64
        %v2884 = vpop.permute.xlu0 %2883
        %2885 = vrot.lane.b32.xlu0 %v2641, 64
        %v2886 = vpop.permute.xlu0 %2885
        %2887 = vrot.lane.b32.xlu0 %v2642, 64
        %v2888 = vpop.permute.xlu0 %2887
        %2889 = vrot.lane.b32.xlu0 %v2643, 64
        %v2890 = vpop.permute.xlu0 %2889
        %2891 = vrot.lane.b32.xlu0 %v2644, 64
        %v2892 = vpop.permute.xlu0 %2891
        %2893 = vrot.lane.b32.xlu0 %v2645, 64
        %v2894 = vpop.permute.xlu0 %2893
        %2895 = vrot.lane.b32.xlu0 %v2646, 64
        %v2896 = vpop.permute.xlu0 %2895
        %2897 = vrot.lane.b32.xlu0 %v2647, 64
        %v2898 = vpop.permute.xlu0 %2897
        %2899 = vrot.lane.b32.xlu0 %v2648, 64
        %v2900 = vpop.permute.xlu0 %2899
        %2901 = vrot.lane.b32.xlu0 %v2649, 64
        %v2902 = vpop.permute.xlu0 %2901
        %2903 = vrot.lane.b32.xlu0 %v2650, 64
        %v2904 = vpop.permute.xlu0 %2903
        %2905 = vrot.lane.b32.xlu0 %v2651, 64
        %v2906 = vpop.permute.xlu0 %2905
        %2907 = vrot.lane.b32.xlu0 %v2652, 64
        %v2908 = vpop.permute.xlu0 %2907
        %2909 = vrot.lane.b32.xlu0 %v2653, 64
        %v2910 = vpop.permute.xlu0 %2909
        %2911 = vrot.lane.b32.xlu0 %v2654, 64
        %v2912 = vpop.permute.xlu0 %2911
        %2913 = vrot.lane.b32.xlu0 %v2655, 64
        %v2914 = vpop.permute.xlu0 %2913
        %2915 = vrot.lane.b32.xlu0 %v2656, 64
        %v2916 = vpop.permute.xlu0 %2915
        %2917 = vrot.lane.b32.xlu0 %v2657, 64
        %v2918 = vpop.permute.xlu0 %2917
        %2919 = vrot.lane.b32.xlu0 %v2658, 64
        %v2920 = vpop.permute.xlu0 %2919
        %2921 = vrot.lane.b32.xlu0 %v2659, 64
        %v2922 = vpop.permute.xlu0 %2921
        %2923 = vrot.lane.b32.xlu0 %v2660, 64
        %v2924 = vpop.permute.xlu0 %2923
        %2925 = vrot.lane.b32.xlu0 %v2661, 64
        %v2926 = vpop.permute.xlu0 %2925
        %2927 = vrot.lane.b32.xlu0 %v2662, 64
        %v2928 = vpop.permute.xlu0 %2927
        %2929 = vrot.lane.b32.xlu0 %v2663, 64
        %v2930 = vpop.permute.xlu0 %2929
        %2931 = vrot.lane.b32.xlu0 %v2664, 64
        %v2932 = vpop.permute.xlu0 %2931
        %2933 = vrot.lane.b32.xlu0 %v2665, 64
        %v2934 = vpop.permute.xlu0 %2933
        %2935 = vrot.lane.b32.xlu0 %v2666, 64
        %v2936 = vpop.permute.xlu0 %2935
        %2937 = vrot.lane.b32.xlu0 %v2667, 64
        %v2938 = vpop.permute.xlu0 %2937
        %2939 = vrot.lane.b32.xlu0 %v2668, 64
        %v2940 = vpop.permute.xlu0 %2939
        %2941 = vrot.lane.b32.xlu0 %v2669, 64
        %v2942 = vpop.permute.xlu0 %2941
        %2943 = vrot.lane.b32.xlu0 %v2670, 64
        %v2944 = vpop.permute.xlu0 %2943
        %2945 = vrot.lane.b32.xlu0 %v2671, 64
        %v2946 = vpop.permute.xlu0 %2945
        %2947 = vrot.lane.b32.xlu0 %v2672, 64
        %v2948 = vpop.permute.xlu0 %2947
        %2949 = vrot.lane.b32.xlu0 %v2673, 64
        %v2950 = vpop.permute.xlu0 %2949
        %2951 = vrot.lane.b32.xlu0 %v2674, 64
        %v2952 = vpop.permute.xlu0 %2951
        %2953 = vrot.lane.b32.xlu0 %v2675, 64
        %v2954 = vpop.permute.xlu0 %2953
        %2955 = vrot.lane.b32.xlu0 %v2676, 64
        %v2956 = vpop.permute.xlu0 %2955
        %2957 = vrot.lane.b32.xlu0 %v2677, 64
        %v2958 = vpop.permute.xlu0 %2957
        %2959 = vrot.lane.b32.xlu0 %v2678, 64
        %v2960 = vpop.permute.xlu0 %2959
        %2961 = vrot.lane.b32.xlu0 %v2679, 64
        %v2962 = vpop.permute.xlu0 %2961
        %2963 = vrot.lane.b32.xlu0 %v2680, 64
        %v2964 = vpop.permute.xlu0 %2963
        %2965 = vrot.lane.b32.xlu0 %v2681, 64
        %v2966 = vpop.permute.xlu0 %2965
        %2967 = vrot.lane.b32.xlu0 %v2682, 64
        %v2968 = vpop.permute.xlu0 %2967
        %2969 = vrot.lane.b32.xlu0 %v2683, 64
        %v2970 = vpop.permute.xlu0 %2969
        %2971 = vrot.lane.b32.xlu0 %v2684, 64
        %v2972 = vpop.permute.xlu0 %2971
        %2973 = vrot.lane.b32.xlu0 %v2685, 64
        %v2974 = vpop.permute.xlu0 %2973
        %2975 = vrot.lane.b32.xlu0 %v2686, 64
        %v2976 = vpop.permute.xlu0 %2975
        %2977 = vrot.lane.b32.xlu0 %v2687, 64
        %v2978 = vpop.permute.xlu0 %2977
        %2979 = vrot.lane.b32.xlu0 %v2688, 64
        %v2980 = vpop.permute.xlu0 %2979
        %2981 = vrot.lane.b32.xlu0 %v2689, 64
        %v2982 = vpop.permute.xlu0 %2981
        %2983 = vrot.lane.b32.xlu0 %v2690, 64
        %v2984 = vpop.permute.xlu0 %2983
        %vm2985 = vcmask 523264
        %v2986 = vsel %vm2985, %v2790, %v2792
        %v2987 = vsel %vm2985, %v2792, %v2794
        %v2988 = vsel %vm2985, %v2794, %v2796
        %v2989 = vsel %vm2985, %v2796, %v2798
        %v2990 = vsel %vm2985, %v2798, %v2800
        %v2991 = vsel %vm2985, %v2800, %v2802
        %v2992 = vsel %vm2985, %v2804, %v2806
        %v2993 = vsel %vm2985, %v2806, %v2808
        %v2994 = vsel %vm2985, %v2808, %v2810
        %v2995 = vsel %vm2985, %v2810, %v2812
        %v2996 = vsel %vm2985, %v2812, %v2814
        %v2997 = vsel %vm2985, %v2814, %v2816
        %v2998 = vsel %vm2985, %v2818, %v2820
        %v2999 = vsel %vm2985, %v2820, %v2822
        %v3000 = vsel %vm2985, %v2822, %v2824
        %v3001 = vsel %vm2985, %v2824, %v2826
        %v3002 = vsel %vm2985, %v2826, %v2828
        %v3003 = vsel %vm2985, %v2828, %v2830
        %v3004 = vsel %vm2985, %v2832, %v2834
        %v3005 = vsel %vm2985, %v2834, %v2836
        %v3006 = vsel %vm2985, %v2836, %v2838
        %v3007 = vsel %vm2985, %v2838, %v2840
        %v3008 = vsel %vm2985, %v2840, %v2842
        %v3009 = vsel %vm2985, %v2842, %v2844
        %v3010 = vsel %vm2985, %v2846, %v2848
        %v3011 = vsel %vm2985, %v2848, %v2850
        %v3012 = vsel %vm2985, %v2850, %v2852
        %v3013 = vsel %vm2985, %v2852, %v2854
        %v3014 = vsel %vm2985, %v2854, %v2856
        %v3015 = vsel %vm2985, %v2856, %v2858
        %v3016 = vsel %vm2985, %v2860, %v2862
        %v3017 = vsel %vm2985, %v2862, %v2864
        %v3018 = vsel %vm2985, %v2864, %v2866
        %v3019 = vsel %vm2985, %v2866, %v2868
        %v3020 = vsel %vm2985, %v2868, %v2870
        %v3021 = vsel %vm2985, %v2870, %v2872
        %v3022 = vsel %vm2985, %v2874, %v2876
        %v3023 = vsel %vm2985, %v2876, %v2878
        %v3024 = vsel %vm2985, %v2878, %v2880
        %v3025 = vsel %vm2985, %v2880, %v2882
        %v3026 = vsel %vm2985, %v2882, %v2884
        %v3027 = vsel %vm2985, %v2884, %v2886
        %v3028 = vsel %vm2985, %v2888, %v2890
        %v3029 = vsel %vm2985, %v2890, %v2892
        %v3030 = vsel %vm2985, %v2892, %v2894
        %v3031 = vsel %vm2985, %v2894, %v2896
        %v3032 = vsel %vm2985, %v2896, %v2898
        %v3033 = vsel %vm2985, %v2898, %v2900
        %v3034 = vsel %vm2985, %v2902, %v2904
        %v3035 = vsel %vm2985, %v2904, %v2906
        %v3036 = vsel %vm2985, %v2906, %v2908
        %v3037 = vsel %vm2985, %v2908, %v2910
        %v3038 = vsel %vm2985, %v2910, %v2912
        %v3039 = vsel %vm2985, %v2912, %v2914
        %v3040 = vsel %vm2985, %v2916, %v2918
        %v3041 = vsel %vm2985, %v2918, %v2920
        %v3042 = vsel %vm2985, %v2920, %v2922
        %v3043 = vsel %vm2985, %v2922, %v2924
        %v3044 = vsel %vm2985, %v2924, %v2926
        %v3045 = vsel %vm2985, %v2926, %v2928
        %v3046 = vsel %vm2985, %v2930, %v2932
        %v3047 = vsel %vm2985, %v2932, %v2934
        %v3048 = vsel %vm2985, %v2934, %v2936
        %v3049 = vsel %vm2985, %v2936, %v2938
        %v3050 = vsel %vm2985, %v2938, %v2940
        %v3051 = vsel %vm2985, %v2940, %v2942
        %v3052 = vsel %vm2985, %v2944, %v2946
        %v3053 = vsel %vm2985, %v2946, %v2948
        %v3054 = vsel %vm2985, %v2948, %v2950
        %v3055 = vsel %vm2985, %v2950, %v2952
        %v3056 = vsel %vm2985, %v2952, %v2954
        %v3057 = vsel %vm2985, %v2954, %v2956
        %v3058 = vsel %vm2985, %v2958, %v2960
        %v3059 = vsel %vm2985, %v2960, %v2962
        %v3060 = vsel %vm2985, %v2962, %v2964
        %v3061 = vsel %vm2985, %v2964, %v2966
        %v3062 = vsel %vm2985, %v2966, %v2968
        %v3063 = vsel %vm2985, %v2968, %v2970
        %v3064 = vsel %vm2985, %v2972, %v2974
        %v3065 = vsel %vm2985, %v2974, %v2976
        %v3066 = vsel %vm2985, %v2976, %v2978
        %v3067 = vsel %vm2985, %v2978, %v2980
        %v3068 = vsel %vm2985, %v2980, %v2982
        %v3069 = vsel %vm2985, %v2982, %v2984
        %v3168 = vmax.f32 %v2593, %v2986
        %v3169 = vmax.f32 %v2594, %v2987
        %v3170 = vmax.f32 %v2595, %v2988
        %v3171 = vmax.f32 %v2596, %v2989
        %v3172 = vmax.f32 %v2597, %v2990
        %v3173 = vmax.f32 %v2598, %v2991
        %v3174 = vmax.f32 %v2599, %v2802
        %v3175 = vmax.f32 %v2600, %v2992
        %v3176 = vmax.f32 %v2601, %v2993
        %v3177 = vmax.f32 %v2602, %v2994
        %v3178 = vmax.f32 %v2603, %v2995
        %v3179 = vmax.f32 %v2604, %v2996
        %v3180 = vmax.f32 %v2605, %v2997
        %v3181 = vmax.f32 %v2606, %v2816
        %v3182 = vmax.f32 %v2607, %v2998
        %v3183 = vmax.f32 %v2608, %v2999
        %v3184 = vmax.f32 %v2609, %v3000
        %v3185 = vmax.f32 %v2610, %v3001
        %v3186 = vmax.f32 %v2611, %v3002
        %v3187 = vmax.f32 %v2612, %v3003
        %v3188 = vmax.f32 %v2613, %v2830
        %v3189 = vmax.f32 %v2614, %v3004
        %v3190 = vmax.f32 %v2615, %v3005
        %v3191 = vmax.f32 %v2616, %v3006
        %v3192 = vmax.f32 %v2617, %v3007
        %v3193 = vmax.f32 %v2618, %v3008
        %v3194 = vmax.f32 %v2619, %v3009
        %v3195 = vmax.f32 %v2620, %v2844
        %v3196 = vmax.f32 %v2621, %v3010
        %v3197 = vmax.f32 %v2622, %v3011
        %v3198 = vmax.f32 %v2623, %v3012
        %v3199 = vmax.f32 %v2624, %v3013
        %v3200 = vmax.f32 %v2625, %v3014
        %v3201 = vmax.f32 %v2626, %v3015
        %v3202 = vmax.f32 %v2627, %v2858
        %v3203 = vmax.f32 %v2628, %v3016
        %v3204 = vmax.f32 %v2629, %v3017
        %v3205 = vmax.f32 %v2630, %v3018
        %v3206 = vmax.f32 %v2631, %v3019
        %v3207 = vmax.f32 %v2632, %v3020
        %v3208 = vmax.f32 %v2633, %v3021
        %v3209 = vmax.f32 %v2634, %v2872
        %v3210 = vmax.f32 %v2635, %v3022
        %v3211 = vmax.f32 %v2636, %v3023
        %v3212 = vmax.f32 %v2637, %v3024
        %v3213 = vmax.f32 %v2638, %v3025
        %v3214 = vmax.f32 %v2639, %v3026
        %v3215 = vmax.f32 %v2640, %v3027
        %v3216 = vmax.f32 %v2641, %v2886
        %v3217 = vmax.f32 %v2642, %v3028
        %v3218 = vmax.f32 %v2643, %v3029
        %v3219 = vmax.f32 %v2644, %v3030
        %v3220 = vmax.f32 %v2645, %v3031
        %v3221 = vmax.f32 %v2646, %v3032
        %v3222 = vmax.f32 %v2647, %v3033
        %v3223 = vmax.f32 %v2648, %v2900
        %v3224 = vmax.f32 %v2649, %v3034
        %v3225 = vmax.f32 %v2650, %v3035
        %v3226 = vmax.f32 %v2651, %v3036
        %v3227 = vmax.f32 %v2652, %v3037
        %v3228 = vmax.f32 %v2653, %v3038
        %v3229 = vmax.f32 %v2654, %v3039
        %v3230 = vmax.f32 %v2655, %v2914
        %v3231 = vmax.f32 %v2656, %v3040
        %v3232 = vmax.f32 %v2657, %v3041
        %v3233 = vmax.f32 %v2658, %v3042
        %v3234 = vmax.f32 %v2659, %v3043
        %v3235 = vmax.f32 %v2660, %v3044
        %v3236 = vmax.f32 %v2661, %v3045
        %v3237 = vmax.f32 %v2662, %v2928
        %v3238 = vmax.f32 %v2663, %v3046
        %v3239 = vmax.f32 %v2664, %v3047
        %v3240 = vmax.f32 %v2665, %v3048
        %v3241 = vmax.f32 %v2666, %v3049
        %v3242 = vmax.f32 %v2667, %v3050
        %v3243 = vmax.f32 %v2668, %v3051
        %v3244 = vmax.f32 %v2669, %v2942
        %v3245 = vmax.f32 %v2670, %v3052
        %v3246 = vmax.f32 %v2671, %v3053
        %v3247 = vmax.f32 %v2672, %v3054
        %v3248 = vmax.f32 %v2673, %v3055
        %v3249 = vmax.f32 %v2674, %v3056
        %v3250 = vmax.f32 %v2675, %v3057
        %v3251 = vmax.f32 %v2676, %v2956
        %v3252 = vmax.f32 %v2677, %v3058
        %v3253 = vmax.f32 %v2678, %v3059
        %v3254 = vmax.f32 %v2679, %v3060
        %v3255 = vmax.f32 %v2680, %v3061
        %v3256 = vmax.f32 %v2681, %v3062
        %v3257 = vmax.f32 %v2682, %v3063
        %v3258 = vmax.f32 %v2683, %v2970
        %v3259 = vmax.f32 %v2684, %v3064
        %v3260 = vmax.f32 %v2685, %v3065
        %v3261 = vmax.f32 %v2686, %v3066
        %v3262 = vmax.f32 %v2687, %v3067
        %v3263 = vmax.f32 %v2688, %v3068
        %v3264 = vmax.f32 %v2689, %v3069
        %v3265 = vmax.f32 %v2690, %v2984
        %v3266 = vmax.f32 %v3168, %v3175
        %v3267 = vmax.f32 %v3169, %v3176
        %v3268 = vmax.f32 %v3170, %v3177
        %v3269 = vmax.f32 %v3171, %v3178
        %v3270 = vmax.f32 %v3172, %v3179
        %v3271 = vmax.f32 %v3173, %v3180
        %v3272 = vmax.f32 %v3174, %v3181
        %v3273 = vmax.f32 %v3182, %v3189
        %v3274 = vmax.f32 %v3183, %v3190
        %v3275 = vmax.f32 %v3184, %v3191
        %v3276 = vmax.f32 %v3185, %v3192
        %v3277 = vmax.f32 %v3186, %v3193
        %v3278 = vmax.f32 %v3187, %v3194
        %v3279 = vmax.f32 %v3188, %v3195
        %v3280 = vmax.f32 %v3196, %v3203
        %v3281 = vmax.f32 %v3197, %v3204
        %v3282 = vmax.f32 %v3198, %v3205
        %v3283 = vmax.f32 %v3199, %v3206
        %v3284 = vmax.f32 %v3200, %v3207
        %v3285 = vmax.f32 %v3201, %v3208
        %v3286 = vmax.f32 %v3202, %v3209
        %v3287 = vmax.f32 %v3210, %v3217
        %v3288 = vmax.f32 %v3211, %v3218
        %v3289 = vmax.f32 %v3212, %v3219
        %v3290 = vmax.f32 %v3213, %v3220
        %v3291 = vmax.f32 %v3214, %v3221
        %v3292 = vmax.f32 %v3215, %v3222
        %v3293 = vmax.f32 %v3216, %v3223
        %v3294 = vmax.f32 %v3224, %v3231
        %v3295 = vmax.f32 %v3225, %v3232
        %v3296 = vmax.f32 %v3226, %v3233
        %v3297 = vmax.f32 %v3227, %v3234
        %v3298 = vmax.f32 %v3228, %v3235
        %v3299 = vmax.f32 %v3229, %v3236
        %v3300 = vmax.f32 %v3230, %v3237
        %v3301 = vmax.f32 %v3238, %v3245
        %v3302 = vmax.f32 %v3239, %v3246
        %v3303 = vmax.f32 %v3240, %v3247
        %v3304 = vmax.f32 %v3241, %v3248
        %v3305 = vmax.f32 %v3242, %v3249
        %v3306 = vmax.f32 %v3243, %v3250
        %v3307 = vmax.f32 %v3244, %v3251
        %v3308 = vmax.f32 %v3252, %v3259
        %v3309 = vmax.f32 %v3253, %v3260
        %v3310 = vmax.f32 %v3254, %v3261
        %v3311 = vmax.f32 %v3255, %v3262
        %v3312 = vmax.f32 %v3256, %v3263
        %v3313 = vmax.f32 %v3257, %v3264
        %v3314 = vmax.f32 %v3258, %v3265
        %v3315 = vld [vmem:[%s3] sm:$0xff]
        %v3316 = vld [vmem:[%s3 + $0x8] sm:$0xff]
        %v3317 = vld [vmem:[%s3 + $0x10] sm:$0xff]
        %v3318 = vld [vmem:[%s3 + $0x18] sm:$0xff]
        %v3319 = vld [vmem:[%s3 + $0x20] sm:$0xff]
        %v3320 = vld [vmem:[%s3 + $0x28] sm:$0xff]
        %v3321 = vld [vmem:[%s3 + $0x30] sm:$0xff]
        %v3322 = vld [vmem:[%s3 + $0x38] sm:$0xff]
        %v3323 = vld [vmem:[%s3 + $0x40] sm:$0xff]
        %v3324 = vld [vmem:[%s3 + $0x48] sm:$0xff]
        %v3325 = vld [vmem:[%s3 + $0x50] sm:$0xff]
        %v3326 = vld [vmem:[%s3 + $0x58] sm:$0xff]
        %v3327 = vld [vmem:[%s3 + $0x60] sm:$0xff]
        %v3328 = vld [vmem:[%s3 + $0x68] sm:$0xff]
        %v3329 = vld [vmem:[%s3 + $0x70] sm:$0xff]
        %v3330 = vld [vmem:[%s3 + $0x78] sm:$0xff]
        %v3331 = vld [vmem:[%s3 + $0x80] sm:$0xff]
        %v3332 = vld [vmem:[%s3 + $0x88] sm:$0xff]
        %v3333 = vld [vmem:[%s3 + $0x90] sm:$0xff]
        %v3334 = vld [vmem:[%s3 + $0x98] sm:$0xff]
        %v3335 = vld [vmem:[%s3 + $0xa0] sm:$0xff]
        %v3336 = vld [vmem:[%s3 + $0xa8] sm:$0xff]
        %v3337 = vld [vmem:[%s3 + $0xb0] sm:$0xff]
        %v3338 = vld [vmem:[%s3 + $0xb8] sm:$0xff]
        %v3339 = vld [vmem:[%s3 + $0xc0] sm:$0xff]
        %v3340 = vld [vmem:[%s3 + $0xc8] sm:$0xff]
        %v3341 = vld [vmem:[%s3 + $0xd0] sm:$0xff]
        %v3342 = vld [vmem:[%s3 + $0xd8] sm:$0xff]
        %v3343 = vld [vmem:[%s3 + $0xe0] sm:$0xff]
        %v3344 = vld [vmem:[%s3 + $0xe8] sm:$0xff]
        %v3345 = vld [vmem:[%s3 + $0xf0] sm:$0xff]
        %v3346 = vld [vmem:[%s3 + $0xf8] sm:$0xff]
        %v3347 = vld [vmem:[%s3 + $0x100] sm:$0xff]
        %v3348 = vld [vmem:[%s3 + $0x108] sm:$0xff]
        %v3349 = vld [vmem:[%s3 + $0x110] sm:$0xff]
        %v3350 = vld [vmem:[%s3 + $0x118] sm:$0xff]
        %v3351 = vld [vmem:[%s3 + $0x120] sm:$0xff]
        %v3352 = vld [vmem:[%s3 + $0x128] sm:$0xff]
        %v3353 = vld [vmem:[%s3 + $0x130] sm:$0xff]
        %v3354 = vld [vmem:[%s3 + $0x138] sm:$0xff]
        %v3355 = vld [vmem:[%s3 + $0x140] sm:$0xff]
        %v3356 = vld [vmem:[%s3 + $0x148] sm:$0xff]
        %v3357 = vld [vmem:[%s3 + $0x150] sm:$0xff]
        %v3358 = vld [vmem:[%s3 + $0x158] sm:$0xff]
        %v3359 = vld [vmem:[%s3 + $0x160] sm:$0xff]
        %v3360 = vld [vmem:[%s3 + $0x168] sm:$0xff]
        %v3361 = vld [vmem:[%s3 + $0x170] sm:$0xff]
        %v3362 = vld [vmem:[%s3 + $0x178] sm:$0xff]
        %v3363 = vld [vmem:[%s3 + $0x180] sm:$0xff]
        %v3364 = vld [vmem:[%s3 + $0x188] sm:$0xff]
        %v3365 = vld [vmem:[%s3 + $0x190] sm:$0xff]
        %v3366 = vld [vmem:[%s3 + $0x198] sm:$0xff]
        %v3367 = vld [vmem:[%s3 + $0x1a0] sm:$0xff]
        %v3368 = vld [vmem:[%s3 + $0x1a8] sm:$0xff]
        %v3369 = vld [vmem:[%s3 + $0x1b0] sm:$0xff]
        %v3370 = vld [vmem:[%s3 + $0x1b8] sm:$0xff]
        %v3371 = vld [vmem:[%s3 + $0x1c0] sm:$0xff]
        %v3372 = vld [vmem:[%s3 + $0x1c8] sm:$0xff]
        %v3373 = vld [vmem:[%s3 + $0x1d0] sm:$0xff]
        %v3374 = vld [vmem:[%s3 + $0x1d8] sm:$0xff]
        %v3375 = vld [vmem:[%s3 + $0x1e0] sm:$0xff]
        %v3376 = vld [vmem:[%s3 + $0x1e8] sm:$0xff]
        %v3377 = vld [vmem:[%s3 + $0x1f0] sm:$0xff]
        %v3378 = vld [vmem:[%s3 + $0x1f8] sm:$0xff]
        %v3379 = vld [vmem:[%s3 + $0x200] sm:$0xff]
        %v3380 = vld [vmem:[%s3 + $0x208] sm:$0xff]
        %v3381 = vld [vmem:[%s3 + $0x210] sm:$0xff]
        %v3382 = vld [vmem:[%s3 + $0x218] sm:$0xff]
        %v3383 = vld [vmem:[%s3 + $0x220] sm:$0xff]
        %v3384 = vld [vmem:[%s3 + $0x228] sm:$0xff]
        %v3385 = vld [vmem:[%s3 + $0x230] sm:$0xff]
        %v3386 = vld [vmem:[%s3 + $0x238] sm:$0xff]
        %v3387 = vld [vmem:[%s3 + $0x240] sm:$0xff]
        %v3388 = vld [vmem:[%s3 + $0x248] sm:$0xff]
        %v3389 = vld [vmem:[%s3 + $0x250] sm:$0xff]
        %v3390 = vld [vmem:[%s3 + $0x258] sm:$0xff]
        %v3391 = vld [vmem:[%s3 + $0x260] sm:$0xff]
        %v3392 = vld [vmem:[%s3 + $0x268] sm:$0xff]
        %v3393 = vld [vmem:[%s3 + $0x270] sm:$0xff]
        %v3394 = vld [vmem:[%s3 + $0x278] sm:$0xff]
        %v3395 = vld [vmem:[%s3 + $0x280] sm:$0xff]
        %v3396 = vld [vmem:[%s3 + $0x288] sm:$0xff]
        %v3397 = vld [vmem:[%s3 + $0x290] sm:$0xff]
        %v3398 = vld [vmem:[%s3 + $0x298] sm:$0xff]
        %v3399 = vld [vmem:[%s3 + $0x2a0] sm:$0xff]
        %v3400 = vld [vmem:[%s3 + $0x2a8] sm:$0xff]
        %v3401 = vld [vmem:[%s3 + $0x2b0] sm:$0xff]
        %v3402 = vld [vmem:[%s3 + $0x2b8] sm:$0xff]
        %v3403 = vld [vmem:[%s3 + $0x2c0] sm:$0xff]
        %v3404 = vld [vmem:[%s3 + $0x2c8] sm:$0xff]
        %v3405 = vld [vmem:[%s3 + $0x2d0] sm:$0xff]
        %v3406 = vld [vmem:[%s3 + $0x2d8] sm:$0xff]
        %v3407 = vld [vmem:[%s3 + $0x2e0] sm:$0xff]
        %v3408 = vld [vmem:[%s3 + $0x2e8] sm:$0xff]
        %v3409 = vld [vmem:[%s3 + $0x2f0] sm:$0xff]
        %v3410 = vld [vmem:[%s3 + $0x2f8] sm:$0xff]
        %v3411 = vld [vmem:[%s3 + $0x300] sm:$0xff]
        %v3412 = vld [vmem:[%s3 + $0x308] sm:$0xff]
        %v3413 = vld [vmem:[%s3 + $0x310] sm:$0xff]
        %v3414 = vld [vmem:[%s3 + $0x318] sm:$0xff]
        %v3415 = vld [vmem:[%s3 + $0x320] sm:$0xff]
        %v3416 = vld [vmem:[%s3 + $0x328] sm:$0xff]
        %v3417 = vld [vmem:[%s3 + $0x330] sm:$0xff]
        %v3418 = vld [vmem:[%s3 + $0x338] sm:$0xff]
        %v3419 = vld [vmem:[%s3 + $0x340] sm:$0xff]
        %v3420 = vld [vmem:[%s3 + $0x348] sm:$0xff]
        %v3421 = vld [vmem:[%s3 + $0x350] sm:$0xff]
        %v3422 = vld [vmem:[%s3 + $0x358] sm:$0xff]
        %v3423 = vld [vmem:[%s3 + $0x360] sm:$0xff]
        %v3424 = vld [vmem:[%s3 + $0x368] sm:$0xff]
        %v3425 = vld [vmem:[%s3 + $0x370] sm:$0xff]
        %v3426 = vld [vmem:[%s3 + $0x378] sm:$0xff]
        %v3427 = vld [vmem:[%s3 + $0x380] sm:$0xff]
        %v3428 = vld [vmem:[%s3 + $0x388] sm:$0xff]
        %v3429 = vld [vmem:[%s3 + $0x390] sm:$0xff]
        %v3430 = vld [vmem:[%s3 + $0x398] sm:$0xff]
        %v3431 = vld [vmem:[%s3 + $0x3a0] sm:$0xff]
        %v3432 = vld [vmem:[%s3 + $0x3a8] sm:$0xff]
        %v3433 = vld [vmem:[%s3 + $0x3b0] sm:$0xff]
        %v3434 = vld [vmem:[%s3 + $0x3b8] sm:$0xff]
        %v3435 = vld [vmem:[%s3 + $0x3c0] sm:$0xff]
        %v3436 = vld [vmem:[%s3 + $0x3c8] sm:$0xff]
        %v3437 = vld [vmem:[%s3 + $0x3d0] sm:$0xff]
        %v3438 = vld [vmem:[%s3 + $0x3d8] sm:$0xff]
        %v3439 = vld [vmem:[%s3 + $0x3e0] sm:$0xff]
        %v3440 = vld [vmem:[%s3 + $0x3e8] sm:$0xff]
        %v3441 = vld [vmem:[%s3 + $0x3f0] sm:$0xff]
        %v3442 = vld [vmem:[%s3 + $0x3f8] sm:$0xff]
        %v3443 = vld [vmem:[%s3 + $0x400] sm:$0xff]
        %v3444 = vld [vmem:[%s3 + $0x408] sm:$0xff]
        %v3445 = vld [vmem:[%s3 + $0x410] sm:$0xff]
        %v3446 = vld [vmem:[%s3 + $0x418] sm:$0xff]
        %v3447 = vld [vmem:[%s3 + $0x420] sm:$0xff]
        %v3448 = vld [vmem:[%s3 + $0x428] sm:$0xff]
        %v3449 = vld [vmem:[%s3 + $0x430] sm:$0xff]
        %v3450 = vld [vmem:[%s3 + $0x438] sm:$0xff]
        %v3451 = vld [vmem:[%s3 + $0x440] sm:$0xff]
        %v3452 = vld [vmem:[%s3 + $0x448] sm:$0xff]
        %v3453 = vld [vmem:[%s3 + $0x450] sm:$0xff]
        %v3454 = vld [vmem:[%s3 + $0x458] sm:$0xff]
        %v3455 = vld [vmem:[%s3 + $0x460] sm:$0xff]
        %v3456 = vld [vmem:[%s3 + $0x468] sm:$0xff]
        %v3457 = vld [vmem:[%s3 + $0x470] sm:$0xff]
        %v3458 = vld [vmem:[%s3 + $0x478] sm:$0xff]
        %v3459 = vld [vmem:[%s3 + $0x480] sm:$0xff]
        %v3460 = vld [vmem:[%s3 + $0x488] sm:$0xff]
        %v3461 = vld [vmem:[%s3 + $0x490] sm:$0xff]
        %v3462 = vld [vmem:[%s3 + $0x498] sm:$0xff]
        %v3463 = vld [vmem:[%s3 + $0x4a0] sm:$0xff]
        %v3464 = vld [vmem:[%s3 + $0x4a8] sm:$0xff]
        %v3465 = vld [vmem:[%s3 + $0x4b0] sm:$0xff]
        %v3466 = vld [vmem:[%s3 + $0x4b8] sm:$0xff]
        %v3467 = vld [vmem:[%s3 + $0x4c0] sm:$0xff]
        %v3468 = vld [vmem:[%s3 + $0x4c8] sm:$0xff]
        %v3469 = vld [vmem:[%s3 + $0x4d0] sm:$0xff]
        %v3470 = vld [vmem:[%s3 + $0x4d8] sm:$0xff]
        %v3471 = vld [vmem:[%s3 + $0x4e0] sm:$0xff]
        %v3472 = vld [vmem:[%s3 + $0x4e8] sm:$0xff]
        %v3473 = vld [vmem:[%s3 + $0x4f0] sm:$0xff]
        %v3474 = vld [vmem:[%s3 + $0x4f8] sm:$0xff]
        %v3475 = vld [vmem:[%s3 + $0x500] sm:$0xff]
        %v3476 = vld [vmem:[%s3 + $0x508] sm:$0xff]
        %v3477 = vld [vmem:[%s3 + $0x510] sm:$0xff]
        %v3478 = vld [vmem:[%s3 + $0x518] sm:$0xff]
        %v3479 = vld [vmem:[%s3 + $0x520] sm:$0xff]
        %v3480 = vld [vmem:[%s3 + $0x528] sm:$0xff]
        %v3481 = vld [vmem:[%s3 + $0x530] sm:$0xff]
        %v3482 = vld [vmem:[%s3 + $0x538] sm:$0xff]
        %v3483 = vld [vmem:[%s3 + $0x540] sm:$0xff]
        %v3484 = vld [vmem:[%s3 + $0x548] sm:$0xff]
        %v3485 = vld [vmem:[%s3 + $0x550] sm:$0xff]
        %v3486 = vld [vmem:[%s3 + $0x558] sm:$0xff]
        %v3487 = vld [vmem:[%s3 + $0x560] sm:$0xff]
        %v3488 = vld [vmem:[%s3 + $0x568] sm:$0xff]
        %v3489 = vld [vmem:[%s3 + $0x570] sm:$0xff]
        %v3490 = vld [vmem:[%s3 + $0x578] sm:$0xff]
        %v3491 = vld [vmem:[%s3 + $0x580] sm:$0xff]
        %v3492 = vld [vmem:[%s3 + $0x588] sm:$0xff]
        %v3493 = vld [vmem:[%s3 + $0x590] sm:$0xff]
        %v3494 = vld [vmem:[%s3 + $0x598] sm:$0xff]
        %v3495 = vld [vmem:[%s3 + $0x5a0] sm:$0xff]
        %v3496 = vld [vmem:[%s3 + $0x5a8] sm:$0xff]
        %v3497 = vld [vmem:[%s3 + $0x5b0] sm:$0xff]
        %v3498 = vld [vmem:[%s3 + $0x5b8] sm:$0xff]
        %v3499 = vld [vmem:[%s3 + $0x5c0] sm:$0xff]
        %v3500 = vld [vmem:[%s3 + $0x5c8] sm:$0xff]
        %v3501 = vld [vmem:[%s3 + $0x5d0] sm:$0xff]
        %v3502 = vld [vmem:[%s3 + $0x5d8] sm:$0xff]
        %v3503 = vld [vmem:[%s3 + $0x5e0] sm:$0xff]
        %v3504 = vld [vmem:[%s3 + $0x5e8] sm:$0xff]
        %v3505 = vld [vmem:[%s3 + $0x5f0] sm:$0xff]
        %v3506 = vld [vmem:[%s3 + $0x5f8] sm:$0xff]
        %v3507 = vld [vmem:[%s3 + $0x600] sm:$0xff]
        %v3508 = vld [vmem:[%s3 + $0x608] sm:$0xff]
        %v3509 = vld [vmem:[%s3 + $0x610] sm:$0xff]
        %v3510 = vld [vmem:[%s3 + $0x618] sm:$0xff]
        %v3511 = vld [vmem:[%s3 + $0x620] sm:$0xff]
        %v3512 = vld [vmem:[%s3 + $0x628] sm:$0xff]
        %v3513 = vld [vmem:[%s3 + $0x630] sm:$0xff]
        %v3514 = vld [vmem:[%s3 + $0x638] sm:$0xff]
        %v3515 = vld [vmem:[%s3 + $0x640] sm:$0xff]
        %v3516 = vld [vmem:[%s3 + $0x648] sm:$0xff]
        %v3517 = vld [vmem:[%s3 + $0x650] sm:$0xff]
        %v3518 = vld [vmem:[%s3 + $0x658] sm:$0xff]
        %v3519 = vld [vmem:[%s3 + $0x660] sm:$0xff]
        %v3520 = vld [vmem:[%s3 + $0x668] sm:$0xff]
        %v3521 = vld [vmem:[%s3 + $0x670] sm:$0xff]
        %v3522 = vld [vmem:[%s3 + $0x678] sm:$0xff]
        %v3523 = vld [vmem:[%s3 + $0x680] sm:$0xff]
        %v3524 = vld [vmem:[%s3 + $0x688] sm:$0xff]
        %v3525 = vld [vmem:[%s3 + $0x690] sm:$0xff]
        %v3526 = vld [vmem:[%s3 + $0x698] sm:$0xff]
        %v3527 = vld [vmem:[%s3 + $0x6a0] sm:$0xff]
        %v3528 = vld [vmem:[%s3 + $0x6a8] sm:$0xff]
        %v3529 = vld [vmem:[%s3 + $0x6b0] sm:$0xff]
        %v3530 = vld [vmem:[%s3 + $0x6b8] sm:$0xff]
        %v3531 = vld [vmem:[%s3 + $0x6c0] sm:$0xff]
        %v3532 = vld [vmem:[%s3 + $0x6c8] sm:$0xff]
        %v3533 = vld [vmem:[%s3 + $0x6d0] sm:$0xff]
        %v3534 = vld [vmem:[%s3 + $0x6d8] sm:$0xff]
        %v3535 = vld [vmem:[%s3 + $0x6e0] sm:$0xff]
        %v3536 = vld [vmem:[%s3 + $0x6e8] sm:$0xff]
        %v3537 = vld [vmem:[%s3 + $0x6f0] sm:$0xff]
        %v3538 = vld [vmem:[%s3 + $0x6f8] sm:$0xff]
        %v3539 = vld [vmem:[%s3 + $0x700] sm:$0xff]
        %v3540 = vld [vmem:[%s3 + $0x708] sm:$0xff]
        %v3541 = vld [vmem:[%s3 + $0x710] sm:$0xff]
        %v3542 = vld [vmem:[%s3 + $0x718] sm:$0xff]
        %v3543 = vld [vmem:[%s3 + $0x720] sm:$0xff]
        %v3544 = vld [vmem:[%s3 + $0x728] sm:$0xff]
        %v3545 = vld [vmem:[%s3 + $0x730] sm:$0xff]
        %v3546 = vld [vmem:[%s3 + $0x738] sm:$0xff]
        %v3547 = vld [vmem:[%s3 + $0x740] sm:$0xff]
        %v3548 = vld [vmem:[%s3 + $0x748] sm:$0xff]
        %v3549 = vld [vmem:[%s3 + $0x750] sm:$0xff]
        %v3550 = vld [vmem:[%s3 + $0x758] sm:$0xff]
        %v3551 = vld [vmem:[%s3 + $0x760] sm:$0xff]
        %v3552 = vld [vmem:[%s3 + $0x768] sm:$0xff]
        %v3553 = vld [vmem:[%s3 + $0x770] sm:$0xff]
        %v3554 = vld [vmem:[%s3 + $0x778] sm:$0xff]
        %v3555 = vld [vmem:[%s3 + $0x780] sm:$0xff]
        %v3556 = vld [vmem:[%s3 + $0x788] sm:$0xff]
        %v3557 = vld [vmem:[%s3 + $0x790] sm:$0xff]
        %v3558 = vld [vmem:[%s3 + $0x798] sm:$0xff]
        %v3559 = vld [vmem:[%s3 + $0x7a0] sm:$0xff]
        %v3560 = vld [vmem:[%s3 + $0x7a8] sm:$0xff]
        %v3561 = vld [vmem:[%s3 + $0x7b0] sm:$0xff]
        %v3562 = vld [vmem:[%s3 + $0x7b8] sm:$0xff]
        %v3563 = vld [vmem:[%s3 + $0x7c0] sm:$0xff]
        %v3564 = vld [vmem:[%s3 + $0x7c8] sm:$0xff]
        %v3565 = vld [vmem:[%s3 + $0x7d0] sm:$0xff]
        %v3566 = vld [vmem:[%s3 + $0x7d8] sm:$0xff]
        %v3567 = vld [vmem:[%s3 + $0x7e0] sm:$0xff]
        %v3568 = vld [vmem:[%s3 + $0x7e8] sm:$0xff]
        %v3569 = vld [vmem:[%s3 + $0x7f0] sm:$0xff]
        %v3570 = vld [vmem:[%s3 + $0x7f8] sm:$0xff]
        %v3571 = vld [vmem:[%s3 + $0x800] sm:$0xff]
        %v3572 = vld [vmem:[%s3 + $0x808] sm:$0xff]
        %v3573 = vld [vmem:[%s3 + $0x810] sm:$0xff]
        %v3574 = vld [vmem:[%s3 + $0x818] sm:$0xff]
        %v3575 = vld [vmem:[%s3 + $0x820] sm:$0xff]
        %v3576 = vld [vmem:[%s3 + $0x828] sm:$0xff]
        %v3577 = vld [vmem:[%s3 + $0x830] sm:$0xff]
        %v3578 = vld [vmem:[%s3 + $0x838] sm:$0xff]
        %v3579 = vld [vmem:[%s3 + $0x840] sm:$0xff]
        %v3580 = vld [vmem:[%s3 + $0x848] sm:$0xff]
        %v3581 = vld [vmem:[%s3 + $0x850] sm:$0xff]
        %v3582 = vld [vmem:[%s3 + $0x858] sm:$0xff]
        %v3583 = vld [vmem:[%s3 + $0x860] sm:$0xff]
        %v3584 = vld [vmem:[%s3 + $0x868] sm:$0xff]
        %v3585 = vld [vmem:[%s3 + $0x870] sm:$0xff]
        %v3586 = vld [vmem:[%s3 + $0x878] sm:$0xff]
        %v3587 = vld [vmem:[%s3 + $0x880] sm:$0xff]
        %v3588 = vld [vmem:[%s3 + $0x888] sm:$0xff]
        %v3589 = vld [vmem:[%s3 + $0x890] sm:$0xff]
        %v3590 = vld [vmem:[%s3 + $0x898] sm:$0xff]
        %v3591 = vld [vmem:[%s3 + $0x8a0] sm:$0xff]
        %v3592 = vld [vmem:[%s3 + $0x8a8] sm:$0xff]
        %v3593 = vld [vmem:[%s3 + $0x8b0] sm:$0xff]
        %v3594 = vld [vmem:[%s3 + $0x8b8] sm:$0xff]
        %v3595 = vld [vmem:[%s3 + $0x8c0] sm:$0xff]
        %v3596 = vld [vmem:[%s3 + $0x8c8] sm:$0xff]
        %v3597 = vld [vmem:[%s3 + $0x8d0] sm:$0xff]
        %v3598 = vld [vmem:[%s3 + $0x8d8] sm:$0xff]
        %v3599 = vld [vmem:[%s3 + $0x8e0] sm:$0xff]
        %v3600 = vld [vmem:[%s3 + $0x8e8] sm:$0xff]
        %v3601 = vld [vmem:[%s3 + $0x8f0] sm:$0xff]
        %v3602 = vld [vmem:[%s3 + $0x8f8] sm:$0xff]
        %v3603 = vld [vmem:[%s3 + $0x900] sm:$0xff]
        %v3604 = vld [vmem:[%s3 + $0x908] sm:$0xff]
        %v3605 = vld [vmem:[%s3 + $0x910] sm:$0xff]
        %v3606 = vld [vmem:[%s3 + $0x918] sm:$0xff]
        %v3607 = vld [vmem:[%s3 + $0x920] sm:$0xff]
        %v3608 = vld [vmem:[%s3 + $0x928] sm:$0xff]
        %v3609 = vld [vmem:[%s3 + $0x930] sm:$0xff]
        %v3610 = vld [vmem:[%s3 + $0x938] sm:$0xff]
        %v3611 = vld [vmem:[%s3 + $0x940] sm:$0xff]
        %v3612 = vld [vmem:[%s3 + $0x948] sm:$0xff]
        %v3613 = vld [vmem:[%s3 + $0x950] sm:$0xff]
        %v3614 = vld [vmem:[%s3 + $0x958] sm:$0xff]
        %v3615 = vld [vmem:[%s3 + $0x960] sm:$0xff]
        %v3616 = vld [vmem:[%s3 + $0x968] sm:$0xff]
        %v3617 = vld [vmem:[%s3 + $0x970] sm:$0xff]
        %v3618 = vld [vmem:[%s3 + $0x978] sm:$0xff]
        %v3619 = vld [vmem:[%s3 + $0x980] sm:$0xff]
        %v3620 = vld [vmem:[%s3 + $0x988] sm:$0xff]
        %v3621 = vld [vmem:[%s3 + $0x990] sm:$0xff]
        %v3622 = vld [vmem:[%s3 + $0x998] sm:$0xff]
        %v3623 = vld [vmem:[%s3 + $0x9a0] sm:$0xff]
        %v3624 = vld [vmem:[%s3 + $0x9a8] sm:$0xff]
        %v3625 = vld [vmem:[%s3 + $0x9b0] sm:$0xff]
        %v3626 = vld [vmem:[%s3 + $0x9b8] sm:$0xff]
        %s3627 = scalar_lea.vmem %s3, 2496
        %v3628 = vld [vmem:[%s3627] sm:$0xff]
        %v3629 = vld [vmem:[%s3627 + $0x8] sm:$0xff]
        %v3630 = vld [vmem:[%s3627 + $0x10] sm:$0xff]
        %v3631 = vld [vmem:[%s3627 + $0x18] sm:$0xff]
        %v3632 = vld [vmem:[%s3627 + $0x20] sm:$0xff]
        %v3633 = vld [vmem:[%s3627 + $0x28] sm:$0xff]
        %v3634 = vld [vmem:[%s3627 + $0x30] sm:$0xff]
        %v3635 = vld [vmem:[%s3627 + $0x38] sm:$0xff]
        %v3636 = vld [vmem:[%s3627 + $0x40] sm:$0xff]
        %v3637 = vld [vmem:[%s3627 + $0x48] sm:$0xff]
        %v3638 = vld [vmem:[%s3627 + $0x50] sm:$0xff]
        %v3639 = vld [vmem:[%s3627 + $0x58] sm:$0xff]
        %v3640 = vld [vmem:[%s3627 + $0x60] sm:$0xff]
        %v3641 = vld [vmem:[%s3627 + $0x68] sm:$0xff]
        %v3642 = vld [vmem:[%s3627 + $0x70] sm:$0xff]
        %v3643 = vld [vmem:[%s3627 + $0x78] sm:$0xff]
        %v3644 = vld [vmem:[%s3627 + $0x80] sm:$0xff]
        %v3645 = vld [vmem:[%s3627 + $0x88] sm:$0xff]
        %v3646 = vld [vmem:[%s3627 + $0x90] sm:$0xff]
        %v3647 = vld [vmem:[%s3627 + $0x98] sm:$0xff]
        %v3648 = vld [vmem:[%s3627 + $0xa0] sm:$0xff]
        %v3649 = vld [vmem:[%s3627 + $0xa8] sm:$0xff]
        %v3650 = vld [vmem:[%s3627 + $0xb0] sm:$0xff]
        %v3651 = vld [vmem:[%s3627 + $0xb8] sm:$0xff]
        %v3652 = vld [vmem:[%s3627 + $0xc0] sm:$0xff]
        %v3653 = vld [vmem:[%s3627 + $0xc8] sm:$0xff]
        %v3654 = vld [vmem:[%s3627 + $0xd0] sm:$0xff]
        %v3655 = vld [vmem:[%s3627 + $0xd8] sm:$0xff]
        %v3656 = vld [vmem:[%s3627 + $0xe0] sm:$0xff]
        %v3657 = vld [vmem:[%s3627 + $0xe8] sm:$0xff]
        %v3658 = vld [vmem:[%s3627 + $0xf0] sm:$0xff]
        %v3659 = vld [vmem:[%s3627 + $0xf8] sm:$0xff]
        %v3660 = vld [vmem:[%s3627 + $0x100] sm:$0xff]
        %v3661 = vld [vmem:[%s3627 + $0x108] sm:$0xff]
        %v3662 = vld [vmem:[%s3627 + $0x110] sm:$0xff]
        %v3663 = vld [vmem:[%s3627 + $0x118] sm:$0xff]
        %v3664 = vld [vmem:[%s3627 + $0x120] sm:$0xff]
        %v3665 = vld [vmem:[%s3627 + $0x128] sm:$0xff]
        %v3666 = vld [vmem:[%s3627 + $0x130] sm:$0xff]
        %v3667 = vld [vmem:[%s3627 + $0x138] sm:$0xff]
        %v3668 = vld [vmem:[%s3627 + $0x140] sm:$0xff]
        %v3669 = vld [vmem:[%s3627 + $0x148] sm:$0xff]
        %v3670 = vld [vmem:[%s3627 + $0x150] sm:$0xff]
        %v3671 = vld [vmem:[%s3627 + $0x158] sm:$0xff]
        %v3672 = vld [vmem:[%s3627 + $0x160] sm:$0xff]
        %v3673 = vld [vmem:[%s3627 + $0x168] sm:$0xff]
        %v3674 = vld [vmem:[%s3627 + $0x170] sm:$0xff]
        %v3675 = vld [vmem:[%s3627 + $0x178] sm:$0xff]
        %v3676 = vld [vmem:[%s3627 + $0x180] sm:$0xff]
        %v3677 = vld [vmem:[%s3627 + $0x188] sm:$0xff]
        %v3678 = vld [vmem:[%s3627 + $0x190] sm:$0xff]
        %v3679 = vld [vmem:[%s3627 + $0x198] sm:$0xff]
        %v3680 = vld [vmem:[%s3627 + $0x1a0] sm:$0xff]
        %v3681 = vld [vmem:[%s3627 + $0x1a8] sm:$0xff]
        %v3682 = vld [vmem:[%s3627 + $0x1b0] sm:$0xff]
        %v3683 = vld [vmem:[%s3627 + $0x1b8] sm:$0xff]
        %v3684 = vld [vmem:[%s3627 + $0x1c0] sm:$0xff]
        %v3685 = vld [vmem:[%s3627 + $0x1c8] sm:$0xff]
        %v3686 = vld [vmem:[%s3627 + $0x1d0] sm:$0xff]
        %v3687 = vld [vmem:[%s3627 + $0x1d8] sm:$0xff]
        %v3688 = vld [vmem:[%s3627 + $0x1e0] sm:$0xff]
        %v3689 = vld [vmem:[%s3627 + $0x1e8] sm:$0xff]
        %v3690 = vld [vmem:[%s3627 + $0x1f0] sm:$0xff]
        %v3691 = vld [vmem:[%s3627 + $0x1f8] sm:$0xff]
        %v3692 = vld [vmem:[%s3627 + $0x200] sm:$0xff]
        %v3693 = vld [vmem:[%s3627 + $0x208] sm:$0xff]
        %v3694 = vld [vmem:[%s3627 + $0x210] sm:$0xff]
        %v3695 = vld [vmem:[%s3627 + $0x218] sm:$0xff]
        %v3696 = vld [vmem:[%s3627 + $0x220] sm:$0xff]
        %v3697 = vld [vmem:[%s3627 + $0x228] sm:$0xff]
        %v3698 = vld [vmem:[%s3627 + $0x230] sm:$0xff]
        %v3699 = vld [vmem:[%s3627 + $0x238] sm:$0xff]
        %v3700 = vld [vmem:[%s3627 + $0x240] sm:$0xff]
        %v3701 = vld [vmem:[%s3627 + $0x248] sm:$0xff]
        %v3702 = vld [vmem:[%s3627 + $0x250] sm:$0xff]
        %v3703 = vld [vmem:[%s3627 + $0x258] sm:$0xff]
        %v3704 = vld [vmem:[%s3627 + $0x260] sm:$0xff]
        %v3705 = vld [vmem:[%s3627 + $0x268] sm:$0xff]
        %v3706 = vld [vmem:[%s3627 + $0x270] sm:$0xff]
        %v3707 = vld [vmem:[%s3627 + $0x278] sm:$0xff]
        %v3708 = vld [vmem:[%s3627 + $0x280] sm:$0xff]
        %v3709 = vld [vmem:[%s3627 + $0x288] sm:$0xff]
        %v3710 = vld [vmem:[%s3627 + $0x290] sm:$0xff]
        %v3711 = vld [vmem:[%s3627 + $0x298] sm:$0xff]
        %v3712 = vld [vmem:[%s3627 + $0x2a0] sm:$0xff]
        %v3713 = vld [vmem:[%s3627 + $0x2a8] sm:$0xff]
        %v3714 = vld [vmem:[%s3627 + $0x2b0] sm:$0xff]
        %v3715 = vld [vmem:[%s3627 + $0x2b8] sm:$0xff]
        %v3716 = vld [vmem:[%s3627 + $0x2c0] sm:$0xff]
        %v3717 = vld [vmem:[%s3627 + $0x2c8] sm:$0xff]
        %v3718 = vld [vmem:[%s3627 + $0x2d0] sm:$0xff]
        %v3719 = vld [vmem:[%s3627 + $0x2d8] sm:$0xff]
        %v3720 = vld [vmem:[%s3627 + $0x2e0] sm:$0xff]
        %v3721 = vld [vmem:[%s3627 + $0x2e8] sm:$0xff]
        %v3722 = vld [vmem:[%s3627 + $0x2f0] sm:$0xff]
        %v3723 = vld [vmem:[%s3627 + $0x2f8] sm:$0xff]
        %v3724 = vld [vmem:[%s3627 + $0x300] sm:$0xff]
        %v3725 = vld [vmem:[%s3627 + $0x308] sm:$0xff]
        %v3726 = vld [vmem:[%s3627 + $0x310] sm:$0xff]
        %v3727 = vld [vmem:[%s3627 + $0x318] sm:$0xff]
        %v3728 = vld [vmem:[%s3627 + $0x320] sm:$0xff]
        %v3729 = vld [vmem:[%s3627 + $0x328] sm:$0xff]
        %v3730 = vld [vmem:[%s3627 + $0x330] sm:$0xff]
        %v3731 = vld [vmem:[%s3627 + $0x338] sm:$0xff]
        %v3732 = vld [vmem:[%s3627 + $0x340] sm:$0xff]
        %v3733 = vld [vmem:[%s3627 + $0x348] sm:$0xff]
        %v3734 = vld [vmem:[%s3627 + $0x350] sm:$0xff]
        %v3735 = vld [vmem:[%s3627 + $0x358] sm:$0xff]
        %v3736 = vld [vmem:[%s3627 + $0x360] sm:$0xff]
        %v3737 = vld [vmem:[%s3627 + $0x368] sm:$0xff]
        %v3738 = vld [vmem:[%s3627 + $0x370] sm:$0xff]
        %v3739 = vld [vmem:[%s3627 + $0x378] sm:$0xff]
        %v3740 = vld [vmem:[%s3627 + $0x380] sm:$0xff]
        %v3741 = vld [vmem:[%s3627 + $0x388] sm:$0xff]
        %v3742 = vld [vmem:[%s3627 + $0x390] sm:$0xff]
        %v3743 = vld [vmem:[%s3627 + $0x398] sm:$0xff]
        %v3744 = vld [vmem:[%s3627 + $0x3a0] sm:$0xff]
        %v3745 = vld [vmem:[%s3627 + $0x3a8] sm:$0xff]
        %v3746 = vld [vmem:[%s3627 + $0x3b0] sm:$0xff]
        %v3747 = vld [vmem:[%s3627 + $0x3b8] sm:$0xff]
        %v3748 = vld [vmem:[%s3627 + $0x3c0] sm:$0xff]
        %v3749 = vld [vmem:[%s3627 + $0x3c8] sm:$0xff]
        %v3750 = vld [vmem:[%s3627 + $0x3d0] sm:$0xff]
        %v3751 = vld [vmem:[%s3627 + $0x3d8] sm:$0xff]
        %v3752 = vld [vmem:[%s3627 + $0x3e0] sm:$0xff]
        %v3753 = vld [vmem:[%s3627 + $0x3e8] sm:$0xff]
        %v3754 = vld [vmem:[%s3627 + $0x3f0] sm:$0xff]
        %v3755 = vld [vmem:[%s3627 + $0x3f8] sm:$0xff]
        %v3756 = vld [vmem:[%s3627 + $0x400] sm:$0xff]
        %v3757 = vld [vmem:[%s3627 + $0x408] sm:$0xff]
        %v3758 = vld [vmem:[%s3627 + $0x410] sm:$0xff]
        %v3759 = vld [vmem:[%s3627 + $0x418] sm:$0xff]
        %v3760 = vld [vmem:[%s3627 + $0x420] sm:$0xff]
        %v3761 = vld [vmem:[%s3627 + $0x428] sm:$0xff]
        %v3762 = vld [vmem:[%s3627 + $0x430] sm:$0xff]
        %v3763 = vld [vmem:[%s3627 + $0x438] sm:$0xff]
        %v3764 = vld [vmem:[%s3627 + $0x440] sm:$0xff]
        %v3765 = vld [vmem:[%s3627 + $0x448] sm:$0xff]
        %v3766 = vld [vmem:[%s3627 + $0x450] sm:$0xff]
        %v3767 = vld [vmem:[%s3627 + $0x458] sm:$0xff]
        %v3768 = vld [vmem:[%s3627 + $0x460] sm:$0xff]
        %v3769 = vld [vmem:[%s3627 + $0x468] sm:$0xff]
        %v3770 = vld [vmem:[%s3627 + $0x470] sm:$0xff]
        %v3771 = vld [vmem:[%s3627 + $0x478] sm:$0xff]
        %v3772 = vld [vmem:[%s3627 + $0x480] sm:$0xff]
        %v3773 = vld [vmem:[%s3627 + $0x488] sm:$0xff]
        %v3774 = vld [vmem:[%s3627 + $0x490] sm:$0xff]
        %v3775 = vld [vmem:[%s3627 + $0x498] sm:$0xff]
        %v3776 = vld [vmem:[%s3627 + $0x4a0] sm:$0xff]
        %v3777 = vld [vmem:[%s3627 + $0x4a8] sm:$0xff]
        %v3778 = vld [vmem:[%s3627 + $0x4b0] sm:$0xff]
        %v3779 = vld [vmem:[%s3627 + $0x4b8] sm:$0xff]
        %v3780 = vld [vmem:[%s3627 + $0x4c0] sm:$0xff]
        %v3781 = vld [vmem:[%s3627 + $0x4c8] sm:$0xff]
        %v3782 = vld [vmem:[%s3627 + $0x4d0] sm:$0xff]
        %v3783 = vld [vmem:[%s3627 + $0x4d8] sm:$0xff]
        %v3784 = vld [vmem:[%s3627 + $0x4e0] sm:$0xff]
        %v3785 = vld [vmem:[%s3627 + $0x4e8] sm:$0xff]
        %v3786 = vld [vmem:[%s3627 + $0x4f0] sm:$0xff]
        %v3787 = vld [vmem:[%s3627 + $0x4f8] sm:$0xff]
        %v3788 = vld [vmem:[%s3627 + $0x500] sm:$0xff]
        %v3789 = vld [vmem:[%s3627 + $0x508] sm:$0xff]
        %v3790 = vld [vmem:[%s3627 + $0x510] sm:$0xff]
        %v3791 = vld [vmem:[%s3627 + $0x518] sm:$0xff]
        %v3792 = vld [vmem:[%s3627 + $0x520] sm:$0xff]
        %v3793 = vld [vmem:[%s3627 + $0x528] sm:$0xff]
        %v3794 = vld [vmem:[%s3627 + $0x530] sm:$0xff]
        %v3795 = vld [vmem:[%s3627 + $0x538] sm:$0xff]
        %v3796 = vld [vmem:[%s3627 + $0x540] sm:$0xff]
        %v3797 = vld [vmem:[%s3627 + $0x548] sm:$0xff]
        %v3798 = vld [vmem:[%s3627 + $0x550] sm:$0xff]
        %v3799 = vld [vmem:[%s3627 + $0x558] sm:$0xff]
        %v3800 = vld [vmem:[%s3627 + $0x560] sm:$0xff]
        %v3801 = vld [vmem:[%s3627 + $0x568] sm:$0xff]
        %v3802 = vld [vmem:[%s3627 + $0x570] sm:$0xff]
        %v3803 = vld [vmem:[%s3627 + $0x578] sm:$0xff]
        %v3804 = vld [vmem:[%s3627 + $0x580] sm:$0xff]
        %v3805 = vld [vmem:[%s3627 + $0x588] sm:$0xff]
        %v3806 = vld [vmem:[%s3627 + $0x590] sm:$0xff]
        %v3807 = vld [vmem:[%s3627 + $0x598] sm:$0xff]
        %v3808 = vld [vmem:[%s3627 + $0x5a0] sm:$0xff]
        %v3809 = vld [vmem:[%s3627 + $0x5a8] sm:$0xff]
        %v3810 = vld [vmem:[%s3627 + $0x5b0] sm:$0xff]
        %v3811 = vld [vmem:[%s3627 + $0x5b8] sm:$0xff]
        %v3812 = vld [vmem:[%s3627 + $0x5c0] sm:$0xff]
        %v3813 = vld [vmem:[%s3627 + $0x5c8] sm:$0xff]
        %v3814 = vld [vmem:[%s3627 + $0x5d0] sm:$0xff]
        %v3815 = vld [vmem:[%s3627 + $0x5d8] sm:$0xff]
        %v3816 = vld [vmem:[%s3627 + $0x5e0] sm:$0xff]
        %v3817 = vld [vmem:[%s3627 + $0x5e8] sm:$0xff]
        %v3818 = vld [vmem:[%s3627 + $0x5f0] sm:$0xff]
        %v3819 = vld [vmem:[%s3627 + $0x5f8] sm:$0xff]
        %v3820 = vld [vmem:[%s3627 + $0x600] sm:$0xff]
        %v3821 = vld [vmem:[%s3627 + $0x608] sm:$0xff]
        %v3822 = vld [vmem:[%s3627 + $0x610] sm:$0xff]
        %v3823 = vld [vmem:[%s3627 + $0x618] sm:$0xff]
        %v3824 = vld [vmem:[%s3627 + $0x620] sm:$0xff]
        %v3825 = vld [vmem:[%s3627 + $0x628] sm:$0xff]
        %v3826 = vld [vmem:[%s3627 + $0x630] sm:$0xff]
        %v3827 = vld [vmem:[%s3627 + $0x638] sm:$0xff]
        %v3828 = vld [vmem:[%s3627 + $0x640] sm:$0xff]
        %v3829 = vld [vmem:[%s3627 + $0x648] sm:$0xff]
        %v3830 = vld [vmem:[%s3627 + $0x650] sm:$0xff]
        %v3831 = vld [vmem:[%s3627 + $0x658] sm:$0xff]
        %v3832 = vld [vmem:[%s3627 + $0x660] sm:$0xff]
        %v3833 = vld [vmem:[%s3627 + $0x668] sm:$0xff]
        %v3834 = vld [vmem:[%s3627 + $0x670] sm:$0xff]
        %v3835 = vld [vmem:[%s3627 + $0x678] sm:$0xff]
        %v3836 = vld [vmem:[%s3627 + $0x680] sm:$0xff]
        %v3837 = vld [vmem:[%s3627 + $0x688] sm:$0xff]
        %v3838 = vld [vmem:[%s3627 + $0x690] sm:$0xff]
        %v3839 = vld [vmem:[%s3627 + $0x698] sm:$0xff]
        %v3840 = vld [vmem:[%s3627 + $0x6a0] sm:$0xff]
        %v3841 = vld [vmem:[%s3627 + $0x6a8] sm:$0xff]
        %v3842 = vld [vmem:[%s3627 + $0x6b0] sm:$0xff]
        %v3843 = vld [vmem:[%s3627 + $0x6b8] sm:$0xff]
        %v3844 = vld [vmem:[%s3627 + $0x6c0] sm:$0xff]
        %v3845 = vld [vmem:[%s3627 + $0x6c8] sm:$0xff]
        %v3846 = vld [vmem:[%s3627 + $0x6d0] sm:$0xff]
        %v3847 = vld [vmem:[%s3627 + $0x6d8] sm:$0xff]
        %v3848 = vld [vmem:[%s3627 + $0x6e0] sm:$0xff]
        %v3849 = vld [vmem:[%s3627 + $0x6e8] sm:$0xff]
        %v3850 = vld [vmem:[%s3627 + $0x6f0] sm:$0xff]
        %v3851 = vld [vmem:[%s3627 + $0x6f8] sm:$0xff]
        %v3852 = vld [vmem:[%s3627 + $0x700] sm:$0xff]
        %v3853 = vld [vmem:[%s3627 + $0x708] sm:$0xff]
        %v3854 = vld [vmem:[%s3627 + $0x710] sm:$0xff]
        %v3855 = vld [vmem:[%s3627 + $0x718] sm:$0xff]
        %v3856 = vld [vmem:[%s3627 + $0x720] sm:$0xff]
        %v3857 = vld [vmem:[%s3627 + $0x728] sm:$0xff]
        %v3858 = vld [vmem:[%s3627 + $0x730] sm:$0xff]
        %v3859 = vld [vmem:[%s3627 + $0x738] sm:$0xff]
        %v3860 = vld [vmem:[%s3627 + $0x740] sm:$0xff]
        %v3861 = vld [vmem:[%s3627 + $0x748] sm:$0xff]
        %v3862 = vld [vmem:[%s3627 + $0x750] sm:$0xff]
        %v3863 = vld [vmem:[%s3627 + $0x758] sm:$0xff]
        %v3864 = vld [vmem:[%s3627 + $0x760] sm:$0xff]
        %v3865 = vld [vmem:[%s3627 + $0x768] sm:$0xff]
        %v3866 = vld [vmem:[%s3627 + $0x770] sm:$0xff]
        %v3867 = vld [vmem:[%s3627 + $0x778] sm:$0xff]
        %v3868 = vld [vmem:[%s3627 + $0x780] sm:$0xff]
        %v3869 = vld [vmem:[%s3627 + $0x788] sm:$0xff]
        %v3870 = vld [vmem:[%s3627 + $0x790] sm:$0xff]
        %v3871 = vld [vmem:[%s3627 + $0x798] sm:$0xff]
        %v3872 = vld [vmem:[%s3627 + $0x7a0] sm:$0xff]
        %v3873 = vld [vmem:[%s3627 + $0x7a8] sm:$0xff]
        %v3874 = vld [vmem:[%s3627 + $0x7b0] sm:$0xff]
        %v3875 = vld [vmem:[%s3627 + $0x7b8] sm:$0xff]
        %v3876 = vld [vmem:[%s3627 + $0x7c0] sm:$0xff]
        %v3877 = vld [vmem:[%s3627 + $0x7c8] sm:$0xff]
        %v3878 = vld [vmem:[%s3627 + $0x7d0] sm:$0xff]
        %v3879 = vld [vmem:[%s3627 + $0x7d8] sm:$0xff]
        %v3880 = vld [vmem:[%s3627 + $0x7e0] sm:$0xff]
        %v3881 = vld [vmem:[%s3627 + $0x7e8] sm:$0xff]
        %v3882 = vld [vmem:[%s3627 + $0x7f0] sm:$0xff]
        %v3883 = vld [vmem:[%s3627 + $0x7f8] sm:$0xff]
        %v3884 = vld [vmem:[%s3627 + $0x800] sm:$0xff]
        %v3885 = vld [vmem:[%s3627 + $0x808] sm:$0xff]
        %v3886 = vld [vmem:[%s3627 + $0x810] sm:$0xff]
        %v3887 = vld [vmem:[%s3627 + $0x818] sm:$0xff]
        %v3888 = vld [vmem:[%s3627 + $0x820] sm:$0xff]
        %v3889 = vld [vmem:[%s3627 + $0x828] sm:$0xff]
        %v3890 = vld [vmem:[%s3627 + $0x830] sm:$0xff]
        %v3891 = vld [vmem:[%s3627 + $0x838] sm:$0xff]
        %v3892 = vld [vmem:[%s3627 + $0x840] sm:$0xff]
        %v3893 = vld [vmem:[%s3627 + $0x848] sm:$0xff]
        %v3894 = vld [vmem:[%s3627 + $0x850] sm:$0xff]
        %v3895 = vld [vmem:[%s3627 + $0x858] sm:$0xff]
        %v3896 = vld [vmem:[%s3627 + $0x860] sm:$0xff]
        %v3897 = vld [vmem:[%s3627 + $0x868] sm:$0xff]
        %v3898 = vld [vmem:[%s3627 + $0x870] sm:$0xff]
        %v3899 = vld [vmem:[%s3627 + $0x878] sm:$0xff]
        %v3900 = vld [vmem:[%s3627 + $0x880] sm:$0xff]
        %v3901 = vld [vmem:[%s3627 + $0x888] sm:$0xff]
        %v3902 = vld [vmem:[%s3627 + $0x890] sm:$0xff]
        %v3903 = vld [vmem:[%s3627 + $0x898] sm:$0xff]
        %v3904 = vld [vmem:[%s3627 + $0x8a0] sm:$0xff]
        %v3905 = vld [vmem:[%s3627 + $0x8a8] sm:$0xff]
        %v3906 = vld [vmem:[%s3627 + $0x8b0] sm:$0xff]
        %v3907 = vld [vmem:[%s3627 + $0x8b8] sm:$0xff]
        %v3908 = vld [vmem:[%s3627 + $0x8c0] sm:$0xff]
        %v3909 = vld [vmem:[%s3627 + $0x8c8] sm:$0xff]
        %v3910 = vld [vmem:[%s3627 + $0x8d0] sm:$0xff]
        %v3911 = vld [vmem:[%s3627 + $0x8d8] sm:$0xff]
        %v3912 = vld [vmem:[%s3627 + $0x8e0] sm:$0xff]
        %v3913 = vld [vmem:[%s3627 + $0x8e8] sm:$0xff]
        %v3914 = vld [vmem:[%s3627 + $0x8f0] sm:$0xff]
        %v3915 = vld [vmem:[%s3627 + $0x8f8] sm:$0xff]
        %v3916 = vld [vmem:[%s3627 + $0x900] sm:$0xff]
        %v3917 = vld [vmem:[%s3627 + $0x908] sm:$0xff]
        %v3918 = vld [vmem:[%s3627 + $0x910] sm:$0xff]
        %v3919 = vld [vmem:[%s3627 + $0x918] sm:$0xff]
        %v3920 = vld [vmem:[%s3627 + $0x920] sm:$0xff]
        %v3921 = vld [vmem:[%s3627 + $0x928] sm:$0xff]
        %v3922 = vld [vmem:[%s3627 + $0x930] sm:$0xff]
        %v3923 = vld [vmem:[%s3627 + $0x938] sm:$0xff]
        %v3924 = vld [vmem:[%s3627 + $0x940] sm:$0xff]
        %v3925 = vld [vmem:[%s3627 + $0x948] sm:$0xff]
        %v3926 = vld [vmem:[%s3627 + $0x950] sm:$0xff]
        %v3927 = vld [vmem:[%s3627 + $0x958] sm:$0xff]
        %v3928 = vld [vmem:[%s3627 + $0x960] sm:$0xff]
        %v3929 = vld [vmem:[%s3627 + $0x968] sm:$0xff]
        %v3930 = vld [vmem:[%s3627 + $0x970] sm:$0xff]
        %v3931 = vld [vmem:[%s3627 + $0x978] sm:$0xff]
        %v3932 = vld [vmem:[%s3627 + $0x980] sm:$0xff]
        %v3933 = vld [vmem:[%s3627 + $0x988] sm:$0xff]
        %v3934 = vld [vmem:[%s3627 + $0x990] sm:$0xff]
        %v3935 = vld [vmem:[%s3627 + $0x998] sm:$0xff]
        %v3936 = vld [vmem:[%s3627 + $0x9a0] sm:$0xff]
        %v3937 = vld [vmem:[%s3627 + $0x9a8] sm:$0xff]
        %v3938 = vld [vmem:[%s3627 + $0x9b0] sm:$0xff]
        %v3939 = vld [vmem:[%s3627 + $0x9b8] sm:$0xff]
        %v3941 = vsel %vm2985, %v3279, 0
        %v3944 = vsel %vm2985, %v3286, 0
        %v3947 = vsel %vm2985, %v3293, 0
        %v3950 = vsel %vm2985, %v3300, 0
        %v3953 = vsel %vm2985, %v3307, 0
        %3955 = vmatprep.subr.mxu0 %v3629
        %3956 = vmatpush1.msra.mxu0 %v3628
        %3957 = vmatprep.subr.mxu0 %v3632
        %3958 = vmatpush1.msra.mxu0 %v3631
        %3959 = vmatprep.subr.mxu0 %v3635
        %3960 = vmatpush1.msra.mxu0 %v3634
        %3961 = vmatprep.subr.mxu0 %v3638
        %3962 = vmatpush1.msra.mxu0 %v3637
        %3963 = vmatprep.subr.mxu0 %v3641
        %3964 = vmatpush1.msra.mxu0 %v3640
        %3965 = vmatprep.subr.mxu0 %v3644
        %3966 = vmatpush1.msra.mxu0 %v3643
        %3967 = vmatprep.subr.mxu0 %v3647
        %3968 = vmatpush1.msra.mxu0 %v3646
        %3969 = vmatprep.subr.mxu0 %v3650
        %3970 = vmatpush1.msra.mxu0 %v3649
        %3971 = vmatprep.subr.mxu0 %v3653
        %3972 = vmatpush1.msra.mxu0 %v3652
        %3973 = vmatprep.subr.mxu0 %v3656
        %3974 = vmatpush1.msra.mxu0 %v3655
        %3975 = vmatprep.subr.mxu0 %v3659
        %3976 = vmatpush1.msra.mxu0 %v3658
        %3977 = vmatprep.subr.mxu0 %v3662
        %3978 = vmatpush1.msra.mxu0 %v3661
        %3979 = vmatprep.subr.mxu0 %v3665
        %3980 = vmatpush1.msra.mxu0 %v3664
        %3981 = vmatprep.subr.mxu0 %v3668
        %3982 = vmatpush1.msra.mxu0 %v3667
        %3983 = vmatprep.subr.mxu0 %v3671
        %3984 = vmatpush1.msra.mxu0 %v3670
        %3985 = vmatprep.subr.mxu0 %v3674
        %3986 = vmatpush1.msra.mxu0 %v3673
        %3987 = vmatprep.subr.mxu0 %v3677
        %3988 = vmatpush1.msra.mxu0 %v3676
        %3989 = vmatprep.subr.mxu0 %v3680
        %3990 = vmatpush1.msra.mxu0 %v3679
        %3991 = vmatprep.subr.mxu0 %v3683
        %3992 = vmatpush1.msra.mxu0 %v3682
        %3993 = vmatprep.subr.mxu0 %v3686
        %3994 = vmatpush1.msra.mxu0 %v3685
        %3995 = vmatprep.subr.mxu0 %v3689
        %3996 = vmatpush1.msra.mxu0 %v3688
        %3997 = vmatprep.subr.mxu0 %v3692
        %3998 = vmatpush1.msra.mxu0 %v3691
        %3999 = vmatprep.subr.mxu0 %v3695
        %4000 = vmatpush1.msra.mxu0 %v3694
        %4001 = vmatprep.subr.mxu0 %v3698
        %4002 = vmatpush1.msra.mxu0 %v3697
        %4003 = vmatprep.subr.mxu0 %v3701
        %4004 = vmatpush1.msra.mxu0 %v3700
        %4005 = vmatprep.subr.mxu0 %v3704
        %4006 = vmatpush1.msra.mxu0 %v3703
        %4007 = vmatprep.subr.mxu0 %v3707
        %4008 = vmatpush1.msra.mxu0 %v3706
        %4009 = vmatprep.subr.mxu0 %v3710
        %4010 = vmatpush1.msra.mxu0 %v3709
        %4011 = vmatprep.subr.mxu0 %v3713
        %4012 = vmatpush1.msra.mxu0 %v3712
        %4013 = vmatprep.subr.mxu0 %v3716
        %4014 = vmatpush1.msra.mxu0 %v3715
        %4015 = vmatprep.subr.mxu0 %v3719
        %4016 = vmatpush1.msra.mxu0 %v3718
        %4017 = vmatprep.subr.mxu0 %v3722
        %4018 = vmatpush1.msra.mxu0 %v3721
        %4019 = vmatprep.mubr.f32.mxu0 %v3274
        %4020 = vmatmul.mubr.f32.gmra.mrb[0].mxu0 %v3273
        %v4021 = vpop.f32.mrb[0].mxu0
        %v4022 = vadd.f32 0.0, %v4021
        %v4023 = vpop.f32.mrb[0].mxu0
        %v4024 = vadd.f32 0.0, %v4023
        %4025 = vmatprep.mubr.f32.mxu0 %v3281
        %4026 = vmatmul.mubr.f32.gmra.mrb[0].mxu0 %v3280
        %v4027 = vpop.f32.mrb[0].mxu0
        %v4028 = vadd.f32 0.0, %v4027
        %v4029 = vpop.f32.mrb[0].mxu0
        %v4030 = vadd.f32 0.0, %v4029
        %4031 = vmatprep.mubr.f32.mxu0 %v3288
        %4032 = vmatmul.mubr.f32.gmra.mrb[0].mxu0 %v3287
        %v4033 = vpop.f32.mrb[0].mxu0
        %v4034 = vadd.f32 0.0, %v4033
        %v4035 = vpop.f32.mrb[0].mxu0
        %v4036 = vadd.f32 0.0, %v4035
        %4037 = vmatprep.mubr.f32.mxu0 %v3295
        %4038 = vmatmul.mubr.f32.gmra.mrb[0].mxu0 %v3294
        %v4039 = vpop.f32.mrb[0].mxu0
        %v4040 = vadd.f32 0.0, %v4039
        %v4041 = vpop.f32.mrb[0].mxu0
        %v4042 = vadd.f32 0.0, %v4041
        %4043 = vmatprep.mubr.f32.mxu0 %v3302
        %4044 = vmatmul.mubr.f32.gmra.mrb[0].mxu0 %v3301
        %v4045 = vpop.f32.mrb[0].mxu0
        %v4046 = vpop.f32.mrb[0].mxu0
        %4047 = vdwg.mxu0
        %4048 = vmatprep.subr.mxu0 %v3725
        %4049 = vmatpush1.msra.mxu0 %v3724
        %4050 = vmatprep.subr.mxu0 %v3728
        %4051 = vmatpush1.msra.mxu0 %v3727
        %4052 = vmatprep.subr.mxu0 %v3731
        %4053 = vmatpush1.msra.mxu0 %v3730
        %4054 = vmatprep.subr.mxu0 %v3734
        %4055 = vmatpush1.msra.mxu0 %v3733
        %4056 = vmatprep.subr.mxu0 %v3737
        %4057 = vmatpush1.msra.mxu0 %v3736
        %4058 = vmatprep.subr.mxu0 %v3740
        %4059 = vmatpush1.msra.mxu0 %v3739
        %4060 = vmatprep.subr.mxu0 %v3743
        %4061 = vmatpush1.msra.mxu0 %v3742
        %4062 = vmatprep.subr.mxu0 %v3746
        %4063 = vmatpush1.msra.mxu0 %v3745
        %4064 = vmatprep.subr.mxu0 %v3749
        %4065 = vmatpush1.msra.mxu0 %v3748
        %4066 = vmatprep.subr.mxu0 %v3752
        %4067 = vmatpush1.msra.mxu0 %v3751
        %4068 = vmatprep.subr.mxu0 %v3755
        %4069 = vmatpush1.msra.mxu0 %v3754
        %4070 = vmatprep.subr.mxu0 %v3758
        %4071 = vmatpush1.msra.mxu0 %v3757
        %4072 = vmatprep.subr.mxu0 %v3761
        %4073 = vmatpush1.msra.mxu0 %v3760
        %4074 = vmatprep.subr.mxu0 %v3764
        %4075 = vmatpush1.msra.mxu0 %v3763
        %4076 = vmatprep.subr.mxu0 %v3767
        %4077 = vmatpush1.msra.mxu0 %v3766
        %4078 = vmatprep.subr.mxu0 %v3770
        %4079 = vmatpush1.msra.mxu0 %v3769
        %4080 = vmatprep.subr.mxu0 %v3773
        %4081 = vmatpush1.msra.mxu0 %v3772
        %4082 = vmatprep.subr.mxu0 %v3776
        %4083 = vmatpush1.msra.mxu0 %v3775
        %4084 = vmatprep.subr.mxu0 %v3779
        %4085 = vmatpush1.msra.mxu0 %v3778
        %4086 = vmatprep.subr.mxu0 %v3782
        %4087 = vmatpush1.msra.mxu0 %v3781
        %4088 = vmatprep.subr.mxu0 %v3785
        %4089 = vmatpush1.msra.mxu0 %v3784
        %4090 = vmatprep.subr.mxu0 %v3788
        %4091 = vmatpush1.msra.mxu0 %v3787
        %4092 = vmatprep.subr.mxu0 %v3791
        %4093 = vmatpush1.msra.mxu0 %v3790
        %4094 = vmatprep.subr.mxu0 %v3794
        %4095 = vmatpush1.msra.mxu0 %v3793
        %4096 = vmatprep.subr.mxu0 %v3797
        %4097 = vmatpush1.msra.mxu0 %v3796
        %4098 = vmatprep.subr.mxu0 %v3800
        %4099 = vmatpush1.msra.mxu0 %v3799
        %4100 = vmatprep.subr.mxu0 %v3803
        %4101 = vmatpush1.msra.mxu0 %v3802
        %4102 = vmatprep.subr.mxu0 %v3806
        %4103 = vmatpush1.msra.mxu0 %v3805
        %4104 = vmatprep.subr.mxu0 %v3809
        %4105 = vmatpush1.msra.mxu0 %v3808
        %4106 = vmatprep.subr.mxu0 %v3812
        %4107 = vmatpush1.msra.mxu0 %v3811
        %4108 = vmatprep.subr.mxu0 %v3815
        %4109 = vmatpush1.msra.mxu0 %v3814
        %4110 = vmatprep.subr.mxu0 %v3818
        %4111 = vmatpush1.msra.mxu0 %v3817
        %4112 = vmatprep.mubr.f32.mxu0 %v3276
        %4113 = vmatmul.mubr.f32.gmra.mrb[0].mxu0 %v3275
        %v4114 = vpop.f32.mrb[0].mxu0
        %v4115 = vadd.f32 %v4022, %v4114
        %v4116 = vpop.f32.mrb[0].mxu0
        %v4117 = vadd.f32 %v4024, %v4116
        %4118 = vmatprep.mubr.f32.mxu0 %v3283
        %4119 = vmatmul.mubr.f32.gmra.mrb[0].mxu0 %v3282
        %v4120 = vpop.f32.mrb[0].mxu0
        %v4121 = vadd.f32 %v4028, %v4120
        %v4122 = vpop.f32.mrb[0].mxu0
        %v4123 = vadd.f32 %v4030, %v4122
        %4124 = vmatprep.mubr.f32.mxu0 %v3290
        %4125 = vmatmul.mubr.f32.gmra.mrb[0].mxu0 %v3289
        %v4126 = vpop.f32.mrb[0].mxu0
        %v4127 = vadd.f32 %v4034, %v4126
        %v4128 = vpop.f32.mrb[0].mxu0
        %v4129 = vadd.f32 %v4036, %v4128
        %4130 = vmatprep.mubr.f32.mxu0 %v3297
        %4131 = vmatmul.mubr.f32.gmra.mrb[0].mxu0 %v3296
        %v4132 = vpop.f32.mrb[0].mxu0
        %v4133 = vadd.f32 %v4040, %v4132
        %v4134 = vpop.f32.mrb[0].mxu0
        %v4135 = vadd.f32 %v4042, %v4134
        %4136 = vmatprep.mubr.f32.mxu0 %v3304
        %4137 = vmatmul.mubr.f32.gmra.mrb[0].mxu0 %v3303
        %v4138 = vpop.f32.mrb[0].mxu0
        %v4139 = vpop.f32.mrb[0].mxu0
        %4140 = vdwg.mxu0
        %4141 = vmatprep.subr.mxu0 %v3821
        %4142 = vmatpush1.msra.mxu0 %v3820
        %4143 = vmatprep.subr.mxu0 %v3824
        %4144 = vmatpush1.msra.mxu0 %v3823
        %4145 = vmatprep.subr.mxu0 %v3827
        %4146 = vmatpush1.msra.mxu0 %v3826
        %4147 = vmatprep.subr.mxu0 %v3830
        %4148 = vmatpush1.msra.mxu0 %v3829
        %4149 = vmatprep.subr.mxu0 %v3833
        %4150 = vmatpush1.msra.mxu0 %v3832
        %4151 = vmatprep.subr.mxu0 %v3836
        %4152 = vmatpush1.msra.mxu0 %v3835
        %4153 = vmatprep.subr.mxu0 %v3839
        %4154 = vmatpush1.msra.mxu0 %v3838
        %4155 = vmatprep.subr.mxu0 %v3842
        %4156 = vmatpush1.msra.mxu0 %v3841
        %4157 = vmatprep.subr.mxu0 %v3845
        %4158 = vmatpush1.msra.mxu0 %v3844
        %4159 = vmatprep.subr.mxu0 %v3848
        %4160 = vmatpush1.msra.mxu0 %v3847
        %4161 = vmatprep.subr.mxu0 %v3851
        %4162 = vmatpush1.msra.mxu0 %v3850
        %4163 = vmatprep.subr.mxu0 %v3854
        %4164 = vmatpush1.msra.mxu0 %v3853
        %4165 = vmatprep.subr.mxu0 %v3857
        %4166 = vmatpush1.msra.mxu0 %v3856
        %4167 = vmatprep.subr.mxu0 %v3860
        %4168 = vmatpush1.msra.mxu0 %v3859
        %4169 = vmatprep.subr.mxu0 %v3863
        %4170 = vmatpush1.msra.mxu0 %v3862
        %4171 = vmatprep.subr.mxu0 %v3866
        %4172 = vmatpush1.msra.mxu0 %v3865
        %4173 = vmatprep.subr.mxu0 %v3869
        %4174 = vmatpush1.msra.mxu0 %v3868
        %4175 = vmatprep.subr.mxu0 %v3872
        %4176 = vmatpush1.msra.mxu0 %v3871
        %4177 = vmatprep.subr.mxu0 %v3875
        %4178 = vmatpush1.msra.mxu0 %v3874
        %4179 = vmatprep.subr.mxu0 %v3878
        %4180 = vmatpush1.msra.mxu0 %v3877
        %4181 = vmatprep.subr.mxu0 %v3881
        %4182 = vmatpush1.msra.mxu0 %v3880
        %4183 = vmatprep.subr.mxu0 %v3884
        %4184 = vmatpush1.msra.mxu0 %v3883
        %4185 = vmatprep.subr.mxu0 %v3887
        %4186 = vmatpush1.msra.mxu0 %v3886
        %4187 = vmatprep.subr.mxu0 %v3890
        %4188 = vmatpush1.msra.mxu0 %v3889
        %4189 = vmatprep.subr.mxu0 %v3893
        %4190 = vmatpush1.msra.mxu0 %v3892
        %4191 = vmatprep.subr.mxu0 %v3896
        %4192 = vmatpush1.msra.mxu0 %v3895
        %4193 = vmatprep.subr.mxu0 %v3899
        %4194 = vmatpush1.msra.mxu0 %v3898
        %4195 = vmatprep.subr.mxu0 %v3902
        %4196 = vmatpush1.msra.mxu0 %v3901
        %4197 = vmatprep.subr.mxu0 %v3905
        %4198 = vmatpush1.msra.mxu0 %v3904
        %4199 = vmatprep.subr.mxu0 %v3908
        %4200 = vmatpush1.msra.mxu0 %v3907
        %4201 = vmatprep.subr.mxu0 %v3911
        %4202 = vmatpush1.msra.mxu0 %v3910
        %4203 = vmatprep.subr.mxu0 %v3914
        %4204 = vmatpush1.msra.mxu0 %v3913
        %4205 = vmatprep.mubr.f32.mxu0 %v3278
        %4206 = vmatmul.mubr.f32.gmra.mrb[0].mxu0 %v3277
        %v4207 = vpop.f32.mrb[0].mxu0
        %v4208 = vadd.f32 %v4115, %v4207
        %v4209 = vpop.f32.mrb[0].mxu0
        %v4210 = vadd.f32 %v4117, %v4209
        %4211 = vmatprep.mubr.f32.mxu0 %v3285
        %4212 = vmatmul.mubr.f32.gmra.mrb[0].mxu0 %v3284
        %v4213 = vpop.f32.mrb[0].mxu0
        %v4214 = vadd.f32 %v4121, %v4213
        %v4215 = vpop.f32.mrb[0].mxu0
        %v4216 = vadd.f32 %v4123, %v4215
        %4217 = vmatprep.mubr.f32.mxu0 %v3292
        %4218 = vmatmul.mubr.f32.gmra.mrb[0].mxu0 %v3291
        %v4219 = vpop.f32.mrb[0].mxu0
        %v4220 = vadd.f32 %v4127, %v4219
        %v4221 = vpop.f32.mrb[0].mxu0
        %v4222 = vadd.f32 %v4129, %v4221
        %4223 = vmatprep.mubr.f32.mxu0 %v3299
        %4224 = vmatmul.mubr.f32.gmra.mrb[0].mxu0 %v3298
        %v4225 = vpop.f32.mrb[0].mxu0
        %v4226 = vadd.f32 %v4133, %v4225
        %v4227 = vpop.f32.mrb[0].mxu0
        %v4228 = vadd.f32 %v4135, %v4227
        %4229 = vmatprep.mubr.f32.mxu0 %v3306
        %4230 = vmatmul.mubr.f32.gmra.mrb[0].mxu0 %v3305
        %v4231 = vpop.f32.mrb[0].mxu0
        %v4232 = vpop.f32.mrb[0].mxu0
        %4233 = vdwg.mxu0
        %4234 = vmatprep.subr.mxu0 %v3917
        %4235 = vmatpush1.msra.mxu0 %v3916
        %4236 = vmatprep.subr.mxu0 %v3920
        %4237 = vmatpush1.msra.mxu0 %v3919
        %4238 = vmatprep.subr.mxu0 %v3923
        %4239 = vmatpush1.msra.mxu0 %v3922
        %4240 = vmatprep.subr.mxu0 %v3926
        %4241 = vmatpush1.msra.mxu0 %v3925
        %4242 = vmatprep.subr.mxu0 %v3929
        %4243 = vmatpush1.msra.mxu0 %v3928
        %4244 = vmatprep.subr.mxu0 %v3932
        %4245 = vmatpush1.msra.mxu0 %v3931
        %4246 = vmatprep.subr.mxu0 %v3935
        %4247 = vmatpush1.msra.mxu0 %v3934
        %4248 = vmatprep.subr.mxu0 %v3938
        %4249 = vmatpush1.msra.mxu0 %v3937
        %4250 = vmatprep.subr.mxu0 0.0
        %4251 = vmatpush1.msra.mxu0 0.0
        %4252 = vmatprep.subr.mxu0 0.0
        %4253 = vmatpush1.msra.mxu0 0.0
        %4254 = vmatprep.subr.mxu0 0.0
        %4255 = vmatpush1.msra.mxu0 0.0
        %4256 = vmatprep.subr.mxu0 0.0
        %4257 = vmatpush1.msra.mxu0 0.0
        %4258 = vmatprep.subr.mxu0 0.0
        %4259 = vmatpush1.msra.mxu0 0.0
        %4260 = vmatprep.subr.mxu0 0.0
        %4261 = vmatpush1.msra.mxu0 0.0
        %4262 = vmatprep.subr.mxu0 0.0
        %4263 = vmatpush1.msra.mxu0 0.0
        %4264 = vmatprep.subr.mxu0 0.0
        %4265 = vmatpush1.msra.mxu0 0.0
        %4266 = vmatprep.subr.mxu0 0.0
        %4267 = vmatpush1.msra.mxu0 0.0
        %4268 = vmatprep.subr.mxu0 0.0
        %4269 = vmatpush1.msra.mxu0 0.0
        %4270 = vmatprep.subr.mxu0 0.0
        %4271 = vmatpush1.msra.mxu0 0.0
        %4272 = vmatprep.subr.mxu0 0.0
        %4273 = vmatpush1.msra.mxu0 0.0
        %4274 = vmatprep.subr.mxu0 0.0
        %4275 = vmatpush1.msra.mxu0 0.0
        %4276 = vmatprep.subr.mxu0 0.0
        %4277 = vmatpush1.msra.mxu0 0.0
        %4278 = vmatprep.subr.mxu0 0.0
        %4279 = vmatpush1.msra.mxu0 0.0
        %4280 = vmatprep.subr.mxu0 0.0
        %4281 = vmatpush1.msra.mxu0 0.0
        %4282 = vmatprep.subr.mxu0 0.0
        %4283 = vmatpush1.msra.mxu0 0.0
        %4284 = vmatprep.subr.mxu0 0.0
        %4285 = vmatpush1.msra.mxu0 0.0
        %4286 = vmatprep.subr.mxu0 0.0
        %4287 = vmatpush1.msra.mxu0 0.0
        %4288 = vmatprep.subr.mxu0 0.0
        %4289 = vmatpush1.msra.mxu0 0.0
        %4290 = vmatprep.subr.mxu0 0.0
        %4291 = vmatpush1.msra.mxu0 0.0
        %4292 = vmatprep.subr.mxu0 0.0
        %4293 = vmatpush1.msra.mxu0 0.0
        %4294 = vmatprep.subr.mxu0 0.0
        %4295 = vmatpush1.msra.mxu0 0.0
        %4296 = vmatprep.subr.mxu0 0.0
        %4297 = vmatpush1.msra.mxu0 0.0
        %4298 = vmatprep.mubr.f32.mxu0 0.0
        %4299 = vmatmul.mubr.f32.gmra.mrb[0].mxu0 %v3941
        %v4300 = vpop.f32.mrb[0].mxu0
        %v4301 = vadd.f32 %v4208, %v4300
        %v4302 = vpop.f32.mrb[0].mxu0
        %v4303 = vadd.f32 %v4210, %v4302
        %4304 = vmatprep.mubr.f32.mxu0 0.0
        %4305 = vmatmul.mubr.f32.gmra.mrb[0].mxu0 %v3944
        %v4306 = vpop.f32.mrb[0].mxu0
        %v4307 = vadd.f32 %v4214, %v4306
        %v4308 = vpop.f32.mrb[0].mxu0
        %v4309 = vadd.f32 %v4216, %v4308
        %4310 = vmatprep.mubr.f32.mxu0 0.0
        %4311 = vmatmul.mubr.f32.gmra.mrb[0].mxu0 %v3947
        %v4312 = vpop.f32.mrb[0].mxu0
        %v4313 = vadd.f32 %v4220, %v4312
        %v4314 = vpop.f32.mrb[0].mxu0
        %v4315 = vadd.f32 %v4222, %v4314
        %4316 = vmatprep.mubr.f32.mxu0 0.0
        %4317 = vmatmul.mubr.f32.gmra.mrb[0].mxu0 %v3950
        %v4318 = vpop.f32.mrb[0].mxu0
        %v4319 = vadd.f32 %v4226, %v4318
        %v4320 = vpop.f32.mrb[0].mxu0
        %v4321 = vadd.f32 %v4228, %v4320
        %4322 = vmatprep.mubr.f32.mxu0 0.0
        %4323 = vmatmul.mubr.f32.gmra.mrb[0].mxu0 %v3953
        %v4324 = vpop.f32.mrb[0].mxu0
        %v4325 = vpop.f32.mrb[0].mxu0
        %4326 = vdwg.mxu0
        %4327 = vmatprep.subr.mxu0 0.0
        %4328 = vmatpush1.msra.mxu0 %v3630
        %4329 = vmatprep.subr.mxu0 0.0
        %4330 = vmatpush1.msra.mxu0 %v3633
        %4331 = vmatprep.subr.mxu0 0.0
        %4332 = vmatpush1.msra.mxu0 %v3636
        %4333 = vmatprep.subr.mxu0 0.0
        %4334 = vmatpush1.msra.mxu0 %v3639
        %4335 = vmatprep.subr.mxu0 0.0
        %4336 = vmatpush1.msra.mxu0 %v3642
        %4337 = vmatprep.subr.mxu0 0.0
        %4338 = vmatpush1.msra.mxu0 %v3645
        %4339 = vmatprep.subr.mxu0 0.0
        %4340 = vmatpush1.msra.mxu0 %v3648
        %4341 = vmatprep.subr.mxu0 0.0
        %4342 = vmatpush1.msra.mxu0 %v3651
        %4343 = vmatprep.subr.mxu0 0.0
        %4344 = vmatpush1.msra.mxu0 %v3654
        %4345 = vmatprep.subr.mxu0 0.0
        %4346 = vmatpush1.msra.mxu0 %v3657
        %4347 = vmatprep.subr.mxu0 0.0
        %4348 = vmatpush1.msra.mxu0 %v3660
        %4349 = vmatprep.subr.mxu0 0.0
        %4350 = vmatpush1.msra.mxu0 %v3663
        %4351 = vmatprep.subr.mxu0 0.0
        %4352 = vmatpush1.msra.mxu0 %v3666
        %4353 = vmatprep.subr.mxu0 0.0
        %4354 = vmatpush1.msra.mxu0 %v3669
        %4355 = vmatprep.subr.mxu0 0.0
        %4356 = vmatpush1.msra.mxu0 %v3672
        %4357 = vmatprep.subr.mxu0 0.0
        %4358 = vmatpush1.msra.mxu0 %v3675
        %4359 = vmatprep.subr.mxu0 0.0
        %4360 = vmatpush1.msra.mxu0 %v3678
        %4361 = vmatprep.subr.mxu0 0.0
        %4362 = vmatpush1.msra.mxu0 %v3681
        %4363 = vmatprep.subr.mxu0 0.0
        %4364 = vmatpush1.msra.mxu0 %v3684
        %4365 = vmatprep.subr.mxu0 0.0
        %4366 = vmatpush1.msra.mxu0 %v3687
        %4367 = vmatprep.subr.mxu0 0.0
        %4368 = vmatpush1.msra.mxu0 %v3690
        %4369 = vmatprep.subr.mxu0 0.0
        %4370 = vmatpush1.msra.mxu0 %v3693
        %4371 = vmatprep.subr.mxu0 0.0
        %4372 = vmatpush1.msra.mxu0 %v3696
        %4373 = vmatprep.subr.mxu0 0.0
        %4374 = vmatpush1.msra.mxu0 %v3699
        %4375 = vmatprep.subr.mxu0 0.0
        %4376 = vmatpush1.msra.mxu0 %v3702
        %4377 = vmatprep.subr.mxu0 0.0
        %4378 = vmatpush1.msra.mxu0 %v3705
        %4379 = vmatprep.subr.mxu0 0.0
        %4380 = vmatpush1.msra.mxu0 %v3708
        %4381 = vmatprep.subr.mxu0 0.0
        %4382 = vmatpush1.msra.mxu0 %v3711
        %4383 = vmatprep.subr.mxu0 0.0
        %4384 = vmatpush1.msra.mxu0 %v3714
        %4385 = vmatprep.subr.mxu0 0.0
        %4386 = vmatpush1.msra.mxu0 %v3717
        %4387 = vmatprep.subr.mxu0 0.0
        %4388 = vmatpush1.msra.mxu0 %v3720
        %4389 = vmatprep.subr.mxu0 0.0
        %4390 = vmatpush1.msra.mxu0 %v3723
        %4391 = vmatprep.mubr.f32.mxu0 %v3274
        %4392 = vmatmul.mubr.f32.gmra.mrb[0].mxu0 %v3273
        %v4393 = vpop.f32.mrb[0].mxu0
        %v4394 = vadd.f32 0.0, %v4393
        %v4395 = vpop.f32.mrb[0].mxu0
        %4396 = vmatprep.mubr.f32.mxu0 %v3281
        %4397 = vmatmul.mubr.f32.gmra.mrb[0].mxu0 %v3280
        %v4398 = vpop.f32.mrb[0].mxu0
        %v4399 = vadd.f32 0.0, %v4398
        %v4400 = vpop.f32.mrb[0].mxu0
        %4401 = vmatprep.mubr.f32.mxu0 %v3288
        %4402 = vmatmul.mubr.f32.gmra.mrb[0].mxu0 %v3287
        %v4403 = vpop.f32.mrb[0].mxu0
        %v4404 = vadd.f32 0.0, %v4403
        %v4405 = vpop.f32.mrb[0].mxu0
        %4406 = vmatprep.mubr.f32.mxu0 %v3295
        %4407 = vmatmul.mubr.f32.gmra.mrb[0].mxu0 %v3294
        %v4408 = vpop.f32.mrb[0].mxu0
        %v4409 = vadd.f32 0.0, %v4408
        %v4410 = vpop.f32.mrb[0].mxu0
        %4411 = vmatprep.mubr.f32.mxu0 %v3302
        %4412 = vmatmul.mubr.f32.gmra.mrb[0].mxu0 %v3301
        %v4413 = vpop.f32.mrb[0].mxu0
        %v4414 = vpop.f32.mrb[0].mxu0
        %4415 = vdwg.mxu0
        %4416 = vmatprep.subr.mxu0 0.0
        %4417 = vmatpush1.msra.mxu0 %v3726
        %4418 = vmatprep.subr.mxu0 0.0
        %4419 = vmatpush1.msra.mxu0 %v3729
        %4420 = vmatprep.subr.mxu0 0.0
        %4421 = vmatpush1.msra.mxu0 %v3732
        %4422 = vmatprep.subr.mxu0 0.0
        %4423 = vmatpush1.msra.mxu0 %v3735
        %4424 = vmatprep.subr.mxu0 0.0
        %4425 = vmatpush1.msra.mxu0 %v3738
        %4426 = vmatprep.subr.mxu0 0.0
        %4427 = vmatpush1.msra.mxu0 %v3741
        %4428 = vmatprep.subr.mxu0 0.0
        %4429 = vmatpush1.msra.mxu0 %v3744
        %4430 = vmatprep.subr.mxu0 0.0
        %4431 = vmatpush1.msra.mxu0 %v3747
        %4432 = vmatprep.subr.mxu0 0.0
        %4433 = vmatpush1.msra.mxu0 %v3750
        %4434 = vmatprep.subr.mxu0 0.0
        %4435 = vmatpush1.msra.mxu0 %v3753
        %4436 = vmatprep.subr.mxu0 0.0
        %4437 = vmatpush1.msra.mxu0 %v3756
        %4438 = vmatprep.subr.mxu0 0.0
        %4439 = vmatpush1.msra.mxu0 %v3759
        %4440 = vmatprep.subr.mxu0 0.0
        %4441 = vmatpush1.msra.mxu0 %v3762
        %4442 = vmatprep.subr.mxu0 0.0
        %4443 = vmatpush1.msra.mxu0 %v3765
        %4444 = vmatprep.subr.mxu0 0.0
        %4445 = vmatpush1.msra.mxu0 %v3768
        %4446 = vmatprep.subr.mxu0 0.0
        %4447 = vmatpush1.msra.mxu0 %v3771
        %4448 = vmatprep.subr.mxu0 0.0
        %4449 = vmatpush1.msra.mxu0 %v3774
        %4450 = vmatprep.subr.mxu0 0.0
        %4451 = vmatpush1.msra.mxu0 %v3777
        %4452 = vmatprep.subr.mxu0 0.0
        %4453 = vmatpush1.msra.mxu0 %v3780
        %4454 = vmatprep.subr.mxu0 0.0
        %4455 = vmatpush1.msra.mxu0 %v3783
        %4456 = vmatprep.subr.mxu0 0.0
        %4457 = vmatpush1.msra.mxu0 %v3786
        %4458 = vmatprep.subr.mxu0 0.0
        %4459 = vmatpush1.msra.mxu0 %v3789
        %4460 = vmatprep.subr.mxu0 0.0
        %4461 = vmatpush1.msra.mxu0 %v3792
        %4462 = vmatprep.subr.mxu0 0.0
        %4463 = vmatpush1.msra.mxu0 %v3795
        %4464 = vmatprep.subr.mxu0 0.0
        %4465 = vmatpush1.msra.mxu0 %v3798
        %4466 = vmatprep.subr.mxu0 0.0
        %4467 = vmatpush1.msra.mxu0 %v3801
        %4468 = vmatprep.subr.mxu0 0.0
        %4469 = vmatpush1.msra.mxu0 %v3804
        %4470 = vmatprep.subr.mxu0 0.0
        %4471 = vmatpush1.msra.mxu0 %v3807
        %4472 = vmatprep.subr.mxu0 0.0
        %4473 = vmatpush1.msra.mxu0 %v3810
        %4474 = vmatprep.subr.mxu0 0.0
        %4475 = vmatpush1.msra.mxu0 %v3813
        %4476 = vmatprep.subr.mxu0 0.0
        %4477 = vmatpush1.msra.mxu0 %v3816
        %4478 = vmatprep.subr.mxu0 0.0
        %4479 = vmatpush1.msra.mxu0 %v3819
        %4480 = vmatprep.mubr.f32.mxu0 %v3276
        %4481 = vmatmul.mubr.f32.gmra.mrb[0].mxu0 %v3275
        %v4482 = vpop.f32.mrb[0].mxu0
        %v4483 = vadd.f32 %v4394, %v4482
        %v4484 = vpop.f32.mrb[0].mxu0
        %4485 = vmatprep.mubr.f32.mxu0 %v3283
        %4486 = vmatmul.mubr.f32.gmra.mrb[0].mxu0 %v3282
        %v4487 = vpop.f32.mrb[0].mxu0
        %v4488 = vadd.f32 %v4399, %v4487
        %v4489 = vpop.f32.mrb[0].mxu0
        %4490 = vmatprep.mubr.f32.mxu0 %v3290
        %4491 = vmatmul.mubr.f32.gmra.mrb[0].mxu0 %v3289
        %v4492 = vpop.f32.mrb[0].mxu0
        %v4493 = vadd.f32 %v4404, %v4492
        %v4494 = vpop.f32.mrb[0].mxu0
        %4495 = vmatprep.mubr.f32.mxu0 %v3297
        %4496 = vmatmul.mubr.f32.gmra.mrb[0].mxu0 %v3296
        %v4497 = vpop.f32.mrb[0].mxu0
        %v4498 = vadd.f32 %v4409, %v4497
        %v4499 = vpop.f32.mrb[0].mxu0
        %4500 = vmatprep.mubr.f32.mxu0 %v3304
        %4501 = vmatmul.mubr.f32.gmra.mrb[0].mxu0 %v3303
        %v4502 = vpop.f32.mrb[0].mxu0
        %v4503 = vpop.f32.mrb[0].mxu0
        %4504 = vdwg.mxu0
        %4505 = vmatprep.subr.mxu0 0.0
        %4506 = vmatpush1.msra.mxu0 %v3822
        %4507 = vmatprep.subr.mxu0 0.0
        %4508 = vmatpush1.msra.mxu0 %v3825
        %4509 = vmatprep.subr.mxu0 0.0
        %4510 = vmatpush1.msra.mxu0 %v3828
        %4511 = vmatprep.subr.mxu0 0.0
        %4512 = vmatpush1.msra.mxu0 %v3831
        %4513 = vmatprep.subr.mxu0 0.0
        %4514 = vmatpush1.msra.mxu0 %v3834
        %4515 = vmatprep.subr.mxu0 0.0
        %4516 = vmatpush1.msra.mxu0 %v3837
        %4517 = vmatprep.subr.mxu0 0.0
        %4518 = vmatpush1.msra.mxu0 %v3840
        %4519 = vmatprep.subr.mxu0 0.0
        %4520 = vmatpush1.msra.mxu0 %v3843
        %4521 = vmatprep.subr.mxu0 0.0
        %4522 = vmatpush1.msra.mxu0 %v3846
        %4523 = vmatprep.subr.mxu0 0.0
        %4524 = vmatpush1.msra.mxu0 %v3849
        %4525 = vmatprep.subr.mxu0 0.0
        %4526 = vmatpush1.msra.mxu0 %v3852
        %4527 = vmatprep.subr.mxu0 0.0
        %4528 = vmatpush1.msra.mxu0 %v3855
        %4529 = vmatprep.subr.mxu0 0.0
        %4530 = vmatpush1.msra.mxu0 %v3858
        %4531 = vmatprep.subr.mxu0 0.0
        %4532 = vmatpush1.msra.mxu0 %v3861
        %4533 = vmatprep.subr.mxu0 0.0
        %4534 = vmatpush1.msra.mxu0 %v3864
        %4535 = vmatprep.subr.mxu0 0.0
        %4536 = vmatpush1.msra.mxu0 %v3867
        %4537 = vmatprep.subr.mxu0 0.0
        %4538 = vmatpush1.msra.mxu0 %v3870
        %4539 = vmatprep.subr.mxu0 0.0
        %4540 = vmatpush1.msra.mxu0 %v3873
        %4541 = vmatprep.subr.mxu0 0.0
        %4542 = vmatpush1.msra.mxu0 %v3876
        %4543 = vmatprep.subr.mxu0 0.0
        %4544 = vmatpush1.msra.mxu0 %v3879
        %4545 = vmatprep.subr.mxu0 0.0
        %4546 = vmatpush1.msra.mxu0 %v3882
        %4547 = vmatprep.subr.mxu0 0.0
        %4548 = vmatpush1.msra.mxu0 %v3885
        %4549 = vmatprep.subr.mxu0 0.0
        %4550 = vmatpush1.msra.mxu0 %v3888
        %4551 = vmatprep.subr.mxu0 0.0
        %4552 = vmatpush1.msra.mxu0 %v3891
        %4553 = vmatprep.subr.mxu0 0.0
        %4554 = vmatpush1.msra.mxu0 %v3894
        %4555 = vmatprep.subr.mxu0 0.0
        %4556 = vmatpush1.msra.mxu0 %v3897
        %4557 = vmatprep.subr.mxu0 0.0
        %4558 = vmatpush1.msra.mxu0 %v3900
        %4559 = vmatprep.subr.mxu0 0.0
        %4560 = vmatpush1.msra.mxu0 %v3903
        %4561 = vmatprep.subr.mxu0 0.0
        %4562 = vmatpush1.msra.mxu0 %v3906
        %4563 = vmatprep.subr.mxu0 0.0
        %4564 = vmatpush1.msra.mxu0 %v3909
        %4565 = vmatprep.subr.mxu0 0.0
        %4566 = vmatpush1.msra.mxu0 %v3912
        %4567 = vmatprep.subr.mxu0 0.0
        %4568 = vmatpush1.msra.mxu0 %v3915
        %4569 = vmatprep.mubr.f32.mxu0 %v3278
        %4570 = vmatmul.mubr.f32.gmra.mrb[0].mxu0 %v3277
        %v4571 = vpop.f32.mrb[0].mxu0
        %v4572 = vadd.f32 %v4483, %v4571
        %v4573 = vpop.f32.mrb[0].mxu0
        %4574 = vmatprep.mubr.f32.mxu0 %v3285
        %4575 = vmatmul.mubr.f32.gmra.mrb[0].mxu0 %v3284
        %v4576 = vpop.f32.mrb[0].mxu0
        %v4577 = vadd.f32 %v4488, %v4576
        %v4578 = vpop.f32.mrb[0].mxu0
        %4579 = vmatprep.mubr.f32.mxu0 %v3292
        %4580 = vmatmul.mubr.f32.gmra.mrb[0].mxu0 %v3291
        %v4581 = vpop.f32.mrb[0].mxu0
        %v4582 = vadd.f32 %v4493, %v4581
        %v4583 = vpop.f32.mrb[0].mxu0
        %4584 = vmatprep.mubr.f32.mxu0 %v3299
        %4585 = vmatmul.mubr.f32.gmra.mrb[0].mxu0 %v3298
        %v4586 = vpop.f32.mrb[0].mxu0
        %v4587 = vadd.f32 %v4498, %v4586
        %v4588 = vpop.f32.mrb[0].mxu0
        %4589 = vmatprep.mubr.f32.mxu0 %v3306
        %4590 = vmatmul.mubr.f32.gmra.mrb[0].mxu0 %v3305
        %v4591 = vpop.f32.mrb[0].mxu0
        %v4592 = vpop.f32.mrb[0].mxu0
        %4593 = vdwg.mxu0
        %4594 = vmatprep.subr.mxu0 0.0
        %4595 = vmatpush1.msra.mxu0 %v3918
        %4596 = vmatprep.subr.mxu0 0.0
        %4597 = vmatpush1.msra.mxu0 %v3921
        %4598 = vmatprep.subr.mxu0 0.0
        %4599 = vmatpush1.msra.mxu0 %v3924
        %4600 = vmatprep.subr.mxu0 0.0
        %4601 = vmatpush1.msra.mxu0 %v3927
        %4602 = vmatprep.subr.mxu0 0.0
        %4603 = vmatpush1.msra.mxu0 %v3930
        %4604 = vmatprep.subr.mxu0 0.0
        %4605 = vmatpush1.msra.mxu0 %v3933
        %4606 = vmatprep.subr.mxu0 0.0
        %4607 = vmatpush1.msra.mxu0 %v3936
        %4608 = vmatprep.subr.mxu0 0.0
        %4609 = vmatpush1.msra.mxu0 %v3939
        %4610 = vmatprep.subr.mxu0 0.0
        %4611 = vmatpush1.msra.mxu0 0.0
        %4612 = vmatprep.subr.mxu0 0.0
        %4613 = vmatpush1.msra.mxu0 0.0
        %4614 = vmatprep.subr.mxu0 0.0
        %4615 = vmatpush1.msra.mxu0 0.0
        %4616 = vmatprep.subr.mxu0 0.0
        %4617 = vmatpush1.msra.mxu0 0.0
        %4618 = vmatprep.subr.mxu0 0.0
        %4619 = vmatpush1.msra.mxu0 0.0
        %4620 = vmatprep.subr.mxu0 0.0
        %4621 = vmatpush1.msra.mxu0 0.0
        %4622 = vmatprep.subr.mxu0 0.0
        %4623 = vmatpush1.msra.mxu0 0.0
        %4624 = vmatprep.subr.mxu0 0.0
        %4625 = vmatpush1.msra.mxu0 0.0
        %4626 = vmatprep.subr.mxu0 0.0
        %4627 = vmatpush1.msra.mxu0 0.0
        %4628 = vmatprep.subr.mxu0 0.0
        %4629 = vmatpush1.msra.mxu0 0.0
        %4630 = vmatprep.subr.mxu0 0.0
        %4631 = vmatpush1.msra.mxu0 0.0
        %4632 = vmatprep.subr.mxu0 0.0
        %4633 = vmatpush1.msra.mxu0 0.0
        %4634 = vmatprep.subr.mxu0 0.0
        %4635 = vmatpush1.msra.mxu0 0.0
        %4636 = vmatprep.subr.mxu0 0.0
        %4637 = vmatpush1.msra.mxu0 0.0
        %4638 = vmatprep.subr.mxu0 0.0
        %4639 = vmatpush1.msra.mxu0 0.0
        %4640 = vmatprep.subr.mxu0 0.0
        %4641 = vmatpush1.msra.mxu0 0.0
        %4642 = vmatprep.subr.mxu0 0.0
        %4643 = vmatpush1.msra.mxu0 0.0
        %4644 = vmatprep.subr.mxu0 0.0
        %4645 = vmatpush1.msra.mxu0 0.0
        %4646 = vmatprep.subr.mxu0 0.0
        %4647 = vmatpush1.msra.mxu0 0.0
        %4648 = vmatprep.subr.mxu0 0.0
        %4649 = vmatpush1.msra.mxu0 0.0
        %4650 = vmatprep.subr.mxu0 0.0
        %4651 = vmatpush1.msra.mxu0 0.0
        %4652 = vmatprep.subr.mxu0 0.0
        %4653 = vmatpush1.msra.mxu0 0.0
        %4654 = vmatprep.subr.mxu0 0.0
        %4655 = vmatpush1.msra.mxu0 0.0
        %4656 = vmatprep.subr.mxu0 0.0
        %4657 = vmatpush1.msra.mxu0 0.0
        %4658 = vmatprep.mubr.f32.mxu0 0.0
        %4659 = vmatmul.mubr.f32.gmra.mrb[0].mxu0 %v3941
        %v4660 = vpop.f32.mrb[0].mxu0
        %v4661 = vadd.f32 %v4572, %v4660
        %v4662 = vpop.f32.mrb[0].mxu0
        %4663 = vmatprep.mubr.f32.mxu0 0.0
        %4664 = vmatmul.mubr.f32.gmra.mrb[0].mxu0 %v3944
        %v4665 = vpop.f32.mrb[0].mxu0
        %v4666 = vadd.f32 %v4577, %v4665
        %v4667 = vpop.f32.mrb[0].mxu0
        %4668 = vmatprep.mubr.f32.mxu0 0.0
        %4669 = vmatmul.mubr.f32.gmra.mrb[0].mxu0 %v3947
        %v4670 = vpop.f32.mrb[0].mxu0
        %v4671 = vadd.f32 %v4582, %v4670
        %v4672 = vpop.f32.mrb[0].mxu0
        %4673 = vmatprep.mubr.f32.mxu0 0.0
        %4674 = vmatmul.mubr.f32.gmra.mrb[0].mxu0 %v3950
        %v4675 = vpop.f32.mrb[0].mxu0
        %v4676 = vadd.f32 %v4587, %v4675
        %v4677 = vpop.f32.mrb[0].mxu0
        %4678 = vmatprep.mubr.f32.mxu0 0.0
        %4679 = vmatmul.mubr.f32.gmra.mrb[0].mxu0 %v3953
        %v4680 = vpop.f32.mrb[0].mxu0
        %v4681 = vpop.f32.mrb[0].mxu0
        %4682 = vdwg.mxu0
        %v4684 = vsel %vm2985, %v3272, 0
        %4686 = vmatprep.subr.mxu0 %v3316
        %4687 = vmatpush1.msra.mxu0 %v3315
        %4688 = vmatprep.subr.mxu0 %v3319
        %4689 = vmatpush1.msra.mxu0 %v3318
        %4690 = vmatprep.subr.mxu0 %v3322
        %4691 = vmatpush1.msra.mxu0 %v3321
        %4692 = vmatprep.subr.mxu0 %v3325
        %4693 = vmatpush1.msra.mxu0 %v3324
        %4694 = vmatprep.subr.mxu0 %v3328
        %4695 = vmatpush1.msra.mxu0 %v3327
        %4696 = vmatprep.subr.mxu0 %v3331
        %4697 = vmatpush1.msra.mxu0 %v3330
        %4698 = vmatprep.subr.mxu0 %v3334
        %4699 = vmatpush1.msra.mxu0 %v3333
        %4700 = vmatprep.subr.mxu0 %v3337
        %4701 = vmatpush1.msra.mxu0 %v3336
        %4702 = vmatprep.subr.mxu0 %v3340
        %4703 = vmatpush1.msra.mxu0 %v3339
        %4704 = vmatprep.subr.mxu0 %v3343
        %4705 = vmatpush1.msra.mxu0 %v3342
        %4706 = vmatprep.subr.mxu0 %v3346
        %4707 = vmatpush1.msra.mxu0 %v3345
        %4708 = vmatprep.subr.mxu0 %v3349
        %4709 = vmatpush1.msra.mxu0 %v3348
        %4710 = vmatprep.subr.mxu0 %v3352
        %4711 = vmatpush1.msra.mxu0 %v3351
        %4712 = vmatprep.subr.mxu0 %v3355
        %4713 = vmatpush1.msra.mxu0 %v3354
        %4714 = vmatprep.subr.mxu0 %v3358
        %4715 = vmatpush1.msra.mxu0 %v3357
        %4716 = vmatprep.subr.mxu0 %v3361
        %4717 = vmatpush1.msra.mxu0 %v3360
        %4718 = vmatprep.subr.mxu0 %v3364
        %4719 = vmatpush1.msra.mxu0 %v3363
        %4720 = vmatprep.subr.mxu0 %v3367
        %4721 = vmatpush1.msra.mxu0 %v3366
        %4722 = vmatprep.subr.mxu0 %v3370
        %4723 = vmatpush1.msra.mxu0 %v3369
        %4724 = vmatprep.subr.mxu0 %v3373
        %4725 = vmatpush1.msra.mxu0 %v3372
        %4726 = vmatprep.subr.mxu0 %v3376
        %4727 = vmatpush1.msra.mxu0 %v3375
        %4728 = vmatprep.subr.mxu0 %v3379
        %4729 = vmatpush1.msra.mxu0 %v3378
        %4730 = vmatprep.subr.mxu0 %v3382
        %4731 = vmatpush1.msra.mxu0 %v3381
        %4732 = vmatprep.subr.mxu0 %v3385
        %4733 = vmatpush1.msra.mxu0 %v3384
        %4734 = vmatprep.subr.mxu0 %v3388
        %4735 = vmatpush1.msra.mxu0 %v3387
        %4736 = vmatprep.subr.mxu0 %v3391
        %4737 = vmatpush1.msra.mxu0 %v3390
        %4738 = vmatprep.subr.mxu0 %v3394
        %4739 = vmatpush1.msra.mxu0 %v3393
        %4740 = vmatprep.subr.mxu0 %v3397
        %4741 = vmatpush1.msra.mxu0 %v3396
        %4742 = vmatprep.subr.mxu0 %v3400
        %4743 = vmatpush1.msra.mxu0 %v3399
        %4744 = vmatprep.subr.mxu0 %v3403
        %4745 = vmatpush1.msra.mxu0 %v3402
        %4746 = vmatprep.subr.mxu0 %v3406
        %4747 = vmatpush1.msra.mxu0 %v3405
        %4748 = vmatprep.subr.mxu0 %v3409
        %4749 = vmatpush1.msra.mxu0 %v3408
        %4750 = vmatprep.mubr.f32.mxu0 %v3267
        %4751 = vmatmul.mubr.f32.gmra.mrb[0].mxu0 %v3266
        %v4752 = vpop.f32.mrb[0].mxu0
        %v4753 = vadd.f32 %v4301, %v4752
        %v4754 = vpop.f32.mrb[0].mxu0
        %v4755 = vadd.f32 %v4303, %v4754
        %4756 = vmatprep.mubr.f32.mxu0 %v3274
        %4757 = vmatmul.mubr.f32.gmra.mrb[0].mxu0 %v3273
        %v4758 = vpop.f32.mrb[0].mxu0
        %v4759 = vadd.f32 %v4307, %v4758
        %v4760 = vpop.f32.mrb[0].mxu0
        %v4761 = vadd.f32 %v4309, %v4760
        %4762 = vmatprep.mubr.f32.mxu0 %v3281
        %4763 = vmatmul.mubr.f32.gmra.mrb[0].mxu0 %v3280
        %v4764 = vpop.f32.mrb[0].mxu0
        %v4765 = vadd.f32 %v4313, %v4764
        %v4766 = vpop.f32.mrb[0].mxu0
        %v4767 = vadd.f32 %v4315, %v4766
        %4768 = vmatprep.mubr.f32.mxu0 %v3288
        %4769 = vmatmul.mubr.f32.gmra.mrb[0].mxu0 %v3287
        %v4770 = vpop.f32.mrb[0].mxu0
        %v4771 = vadd.f32 %v4319, %v4770
        %v4772 = vpop.f32.mrb[0].mxu0
        %v4773 = vadd.f32 %v4321, %v4772
        %4774 = vmatprep.mubr.f32.mxu0 %v3295
        %4775 = vmatmul.mubr.f32.gmra.mrb[0].mxu0 %v3294
        %v4776 = vpop.f32.mrb[0].mxu0
        %v4777 = vpop.f32.mrb[0].mxu0
        %4778 = vdwg.mxu0
        %4779 = vmatprep.subr.mxu0 %v3412
        %4780 = vmatpush1.msra.mxu0 %v3411
        %4781 = vmatprep.subr.mxu0 %v3415
        %4782 = vmatpush1.msra.mxu0 %v3414
        %4783 = vmatprep.subr.mxu0 %v3418
        %4784 = vmatpush1.msra.mxu0 %v3417
        %4785 = vmatprep.subr.mxu0 %v3421
        %4786 = vmatpush1.msra.mxu0 %v3420
        %4787 = vmatprep.subr.mxu0 %v3424
        %4788 = vmatpush1.msra.mxu0 %v3423
        %4789 = vmatprep.subr.mxu0 %v3427
        %4790 = vmatpush1.msra.mxu0 %v3426
        %4791 = vmatprep.subr.mxu0 %v3430
        %4792 = vmatpush1.msra.mxu0 %v3429
        %4793 = vmatprep.subr.mxu0 %v3433
        %4794 = vmatpush1.msra.mxu0 %v3432
        %4795 = vmatprep.subr.mxu0 %v3436
        %4796 = vmatpush1.msra.mxu0 %v3435
        %4797 = vmatprep.subr.mxu0 %v3439
        %4798 = vmatpush1.msra.mxu0 %v3438
        %4799 = vmatprep.subr.mxu0 %v3442
        %4800 = vmatpush1.msra.mxu0 %v3441
        %4801 = vmatprep.subr.mxu0 %v3445
        %4802 = vmatpush1.msra.mxu0 %v3444
        %4803 = vmatprep.subr.mxu0 %v3448
        %4804 = vmatpush1.msra.mxu0 %v3447
        %4805 = vmatprep.subr.mxu0 %v3451
        %4806 = vmatpush1.msra.mxu0 %v3450
        %4807 = vmatprep.subr.mxu0 %v3454
        %4808 = vmatpush1.msra.mxu0 %v3453
        %4809 = vmatprep.subr.mxu0 %v3457
        %4810 = vmatpush1.msra.mxu0 %v3456
        %4811 = vmatprep.subr.mxu0 %v3460
        %4812 = vmatpush1.msra.mxu0 %v3459
        %4813 = vmatprep.subr.mxu0 %v3463
        %4814 = vmatpush1.msra.mxu0 %v3462
        %4815 = vmatprep.subr.mxu0 %v3466
        %4816 = vmatpush1.msra.mxu0 %v3465
        %4817 = vmatprep.subr.mxu0 %v3469
        %4818 = vmatpush1.msra.mxu0 %v3468
        %4819 = vmatprep.subr.mxu0 %v3472
        %4820 = vmatpush1.msra.mxu0 %v3471
        %4821 = vmatprep.subr.mxu0 %v3475
        %4822 = vmatpush1.msra.mxu0 %v3474
        %4823 = vmatprep.subr.mxu0 %v3478
        %4824 = vmatpush1.msra.mxu0 %v3477
        %4825 = vmatprep.subr.mxu0 %v3481
        %4826 = vmatpush1.msra.mxu0 %v3480
        %4827 = vmatprep.subr.mxu0 %v3484
        %4828 = vmatpush1.msra.mxu0 %v3483
        %4829 = vmatprep.subr.mxu0 %v3487
        %4830 = vmatpush1.msra.mxu0 %v3486
        %4831 = vmatprep.subr.mxu0 %v3490
        %4832 = vmatpush1.msra.mxu0 %v3489
        %4833 = vmatprep.subr.mxu0 %v3493
        %4834 = vmatpush1.msra.mxu0 %v3492
        %4835 = vmatprep.subr.mxu0 %v3496
        %4836 = vmatpush1.msra.mxu0 %v3495
        %4837 = vmatprep.subr.mxu0 %v3499
        %4838 = vmatpush1.msra.mxu0 %v3498
        %4839 = vmatprep.subr.mxu0 %v3502
        %4840 = vmatpush1.msra.mxu0 %v3501
        %4841 = vmatprep.subr.mxu0 %v3505
        %4842 = vmatpush1.msra.mxu0 %v3504
        %4843 = vmatprep.mubr.f32.mxu0 %v3269
        %4844 = vmatmul.mubr.f32.gmra.mrb[0].mxu0 %v3268
        %v4845 = vpop.f32.mrb[0].mxu0
        %v4846 = vadd.f32 %v4753, %v4845
        %v4847 = vpop.f32.mrb[0].mxu0
        %v4848 = vadd.f32 %v4755, %v4847
        %4849 = vmatprep.mubr.f32.mxu0 %v3276
        %4850 = vmatmul.mubr.f32.gmra.mrb[0].mxu0 %v3275
        %v4851 = vpop.f32.mrb[0].mxu0
        %v4852 = vadd.f32 %v4759, %v4851
        %v4853 = vpop.f32.mrb[0].mxu0
        %v4854 = vadd.f32 %v4761, %v4853
        %4855 = vmatprep.mubr.f32.mxu0 %v3283
        %4856 = vmatmul.mubr.f32.gmra.mrb[0].mxu0 %v3282
        %v4857 = vpop.f32.mrb[0].mxu0
        %v4858 = vadd.f32 %v4765, %v4857
        %v4859 = vpop.f32.mrb[0].mxu0
        %v4860 = vadd.f32 %v4767, %v4859
        %4861 = vmatprep.mubr.f32.mxu0 %v3290
        %4862 = vmatmul.mubr.f32.gmra.mrb[0].mxu0 %v3289
        %v4863 = vpop.f32.mrb[0].mxu0
        %v4864 = vadd.f32 %v4771, %v4863
        %v4865 = vpop.f32.mrb[0].mxu0
        %v4866 = vadd.f32 %v4773, %v4865
        %4867 = vmatprep.mubr.f32.mxu0 %v3297
        %4868 = vmatmul.mubr.f32.gmra.mrb[0].mxu0 %v3296
        %v4869 = vpop.f32.mrb[0].mxu0
        %v4870 = vpop.f32.mrb[0].mxu0
        %4871 = vdwg.mxu0
        %4872 = vmatprep.subr.mxu0 %v3508
        %4873 = vmatpush1.msra.mxu0 %v3507
        %4874 = vmatprep.subr.mxu0 %v3511
        %4875 = vmatpush1.msra.mxu0 %v3510
        %4876 = vmatprep.subr.mxu0 %v3514
        %4877 = vmatpush1.msra.mxu0 %v3513
        %4878 = vmatprep.subr.mxu0 %v3517
        %4879 = vmatpush1.msra.mxu0 %v3516
        %4880 = vmatprep.subr.mxu0 %v3520
        %4881 = vmatpush1.msra.mxu0 %v3519
        %4882 = vmatprep.subr.mxu0 %v3523
        %4883 = vmatpush1.msra.mxu0 %v3522
        %4884 = vmatprep.subr.mxu0 %v3526
        %4885 = vmatpush1.msra.mxu0 %v3525
        %4886 = vmatprep.subr.mxu0 %v3529
        %4887 = vmatpush1.msra.mxu0 %v3528
        %4888 = vmatprep.subr.mxu0 %v3532
        %4889 = vmatpush1.msra.mxu0 %v3531
        %4890 = vmatprep.subr.mxu0 %v3535
        %4891 = vmatpush1.msra.mxu0 %v3534
        %4892 = vmatprep.subr.mxu0 %v3538
        %4893 = vmatpush1.msra.mxu0 %v3537
        %4894 = vmatprep.subr.mxu0 %v3541
        %4895 = vmatpush1.msra.mxu0 %v3540
        %4896 = vmatprep.subr.mxu0 %v3544
        %4897 = vmatpush1.msra.mxu0 %v3543
        %4898 = vmatprep.subr.mxu0 %v3547
        %4899 = vmatpush1.msra.mxu0 %v3546
        %4900 = vmatprep.subr.mxu0 %v3550
        %4901 = vmatpush1.msra.mxu0 %v3549
        %4902 = vmatprep.subr.mxu0 %v3553
        %4903 = vmatpush1.msra.mxu0 %v3552
        %4904 = vmatprep.subr.mxu0 %v3556
        %4905 = vmatpush1.msra.mxu0 %v3555
        %4906 = vmatprep.subr.mxu0 %v3559
        %4907 = vmatpush1.msra.mxu0 %v3558
        %4908 = vmatprep.subr.mxu0 %v3562
        %4909 = vmatpush1.msra.mxu0 %v3561
        %4910 = vmatprep.subr.mxu0 %v3565
        %4911 = vmatpush1.msra.mxu0 %v3564
        %4912 = vmatprep.subr.mxu0 %v3568
        %4913 = vmatpush1.msra.mxu0 %v3567
        %4914 = vmatprep.subr.mxu0 %v3571
        %4915 = vmatpush1.msra.mxu0 %v3570
        %4916 = vmatprep.subr.mxu0 %v3574
        %4917 = vmatpush1.msra.mxu0 %v3573
        %4918 = vmatprep.subr.mxu0 %v3577
        %4919 = vmatpush1.msra.mxu0 %v3576
        %4920 = vmatprep.subr.mxu0 %v3580
        %4921 = vmatpush1.msra.mxu0 %v3579
        %4922 = vmatprep.subr.mxu0 %v3583
        %4923 = vmatpush1.msra.mxu0 %v3582
        %4924 = vmatprep.subr.mxu0 %v3586
        %4925 = vmatpush1.msra.mxu0 %v3585
        %4926 = vmatprep.subr.mxu0 %v3589
        %4927 = vmatpush1.msra.mxu0 %v3588
        %4928 = vmatprep.subr.mxu0 %v3592
        %4929 = vmatpush1.msra.mxu0 %v3591
        %4930 = vmatprep.subr.mxu0 %v3595
        %4931 = vmatpush1.msra.mxu0 %v3594
        %4932 = vmatprep.subr.mxu0 %v3598
        %4933 = vmatpush1.msra.mxu0 %v3597
        %4934 = vmatprep.subr.mxu0 %v3601
        %4935 = vmatpush1.msra.mxu0 %v3600
        %4936 = vmatprep.mubr.f32.mxu0 %v3271
        %4937 = vmatmul.mubr.f32.gmra.mrb[0].mxu0 %v3270
        %v4938 = vpop.f32.mrb[0].mxu0
        %v4939 = vadd.f32 %v4846, %v4938
        %v4940 = vpop.f32.mrb[0].mxu0
        %v4941 = vadd.f32 %v4848, %v4940
        %4942 = vmatprep.mubr.f32.mxu0 %v3278
        %4943 = vmatmul.mubr.f32.gmra.mrb[0].mxu0 %v3277
        %v4944 = vpop.f32.mrb[0].mxu0
        %v4945 = vadd.f32 %v4852, %v4944
        %v4946 = vpop.f32.mrb[0].mxu0
        %v4947 = vadd.f32 %v4854, %v4946
        %4948 = vmatprep.mubr.f32.mxu0 %v3285
        %4949 = vmatmul.mubr.f32.gmra.mrb[0].mxu0 %v3284
        %v4950 = vpop.f32.mrb[0].mxu0
        %v4951 = vadd.f32 %v4858, %v4950
        %v4952 = vpop.f32.mrb[0].mxu0
        %v4953 = vadd.f32 %v4860, %v4952
        %4954 = vmatprep.mubr.f32.mxu0 %v3292
        %4955 = vmatmul.mubr.f32.gmra.mrb[0].mxu0 %v3291
        %v4956 = vpop.f32.mrb[0].mxu0
        %v4957 = vadd.f32 %v4864, %v4956
        %v4958 = vpop.f32.mrb[0].mxu0
        %v4959 = vadd.f32 %v4866, %v4958
        %4960 = vmatprep.mubr.f32.mxu0 %v3299
        %4961 = vmatmul.mubr.f32.gmra.mrb[0].mxu0 %v3298
        %v4962 = vpop.f32.mrb[0].mxu0
        %v4963 = vpop.f32.mrb[0].mxu0
        %4964 = vdwg.mxu0
        %4965 = vmatprep.subr.mxu0 %v3604
        %4966 = vmatpush1.msra.mxu0 %v3603
        %4967 = vmatprep.subr.mxu0 %v3607
        %4968 = vmatpush1.msra.mxu0 %v3606
        %4969 = vmatprep.subr.mxu0 %v3610
        %4970 = vmatpush1.msra.mxu0 %v3609
        %4971 = vmatprep.subr.mxu0 %v3613
        %4972 = vmatpush1.msra.mxu0 %v3612
        %4973 = vmatprep.subr.mxu0 %v3616
        %4974 = vmatpush1.msra.mxu0 %v3615
        %4975 = vmatprep.subr.mxu0 %v3619
        %4976 = vmatpush1.msra.mxu0 %v3618
        %4977 = vmatprep.subr.mxu0 %v3622
        %4978 = vmatpush1.msra.mxu0 %v3621
        %4979 = vmatprep.subr.mxu0 %v3625
        %4980 = vmatpush1.msra.mxu0 %v3624
        %4981 = vmatprep.subr.mxu0 0.0
        %4982 = vmatpush1.msra.mxu0 0.0
        %4983 = vmatprep.subr.mxu0 0.0
        %4984 = vmatpush1.msra.mxu0 0.0
        %4985 = vmatprep.subr.mxu0 0.0
        %4986 = vmatpush1.msra.mxu0 0.0
        %4987 = vmatprep.subr.mxu0 0.0
        %4988 = vmatpush1.msra.mxu0 0.0
        %4989 = vmatprep.subr.mxu0 0.0
        %4990 = vmatpush1.msra.mxu0 0.0
        %4991 = vmatprep.subr.mxu0 0.0
        %4992 = vmatpush1.msra.mxu0 0.0
        %4993 = vmatprep.subr.mxu0 0.0
        %4994 = vmatpush1.msra.mxu0 0.0
        %4995 = vmatprep.subr.mxu0 0.0
        %4996 = vmatpush1.msra.mxu0 0.0
        %4997 = vmatprep.subr.mxu0 0.0
        %4998 = vmatpush1.msra.mxu0 0.0
        %4999 = vmatprep.subr.mxu0 0.0
        %5000 = vmatpush1.msra.mxu0 0.0
        %5001 = vmatprep.subr.mxu0 0.0
        %5002 = vmatpush1.msra.mxu0 0.0
        %5003 = vmatprep.subr.mxu0 0.0
        %5004 = vmatpush1.msra.mxu0 0.0
        %5005 = vmatprep.subr.mxu0 0.0
        %5006 = vmatpush1.msra.mxu0 0.0
        %5007 = vmatprep.subr.mxu0 0.0
        %5008 = vmatpush1.msra.mxu0 0.0
        %5009 = vmatprep.subr.mxu0 0.0
        %5010 = vmatpush1.msra.mxu0 0.0
        %5011 = vmatprep.subr.mxu0 0.0
        %5012 = vmatpush1.msra.mxu0 0.0
        %5013 = vmatprep.subr.mxu0 0.0
        %5014 = vmatpush1.msra.mxu0 0.0
        %5015 = vmatprep.subr.mxu0 0.0
        %5016 = vmatpush1.msra.mxu0 0.0
        %5017 = vmatprep.subr.mxu0 0.0
        %5018 = vmatpush1.msra.mxu0 0.0
        %5019 = vmatprep.subr.mxu0 0.0
        %5020 = vmatpush1.msra.mxu0 0.0
        %5021 = vmatprep.subr.mxu0 0.0
        %5022 = vmatpush1.msra.mxu0 0.0
        %5023 = vmatprep.subr.mxu0 0.0
        %5024 = vmatpush1.msra.mxu0 0.0
        %5025 = vmatprep.subr.mxu0 0.0
        %5026 = vmatpush1.msra.mxu0 0.0
        %5027 = vmatprep.subr.mxu0 0.0
        %5028 = vmatpush1.msra.mxu0 0.0
        %5029 = vmatprep.mubr.f32.mxu0 0.0
        %5030 = vmatmul.mubr.f32.gmra.mrb[0].mxu0 %v4684
        %v5031 = vpop.f32.mrb[0].mxu0
        %v5032 = vadd.f32 %v4939, %v5031
        %v5033 = vpop.f32.mrb[0].mxu0
        %v5034 = vadd.f32 %v4941, %v5033
        %5035 = vmatprep.mubr.f32.mxu0 0.0
        %5036 = vmatmul.mubr.f32.gmra.mrb[0].mxu0 %v3941
        %v5037 = vpop.f32.mrb[0].mxu0
        %v5038 = vadd.f32 %v4945, %v5037
        %v5039 = vpop.f32.mrb[0].mxu0
        %v5040 = vadd.f32 %v4947, %v5039
        %5041 = vmatprep.mubr.f32.mxu0 0.0
        %5042 = vmatmul.mubr.f32.gmra.mrb[0].mxu0 %v3944
        %v5043 = vpop.f32.mrb[0].mxu0
        %v5044 = vadd.f32 %v4951, %v5043
        %v5045 = vpop.f32.mrb[0].mxu0
        %v5046 = vadd.f32 %v4953, %v5045
        %5047 = vmatprep.mubr.f32.mxu0 0.0
        %5048 = vmatmul.mubr.f32.gmra.mrb[0].mxu0 %v3947
        %v5049 = vpop.f32.mrb[0].mxu0
        %v5050 = vadd.f32 %v4957, %v5049
        %v5051 = vpop.f32.mrb[0].mxu0
        %v5052 = vadd.f32 %v4959, %v5051
        %5053 = vmatprep.mubr.f32.mxu0 0.0
        %5054 = vmatmul.mubr.f32.gmra.mrb[0].mxu0 %v3950
        %v5055 = vpop.f32.mrb[0].mxu0
        %v5056 = vpop.f32.mrb[0].mxu0
        %5057 = vdwg.mxu0
        %5058 = vmatprep.subr.mxu0 0.0
        %5059 = vmatpush1.msra.mxu0 %v3317
        %5060 = vmatprep.subr.mxu0 0.0
        %5061 = vmatpush1.msra.mxu0 %v3320
        %5062 = vmatprep.subr.mxu0 0.0
        %5063 = vmatpush1.msra.mxu0 %v3323
        %5064 = vmatprep.subr.mxu0 0.0
        %5065 = vmatpush1.msra.mxu0 %v3326
        %5066 = vmatprep.subr.mxu0 0.0
        %5067 = vmatpush1.msra.mxu0 %v3329
        %5068 = vmatprep.subr.mxu0 0.0
        %5069 = vmatpush1.msra.mxu0 %v3332
        %5070 = vmatprep.subr.mxu0 0.0
        %5071 = vmatpush1.msra.mxu0 %v3335
        %5072 = vmatprep.subr.mxu0 0.0
        %5073 = vmatpush1.msra.mxu0 %v3338
        %5074 = vmatprep.subr.mxu0 0.0
        %5075 = vmatpush1.msra.mxu0 %v3341
        %5076 = vmatprep.subr.mxu0 0.0
        %5077 = vmatpush1.msra.mxu0 %v3344
        %5078 = vmatprep.subr.mxu0 0.0
        %5079 = vmatpush1.msra.mxu0 %v3347
        %5080 = vmatprep.subr.mxu0 0.0
        %5081 = vmatpush1.msra.mxu0 %v3350
        %5082 = vmatprep.subr.mxu0 0.0
        %5083 = vmatpush1.msra.mxu0 %v3353
        %5084 = vmatprep.subr.mxu0 0.0
        %5085 = vmatpush1.msra.mxu0 %v3356
        %5086 = vmatprep.subr.mxu0 0.0
        %5087 = vmatpush1.msra.mxu0 %v3359
        %5088 = vmatprep.subr.mxu0 0.0
        %5089 = vmatpush1.msra.mxu0 %v3362
        %5090 = vmatprep.subr.mxu0 0.0
        %5091 = vmatpush1.msra.mxu0 %v3365
        %5092 = vmatprep.subr.mxu0 0.0
        %5093 = vmatpush1.msra.mxu0 %v3368
        %5094 = vmatprep.subr.mxu0 0.0
        %5095 = vmatpush1.msra.mxu0 %v3371
        %5096 = vmatprep.subr.mxu0 0.0
        %5097 = vmatpush1.msra.mxu0 %v3374
        %5098 = vmatprep.subr.mxu0 0.0
        %5099 = vmatpush1.msra.mxu0 %v3377
        %5100 = vmatprep.subr.mxu0 0.0
        %5101 = vmatpush1.msra.mxu0 %v3380
        %5102 = vmatprep.subr.mxu0 0.0
        %5103 = vmatpush1.msra.mxu0 %v3383
        %5104 = vmatprep.subr.mxu0 0.0
        %5105 = vmatpush1.msra.mxu0 %v3386
        %5106 = vmatprep.subr.mxu0 0.0
        %5107 = vmatpush1.msra.mxu0 %v3389
        %5108 = vmatprep.subr.mxu0 0.0
        %5109 = vmatpush1.msra.mxu0 %v3392
        %5110 = vmatprep.subr.mxu0 0.0
        %5111 = vmatpush1.msra.mxu0 %v3395
        %5112 = vmatprep.subr.mxu0 0.0
        %5113 = vmatpush1.msra.mxu0 %v3398
        %5114 = vmatprep.subr.mxu0 0.0
        %5115 = vmatpush1.msra.mxu0 %v3401
        %5116 = vmatprep.subr.mxu0 0.0
        %5117 = vmatpush1.msra.mxu0 %v3404
        %5118 = vmatprep.subr.mxu0 0.0
        %5119 = vmatpush1.msra.mxu0 %v3407
        %5120 = vmatprep.subr.mxu0 0.0
        %5121 = vmatpush1.msra.mxu0 %v3410
        %5122 = vmatprep.mubr.f32.mxu0 %v3267
        %5123 = vmatmul.mubr.f32.gmra.mrb[0].mxu0 %v3266
        %v5124 = vpop.f32.mrb[0].mxu0
        %v5125 = vadd.f32 %v4661, %v5124
        %v5126 = vpop.f32.mrb[0].mxu0
        %5127 = vmatprep.mubr.f32.mxu0 %v3274
        %5128 = vmatmul.mubr.f32.gmra.mrb[0].mxu0 %v3273
        %v5129 = vpop.f32.mrb[0].mxu0
        %v5130 = vadd.f32 %v4666, %v5129
        %v5131 = vpop.f32.mrb[0].mxu0
        %5132 = vmatprep.mubr.f32.mxu0 %v3281
        %5133 = vmatmul.mubr.f32.gmra.mrb[0].mxu0 %v3280
        %v5134 = vpop.f32.mrb[0].mxu0
        %v5135 = vadd.f32 %v4671, %v5134
        %v5136 = vpop.f32.mrb[0].mxu0
        %5137 = vmatprep.mubr.f32.mxu0 %v3288
        %5138 = vmatmul.mubr.f32.gmra.mrb[0].mxu0 %v3287
        %v5139 = vpop.f32.mrb[0].mxu0
        %v5140 = vadd.f32 %v4676, %v5139
        %v5141 = vpop.f32.mrb[0].mxu0
        %5142 = vmatprep.mubr.f32.mxu0 %v3295
        %5143 = vmatmul.mubr.f32.gmra.mrb[0].mxu0 %v3294
        %v5144 = vpop.f32.mrb[0].mxu0
        %v5145 = vpop.f32.mrb[0].mxu0
        %5146 = vdwg.mxu0
        %5147 = vmatprep.subr.mxu0 0.0
        %5148 = vmatpush1.msra.mxu0 %v3413
        %5149 = vmatprep.subr.mxu0 0.0
        %5150 = vmatpush1.msra.mxu0 %v3416
        %5151 = vmatprep.subr.mxu0 0.0
        %5152 = vmatpush1.msra.mxu0 %v3419
        %5153 = vmatprep.subr.mxu0 0.0
        %5154 = vmatpush1.msra.mxu0 %v3422
        %5155 = vmatprep.subr.mxu0 0.0
        %5156 = vmatpush1.msra.mxu0 %v3425
        %5157 = vmatprep.subr.mxu0 0.0
        %5158 = vmatpush1.msra.mxu0 %v3428
        %5159 = vmatprep.subr.mxu0 0.0
        %5160 = vmatpush1.msra.mxu0 %v3431
        %5161 = vmatprep.subr.mxu0 0.0
        %5162 = vmatpush1.msra.mxu0 %v3434
        %5163 = vmatprep.subr.mxu0 0.0
        %5164 = vmatpush1.msra.mxu0 %v3437
        %5165 = vmatprep.subr.mxu0 0.0
        %5166 = vmatpush1.msra.mxu0 %v3440
        %5167 = vmatprep.subr.mxu0 0.0
        %5168 = vmatpush1.msra.mxu0 %v3443
        %5169 = vmatprep.subr.mxu0 0.0
        %5170 = vmatpush1.msra.mxu0 %v3446
        %5171 = vmatprep.subr.mxu0 0.0
        %5172 = vmatpush1.msra.mxu0 %v3449
        %5173 = vmatprep.subr.mxu0 0.0
        %5174 = vmatpush1.msra.mxu0 %v3452
        %5175 = vmatprep.subr.mxu0 0.0
        %5176 = vmatpush1.msra.mxu0 %v3455
        %5177 = vmatprep.subr.mxu0 0.0
        %5178 = vmatpush1.msra.mxu0 %v3458
        %5179 = vmatprep.subr.mxu0 0.0
        %5180 = vmatpush1.msra.mxu0 %v3461
        %5181 = vmatprep.subr.mxu0 0.0
        %5182 = vmatpush1.msra.mxu0 %v3464
        %5183 = vmatprep.subr.mxu0 0.0
        %5184 = vmatpush1.msra.mxu0 %v3467
        %5185 = vmatprep.subr.mxu0 0.0
        %5186 = vmatpush1.msra.mxu0 %v3470
        %5187 = vmatprep.subr.mxu0 0.0
        %5188 = vmatpush1.msra.mxu0 %v3473
        %5189 = vmatprep.subr.mxu0 0.0
        %5190 = vmatpush1.msra.mxu0 %v3476
        %5191 = vmatprep.subr.mxu0 0.0
        %5192 = vmatpush1.msra.mxu0 %v3479
        %5193 = vmatprep.subr.mxu0 0.0
        %5194 = vmatpush1.msra.mxu0 %v3482
        %5195 = vmatprep.subr.mxu0 0.0
        %5196 = vmatpush1.msra.mxu0 %v3485
        %5197 = vmatprep.subr.mxu0 0.0
        %5198 = vmatpush1.msra.mxu0 %v3488
        %5199 = vmatprep.subr.mxu0 0.0
        %5200 = vmatpush1.msra.mxu0 %v3491
        %5201 = vmatprep.subr.mxu0 0.0
        %5202 = vmatpush1.msra.mxu0 %v3494
        %5203 = vmatprep.subr.mxu0 0.0
        %5204 = vmatpush1.msra.mxu0 %v3497
        %5205 = vmatprep.subr.mxu0 0.0
        %5206 = vmatpush1.msra.mxu0 %v3500
        %5207 = vmatprep.subr.mxu0 0.0
        %5208 = vmatpush1.msra.mxu0 %v3503
        %5209 = vmatprep.subr.mxu0 0.0
        %5210 = vmatpush1.msra.mxu0 %v3506
        %5211 = vmatprep.mubr.f32.mxu0 %v3269
        %5212 = vmatmul.mubr.f32.gmra.mrb[0].mxu0 %v3268
        %v5213 = vpop.f32.mrb[0].mxu0
        %v5214 = vadd.f32 %v5125, %v5213
        %v5215 = vpop.f32.mrb[0].mxu0
        %5216 = vmatprep.mubr.f32.mxu0 %v3276
        %5217 = vmatmul.mubr.f32.gmra.mrb[0].mxu0 %v3275
        %v5218 = vpop.f32.mrb[0].mxu0
        %v5219 = vadd.f32 %v5130, %v5218
        %v5220 = vpop.f32.mrb[0].mxu0
        %5221 = vmatprep.mubr.f32.mxu0 %v3283
        %5222 = vmatmul.mubr.f32.gmra.mrb[0].mxu0 %v3282
        %v5223 = vpop.f32.mrb[0].mxu0
        %v5224 = vadd.f32 %v5135, %v5223
        %v5225 = vpop.f32.mrb[0].mxu0
        %5226 = vmatprep.mubr.f32.mxu0 %v3290
        %5227 = vmatmul.mubr.f32.gmra.mrb[0].mxu0 %v3289
        %v5228 = vpop.f32.mrb[0].mxu0
        %v5229 = vadd.f32 %v5140, %v5228
        %v5230 = vpop.f32.mrb[0].mxu0
        %5231 = vmatprep.mubr.f32.mxu0 %v3297
        %5232 = vmatmul.mubr.f32.gmra.mrb[0].mxu0 %v3296
        %v5233 = vpop.f32.mrb[0].mxu0
        %v5234 = vpop.f32.mrb[0].mxu0
        %5235 = vdwg.mxu0
        %5236 = vmatprep.subr.mxu0 0.0
        %5237 = vmatpush1.msra.mxu0 %v3509
        %5238 = vmatprep.subr.mxu0 0.0
        %5239 = vmatpush1.msra.mxu0 %v3512
        %5240 = vmatprep.subr.mxu0 0.0
        %5241 = vmatpush1.msra.mxu0 %v3515
        %5242 = vmatprep.subr.mxu0 0.0
        %5243 = vmatpush1.msra.mxu0 %v3518
        %5244 = vmatprep.subr.mxu0 0.0
        %5245 = vmatpush1.msra.mxu0 %v3521
        %5246 = vmatprep.subr.mxu0 0.0
        %5247 = vmatpush1.msra.mxu0 %v3524
        %5248 = vmatprep.subr.mxu0 0.0
        %5249 = vmatpush1.msra.mxu0 %v3527
        %5250 = vmatprep.subr.mxu0 0.0
        %5251 = vmatpush1.msra.mxu0 %v3530
        %5252 = vmatprep.subr.mxu0 0.0
        %5253 = vmatpush1.msra.mxu0 %v3533
        %5254 = vmatprep.subr.mxu0 0.0
        %5255 = vmatpush1.msra.mxu0 %v3536
        %5256 = vmatprep.subr.mxu0 0.0
        %5257 = vmatpush1.msra.mxu0 %v3539
        %5258 = vmatprep.subr.mxu0 0.0
        %5259 = vmatpush1.msra.mxu0 %v3542
        %5260 = vmatprep.subr.mxu0 0.0
        %5261 = vmatpush1.msra.mxu0 %v3545
        %5262 = vmatprep.subr.mxu0 0.0
        %5263 = vmatpush1.msra.mxu0 %v3548
        %5264 = vmatprep.subr.mxu0 0.0
        %5265 = vmatpush1.msra.mxu0 %v3551
        %5266 = vmatprep.subr.mxu0 0.0
        %5267 = vmatpush1.msra.mxu0 %v3554
        %5268 = vmatprep.subr.mxu0 0.0
        %5269 = vmatpush1.msra.mxu0 %v3557
        %5270 = vmatprep.subr.mxu0 0.0
        %5271 = vmatpush1.msra.mxu0 %v3560
        %5272 = vmatprep.subr.mxu0 0.0
        %5273 = vmatpush1.msra.mxu0 %v3563
        %5274 = vmatprep.subr.mxu0 0.0
        %5275 = vmatpush1.msra.mxu0 %v3566
        %5276 = vmatprep.subr.mxu0 0.0
        %5277 = vmatpush1.msra.mxu0 %v3569
        %5278 = vmatprep.subr.mxu0 0.0
        %5279 = vmatpush1.msra.mxu0 %v3572
        %5280 = vmatprep.subr.mxu0 0.0
        %5281 = vmatpush1.msra.mxu0 %v3575
        %5282 = vmatprep.subr.mxu0 0.0
        %5283 = vmatpush1.msra.mxu0 %v3578
        %5284 = vmatprep.subr.mxu0 0.0
        %5285 = vmatpush1.msra.mxu0 %v3581
        %5286 = vmatprep.subr.mxu0 0.0
        %5287 = vmatpush1.msra.mxu0 %v3584
        %5288 = vmatprep.subr.mxu0 0.0
        %5289 = vmatpush1.msra.mxu0 %v3587
        %5290 = vmatprep.subr.mxu0 0.0
        %5291 = vmatpush1.msra.mxu0 %v3590
        %5292 = vmatprep.subr.mxu0 0.0
        %5293 = vmatpush1.msra.mxu0 %v3593
        %5294 = vmatprep.subr.mxu0 0.0
        %5295 = vmatpush1.msra.mxu0 %v3596
        %5296 = vmatprep.subr.mxu0 0.0
        %5297 = vmatpush1.msra.mxu0 %v3599
        %5298 = vmatprep.subr.mxu0 0.0
        %5299 = vmatpush1.msra.mxu0 %v3602
        %5300 = vmatprep.mubr.f32.mxu0 %v3271
        %5301 = vmatmul.mubr.f32.gmra.mrb[0].mxu0 %v3270
        %v5302 = vpop.f32.mrb[0].mxu0
        %v5303 = vadd.f32 %v5214, %v5302
        %v5304 = vpop.f32.mrb[0].mxu0
        %5305 = vmatprep.mubr.f32.mxu0 %v3278
        %5306 = vmatmul.mubr.f32.gmra.mrb[0].mxu0 %v3277
        %v5307 = vpop.f32.mrb[0].mxu0
        %v5308 = vadd.f32 %v5219, %v5307
        %v5309 = vpop.f32.mrb[0].mxu0
        %5310 = vmatprep.mubr.f32.mxu0 %v3285
        %5311 = vmatmul.mubr.f32.gmra.mrb[0].mxu0 %v3284
        %v5312 = vpop.f32.mrb[0].mxu0
        %v5313 = vadd.f32 %v5224, %v5312
        %v5314 = vpop.f32.mrb[0].mxu0
        %5315 = vmatprep.mubr.f32.mxu0 %v3292
        %5316 = vmatmul.mubr.f32.gmra.mrb[0].mxu0 %v3291
        %v5317 = vpop.f32.mrb[0].mxu0
        %v5318 = vadd.f32 %v5229, %v5317
        %v5319 = vpop.f32.mrb[0].mxu0
        %5320 = vmatprep.mubr.f32.mxu0 %v3299
        %5321 = vmatmul.mubr.f32.gmra.mrb[0].mxu0 %v3298
        %v5322 = vpop.f32.mrb[0].mxu0
        %v5323 = vpop.f32.mrb[0].mxu0
        %5324 = vdwg.mxu0
        %5325 = vmatprep.subr.mxu0 0.0
        %5326 = vmatpush1.msra.mxu0 %v3605
        %5327 = vmatprep.subr.mxu0 0.0
        %5328 = vmatpush1.msra.mxu0 %v3608
        %5329 = vmatprep.subr.mxu0 0.0
        %5330 = vmatpush1.msra.mxu0 %v3611
        %5331 = vmatprep.subr.mxu0 0.0
        %5332 = vmatpush1.msra.mxu0 %v3614
        %5333 = vmatprep.subr.mxu0 0.0
        %5334 = vmatpush1.msra.mxu0 %v3617
        %5335 = vmatprep.subr.mxu0 0.0
        %5336 = vmatpush1.msra.mxu0 %v3620
        %5337 = vmatprep.subr.mxu0 0.0
        %5338 = vmatpush1.msra.mxu0 %v3623
        %5339 = vmatprep.subr.mxu0 0.0
        %5340 = vmatpush1.msra.mxu0 %v3626
        %5341 = vmatprep.subr.mxu0 0.0
        %5342 = vmatpush1.msra.mxu0 0.0
        %5343 = vmatprep.subr.mxu0 0.0
        %5344 = vmatpush1.msra.mxu0 0.0
        %5345 = vmatprep.subr.mxu0 0.0
        %5346 = vmatpush1.msra.mxu0 0.0
        %5347 = vmatprep.subr.mxu0 0.0
        %5348 = vmatpush1.msra.mxu0 0.0
        %5349 = vmatprep.subr.mxu0 0.0
        %5350 = vmatpush1.msra.mxu0 0.0
        %5351 = vmatprep.subr.mxu0 0.0
        %5352 = vmatpush1.msra.mxu0 0.0
        %5353 = vmatprep.subr.mxu0 0.0
        %5354 = vmatpush1.msra.mxu0 0.0
        %5355 = vmatprep.subr.mxu0 0.0
        %5356 = vmatpush1.msra.mxu0 0.0
        %5357 = vmatprep.subr.mxu0 0.0
        %5358 = vmatpush1.msra.mxu0 0.0
        %5359 = vmatprep.subr.mxu0 0.0
        %5360 = vmatpush1.msra.mxu0 0.0
        %5361 = vmatprep.subr.mxu0 0.0
        %5362 = vmatpush1.msra.mxu0 0.0
        %5363 = vmatprep.subr.mxu0 0.0
        %5364 = vmatpush1.msra.mxu0 0.0
        %5365 = vmatprep.subr.mxu0 0.0
        %5366 = vmatpush1.msra.mxu0 0.0
        %5367 = vmatprep.subr.mxu0 0.0
        %5368 = vmatpush1.msra.mxu0 0.0
        %5369 = vmatprep.subr.mxu0 0.0
        %5370 = vmatpush1.msra.mxu0 0.0
        %5371 = vmatprep.subr.mxu0 0.0
        %5372 = vmatpush1.msra.mxu0 0.0
        %5373 = vmatprep.subr.mxu0 0.0
        %5374 = vmatpush1.msra.mxu0 0.0
        %5375 = vmatprep.subr.mxu0 0.0
        %5376 = vmatpush1.msra.mxu0 0.0
        %5377 = vmatprep.subr.mxu0 0.0
        %5378 = vmatpush1.msra.mxu0 0.0
        %5379 = vmatprep.subr.mxu0 0.0
        %5380 = vmatpush1.msra.mxu0 0.0
        %5381 = vmatprep.subr.mxu0 0.0
        %5382 = vmatpush1.msra.mxu0 0.0
        %5383 = vmatprep.subr.mxu0 0.0
        %5384 = vmatpush1.msra.mxu0 0.0
        %5385 = vmatprep.subr.mxu0 0.0
        %5386 = vmatpush1.msra.mxu0 0.0
        %5387 = vmatprep.subr.mxu0 0.0
        %5388 = vmatpush1.msra.mxu0 0.0
        %5389 = vmatprep.mubr.f32.mxu0 0.0
        %5390 = vmatmul.mubr.f32.gmra.mrb[0].mxu0 %v4684
        %v5391 = vpop.f32.mrb[0].mxu0
        %v5392 = vadd.f32 %v5303, %v5391
        %v5393 = vpop.f32.mrb[0].mxu0
        %5394 = vmatprep.mubr.f32.mxu0 0.0
        %5395 = vmatmul.mubr.f32.gmra.mrb[0].mxu0 %v3941
        %v5396 = vpop.f32.mrb[0].mxu0
        %v5397 = vadd.f32 %v5308, %v5396
        %v5398 = vpop.f32.mrb[0].mxu0
        %5399 = vmatprep.mubr.f32.mxu0 0.0
        %5400 = vmatmul.mubr.f32.gmra.mrb[0].mxu0 %v3944
        %v5401 = vpop.f32.mrb[0].mxu0
        %v5402 = vadd.f32 %v5313, %v5401
        %v5403 = vpop.f32.mrb[0].mxu0
        %5404 = vmatprep.mubr.f32.mxu0 0.0
        %5405 = vmatmul.mubr.f32.gmra.mrb[0].mxu0 %v3947
        %v5406 = vpop.f32.mrb[0].mxu0
        %v5407 = vadd.f32 %v5318, %v5406
        %v5408 = vpop.f32.mrb[0].mxu0
        %5409 = vmatprep.mubr.f32.mxu0 0.0
        %5410 = vmatmul.mubr.f32.gmra.mrb[0].mxu0 %v3950
        %v5411 = vpop.f32.mrb[0].mxu0
        %v5412 = vpop.f32.mrb[0].mxu0
        %5413 = vdwg.mxu0
        %s5414 = scalar_lea.vmem %s3, 4992
        %v5415 = vld [vmem:[%s5414] sm:$0xff]
        %v5416 = vld [vmem:[%s5414 + $0x8] sm:$0xff]
        %v5417 = vld [vmem:[%s5414 + $0x10] sm:$0xff]
        %v5418 = vld [vmem:[%s5414 + $0x18] sm:$0xff]
        %v5419 = vld [vmem:[%s5414 + $0x20] sm:$0xff]
        %v5420 = vld [vmem:[%s5414 + $0x28] sm:$0xff]
        %v5421 = vld [vmem:[%s5414 + $0x30] sm:$0xff]
        %v5422 = vld [vmem:[%s5414 + $0x38] sm:$0xff]
        %v5423 = vld [vmem:[%s5414 + $0x40] sm:$0xff]
        %v5424 = vld [vmem:[%s5414 + $0x48] sm:$0xff]
        %v5425 = vld [vmem:[%s5414 + $0x50] sm:$0xff]
        %v5426 = vld [vmem:[%s5414 + $0x58] sm:$0xff]
        %v5427 = vld [vmem:[%s5414 + $0x60] sm:$0xff]
        %v5428 = vld [vmem:[%s5414 + $0x68] sm:$0xff]
        %v5429 = vld [vmem:[%s5414 + $0x70] sm:$0xff]
        %v5430 = vld [vmem:[%s5414 + $0x78] sm:$0xff]
        %v5431 = vld [vmem:[%s5414 + $0x80] sm:$0xff]
        %v5432 = vld [vmem:[%s5414 + $0x88] sm:$0xff]
        %v5433 = vld [vmem:[%s5414 + $0x90] sm:$0xff]
        %v5434 = vld [vmem:[%s5414 + $0x98] sm:$0xff]
        %v5435 = vld [vmem:[%s5414 + $0xa0] sm:$0xff]
        %v5436 = vld [vmem:[%s5414 + $0xa8] sm:$0xff]
        %v5437 = vld [vmem:[%s5414 + $0xb0] sm:$0xff]
        %v5438 = vld [vmem:[%s5414 + $0xb8] sm:$0xff]
        %v5439 = vld [vmem:[%s5414 + $0xc0] sm:$0xff]
        %v5440 = vld [vmem:[%s5414 + $0xc8] sm:$0xff]
        %v5441 = vld [vmem:[%s5414 + $0xd0] sm:$0xff]
        %v5442 = vld [vmem:[%s5414 + $0xd8] sm:$0xff]
        %v5443 = vld [vmem:[%s5414 + $0xe0] sm:$0xff]
        %v5444 = vld [vmem:[%s5414 + $0xe8] sm:$0xff]
        %v5445 = vld [vmem:[%s5414 + $0xf0] sm:$0xff]
        %v5446 = vld [vmem:[%s5414 + $0xf8] sm:$0xff]
        %v5447 = vld [vmem:[%s5414 + $0x100] sm:$0xff]
        %v5448 = vld [vmem:[%s5414 + $0x108] sm:$0xff]
        %v5449 = vld [vmem:[%s5414 + $0x110] sm:$0xff]
        %v5450 = vld [vmem:[%s5414 + $0x118] sm:$0xff]
        %v5451 = vld [vmem:[%s5414 + $0x120] sm:$0xff]
        %v5452 = vld [vmem:[%s5414 + $0x128] sm:$0xff]
        %v5453 = vld [vmem:[%s5414 + $0x130] sm:$0xff]
        %v5454 = vld [vmem:[%s5414 + $0x138] sm:$0xff]
        %v5455 = vld [vmem:[%s5414 + $0x140] sm:$0xff]
        %v5456 = vld [vmem:[%s5414 + $0x148] sm:$0xff]
        %v5457 = vld [vmem:[%s5414 + $0x150] sm:$0xff]
        %v5458 = vld [vmem:[%s5414 + $0x158] sm:$0xff]
        %v5459 = vld [vmem:[%s5414 + $0x160] sm:$0xff]
        %v5460 = vld [vmem:[%s5414 + $0x168] sm:$0xff]
        %v5461 = vld [vmem:[%s5414 + $0x170] sm:$0xff]
        %v5462 = vld [vmem:[%s5414 + $0x178] sm:$0xff]
        %v5463 = vld [vmem:[%s5414 + $0x180] sm:$0xff]
        %v5464 = vld [vmem:[%s5414 + $0x188] sm:$0xff]
        %v5465 = vld [vmem:[%s5414 + $0x190] sm:$0xff]
        %v5466 = vld [vmem:[%s5414 + $0x198] sm:$0xff]
        %v5467 = vld [vmem:[%s5414 + $0x1a0] sm:$0xff]
        %v5468 = vld [vmem:[%s5414 + $0x1a8] sm:$0xff]
        %v5469 = vld [vmem:[%s5414 + $0x1b0] sm:$0xff]
        %v5470 = vld [vmem:[%s5414 + $0x1b8] sm:$0xff]
        %v5471 = vld [vmem:[%s5414 + $0x1c0] sm:$0xff]
        %v5472 = vld [vmem:[%s5414 + $0x1c8] sm:$0xff]
        %v5473 = vld [vmem:[%s5414 + $0x1d0] sm:$0xff]
        %v5474 = vld [vmem:[%s5414 + $0x1d8] sm:$0xff]
        %v5475 = vld [vmem:[%s5414 + $0x1e0] sm:$0xff]
        %v5476 = vld [vmem:[%s5414 + $0x1e8] sm:$0xff]
        %v5477 = vld [vmem:[%s5414 + $0x1f0] sm:$0xff]
        %v5478 = vld [vmem:[%s5414 + $0x1f8] sm:$0xff]
        %v5479 = vld [vmem:[%s5414 + $0x200] sm:$0xff]
        %v5480 = vld [vmem:[%s5414 + $0x208] sm:$0xff]
        %v5481 = vld [vmem:[%s5414 + $0x210] sm:$0xff]
        %v5482 = vld [vmem:[%s5414 + $0x218] sm:$0xff]
        %v5483 = vld [vmem:[%s5414 + $0x220] sm:$0xff]
        %v5484 = vld [vmem:[%s5414 + $0x228] sm:$0xff]
        %v5485 = vld [vmem:[%s5414 + $0x230] sm:$0xff]
        %v5486 = vld [vmem:[%s5414 + $0x238] sm:$0xff]
        %v5487 = vld [vmem:[%s5414 + $0x240] sm:$0xff]
        %v5488 = vld [vmem:[%s5414 + $0x248] sm:$0xff]
        %v5489 = vld [vmem:[%s5414 + $0x250] sm:$0xff]
        %v5490 = vld [vmem:[%s5414 + $0x258] sm:$0xff]
        %v5491 = vld [vmem:[%s5414 + $0x260] sm:$0xff]
        %v5492 = vld [vmem:[%s5414 + $0x268] sm:$0xff]
        %v5493 = vld [vmem:[%s5414 + $0x270] sm:$0xff]
        %v5494 = vld [vmem:[%s5414 + $0x278] sm:$0xff]
        %v5495 = vld [vmem:[%s5414 + $0x280] sm:$0xff]
        %v5496 = vld [vmem:[%s5414 + $0x288] sm:$0xff]
        %v5497 = vld [vmem:[%s5414 + $0x290] sm:$0xff]
        %v5498 = vld [vmem:[%s5414 + $0x298] sm:$0xff]
        %v5499 = vld [vmem:[%s5414 + $0x2a0] sm:$0xff]
        %v5500 = vld [vmem:[%s5414 + $0x2a8] sm:$0xff]
        %v5501 = vld [vmem:[%s5414 + $0x2b0] sm:$0xff]
        %v5502 = vld [vmem:[%s5414 + $0x2b8] sm:$0xff]
        %v5503 = vld [vmem:[%s5414 + $0x2c0] sm:$0xff]
        %v5504 = vld [vmem:[%s5414 + $0x2c8] sm:$0xff]
        %v5505 = vld [vmem:[%s5414 + $0x2d0] sm:$0xff]
        %v5506 = vld [vmem:[%s5414 + $0x2d8] sm:$0xff]
        %v5507 = vld [vmem:[%s5414 + $0x2e0] sm:$0xff]
        %v5508 = vld [vmem:[%s5414 + $0x2e8] sm:$0xff]
        %v5509 = vld [vmem:[%s5414 + $0x2f0] sm:$0xff]
        %v5510 = vld [vmem:[%s5414 + $0x2f8] sm:$0xff]
        %v5511 = vld [vmem:[%s5414 + $0x300] sm:$0xff]
        %v5512 = vld [vmem:[%s5414 + $0x308] sm:$0xff]
        %v5513 = vld [vmem:[%s5414 + $0x310] sm:$0xff]
        %v5514 = vld [vmem:[%s5414 + $0x318] sm:$0xff]
        %v5515 = vld [vmem:[%s5414 + $0x320] sm:$0xff]
        %v5516 = vld [vmem:[%s5414 + $0x328] sm:$0xff]
        %v5517 = vld [vmem:[%s5414 + $0x330] sm:$0xff]
        %v5518 = vld [vmem:[%s5414 + $0x338] sm:$0xff]
        %v5519 = vld [vmem:[%s5414 + $0x340] sm:$0xff]
        %v5520 = vld [vmem:[%s5414 + $0x348] sm:$0xff]
        %v5521 = vld [vmem:[%s5414 + $0x350] sm:$0xff]
        %v5522 = vld [vmem:[%s5414 + $0x358] sm:$0xff]
        %v5523 = vld [vmem:[%s5414 + $0x360] sm:$0xff]
        %v5524 = vld [vmem:[%s5414 + $0x368] sm:$0xff]
        %v5525 = vld [vmem:[%s5414 + $0x370] sm:$0xff]
        %v5526 = vld [vmem:[%s5414 + $0x378] sm:$0xff]
        %v5527 = vld [vmem:[%s5414 + $0x380] sm:$0xff]
        %v5528 = vld [vmem:[%s5414 + $0x388] sm:$0xff]
        %v5529 = vld [vmem:[%s5414 + $0x390] sm:$0xff]
        %v5530 = vld [vmem:[%s5414 + $0x398] sm:$0xff]
        %v5531 = vld [vmem:[%s5414 + $0x3a0] sm:$0xff]
        %v5532 = vld [vmem:[%s5414 + $0x3a8] sm:$0xff]
        %v5533 = vld [vmem:[%s5414 + $0x3b0] sm:$0xff]
        %v5534 = vld [vmem:[%s5414 + $0x3b8] sm:$0xff]
        %v5535 = vld [vmem:[%s5414 + $0x3c0] sm:$0xff]
        %v5536 = vld [vmem:[%s5414 + $0x3c8] sm:$0xff]
        %v5537 = vld [vmem:[%s5414 + $0x3d0] sm:$0xff]
        %v5538 = vld [vmem:[%s5414 + $0x3d8] sm:$0xff]
        %v5539 = vld [vmem:[%s5414 + $0x3e0] sm:$0xff]
        %v5540 = vld [vmem:[%s5414 + $0x3e8] sm:$0xff]
        %v5541 = vld [vmem:[%s5414 + $0x3f0] sm:$0xff]
        %v5542 = vld [vmem:[%s5414 + $0x3f8] sm:$0xff]
        %v5543 = vld [vmem:[%s5414 + $0x400] sm:$0xff]
        %v5544 = vld [vmem:[%s5414 + $0x408] sm:$0xff]
        %v5545 = vld [vmem:[%s5414 + $0x410] sm:$0xff]
        %v5546 = vld [vmem:[%s5414 + $0x418] sm:$0xff]
        %v5547 = vld [vmem:[%s5414 + $0x420] sm:$0xff]
        %v5548 = vld [vmem:[%s5414 + $0x428] sm:$0xff]
        %v5549 = vld [vmem:[%s5414 + $0x430] sm:$0xff]
        %v5550 = vld [vmem:[%s5414 + $0x438] sm:$0xff]
        %v5551 = vld [vmem:[%s5414 + $0x440] sm:$0xff]
        %v5552 = vld [vmem:[%s5414 + $0x448] sm:$0xff]
        %v5553 = vld [vmem:[%s5414 + $0x450] sm:$0xff]
        %v5554 = vld [vmem:[%s5414 + $0x458] sm:$0xff]
        %v5555 = vld [vmem:[%s5414 + $0x460] sm:$0xff]
        %v5556 = vld [vmem:[%s5414 + $0x468] sm:$0xff]
        %v5557 = vld [vmem:[%s5414 + $0x470] sm:$0xff]
        %v5558 = vld [vmem:[%s5414 + $0x478] sm:$0xff]
        %v5559 = vld [vmem:[%s5414 + $0x480] sm:$0xff]
        %v5560 = vld [vmem:[%s5414 + $0x488] sm:$0xff]
        %v5561 = vld [vmem:[%s5414 + $0x490] sm:$0xff]
        %v5562 = vld [vmem:[%s5414 + $0x498] sm:$0xff]
        %v5563 = vld [vmem:[%s5414 + $0x4a0] sm:$0xff]
        %v5564 = vld [vmem:[%s5414 + $0x4a8] sm:$0xff]
        %v5565 = vld [vmem:[%s5414 + $0x4b0] sm:$0xff]
        %v5566 = vld [vmem:[%s5414 + $0x4b8] sm:$0xff]
        %v5567 = vld [vmem:[%s5414 + $0x4c0] sm:$0xff]
        %v5568 = vld [vmem:[%s5414 + $0x4c8] sm:$0xff]
        %v5569 = vld [vmem:[%s5414 + $0x4d0] sm:$0xff]
        %v5570 = vld [vmem:[%s5414 + $0x4d8] sm:$0xff]
        %v5571 = vld [vmem:[%s5414 + $0x4e0] sm:$0xff]
        %v5572 = vld [vmem:[%s5414 + $0x4e8] sm:$0xff]
        %v5573 = vld [vmem:[%s5414 + $0x4f0] sm:$0xff]
        %v5574 = vld [vmem:[%s5414 + $0x4f8] sm:$0xff]
        %v5575 = vld [vmem:[%s5414 + $0x500] sm:$0xff]
        %v5576 = vld [vmem:[%s5414 + $0x508] sm:$0xff]
        %v5577 = vld [vmem:[%s5414 + $0x510] sm:$0xff]
        %v5578 = vld [vmem:[%s5414 + $0x518] sm:$0xff]
        %v5579 = vld [vmem:[%s5414 + $0x520] sm:$0xff]
        %v5580 = vld [vmem:[%s5414 + $0x528] sm:$0xff]
        %v5581 = vld [vmem:[%s5414 + $0x530] sm:$0xff]
        %v5582 = vld [vmem:[%s5414 + $0x538] sm:$0xff]
        %v5583 = vld [vmem:[%s5414 + $0x540] sm:$0xff]
        %v5584 = vld [vmem:[%s5414 + $0x548] sm:$0xff]
        %v5585 = vld [vmem:[%s5414 + $0x550] sm:$0xff]
        %v5586 = vld [vmem:[%s5414 + $0x558] sm:$0xff]
        %v5587 = vld [vmem:[%s5414 + $0x560] sm:$0xff]
        %v5588 = vld [vmem:[%s5414 + $0x568] sm:$0xff]
        %v5589 = vld [vmem:[%s5414 + $0x570] sm:$0xff]
        %v5590 = vld [vmem:[%s5414 + $0x578] sm:$0xff]
        %v5591 = vld [vmem:[%s5414 + $0x580] sm:$0xff]
        %v5592 = vld [vmem:[%s5414 + $0x588] sm:$0xff]
        %v5593 = vld [vmem:[%s5414 + $0x590] sm:$0xff]
        %v5594 = vld [vmem:[%s5414 + $0x598] sm:$0xff]
        %v5595 = vld [vmem:[%s5414 + $0x5a0] sm:$0xff]
        %v5596 = vld [vmem:[%s5414 + $0x5a8] sm:$0xff]
        %v5597 = vld [vmem:[%s5414 + $0x5b0] sm:$0xff]
        %v5598 = vld [vmem:[%s5414 + $0x5b8] sm:$0xff]
        %v5599 = vld [vmem:[%s5414 + $0x5c0] sm:$0xff]
        %v5600 = vld [vmem:[%s5414 + $0x5c8] sm:$0xff]
        %v5601 = vld [vmem:[%s5414 + $0x5d0] sm:$0xff]
        %v5602 = vld [vmem:[%s5414 + $0x5d8] sm:$0xff]
        %v5603 = vld [vmem:[%s5414 + $0x5e0] sm:$0xff]
        %v5604 = vld [vmem:[%s5414 + $0x5e8] sm:$0xff]
        %v5605 = vld [vmem:[%s5414 + $0x5f0] sm:$0xff]
        %v5606 = vld [vmem:[%s5414 + $0x5f8] sm:$0xff]
        %v5607 = vld [vmem:[%s5414 + $0x600] sm:$0xff]
        %v5608 = vld [vmem:[%s5414 + $0x608] sm:$0xff]
        %v5609 = vld [vmem:[%s5414 + $0x610] sm:$0xff]
        %v5610 = vld [vmem:[%s5414 + $0x618] sm:$0xff]
        %v5611 = vld [vmem:[%s5414 + $0x620] sm:$0xff]
        %v5612 = vld [vmem:[%s5414 + $0x628] sm:$0xff]
        %v5613 = vld [vmem:[%s5414 + $0x630] sm:$0xff]
        %v5614 = vld [vmem:[%s5414 + $0x638] sm:$0xff]
        %v5615 = vld [vmem:[%s5414 + $0x640] sm:$0xff]
        %v5616 = vld [vmem:[%s5414 + $0x648] sm:$0xff]
        %v5617 = vld [vmem:[%s5414 + $0x650] sm:$0xff]
        %v5618 = vld [vmem:[%s5414 + $0x658] sm:$0xff]
        %v5619 = vld [vmem:[%s5414 + $0x660] sm:$0xff]
        %v5620 = vld [vmem:[%s5414 + $0x668] sm:$0xff]
        %v5621 = vld [vmem:[%s5414 + $0x670] sm:$0xff]
        %v5622 = vld [vmem:[%s5414 + $0x678] sm:$0xff]
        %v5623 = vld [vmem:[%s5414 + $0x680] sm:$0xff]
        %v5624 = vld [vmem:[%s5414 + $0x688] sm:$0xff]
        %v5625 = vld [vmem:[%s5414 + $0x690] sm:$0xff]
        %v5626 = vld [vmem:[%s5414 + $0x698] sm:$0xff]
        %v5627 = vld [vmem:[%s5414 + $0x6a0] sm:$0xff]
        %v5628 = vld [vmem:[%s5414 + $0x6a8] sm:$0xff]
        %v5629 = vld [vmem:[%s5414 + $0x6b0] sm:$0xff]
        %v5630 = vld [vmem:[%s5414 + $0x6b8] sm:$0xff]
        %v5631 = vld [vmem:[%s5414 + $0x6c0] sm:$0xff]
        %v5632 = vld [vmem:[%s5414 + $0x6c8] sm:$0xff]
        %v5633 = vld [vmem:[%s5414 + $0x6d0] sm:$0xff]
        %v5634 = vld [vmem:[%s5414 + $0x6d8] sm:$0xff]
        %v5635 = vld [vmem:[%s5414 + $0x6e0] sm:$0xff]
        %v5636 = vld [vmem:[%s5414 + $0x6e8] sm:$0xff]
        %v5637 = vld [vmem:[%s5414 + $0x6f0] sm:$0xff]
        %v5638 = vld [vmem:[%s5414 + $0x6f8] sm:$0xff]
        %v5639 = vld [vmem:[%s5414 + $0x700] sm:$0xff]
        %v5640 = vld [vmem:[%s5414 + $0x708] sm:$0xff]
        %v5641 = vld [vmem:[%s5414 + $0x710] sm:$0xff]
        %v5642 = vld [vmem:[%s5414 + $0x718] sm:$0xff]
        %v5643 = vld [vmem:[%s5414 + $0x720] sm:$0xff]
        %v5644 = vld [vmem:[%s5414 + $0x728] sm:$0xff]
        %v5645 = vld [vmem:[%s5414 + $0x730] sm:$0xff]
        %v5646 = vld [vmem:[%s5414 + $0x738] sm:$0xff]
        %v5647 = vld [vmem:[%s5414 + $0x740] sm:$0xff]
        %v5648 = vld [vmem:[%s5414 + $0x748] sm:$0xff]
        %v5649 = vld [vmem:[%s5414 + $0x750] sm:$0xff]
        %v5650 = vld [vmem:[%s5414 + $0x758] sm:$0xff]
        %v5651 = vld [vmem:[%s5414 + $0x760] sm:$0xff]
        %v5652 = vld [vmem:[%s5414 + $0x768] sm:$0xff]
        %v5653 = vld [vmem:[%s5414 + $0x770] sm:$0xff]
        %v5654 = vld [vmem:[%s5414 + $0x778] sm:$0xff]
        %v5655 = vld [vmem:[%s5414 + $0x780] sm:$0xff]
        %v5656 = vld [vmem:[%s5414 + $0x788] sm:$0xff]
        %v5657 = vld [vmem:[%s5414 + $0x790] sm:$0xff]
        %v5658 = vld [vmem:[%s5414 + $0x798] sm:$0xff]
        %v5659 = vld [vmem:[%s5414 + $0x7a0] sm:$0xff]
        %v5660 = vld [vmem:[%s5414 + $0x7a8] sm:$0xff]
        %v5661 = vld [vmem:[%s5414 + $0x7b0] sm:$0xff]
        %v5662 = vld [vmem:[%s5414 + $0x7b8] sm:$0xff]
        %v5663 = vld [vmem:[%s5414 + $0x7c0] sm:$0xff]
        %v5664 = vld [vmem:[%s5414 + $0x7c8] sm:$0xff]
        %v5665 = vld [vmem:[%s5414 + $0x7d0] sm:$0xff]
        %v5666 = vld [vmem:[%s5414 + $0x7d8] sm:$0xff]
        %v5667 = vld [vmem:[%s5414 + $0x7e0] sm:$0xff]
        %v5668 = vld [vmem:[%s5414 + $0x7e8] sm:$0xff]
        %v5669 = vld [vmem:[%s5414 + $0x7f0] sm:$0xff]
        %v5670 = vld [vmem:[%s5414 + $0x7f8] sm:$0xff]
        %v5671 = vld [vmem:[%s5414 + $0x800] sm:$0xff]
        %v5672 = vld [vmem:[%s5414 + $0x808] sm:$0xff]
        %v5673 = vld [vmem:[%s5414 + $0x810] sm:$0xff]
        %v5674 = vld [vmem:[%s5414 + $0x818] sm:$0xff]
        %v5675 = vld [vmem:[%s5414 + $0x820] sm:$0xff]
        %v5676 = vld [vmem:[%s5414 + $0x828] sm:$0xff]
        %v5677 = vld [vmem:[%s5414 + $0x830] sm:$0xff]
        %v5678 = vld [vmem:[%s5414 + $0x838] sm:$0xff]
        %v5679 = vld [vmem:[%s5414 + $0x840] sm:$0xff]
        %v5680 = vld [vmem:[%s5414 + $0x848] sm:$0xff]
        %v5681 = vld [vmem:[%s5414 + $0x850] sm:$0xff]
        %v5682 = vld [vmem:[%s5414 + $0x858] sm:$0xff]
        %v5683 = vld [vmem:[%s5414 + $0x860] sm:$0xff]
        %v5684 = vld [vmem:[%s5414 + $0x868] sm:$0xff]
        %v5685 = vld [vmem:[%s5414 + $0x870] sm:$0xff]
        %v5686 = vld [vmem:[%s5414 + $0x878] sm:$0xff]
        %v5687 = vld [vmem:[%s5414 + $0x880] sm:$0xff]
        %v5688 = vld [vmem:[%s5414 + $0x888] sm:$0xff]
        %v5689 = vld [vmem:[%s5414 + $0x890] sm:$0xff]
        %v5690 = vld [vmem:[%s5414 + $0x898] sm:$0xff]
        %v5691 = vld [vmem:[%s5414 + $0x8a0] sm:$0xff]
        %v5692 = vld [vmem:[%s5414 + $0x8a8] sm:$0xff]
        %v5693 = vld [vmem:[%s5414 + $0x8b0] sm:$0xff]
        %v5694 = vld [vmem:[%s5414 + $0x8b8] sm:$0xff]
        %v5695 = vld [vmem:[%s5414 + $0x8c0] sm:$0xff]
        %v5696 = vld [vmem:[%s5414 + $0x8c8] sm:$0xff]
        %v5697 = vld [vmem:[%s5414 + $0x8d0] sm:$0xff]
        %v5698 = vld [vmem:[%s5414 + $0x8d8] sm:$0xff]
        %v5699 = vld [vmem:[%s5414 + $0x8e0] sm:$0xff]
        %v5700 = vld [vmem:[%s5414 + $0x8e8] sm:$0xff]
        %v5701 = vld [vmem:[%s5414 + $0x8f0] sm:$0xff]
        %v5702 = vld [vmem:[%s5414 + $0x8f8] sm:$0xff]
        %v5703 = vld [vmem:[%s5414 + $0x900] sm:$0xff]
        %v5704 = vld [vmem:[%s5414 + $0x908] sm:$0xff]
        %v5705 = vld [vmem:[%s5414 + $0x910] sm:$0xff]
        %v5706 = vld [vmem:[%s5414 + $0x918] sm:$0xff]
        %v5707 = vld [vmem:[%s5414 + $0x920] sm:$0xff]
        %v5708 = vld [vmem:[%s5414 + $0x928] sm:$0xff]
        %v5709 = vld [vmem:[%s5414 + $0x930] sm:$0xff]
        %v5710 = vld [vmem:[%s5414 + $0x938] sm:$0xff]
        %v5711 = vld [vmem:[%s5414 + $0x940] sm:$0xff]
        %v5712 = vld [vmem:[%s5414 + $0x948] sm:$0xff]
        %v5713 = vld [vmem:[%s5414 + $0x950] sm:$0xff]
        %v5714 = vld [vmem:[%s5414 + $0x958] sm:$0xff]
        %v5715 = vld [vmem:[%s5414 + $0x960] sm:$0xff]
        %v5716 = vld [vmem:[%s5414 + $0x968] sm:$0xff]
        %v5717 = vld [vmem:[%s5414 + $0x970] sm:$0xff]
        %v5718 = vld [vmem:[%s5414 + $0x978] sm:$0xff]
        %v5719 = vld [vmem:[%s5414 + $0x980] sm:$0xff]
        %v5720 = vld [vmem:[%s5414 + $0x988] sm:$0xff]
        %v5721 = vld [vmem:[%s5414 + $0x990] sm:$0xff]
        %v5722 = vld [vmem:[%s5414 + $0x998] sm:$0xff]
        %v5723 = vld [vmem:[%s5414 + $0x9a0] sm:$0xff]
        %v5724 = vld [vmem:[%s5414 + $0x9a8] sm:$0xff]
        %v5725 = vld [vmem:[%s5414 + $0x9b0] sm:$0xff]
        %v5726 = vld [vmem:[%s5414 + $0x9b8] sm:$0xff]
        %v5728 = vsel %vm2985, %v3314, 0
        %5730 = vmatprep.subr.mxu0 %v5416
        %5731 = vmatpush1.msra.mxu0 %v5415
        %5732 = vmatprep.subr.mxu0 %v5419
        %5733 = vmatpush1.msra.mxu0 %v5418
        %5734 = vmatprep.subr.mxu0 %v5422
        %5735 = vmatpush1.msra.mxu0 %v5421
        %5736 = vmatprep.subr.mxu0 %v5425
        %5737 = vmatpush1.msra.mxu0 %v5424
        %5738 = vmatprep.subr.mxu0 %v5428
        %5739 = vmatpush1.msra.mxu0 %v5427
        %5740 = vmatprep.subr.mxu0 %v5431
        %5741 = vmatpush1.msra.mxu0 %v5430
        %5742 = vmatprep.subr.mxu0 %v5434
        %5743 = vmatpush1.msra.mxu0 %v5433
        %5744 = vmatprep.subr.mxu0 %v5437
        %5745 = vmatpush1.msra.mxu0 %v5436
        %5746 = vmatprep.subr.mxu0 %v5440
        %5747 = vmatpush1.msra.mxu0 %v5439
        %5748 = vmatprep.subr.mxu0 %v5443
        %5749 = vmatpush1.msra.mxu0 %v5442
        %5750 = vmatprep.subr.mxu0 %v5446
        %5751 = vmatpush1.msra.mxu0 %v5445
        %5752 = vmatprep.subr.mxu0 %v5449
        %5753 = vmatpush1.msra.mxu0 %v5448
        %5754 = vmatprep.subr.mxu0 %v5452
        %5755 = vmatpush1.msra.mxu0 %v5451
        %5756 = vmatprep.subr.mxu0 %v5455
        %5757 = vmatpush1.msra.mxu0 %v5454
        %5758 = vmatprep.subr.mxu0 %v5458
        %5759 = vmatpush1.msra.mxu0 %v5457
        %5760 = vmatprep.subr.mxu0 %v5461
        %5761 = vmatpush1.msra.mxu0 %v5460
        %5762 = vmatprep.subr.mxu0 %v5464
        %5763 = vmatpush1.msra.mxu0 %v5463
        %5764 = vmatprep.subr.mxu0 %v5467
        %5765 = vmatpush1.msra.mxu0 %v5466
        %5766 = vmatprep.subr.mxu0 %v5470
        %5767 = vmatpush1.msra.mxu0 %v5469
        %5768 = vmatprep.subr.mxu0 %v5473
        %5769 = vmatpush1.msra.mxu0 %v5472
        %5770 = vmatprep.subr.mxu0 %v5476
        %5771 = vmatpush1.msra.mxu0 %v5475
        %5772 = vmatprep.subr.mxu0 %v5479
        %5773 = vmatpush1.msra.mxu0 %v5478
        %5774 = vmatprep.subr.mxu0 %v5482
        %5775 = vmatpush1.msra.mxu0 %v5481
        %5776 = vmatprep.subr.mxu0 %v5485
        %5777 = vmatpush1.msra.mxu0 %v5484
        %5778 = vmatprep.subr.mxu0 %v5488
        %5779 = vmatpush1.msra.mxu0 %v5487
        %5780 = vmatprep.subr.mxu0 %v5491
        %5781 = vmatpush1.msra.mxu0 %v5490
        %5782 = vmatprep.subr.mxu0 %v5494
        %5783 = vmatpush1.msra.mxu0 %v5493
        %5784 = vmatprep.subr.mxu0 %v5497
        %5785 = vmatpush1.msra.mxu0 %v5496
        %5786 = vmatprep.subr.mxu0 %v5500
        %5787 = vmatpush1.msra.mxu0 %v5499
        %5788 = vmatprep.subr.mxu0 %v5503
        %5789 = vmatpush1.msra.mxu0 %v5502
        %5790 = vmatprep.subr.mxu0 %v5506
        %5791 = vmatpush1.msra.mxu0 %v5505
        %5792 = vmatprep.subr.mxu0 %v5509
        %5793 = vmatpush1.msra.mxu0 %v5508
        %5794 = vmatprep.mubr.f32.mxu0 %v3281
        %5795 = vmatmul.mubr.f32.gmra.mrb[0].mxu0 %v3280
        %v5796 = vpop.f32.mrb[0].mxu0
        %v5797 = vadd.f32 0.0, %v5796
        %v5798 = vpop.f32.mrb[0].mxu0
        %v5799 = vadd.f32 0.0, %v5798
        %5800 = vmatprep.mubr.f32.mxu0 %v3288
        %5801 = vmatmul.mubr.f32.gmra.mrb[0].mxu0 %v3287
        %v5802 = vpop.f32.mrb[0].mxu0
        %v5803 = vadd.f32 0.0, %v5802
        %v5804 = vpop.f32.mrb[0].mxu0
        %v5805 = vadd.f32 0.0, %v5804
        %5806 = vmatprep.mubr.f32.mxu0 %v3295
        %5807 = vmatmul.mubr.f32.gmra.mrb[0].mxu0 %v3294
        %v5808 = vpop.f32.mrb[0].mxu0
        %v5809 = vadd.f32 0.0, %v5808
        %v5810 = vpop.f32.mrb[0].mxu0
        %v5811 = vadd.f32 0.0, %v5810
        %5812 = vmatprep.mubr.f32.mxu0 %v3302
        %5813 = vmatmul.mubr.f32.gmra.mrb[0].mxu0 %v3301
        %v5814 = vpop.f32.mrb[0].mxu0
        %v5815 = vadd.f32 0.0, %v5814
        %v5816 = vpop.f32.mrb[0].mxu0
        %v5817 = vadd.f32 0.0, %v5816
        %5818 = vmatprep.mubr.f32.mxu0 %v3309
        %5819 = vmatmul.mubr.f32.gmra.mrb[0].mxu0 %v3308
        %v5820 = vpop.f32.mrb[0].mxu0
        %v5821 = vpop.f32.mrb[0].mxu0
        %5822 = vdwg.mxu0
        %5823 = vmatprep.subr.mxu0 %v5512
        %5824 = vmatpush1.msra.mxu0 %v5511
        %5825 = vmatprep.subr.mxu0 %v5515
        %5826 = vmatpush1.msra.mxu0 %v5514
        %5827 = vmatprep.subr.mxu0 %v5518
        %5828 = vmatpush1.msra.mxu0 %v5517
        %5829 = vmatprep.subr.mxu0 %v5521
        %5830 = vmatpush1.msra.mxu0 %v5520
        %5831 = vmatprep.subr.mxu0 %v5524
        %5832 = vmatpush1.msra.mxu0 %v5523
        %5833 = vmatprep.subr.mxu0 %v5527
        %5834 = vmatpush1.msra.mxu0 %v5526
        %5835 = vmatprep.subr.mxu0 %v5530
        %5836 = vmatpush1.msra.mxu0 %v5529
        %5837 = vmatprep.subr.mxu0 %v5533
        %5838 = vmatpush1.msra.mxu0 %v5532
        %5839 = vmatprep.subr.mxu0 %v5536
        %5840 = vmatpush1.msra.mxu0 %v5535
        %5841 = vmatprep.subr.mxu0 %v5539
        %5842 = vmatpush1.msra.mxu0 %v5538
        %5843 = vmatprep.subr.mxu0 %v5542
        %5844 = vmatpush1.msra.mxu0 %v5541
        %5845 = vmatprep.subr.mxu0 %v5545
        %5846 = vmatpush1.msra.mxu0 %v5544
        %5847 = vmatprep.subr.mxu0 %v5548
        %5848 = vmatpush1.msra.mxu0 %v5547
        %5849 = vmatprep.subr.mxu0 %v5551
        %5850 = vmatpush1.msra.mxu0 %v5550
        %5851 = vmatprep.subr.mxu0 %v5554
        %5852 = vmatpush1.msra.mxu0 %v5553
        %5853 = vmatprep.subr.mxu0 %v5557
        %5854 = vmatpush1.msra.mxu0 %v5556
        %5855 = vmatprep.subr.mxu0 %v5560
        %5856 = vmatpush1.msra.mxu0 %v5559
        %5857 = vmatprep.subr.mxu0 %v5563
        %5858 = vmatpush1.msra.mxu0 %v5562
        %5859 = vmatprep.subr.mxu0 %v5566
        %5860 = vmatpush1.msra.mxu0 %v5565
        %5861 = vmatprep.subr.mxu0 %v5569
        %5862 = vmatpush1.msra.mxu0 %v5568
        %5863 = vmatprep.subr.mxu0 %v5572
        %5864 = vmatpush1.msra.mxu0 %v5571
        %5865 = vmatprep.subr.mxu0 %v5575
        %5866 = vmatpush1.msra.mxu0 %v5574
        %5867 = vmatprep.subr.mxu0 %v5578
        %5868 = vmatpush1.msra.mxu0 %v5577
        %5869 = vmatprep.subr.mxu0 %v5581
        %5870 = vmatpush1.msra.mxu0 %v5580
        %5871 = vmatprep.subr.mxu0 %v5584
        %5872 = vmatpush1.msra.mxu0 %v5583
        %5873 = vmatprep.subr.mxu0 %v5587
        %5874 = vmatpush1.msra.mxu0 %v5586
        %5875 = vmatprep.subr.mxu0 %v5590
        %5876 = vmatpush1.msra.mxu0 %v5589
        %5877 = vmatprep.subr.mxu0 %v5593
        %5878 = vmatpush1.msra.mxu0 %v5592
        %5879 = vmatprep.subr.mxu0 %v5596
        %5880 = vmatpush1.msra.mxu0 %v5595
        %5881 = vmatprep.subr.mxu0 %v5599
        %5882 = vmatpush1.msra.mxu0 %v5598
        %5883 = vmatprep.subr.mxu0 %v5602
        %5884 = vmatpush1.msra.mxu0 %v5601
        %5885 = vmatprep.subr.mxu0 %v5605
        %5886 = vmatpush1.msra.mxu0 %v5604
        %5887 = vmatprep.mubr.f32.mxu0 %v3283
        %5888 = vmatmul.mubr.f32.gmra.mrb[0].mxu0 %v3282
        %v5889 = vpop.f32.mrb[0].mxu0
        %v5890 = vadd.f32 %v5797, %v5889
        %v5891 = vpop.f32.mrb[0].mxu0
        %v5892 = vadd.f32 %v5799, %v5891
        %5893 = vmatprep.mubr.f32.mxu0 %v3290
        %5894 = vmatmul.mubr.f32.gmra.mrb[0].mxu0 %v3289
        %v5895 = vpop.f32.mrb[0].mxu0
        %v5896 = vadd.f32 %v5803, %v5895
        %v5897 = vpop.f32.mrb[0].mxu0
        %v5898 = vadd.f32 %v5805, %v5897
        %5899 = vmatprep.mubr.f32.mxu0 %v3297
        %5900 = vmatmul.mubr.f32.gmra.mrb[0].mxu0 %v3296
        %v5901 = vpop.f32.mrb[0].mxu0
        %v5902 = vadd.f32 %v5809, %v5901
        %v5903 = vpop.f32.mrb[0].mxu0
        %v5904 = vadd.f32 %v5811, %v5903
        %5905 = vmatprep.mubr.f32.mxu0 %v3304
        %5906 = vmatmul.mubr.f32.gmra.mrb[0].mxu0 %v3303
        %v5907 = vpop.f32.mrb[0].mxu0
        %v5908 = vadd.f32 %v5815, %v5907
        %v5909 = vpop.f32.mrb[0].mxu0
        %v5910 = vadd.f32 %v5817, %v5909
        %5911 = vmatprep.mubr.f32.mxu0 %v3311
        %5912 = vmatmul.mubr.f32.gmra.mrb[0].mxu0 %v3310
        %v5913 = vpop.f32.mrb[0].mxu0
        %v5914 = vpop.f32.mrb[0].mxu0
        %5915 = vdwg.mxu0
        %5916 = vmatprep.subr.mxu0 %v5608
        %5917 = vmatpush1.msra.mxu0 %v5607
        %5918 = vmatprep.subr.mxu0 %v5611
        %5919 = vmatpush1.msra.mxu0 %v5610
        %5920 = vmatprep.subr.mxu0 %v5614
        %5921 = vmatpush1.msra.mxu0 %v5613
        %5922 = vmatprep.subr.mxu0 %v5617
        %5923 = vmatpush1.msra.mxu0 %v5616
        %5924 = vmatprep.subr.mxu0 %v5620
        %5925 = vmatpush1.msra.mxu0 %v5619
        %5926 = vmatprep.subr.mxu0 %v5623
        %5927 = vmatpush1.msra.mxu0 %v5622
        %5928 = vmatprep.subr.mxu0 %v5626
        %5929 = vmatpush1.msra.mxu0 %v5625
        %5930 = vmatprep.subr.mxu0 %v5629
        %5931 = vmatpush1.msra.mxu0 %v5628
        %5932 = vmatprep.subr.mxu0 %v5632
        %5933 = vmatpush1.msra.mxu0 %v5631
        %5934 = vmatprep.subr.mxu0 %v5635
        %5935 = vmatpush1.msra.mxu0 %v5634
        %5936 = vmatprep.subr.mxu0 %v5638
        %5937 = vmatpush1.msra.mxu0 %v5637
        %5938 = vmatprep.subr.mxu0 %v5641
        %5939 = vmatpush1.msra.mxu0 %v5640
        %5940 = vmatprep.subr.mxu0 %v5644
        %5941 = vmatpush1.msra.mxu0 %v5643
        %5942 = vmatprep.subr.mxu0 %v5647
        %5943 = vmatpush1.msra.mxu0 %v5646
        %5944 = vmatprep.subr.mxu0 %v5650
        %5945 = vmatpush1.msra.mxu0 %v5649
        %5946 = vmatprep.subr.mxu0 %v5653
        %5947 = vmatpush1.msra.mxu0 %v5652
        %5948 = vmatprep.subr.mxu0 %v5656
        %5949 = vmatpush1.msra.mxu0 %v5655
        %5950 = vmatprep.subr.mxu0 %v5659
        %5951 = vmatpush1.msra.mxu0 %v5658
        %5952 = vmatprep.subr.mxu0 %v5662
        %5953 = vmatpush1.msra.mxu0 %v5661
        %5954 = vmatprep.subr.mxu0 %v5665
        %5955 = vmatpush1.msra.mxu0 %v5664
        %5956 = vmatprep.subr.mxu0 %v5668
        %5957 = vmatpush1.msra.mxu0 %v5667
        %5958 = vmatprep.subr.mxu0 %v5671
        %5959 = vmatpush1.msra.mxu0 %v5670
        %5960 = vmatprep.subr.mxu0 %v5674
        %5961 = vmatpush1.msra.mxu0 %v5673
        %5962 = vmatprep.subr.mxu0 %v5677
        %5963 = vmatpush1.msra.mxu0 %v5676
        %5964 = vmatprep.subr.mxu0 %v5680
        %5965 = vmatpush1.msra.mxu0 %v5679
        %5966 = vmatprep.subr.mxu0 %v5683
        %5967 = vmatpush1.msra.mxu0 %v5682
        %5968 = vmatprep.subr.mxu0 %v5686
        %5969 = vmatpush1.msra.mxu0 %v5685
        %5970 = vmatprep.subr.mxu0 %v5689
        %5971 = vmatpush1.msra.mxu0 %v5688
        %5972 = vmatprep.subr.mxu0 %v5692
        %5973 = vmatpush1.msra.mxu0 %v5691
        %5974 = vmatprep.subr.mxu0 %v5695
        %5975 = vmatpush1.msra.mxu0 %v5694
        %5976 = vmatprep.subr.mxu0 %v5698
        %5977 = vmatpush1.msra.mxu0 %v5697
        %5978 = vmatprep.subr.mxu0 %v5701
        %5979 = vmatpush1.msra.mxu0 %v5700
        %5980 = vmatprep.mubr.f32.mxu0 %v3285
        %5981 = vmatmul.mubr.f32.gmra.mrb[0].mxu0 %v3284
        %v5982 = vpop.f32.mrb[0].mxu0
        %v5983 = vadd.f32 %v5890, %v5982
        %v5984 = vpop.f32.mrb[0].mxu0
        %v5985 = vadd.f32 %v5892, %v5984
        %5986 = vmatprep.mubr.f32.mxu0 %v3292
        %5987 = vmatmul.mubr.f32.gmra.mrb[0].mxu0 %v3291
        %v5988 = vpop.f32.mrb[0].mxu0
        %v5989 = vadd.f32 %v5896, %v5988
        %v5990 = vpop.f32.mrb[0].mxu0
        %v5991 = vadd.f32 %v5898, %v5990
        %5992 = vmatprep.mubr.f32.mxu0 %v3299
        %5993 = vmatmul.mubr.f32.gmra.mrb[0].mxu0 %v3298
        %v5994 = vpop.f32.mrb[0].mxu0
        %v5995 = vadd.f32 %v5902, %v5994
        %v5996 = vpop.f32.mrb[0].mxu0
        %v5997 = vadd.f32 %v5904, %v5996
        %5998 = vmatprep.mubr.f32.mxu0 %v3306
        %5999 = vmatmul.mubr.f32.gmra.mrb[0].mxu0 %v3305
        %v6000 = vpop.f32.mrb[0].mxu0
        %v6001 = vadd.f32 %v5908, %v6000
        %v6002 = vpop.f32.mrb[0].mxu0
        %v6003 = vadd.f32 %v5910, %v6002
        %6004 = vmatprep.mubr.f32.mxu0 %v3313
        %6005 = vmatmul.mubr.f32.gmra.mrb[0].mxu0 %v3312
        %v6006 = vpop.f32.mrb[0].mxu0
        %v6007 = vpop.f32.mrb[0].mxu0
        %6008 = vdwg.mxu0
        %6009 = vmatprep.subr.mxu0 %v5704
        %6010 = vmatpush1.msra.mxu0 %v5703
        %6011 = vmatprep.subr.mxu0 %v5707
        %6012 = vmatpush1.msra.mxu0 %v5706
        %6013 = vmatprep.subr.mxu0 %v5710
        %6014 = vmatpush1.msra.mxu0 %v5709
        %6015 = vmatprep.subr.mxu0 %v5713
        %6016 = vmatpush1.msra.mxu0 %v5712
        %6017 = vmatprep.subr.mxu0 %v5716
        %6018 = vmatpush1.msra.mxu0 %v5715
        %6019 = vmatprep.subr.mxu0 %v5719
        %6020 = vmatpush1.msra.mxu0 %v5718
        %6021 = vmatprep.subr.mxu0 %v5722
        %6022 = vmatpush1.msra.mxu0 %v5721
        %6023 = vmatprep.subr.mxu0 %v5725
        %6024 = vmatpush1.msra.mxu0 %v5724
        %6025 = vmatprep.subr.mxu0 0.0
        %6026 = vmatpush1.msra.mxu0 0.0
        %6027 = vmatprep.subr.mxu0 0.0
        %6028 = vmatpush1.msra.mxu0 0.0
        %6029 = vmatprep.subr.mxu0 0.0
        %6030 = vmatpush1.msra.mxu0 0.0
        %6031 = vmatprep.subr.mxu0 0.0
        %6032 = vmatpush1.msra.mxu0 0.0
        %6033 = vmatprep.subr.mxu0 0.0
        %6034 = vmatpush1.msra.mxu0 0.0
        %6035 = vmatprep.subr.mxu0 0.0
        %6036 = vmatpush1.msra.mxu0 0.0
        %6037 = vmatprep.subr.mxu0 0.0
        %6038 = vmatpush1.msra.mxu0 0.0
        %6039 = vmatprep.subr.mxu0 0.0
        %6040 = vmatpush1.msra.mxu0 0.0
        %6041 = vmatprep.subr.mxu0 0.0
        %6042 = vmatpush1.msra.mxu0 0.0
        %6043 = vmatprep.subr.mxu0 0.0
        %6044 = vmatpush1.msra.mxu0 0.0
        %6045 = vmatprep.subr.mxu0 0.0
        %6046 = vmatpush1.msra.mxu0 0.0
        %6047 = vmatprep.subr.mxu0 0.0
        %6048 = vmatpush1.msra.mxu0 0.0
        %6049 = vmatprep.subr.mxu0 0.0
        %6050 = vmatpush1.msra.mxu0 0.0
        %6051 = vmatprep.subr.mxu0 0.0
        %6052 = vmatpush1.msra.mxu0 0.0
        %6053 = vmatprep.subr.mxu0 0.0
        %6054 = vmatpush1.msra.mxu0 0.0
        %6055 = vmatprep.subr.mxu0 0.0
        %6056 = vmatpush1.msra.mxu0 0.0
        %6057 = vmatprep.subr.mxu0 0.0
        %6058 = vmatpush1.msra.mxu0 0.0
        %6059 = vmatprep.subr.mxu0 0.0
        %6060 = vmatpush1.msra.mxu0 0.0
        %6061 = vmatprep.subr.mxu0 0.0
        %6062 = vmatpush1.msra.mxu0 0.0
        %6063 = vmatprep.subr.mxu0 0.0
        %6064 = vmatpush1.msra.mxu0 0.0
        %6065 = vmatprep.subr.mxu0 0.0
        %6066 = vmatpush1.msra.mxu0 0.0
        %6067 = vmatprep.subr.mxu0 0.0
        %6068 = vmatpush1.msra.mxu0 0.0
        %6069 = vmatprep.subr.mxu0 0.0
        %6070 = vmatpush1.msra.mxu0 0.0
        %6071 = vmatprep.subr.mxu0 0.0
        %6072 = vmatpush1.msra.mxu0 0.0
        %6073 = vmatprep.mubr.f32.mxu0 0.0
        %6074 = vmatmul.mubr.f32.gmra.mrb[0].mxu0 %v3944
        %v6075 = vpop.f32.mrb[0].mxu0
        %v6076 = vadd.f32 %v5983, %v6075
        %v6077 = vpop.f32.mrb[0].mxu0
        %v6078 = vadd.f32 %v5985, %v6077
        %6079 = vmatprep.mubr.f32.mxu0 0.0
        %6080 = vmatmul.mubr.f32.gmra.mrb[0].mxu0 %v3947
        %v6081 = vpop.f32.mrb[0].mxu0
        %v6082 = vadd.f32 %v5989, %v6081
        %v6083 = vpop.f32.mrb[0].mxu0
        %v6084 = vadd.f32 %v5991, %v6083
        %6085 = vmatprep.mubr.f32.mxu0 0.0
        %6086 = vmatmul.mubr.f32.gmra.mrb[0].mxu0 %v3950
        %v6087 = vpop.f32.mrb[0].mxu0
        %v6088 = vadd.f32 %v5995, %v6087
        %v6089 = vpop.f32.mrb[0].mxu0
        %v6090 = vadd.f32 %v5997, %v6089
        %6091 = vmatprep.mubr.f32.mxu0 0.0
        %6092 = vmatmul.mubr.f32.gmra.mrb[0].mxu0 %v3953
        %v6093 = vpop.f32.mrb[0].mxu0
        %v6094 = vadd.f32 %v6001, %v6093
        %v6095 = vpop.f32.mrb[0].mxu0
        %v6096 = vadd.f32 %v6003, %v6095
        %6097 = vmatprep.mubr.f32.mxu0 0.0
        %6098 = vmatmul.mubr.f32.gmra.mrb[0].mxu0 %v5728
        %v6099 = vpop.f32.mrb[0].mxu0
        %v6100 = vpop.f32.mrb[0].mxu0
        %6101 = vdwg.mxu0
        %6102 = vmatprep.subr.mxu0 0.0
        %6103 = vmatpush1.msra.mxu0 %v5417
        %6104 = vmatprep.subr.mxu0 0.0
        %6105 = vmatpush1.msra.mxu0 %v5420
        %6106 = vmatprep.subr.mxu0 0.0
        %6107 = vmatpush1.msra.mxu0 %v5423
        %6108 = vmatprep.subr.mxu0 0.0
        %6109 = vmatpush1.msra.mxu0 %v5426
        %6110 = vmatprep.subr.mxu0 0.0
        %6111 = vmatpush1.msra.mxu0 %v5429
        %6112 = vmatprep.subr.mxu0 0.0
        %6113 = vmatpush1.msra.mxu0 %v5432
        %6114 = vmatprep.subr.mxu0 0.0
        %6115 = vmatpush1.msra.mxu0 %v5435
        %6116 = vmatprep.subr.mxu0 0.0
        %6117 = vmatpush1.msra.mxu0 %v5438
        %6118 = vmatprep.subr.mxu0 0.0
        %6119 = vmatpush1.msra.mxu0 %v5441
        %6120 = vmatprep.subr.mxu0 0.0
        %6121 = vmatpush1.msra.mxu0 %v5444
        %6122 = vmatprep.subr.mxu0 0.0
        %6123 = vmatpush1.msra.mxu0 %v5447
        %6124 = vmatprep.subr.mxu0 0.0
        %6125 = vmatpush1.msra.mxu0 %v5450
        %6126 = vmatprep.subr.mxu0 0.0
        %6127 = vmatpush1.msra.mxu0 %v5453
        %6128 = vmatprep.subr.mxu0 0.0
        %6129 = vmatpush1.msra.mxu0 %v5456
        %6130 = vmatprep.subr.mxu0 0.0
        %6131 = vmatpush1.msra.mxu0 %v5459
        %6132 = vmatprep.subr.mxu0 0.0
        %6133 = vmatpush1.msra.mxu0 %v5462
        %6134 = vmatprep.subr.mxu0 0.0
        %6135 = vmatpush1.msra.mxu0 %v5465
        %6136 = vmatprep.subr.mxu0 0.0
        %6137 = vmatpush1.msra.mxu0 %v5468
        %6138 = vmatprep.subr.mxu0 0.0
        %6139 = vmatpush1.msra.mxu0 %v5471
        %6140 = vmatprep.subr.mxu0 0.0
        %6141 = vmatpush1.msra.mxu0 %v5474
        %6142 = vmatprep.subr.mxu0 0.0
        %6143 = vmatpush1.msra.mxu0 %v5477
        %6144 = vmatprep.subr.mxu0 0.0
        %6145 = vmatpush1.msra.mxu0 %v5480
        %6146 = vmatprep.subr.mxu0 0.0
        %6147 = vmatpush1.msra.mxu0 %v5483
        %6148 = vmatprep.subr.mxu0 0.0
        %6149 = vmatpush1.msra.mxu0 %v5486
        %6150 = vmatprep.subr.mxu0 0.0
        %6151 = vmatpush1.msra.mxu0 %v5489
        %6152 = vmatprep.subr.mxu0 0.0
        %6153 = vmatpush1.msra.mxu0 %v5492
        %6154 = vmatprep.subr.mxu0 0.0
        %6155 = vmatpush1.msra.mxu0 %v5495
        %6156 = vmatprep.subr.mxu0 0.0
        %6157 = vmatpush1.msra.mxu0 %v5498
        %6158 = vmatprep.subr.mxu0 0.0
        %6159 = vmatpush1.msra.mxu0 %v5501
        %6160 = vmatprep.subr.mxu0 0.0
        %6161 = vmatpush1.msra.mxu0 %v5504
        %6162 = vmatprep.subr.mxu0 0.0
        %6163 = vmatpush1.msra.mxu0 %v5507
        %6164 = vmatprep.subr.mxu0 0.0
        %6165 = vmatpush1.msra.mxu0 %v5510
        %6166 = vmatprep.mubr.f32.mxu0 %v3281
        %6167 = vmatmul.mubr.f32.gmra.mrb[0].mxu0 %v3280
        %v6168 = vpop.f32.mrb[0].mxu0
        %v6169 = vadd.f32 0.0, %v6168
        %v6170 = vpop.f32.mrb[0].mxu0
        %6171 = vmatprep.mubr.f32.mxu0 %v3288
        %6172 = vmatmul.mubr.f32.gmra.mrb[0].mxu0 %v3287
        %v6173 = vpop.f32.mrb[0].mxu0
        %v6174 = vadd.f32 0.0, %v6173
        %v6175 = vpop.f32.mrb[0].mxu0
        %6176 = vmatprep.mubr.f32.mxu0 %v3295
        %6177 = vmatmul.mubr.f32.gmra.mrb[0].mxu0 %v3294
        %v6178 = vpop.f32.mrb[0].mxu0
        %v6179 = vadd.f32 0.0, %v6178
        %v6180 = vpop.f32.mrb[0].mxu0
        %6181 = vmatprep.mubr.f32.mxu0 %v3302
        %6182 = vmatmul.mubr.f32.gmra.mrb[0].mxu0 %v3301
        %v6183 = vpop.f32.mrb[0].mxu0
        %v6184 = vadd.f32 0.0, %v6183
        %v6185 = vpop.f32.mrb[0].mxu0
        %6186 = vmatprep.mubr.f32.mxu0 %v3309
        %6187 = vmatmul.mubr.f32.gmra.mrb[0].mxu0 %v3308
        %v6188 = vpop.f32.mrb[0].mxu0
        %v6189 = vpop.f32.mrb[0].mxu0
        %6190 = vdwg.mxu0
        %6191 = vmatprep.subr.mxu0 0.0
        %6192 = vmatpush1.msra.mxu0 %v5513
        %6193 = vmatprep.subr.mxu0 0.0
        %6194 = vmatpush1.msra.mxu0 %v5516
        %6195 = vmatprep.subr.mxu0 0.0
        %6196 = vmatpush1.msra.mxu0 %v5519
        %6197 = vmatprep.subr.mxu0 0.0
        %6198 = vmatpush1.msra.mxu0 %v5522
        %6199 = vmatprep.subr.mxu0 0.0
        %6200 = vmatpush1.msra.mxu0 %v5525
        %6201 = vmatprep.subr.mxu0 0.0
        %6202 = vmatpush1.msra.mxu0 %v5528
        %6203 = vmatprep.subr.mxu0 0.0
        %6204 = vmatpush1.msra.mxu0 %v5531
        %6205 = vmatprep.subr.mxu0 0.0
        %6206 = vmatpush1.msra.mxu0 %v5534
        %6207 = vmatprep.subr.mxu0 0.0
        %6208 = vmatpush1.msra.mxu0 %v5537
        %6209 = vmatprep.subr.mxu0 0.0
        %6210 = vmatpush1.msra.mxu0 %v5540
        %6211 = vmatprep.subr.mxu0 0.0
        %6212 = vmatpush1.msra.mxu0 %v5543
        %6213 = vmatprep.subr.mxu0 0.0
        %6214 = vmatpush1.msra.mxu0 %v5546
        %6215 = vmatprep.subr.mxu0 0.0
        %6216 = vmatpush1.msra.mxu0 %v5549
        %6217 = vmatprep.subr.mxu0 0.0
        %6218 = vmatpush1.msra.mxu0 %v5552
        %6219 = vmatprep.subr.mxu0 0.0
        %6220 = vmatpush1.msra.mxu0 %v5555
        %6221 = vmatprep.subr.mxu0 0.0
        %6222 = vmatpush1.msra.mxu0 %v5558
        %6223 = vmatprep.subr.mxu0 0.0
        %6224 = vmatpush1.msra.mxu0 %v5561
        %6225 = vmatprep.subr.mxu0 0.0
        %6226 = vmatpush1.msra.mxu0 %v5564
        %6227 = vmatprep.subr.mxu0 0.0
        %6228 = vmatpush1.msra.mxu0 %v5567
        %6229 = vmatprep.subr.mxu0 0.0
        %6230 = vmatpush1.msra.mxu0 %v5570
        %6231 = vmatprep.subr.mxu0 0.0
        %6232 = vmatpush1.msra.mxu0 %v5573
        %6233 = vmatprep.subr.mxu0 0.0
        %6234 = vmatpush1.msra.mxu0 %v5576
        %6235 = vmatprep.subr.mxu0 0.0
        %6236 = vmatpush1.msra.mxu0 %v5579
        %6237 = vmatprep.subr.mxu0 0.0
        %6238 = vmatpush1.msra.mxu0 %v5582
        %6239 = vmatprep.subr.mxu0 0.0
        %6240 = vmatpush1.msra.mxu0 %v5585
        %6241 = vmatprep.subr.mxu0 0.0
        %6242 = vmatpush1.msra.mxu0 %v5588
        %6243 = vmatprep.subr.mxu0 0.0
        %6244 = vmatpush1.msra.mxu0 %v5591
        %6245 = vmatprep.subr.mxu0 0.0
        %6246 = vmatpush1.msra.mxu0 %v5594
        %6247 = vmatprep.subr.mxu0 0.0
        %6248 = vmatpush1.msra.mxu0 %v5597
        %6249 = vmatprep.subr.mxu0 0.0
        %6250 = vmatpush1.msra.mxu0 %v5600
        %6251 = vmatprep.subr.mxu0 0.0
        %6252 = vmatpush1.msra.mxu0 %v5603
        %6253 = vmatprep.subr.mxu0 0.0
        %6254 = vmatpush1.msra.mxu0 %v5606
        %6255 = vmatprep.mubr.f32.mxu0 %v3283
        %6256 = vmatmul.mubr.f32.gmra.mrb[0].mxu0 %v3282
        %v6257 = vpop.f32.mrb[0].mxu0
        %v6258 = vadd.f32 %v6169, %v6257
        %v6259 = vpop.f32.mrb[0].mxu0
        %6260 = vmatprep.mubr.f32.mxu0 %v3290
        %6261 = vmatmul.mubr.f32.gmra.mrb[0].mxu0 %v3289
        %v6262 = vpop.f32.mrb[0].mxu0
        %v6263 = vadd.f32 %v6174, %v6262
        %v6264 = vpop.f32.mrb[0].mxu0
        %6265 = vmatprep.mubr.f32.mxu0 %v3297
        %6266 = vmatmul.mubr.f32.gmra.mrb[0].mxu0 %v3296
        %v6267 = vpop.f32.mrb[0].mxu0
        %v6268 = vadd.f32 %v6179, %v6267
        %v6269 = vpop.f32.mrb[0].mxu0
        %6270 = vmatprep.mubr.f32.mxu0 %v3304
        %6271 = vmatmul.mubr.f32.gmra.mrb[0].mxu0 %v3303
        %v6272 = vpop.f32.mrb[0].mxu0
        %v6273 = vadd.f32 %v6184, %v6272
        %v6274 = vpop.f32.mrb[0].mxu0
        %6275 = vmatprep.mubr.f32.mxu0 %v3311
        %6276 = vmatmul.mubr.f32.gmra.mrb[0].mxu0 %v3310
        %v6277 = vpop.f32.mrb[0].mxu0
        %v6278 = vpop.f32.mrb[0].mxu0
        %6279 = vdwg.mxu0
        %6280 = vmatprep.subr.mxu0 0.0
        %6281 = vmatpush1.msra.mxu0 %v5609
        %6282 = vmatprep.subr.mxu0 0.0
        %6283 = vmatpush1.msra.mxu0 %v5612
        %6284 = vmatprep.subr.mxu0 0.0
        %6285 = vmatpush1.msra.mxu0 %v5615
        %6286 = vmatprep.subr.mxu0 0.0
        %6287 = vmatpush1.msra.mxu0 %v5618
        %6288 = vmatprep.subr.mxu0 0.0
        %6289 = vmatpush1.msra.mxu0 %v5621
        %6290 = vmatprep.subr.mxu0 0.0
        %6291 = vmatpush1.msra.mxu0 %v5624
        %6292 = vmatprep.subr.mxu0 0.0
        %6293 = vmatpush1.msra.mxu0 %v5627
        %6294 = vmatprep.subr.mxu0 0.0
        %6295 = vmatpush1.msra.mxu0 %v5630
        %6296 = vmatprep.subr.mxu0 0.0
        %6297 = vmatpush1.msra.mxu0 %v5633
        %6298 = vmatprep.subr.mxu0 0.0
        %6299 = vmatpush1.msra.mxu0 %v5636
        %6300 = vmatprep.subr.mxu0 0.0
        %6301 = vmatpush1.msra.mxu0 %v5639
        %6302 = vmatprep.subr.mxu0 0.0
        %6303 = vmatpush1.msra.mxu0 %v5642
        %6304 = vmatprep.subr.mxu0 0.0
        %6305 = vmatpush1.msra.mxu0 %v5645
        %6306 = vmatprep.subr.mxu0 0.0
        %6307 = vmatpush1.msra.mxu0 %v5648
        %6308 = vmatprep.subr.mxu0 0.0
        %6309 = vmatpush1.msra.mxu0 %v5651
        %6310 = vmatprep.subr.mxu0 0.0
        %6311 = vmatpush1.msra.mxu0 %v5654
        %6312 = vmatprep.subr.mxu0 0.0
        %6313 = vmatpush1.msra.mxu0 %v5657
        %6314 = vmatprep.subr.mxu0 0.0
        %6315 = vmatpush1.msra.mxu0 %v5660
        %6316 = vmatprep.subr.mxu0 0.0
        %6317 = vmatpush1.msra.mxu0 %v5663
        %6318 = vmatprep.subr.mxu0 0.0
        %6319 = vmatpush1.msra.mxu0 %v5666
        %6320 = vmatprep.subr.mxu0 0.0
        %6321 = vmatpush1.msra.mxu0 %v5669
        %6322 = vmatprep.subr.mxu0 0.0
        %6323 = vmatpush1.msra.mxu0 %v5672
        %6324 = vmatprep.subr.mxu0 0.0
        %6325 = vmatpush1.msra.mxu0 %v5675
        %6326 = vmatprep.subr.mxu0 0.0
        %6327 = vmatpush1.msra.mxu0 %v5678
        %6328 = vmatprep.subr.mxu0 0.0
        %6329 = vmatpush1.msra.mxu0 %v5681
        %6330 = vmatprep.subr.mxu0 0.0
        %6331 = vmatpush1.msra.mxu0 %v5684
        %6332 = vmatprep.subr.mxu0 0.0
        %6333 = vmatpush1.msra.mxu0 %v5687
        %6334 = vmatprep.subr.mxu0 0.0
        %6335 = vmatpush1.msra.mxu0 %v5690
        %6336 = vmatprep.subr.mxu0 0.0
        %6337 = vmatpush1.msra.mxu0 %v5693
        %6338 = vmatprep.subr.mxu0 0.0
        %6339 = vmatpush1.msra.mxu0 %v5696
        %6340 = vmatprep.subr.mxu0 0.0
        %6341 = vmatpush1.msra.mxu0 %v5699
        %6342 = vmatprep.subr.mxu0 0.0
        %6343 = vmatpush1.msra.mxu0 %v5702
        %6344 = vmatprep.mubr.f32.mxu0 %v3285
        %6345 = vmatmul.mubr.f32.gmra.mrb[0].mxu0 %v3284
        %v6346 = vpop.f32.mrb[0].mxu0
        %v6347 = vadd.f32 %v6258, %v6346
        %v6348 = vpop.f32.mrb[0].mxu0
        %6349 = vmatprep.mubr.f32.mxu0 %v3292
        %6350 = vmatmul.mubr.f32.gmra.mrb[0].mxu0 %v3291
        %v6351 = vpop.f32.mrb[0].mxu0
        %v6352 = vadd.f32 %v6263, %v6351
        %v6353 = vpop.f32.mrb[0].mxu0
        %6354 = vmatprep.mubr.f32.mxu0 %v3299
        %6355 = vmatmul.mubr.f32.gmra.mrb[0].mxu0 %v3298
        %v6356 = vpop.f32.mrb[0].mxu0
        %v6357 = vadd.f32 %v6268, %v6356
        %v6358 = vpop.f32.mrb[0].mxu0
        %6359 = vmatprep.mubr.f32.mxu0 %v3306
        %6360 = vmatmul.mubr.f32.gmra.mrb[0].mxu0 %v3305
        %v6361 = vpop.f32.mrb[0].mxu0
        %v6362 = vadd.f32 %v6273, %v6361
        %v6363 = vpop.f32.mrb[0].mxu0
        %6364 = vmatprep.mubr.f32.mxu0 %v3313
        %6365 = vmatmul.mubr.f32.gmra.mrb[0].mxu0 %v3312
        %v6366 = vpop.f32.mrb[0].mxu0
        %v6367 = vpop.f32.mrb[0].mxu0
        %6368 = vdwg.mxu0
        %6369 = vmatprep.subr.mxu0 0.0
        %6370 = vmatpush1.msra.mxu0 %v5705
        %6371 = vmatprep.subr.mxu0 0.0
        %6372 = vmatpush1.msra.mxu0 %v5708
        %6373 = vmatprep.subr.mxu0 0.0
        %6374 = vmatpush1.msra.mxu0 %v5711
        %6375 = vmatprep.subr.mxu0 0.0
        %6376 = vmatpush1.msra.mxu0 %v5714
        %6377 = vmatprep.subr.mxu0 0.0
        %6378 = vmatpush1.msra.mxu0 %v5717
        %6379 = vmatprep.subr.mxu0 0.0
        %6380 = vmatpush1.msra.mxu0 %v5720
        %6381 = vmatprep.subr.mxu0 0.0
        %6382 = vmatpush1.msra.mxu0 %v5723
        %6383 = vmatprep.subr.mxu0 0.0
        %6384 = vmatpush1.msra.mxu0 %v5726
        %6385 = vmatprep.subr.mxu0 0.0
        %6386 = vmatpush1.msra.mxu0 0.0
        %6387 = vmatprep.subr.mxu0 0.0
        %6388 = vmatpush1.msra.mxu0 0.0
        %6389 = vmatprep.subr.mxu0 0.0
        %6390 = vmatpush1.msra.mxu0 0.0
        %6391 = vmatprep.subr.mxu0 0.0
        %6392 = vmatpush1.msra.mxu0 0.0
        %6393 = vmatprep.subr.mxu0 0.0
        %6394 = vmatpush1.msra.mxu0 0.0
        %6395 = vmatprep.subr.mxu0 0.0
        %6396 = vmatpush1.msra.mxu0 0.0
        %6397 = vmatprep.subr.mxu0 0.0
        %6398 = vmatpush1.msra.mxu0 0.0
        %6399 = vmatprep.subr.mxu0 0.0
        %6400 = vmatpush1.msra.mxu0 0.0
        %6401 = vmatprep.subr.mxu0 0.0
        %6402 = vmatpush1.msra.mxu0 0.0
        %6403 = vmatprep.subr.mxu0 0.0
        %6404 = vmatpush1.msra.mxu0 0.0
        %6405 = vmatprep.subr.mxu0 0.0
        %6406 = vmatpush1.msra.mxu0 0.0
        %6407 = vmatprep.subr.mxu0 0.0
        %6408 = vmatpush1.msra.mxu0 0.0
        %6409 = vmatprep.subr.mxu0 0.0
        %6410 = vmatpush1.msra.mxu0 0.0
        %6411 = vmatprep.subr.mxu0 0.0
        %6412 = vmatpush1.msra.mxu0 0.0
        %6413 = vmatprep.subr.mxu0 0.0
        %6414 = vmatpush1.msra.mxu0 0.0
        %6415 = vmatprep.subr.mxu0 0.0
        %6416 = vmatpush1.msra.mxu0 0.0
        %6417 = vmatprep.subr.mxu0 0.0
        %6418 = vmatpush1.msra.mxu0 0.0
        %6419 = vmatprep.subr.mxu0 0.0
        %6420 = vmatpush1.msra.mxu0 0.0
        %6421 = vmatprep.subr.mxu0 0.0
        %6422 = vmatpush1.msra.mxu0 0.0
        %6423 = vmatprep.subr.mxu0 0.0
        %6424 = vmatpush1.msra.mxu0 0.0
        %6425 = vmatprep.subr.mxu0 0.0
        %6426 = vmatpush1.msra.mxu0 0.0
        %6427 = vmatprep.subr.mxu0 0.0
        %6428 = vmatpush1.msra.mxu0 0.0
        %6429 = vmatprep.subr.mxu0 0.0
        %6430 = vmatpush1.msra.mxu0 0.0
        %6431 = vmatprep.subr.mxu0 0.0
        %6432 = vmatpush1.msra.mxu0 0.0
        %6433 = vmatprep.mubr.f32.mxu0 0.0
        %6434 = vmatmul.mubr.f32.gmra.mrb[0].mxu0 %v3944
        %v6435 = vpop.f32.mrb[0].mxu0
        %v6436 = vadd.f32 %v6347, %v6435
        %v6437 = vpop.f32.mrb[0].mxu0
        %6438 = vmatprep.mubr.f32.mxu0 0.0
        %6439 = vmatmul.mubr.f32.gmra.mrb[0].mxu0 %v3947
        %v6440 = vpop.f32.mrb[0].mxu0
        %v6441 = vadd.f32 %v6352, %v6440
        %v6442 = vpop.f32.mrb[0].mxu0
        %6443 = vmatprep.mubr.f32.mxu0 0.0
        %6444 = vmatmul.mubr.f32.gmra.mrb[0].mxu0 %v3950
        %v6445 = vpop.f32.mrb[0].mxu0
        %v6446 = vadd.f32 %v6357, %v6445
        %v6447 = vpop.f32.mrb[0].mxu0
        %6448 = vmatprep.mubr.f32.mxu0 0.0
        %6449 = vmatmul.mubr.f32.gmra.mrb[0].mxu0 %v3953
        %v6450 = vpop.f32.mrb[0].mxu0
        %v6451 = vadd.f32 %v6362, %v6450
        %v6452 = vpop.f32.mrb[0].mxu0
        %6453 = vmatprep.mubr.f32.mxu0 0.0
        %6454 = vmatmul.mubr.f32.gmra.mrb[0].mxu0 %v5728
        %v6455 = vpop.f32.mrb[0].mxu0
        %v6456 = vpop.f32.mrb[0].mxu0
        %6457 = vdwg.mxu0
        %v6458 = vadd.f32 %v5032, %v6076
        %v6459 = vadd.f32 %v5034, %v6078
        %v6460 = vadd.f32 %v5392, %v6436
        %v6461 = vadd.f32 %v5038, %v6082
        %v6462 = vadd.f32 %v5040, %v6084
        %v6463 = vadd.f32 %v5397, %v6441
        %v6464 = vadd.f32 %v5044, %v6088
        %v6465 = vadd.f32 %v5046, %v6090
        %v6466 = vadd.f32 %v5402, %v6446
        %v6467 = vadd.f32 %v5050, %v6094
        %v6468 = vadd.f32 %v5052, %v6096
        %v6469 = vadd.f32 %v5407, %v6451
        %v6470 = vld [vmem:[%s4] sm:$0x7]
        %v6472 = vlaneseq
        %v6473 = vshrl.u32 %v6472, 7
        %v6474 = vsub.s32 0, %v6473
        %v6475 = vrot.slane %v6470, %v6474
        %v6476 = vlaneseq
        %v6477 = vshrl.u32 %v6476, 7
        %v6478 = vsub.s32 1, %v6477
        %v6479 = vrot.slane %v6470, %v6478
        %v6480 = vlaneseq
        %v6481 = vshrl.u32 %v6480, 7
        %v6482 = vsub.s32 2, %v6481
        %v6483 = vrot.slane %v6470, %v6482
        %v6487 = vadd.f32 %v6458, %v6475
        %v6488 = vadd.f32 %v6459, %v6479
        %v6489 = vadd.f32 %v6460, %v6483
        %v6490 = vadd.f32 %v6461, %v6475
        %v6491 = vadd.f32 %v6462, %v6479
        %v6492 = vadd.f32 %v6463, %v6483
        %v6493 = vadd.f32 %v6464, %v6475
        %v6494 = vadd.f32 %v6465, %v6479
        %v6495 = vadd.f32 %v6466, %v6483
        %v6496 = vadd.f32 %v6467, %v6475
        %v6497 = vadd.f32 %v6468, %v6479
        %v6498 = vadd.f32 %v6469, %v6483
        %v6499 = vmax.f32 %v6487, 0.0
        %v6500 = vmax.f32 %v6488, 0.0
        %v6501 = vmax.f32 %v6489, 0.0
        %v6502 = vmax.f32 %v6490, 0.0
        %v6503 = vmax.f32 %v6491, 0.0
        %v6504 = vmax.f32 %v6492, 0.0
        %v6505 = vmax.f32 %v6493, 0.0
        %v6506 = vmax.f32 %v6494, 0.0
        %v6507 = vmax.f32 %v6495, 0.0
        %v6508 = vmax.f32 %v6496, 0.0
        %v6509 = vmax.f32 %v6497, 0.0
        %v6510 = vmax.f32 %v6498, 0.0
        %6523 = vrot.lane.b32.xlu0 %v6499, 64
        %v6524 = vpop.permute.xlu0 %6523
        %6525 = vrot.lane.b32.xlu0 %v6500, 64
        %v6526 = vpop.permute.xlu0 %6525
        %6527 = vrot.lane.b32.xlu0 %v6501, 64
        %v6528 = vpop.permute.xlu0 %6527
        %6529 = vrot.lane.b32.xlu0 %v6502, 64
        %v6530 = vpop.permute.xlu0 %6529
        %6531 = vrot.lane.b32.xlu0 %v6503, 64
        %v6532 = vpop.permute.xlu0 %6531
        %6533 = vrot.lane.b32.xlu0 %v6504, 64
        %v6534 = vpop.permute.xlu0 %6533
        %6535 = vrot.lane.b32.xlu0 %v6505, 64
        %v6536 = vpop.permute.xlu0 %6535
        %6537 = vrot.lane.b32.xlu0 %v6506, 64
        %v6538 = vpop.permute.xlu0 %6537
        %6539 = vrot.lane.b32.xlu0 %v6507, 64
        %v6540 = vpop.permute.xlu0 %6539
        %6541 = vrot.lane.b32.xlu0 %v6508, 64
        %v6542 = vpop.permute.xlu0 %6541
        %6543 = vrot.lane.b32.xlu0 %v6509, 64
        %v6544 = vpop.permute.xlu0 %6543
        %6545 = vrot.lane.b32.xlu0 %v6510, 64
        %v6546 = vpop.permute.xlu0 %6545
        %v6547 = vsel %vm2985, %v6524, %v6526
        %v6548 = vsel %vm2985, %v6526, %v6528
        %v6549 = vsel %vm2985, %v6530, %v6532
        %v6550 = vsel %vm2985, %v6532, %v6534
        %v6551 = vsel %vm2985, %v6536, %v6538
        %v6552 = vsel %vm2985, %v6538, %v6540
        %v6553 = vsel %vm2985, %v6542, %v6544
        %v6554 = vsel %vm2985, %v6544, %v6546
        %v6563 = vmax.f32 %v6499, %v6547
        %v6564 = vmax.f32 %v6500, %v6548
        %v6565 = vmax.f32 %v6502, %v6549
        %v6566 = vmax.f32 %v6503, %v6550
        %v6567 = vmax.f32 %v6505, %v6551
        %v6568 = vmax.f32 %v6506, %v6552
        %v6569 = vmax.f32 %v6508, %v6553
        %v6570 = vmax.f32 %v6509, %v6554
        %v6571 = vmax.f32 %v6563, %v6565
        %v6572 = vmax.f32 %v6564, %v6566
        %v6573 = vmax.f32 %v6567, %v6569
        %v6574 = vmax.f32 %v6568, %v6570
        %v6575 = vld [vmem:[%s5] sm:$0xff]
        %v6576 = vld [vmem:[%s5 + $0x8] sm:$0xff]
        %v6577 = vld [vmem:[%s5 + $0x10] sm:$0xff]
        %v6578 = vld [vmem:[%s5 + $0x18] sm:$0xff]
        %v6579 = vld [vmem:[%s5 + $0x20] sm:$0xff]
        %v6580 = vld [vmem:[%s5 + $0x28] sm:$0xff]
        %v6581 = vld [vmem:[%s5 + $0x30] sm:$0xff]
        %v6582 = vld [vmem:[%s5 + $0x38] sm:$0xff]
        %v6583 = vld [vmem:[%s5 + $0x40] sm:$0xff]
        %v6584 = vld [vmem:[%s5 + $0x48] sm:$0xff]
        %v6585 = vld [vmem:[%s5 + $0x50] sm:$0xff]
        %v6586 = vld [vmem:[%s5 + $0x58] sm:$0xff]
        %v6587 = vld [vmem:[%s5 + $0x60] sm:$0xff]
        %v6588 = vld [vmem:[%s5 + $0x68] sm:$0xff]
        %v6589 = vld [vmem:[%s5 + $0x70] sm:$0xff]
        %v6590 = vld [vmem:[%s5 + $0x78] sm:$0xff]
        %v6591 = vld [vmem:[%s5 + $0x80] sm:$0xff]
        %v6592 = vld [vmem:[%s5 + $0x88] sm:$0xff]
        %v6593 = vld [vmem:[%s5 + $0x90] sm:$0xff]
        %v6594 = vld [vmem:[%s5 + $0x98] sm:$0xff]
        %v6595 = vld [vmem:[%s5 + $0xa0] sm:$0xff]
        %v6596 = vld [vmem:[%s5 + $0xa8] sm:$0xff]
        %v6597 = vld [vmem:[%s5 + $0xb0] sm:$0xff]
        %v6598 = vld [vmem:[%s5 + $0xb8] sm:$0xff]
        %v6599 = vld [vmem:[%s5 + $0xc0] sm:$0xff]
        %v6600 = vld [vmem:[%s5 + $0xc8] sm:$0xff]
        %v6601 = vld [vmem:[%s5 + $0xd0] sm:$0xff]
        %v6602 = vld [vmem:[%s5 + $0xd8] sm:$0xff]
        %v6603 = vld [vmem:[%s5 + $0xe0] sm:$0xff]
        %v6604 = vld [vmem:[%s5 + $0xe8] sm:$0xff]
        %v6605 = vld [vmem:[%s5 + $0xf0] sm:$0xff]
        %v6606 = vld [vmem:[%s5 + $0xf8] sm:$0xff]
        %s6607 = scalar_lea.vmem %s5, 256
        %v6608 = vld [vmem:[%s6607] sm:$0xff]
        %v6609 = vld [vmem:[%s6607 + $0x8] sm:$0xff]
        %v6610 = vld [vmem:[%s6607 + $0x10] sm:$0xff]
        %v6611 = vld [vmem:[%s6607 + $0x18] sm:$0xff]
        %v6612 = vld [vmem:[%s6607 + $0x20] sm:$0xff]
        %v6613 = vld [vmem:[%s6607 + $0x28] sm:$0xff]
        %v6614 = vld [vmem:[%s6607 + $0x30] sm:$0xff]
        %v6615 = vld [vmem:[%s6607 + $0x38] sm:$0xff]
        %v6616 = vld [vmem:[%s6607 + $0x40] sm:$0xff]
        %v6617 = vld [vmem:[%s6607 + $0x48] sm:$0xff]
        %v6618 = vld [vmem:[%s6607 + $0x50] sm:$0xff]
        %v6619 = vld [vmem:[%s6607 + $0x58] sm:$0xff]
        %v6620 = vld [vmem:[%s6607 + $0x60] sm:$0xff]
        %v6621 = vld [vmem:[%s6607 + $0x68] sm:$0xff]
        %v6622 = vld [vmem:[%s6607 + $0x70] sm:$0xff]
        %v6623 = vld [vmem:[%s6607 + $0x78] sm:$0xff]
        %v6624 = vld [vmem:[%s6607 + $0x80] sm:$0xff]
        %v6625 = vld [vmem:[%s6607 + $0x88] sm:$0xff]
        %v6626 = vld [vmem:[%s6607 + $0x90] sm:$0xff]
        %v6627 = vld [vmem:[%s6607 + $0x98] sm:$0xff]
        %v6628 = vld [vmem:[%s6607 + $0xa0] sm:$0xff]
        %v6629 = vld [vmem:[%s6607 + $0xa8] sm:$0xff]
        %v6630 = vld [vmem:[%s6607 + $0xb0] sm:$0xff]
        %v6631 = vld [vmem:[%s6607 + $0xb8] sm:$0xff]
        %v6632 = vld [vmem:[%s6607 + $0xc0] sm:$0xff]
        %v6633 = vld [vmem:[%s6607 + $0xc8] sm:$0xff]
        %v6634 = vld [vmem:[%s6607 + $0xd0] sm:$0xff]
        %v6635 = vld [vmem:[%s6607 + $0xd8] sm:$0xff]
        %v6636 = vld [vmem:[%s6607 + $0xe0] sm:$0xff]
        %v6637 = vld [vmem:[%s6607 + $0xe8] sm:$0xff]
        %v6638 = vld [vmem:[%s6607 + $0xf0] sm:$0xff]
        %v6639 = vld [vmem:[%s6607 + $0xf8] sm:$0xff]
        %6640 = vmatprep.subr.mxu0 0.0
        %6641 = vmatpush1.msra.mxu0 %v6608
        %6642 = vmatprep.subr.mxu0 0.0
        %6643 = vmatpush1.msra.mxu0 %v6609
        %6644 = vmatprep.subr.mxu0 0.0
        %6645 = vmatpush1.msra.mxu0 %v6610
        %6646 = vmatprep.subr.mxu0 0.0
        %6647 = vmatpush1.msra.mxu0 %v6611
        %6648 = vmatprep.subr.mxu0 0.0
        %6649 = vmatpush1.msra.mxu0 %v6612
        %6650 = vmatprep.subr.mxu0 0.0
        %6651 = vmatpush1.msra.mxu0 %v6613
        %6652 = vmatprep.subr.mxu0 0.0
        %6653 = vmatpush1.msra.mxu0 %v6614
        %6654 = vmatprep.subr.mxu0 0.0
        %6655 = vmatpush1.msra.mxu0 %v6615
        %6656 = vmatprep.subr.mxu0 0.0
        %6657 = vmatpush1.msra.mxu0 %v6616
        %6658 = vmatprep.subr.mxu0 0.0
        %6659 = vmatpush1.msra.mxu0 %v6617
        %6660 = vmatprep.subr.mxu0 0.0
        %6661 = vmatpush1.msra.mxu0 %v6618
        %6662 = vmatprep.subr.mxu0 0.0
        %6663 = vmatpush1.msra.mxu0 %v6619
        %6664 = vmatprep.subr.mxu0 0.0
        %6665 = vmatpush1.msra.mxu0 %v6620
        %6666 = vmatprep.subr.mxu0 0.0
        %6667 = vmatpush1.msra.mxu0 %v6621
        %6668 = vmatprep.subr.mxu0 0.0
        %6669 = vmatpush1.msra.mxu0 %v6622
        %6670 = vmatprep.subr.mxu0 0.0
        %6671 = vmatpush1.msra.mxu0 %v6623
        %6672 = vmatprep.subr.mxu0 0.0
        %6673 = vmatpush1.msra.mxu0 %v6624
        %6674 = vmatprep.subr.mxu0 0.0
        %6675 = vmatpush1.msra.mxu0 %v6625
        %6676 = vmatprep.subr.mxu0 0.0
        %6677 = vmatpush1.msra.mxu0 %v6626
        %6678 = vmatprep.subr.mxu0 0.0
        %6679 = vmatpush1.msra.mxu0 %v6627
        %6680 = vmatprep.subr.mxu0 0.0
        %6681 = vmatpush1.msra.mxu0 %v6628
        %6682 = vmatprep.subr.mxu0 0.0
        %6683 = vmatpush1.msra.mxu0 %v6629
        %6684 = vmatprep.subr.mxu0 0.0
        %6685 = vmatpush1.msra.mxu0 %v6630
        %6686 = vmatprep.subr.mxu0 0.0
        %6687 = vmatpush1.msra.mxu0 %v6631
        %6688 = vmatprep.subr.mxu0 0.0
        %6689 = vmatpush1.msra.mxu0 %v6632
        %6690 = vmatprep.subr.mxu0 0.0
        %6691 = vmatpush1.msra.mxu0 %v6633
        %6692 = vmatprep.subr.mxu0 0.0
        %6693 = vmatpush1.msra.mxu0 %v6634
        %6694 = vmatprep.subr.mxu0 0.0
        %6695 = vmatpush1.msra.mxu0 %v6635
        %6696 = vmatprep.subr.mxu0 0.0
        %6697 = vmatpush1.msra.mxu0 %v6636
        %6698 = vmatprep.subr.mxu0 0.0
        %6699 = vmatpush1.msra.mxu0 %v6637
        %6700 = vmatprep.subr.mxu0 0.0
        %6701 = vmatpush1.msra.mxu0 %v6638
        %6702 = vmatprep.subr.mxu0 0.0
        %6703 = vmatpush1.msra.mxu0 %v6639
        %6704 = vmatprep.mubr.f32.mxu0 %v6572
        %6705 = vmatmul.mubr.f32.gmra.mrb[0].mxu0 %v6571
        %v6706 = vpop.f32.mrb[0].mxu0
        %v6707 = vadd.f32 0.0, %v6706
        %v6708 = vpop.f32.mrb[0].mxu0
        %6709 = vmatprep.mubr.f32.mxu0 %v6574
        %6710 = vmatmul.mubr.f32.gmra.mrb[0].mxu0 %v6573
        %v6711 = vpop.f32.mrb[0].mxu0
        %v6712 = vadd.f32 0.0, %v6711
        %v6713 = vpop.f32.mrb[0].mxu0
        %6714 = vdwg.mxu0
        %6715 = vmatprep.subr.mxu0 0.0
        %6716 = vmatpush1.msra.mxu0 %v6575
        %6717 = vmatprep.subr.mxu0 0.0
        %6718 = vmatpush1.msra.mxu0 %v6576
        %6719 = vmatprep.subr.mxu0 0.0
        %6720 = vmatpush1.msra.mxu0 %v6577
        %6721 = vmatprep.subr.mxu0 0.0
        %6722 = vmatpush1.msra.mxu0 %v6578
        %6723 = vmatprep.subr.mxu0 0.0
        %6724 = vmatpush1.msra.mxu0 %v6579
        %6725 = vmatprep.subr.mxu0 0.0
        %6726 = vmatpush1.msra.mxu0 %v6580
        %6727 = vmatprep.subr.mxu0 0.0
        %6728 = vmatpush1.msra.mxu0 %v6581
        %6729 = vmatprep.subr.mxu0 0.0
        %6730 = vmatpush1.msra.mxu0 %v6582
        %6731 = vmatprep.subr.mxu0 0.0
        %6732 = vmatpush1.msra.mxu0 %v6583
        %6733 = vmatprep.subr.mxu0 0.0
        %6734 = vmatpush1.msra.mxu0 %v6584
        %6735 = vmatprep.subr.mxu0 0.0
        %6736 = vmatpush1.msra.mxu0 %v6585
        %6737 = vmatprep.subr.mxu0 0.0
        %6738 = vmatpush1.msra.mxu0 %v6586
        %6739 = vmatprep.subr.mxu0 0.0
        %6740 = vmatpush1.msra.mxu0 %v6587
        %6741 = vmatprep.subr.mxu0 0.0
        %6742 = vmatpush1.msra.mxu0 %v6588
        %6743 = vmatprep.subr.mxu0 0.0
        %6744 = vmatpush1.msra.mxu0 %v6589
        %6745 = vmatprep.subr.mxu0 0.0
        %6746 = vmatpush1.msra.mxu0 %v6590
        %6747 = vmatprep.subr.mxu0 0.0
        %6748 = vmatpush1.msra.mxu0 %v6591
        %6749 = vmatprep.subr.mxu0 0.0
        %6750 = vmatpush1.msra.mxu0 %v6592
        %6751 = vmatprep.subr.mxu0 0.0
        %6752 = vmatpush1.msra.mxu0 %v6593
        %6753 = vmatprep.subr.mxu0 0.0
        %6754 = vmatpush1.msra.mxu0 %v6594
        %6755 = vmatprep.subr.mxu0 0.0
        %6756 = vmatpush1.msra.mxu0 %v6595
        %6757 = vmatprep.subr.mxu0 0.0
        %6758 = vmatpush1.msra.mxu0 %v6596
        %6759 = vmatprep.subr.mxu0 0.0
        %6760 = vmatpush1.msra.mxu0 %v6597
        %6761 = vmatprep.subr.mxu0 0.0
        %6762 = vmatpush1.msra.mxu0 %v6598
        %6763 = vmatprep.subr.mxu0 0.0
        %6764 = vmatpush1.msra.mxu0 %v6599
        %6765 = vmatprep.subr.mxu0 0.0
        %6766 = vmatpush1.msra.mxu0 %v6600
        %6767 = vmatprep.subr.mxu0 0.0
        %6768 = vmatpush1.msra.mxu0 %v6601
        %6769 = vmatprep.subr.mxu0 0.0
        %6770 = vmatpush1.msra.mxu0 %v6602
        %6771 = vmatprep.subr.mxu0 0.0
        %6772 = vmatpush1.msra.mxu0 %v6603
        %6773 = vmatprep.subr.mxu0 0.0
        %6774 = vmatpush1.msra.mxu0 %v6604
        %6775 = vmatprep.subr.mxu0 0.0
        %6776 = vmatpush1.msra.mxu0 %v6605
        %6777 = vmatprep.subr.mxu0 0.0
        %6778 = vmatpush1.msra.mxu0 %v6606
        %6779 = vmatprep.mubr.f32.mxu0 0.0
        %6780 = vmatmul.mubr.f32.gmra.mrb[0].mxu0 0.0
        %v6781 = vpop.f32.mrb[0].mxu0
        %v6782 = vadd.f32 %v6707, %v6781
        %v6783 = vpop.f32.mrb[0].mxu0
        %6784 = vmatprep.mubr.f32.mxu0 %v6572
        %6785 = vmatmul.mubr.f32.gmra.mrb[0].mxu0 %v6571
        %v6786 = vpop.f32.mrb[0].mxu0
        %v6787 = vadd.f32 %v6712, %v6786
        %v6788 = vpop.f32.mrb[0].mxu0
        %6789 = vdwg.mxu0
        %s6790 = scalar_lea.vmem %s5, 512
        %v6791 = vld [vmem:[%s6790] sm:$0xff]
        %v6792 = vld [vmem:[%s6790 + $0x8] sm:$0xff]
        %v6793 = vld [vmem:[%s6790 + $0x10] sm:$0xff]
        %v6794 = vld [vmem:[%s6790 + $0x18] sm:$0xff]
        %v6795 = vld [vmem:[%s6790 + $0x20] sm:$0xff]
        %v6796 = vld [vmem:[%s6790 + $0x28] sm:$0xff]
        %v6797 = vld [vmem:[%s6790 + $0x30] sm:$0xff]
        %v6798 = vld [vmem:[%s6790 + $0x38] sm:$0xff]
        %v6799 = vld [vmem:[%s6790 + $0x40] sm:$0xff]
        %v6800 = vld [vmem:[%s6790 + $0x48] sm:$0xff]
        %v6801 = vld [vmem:[%s6790 + $0x50] sm:$0xff]
        %v6802 = vld [vmem:[%s6790 + $0x58] sm:$0xff]
        %v6803 = vld [vmem:[%s6790 + $0x60] sm:$0xff]
        %v6804 = vld [vmem:[%s6790 + $0x68] sm:$0xff]
        %v6805 = vld [vmem:[%s6790 + $0x70] sm:$0xff]
        %v6806 = vld [vmem:[%s6790 + $0x78] sm:$0xff]
        %v6807 = vld [vmem:[%s6790 + $0x80] sm:$0xff]
        %v6808 = vld [vmem:[%s6790 + $0x88] sm:$0xff]
        %v6809 = vld [vmem:[%s6790 + $0x90] sm:$0xff]
        %v6810 = vld [vmem:[%s6790 + $0x98] sm:$0xff]
        %v6811 = vld [vmem:[%s6790 + $0xa0] sm:$0xff]
        %v6812 = vld [vmem:[%s6790 + $0xa8] sm:$0xff]
        %v6813 = vld [vmem:[%s6790 + $0xb0] sm:$0xff]
        %v6814 = vld [vmem:[%s6790 + $0xb8] sm:$0xff]
        %v6815 = vld [vmem:[%s6790 + $0xc0] sm:$0xff]
        %v6816 = vld [vmem:[%s6790 + $0xc8] sm:$0xff]
        %v6817 = vld [vmem:[%s6790 + $0xd0] sm:$0xff]
        %v6818 = vld [vmem:[%s6790 + $0xd8] sm:$0xff]
        %v6819 = vld [vmem:[%s6790 + $0xe0] sm:$0xff]
        %v6820 = vld [vmem:[%s6790 + $0xe8] sm:$0xff]
        %v6821 = vld [vmem:[%s6790 + $0xf0] sm:$0xff]
        %v6822 = vld [vmem:[%s6790 + $0xf8] sm:$0xff]
        %6823 = vmatprep.subr.mxu0 0.0
        %6824 = vmatpush1.msra.mxu0 %v6791
        %6825 = vmatprep.subr.mxu0 0.0
        %6826 = vmatpush1.msra.mxu0 %v6792
        %6827 = vmatprep.subr.mxu0 0.0
        %6828 = vmatpush1.msra.mxu0 %v6793
        %6829 = vmatprep.subr.mxu0 0.0
        %6830 = vmatpush1.msra.mxu0 %v6794
        %6831 = vmatprep.subr.mxu0 0.0
        %6832 = vmatpush1.msra.mxu0 %v6795
        %6833 = vmatprep.subr.mxu0 0.0
        %6834 = vmatpush1.msra.mxu0 %v6796
        %6835 = vmatprep.subr.mxu0 0.0
        %6836 = vmatpush1.msra.mxu0 %v6797
        %6837 = vmatprep.subr.mxu0 0.0
        %6838 = vmatpush1.msra.mxu0 %v6798
        %6839 = vmatprep.subr.mxu0 0.0
        %6840 = vmatpush1.msra.mxu0 %v6799
        %6841 = vmatprep.subr.mxu0 0.0
        %6842 = vmatpush1.msra.mxu0 %v6800
        %6843 = vmatprep.subr.mxu0 0.0
        %6844 = vmatpush1.msra.mxu0 %v6801
        %6845 = vmatprep.subr.mxu0 0.0
        %6846 = vmatpush1.msra.mxu0 %v6802
        %6847 = vmatprep.subr.mxu0 0.0
        %6848 = vmatpush1.msra.mxu0 %v6803
        %6849 = vmatprep.subr.mxu0 0.0
        %6850 = vmatpush1.msra.mxu0 %v6804
        %6851 = vmatprep.subr.mxu0 0.0
        %6852 = vmatpush1.msra.mxu0 %v6805
        %6853 = vmatprep.subr.mxu0 0.0
        %6854 = vmatpush1.msra.mxu0 %v6806
        %6855 = vmatprep.subr.mxu0 0.0
        %6856 = vmatpush1.msra.mxu0 %v6807
        %6857 = vmatprep.subr.mxu0 0.0
        %6858 = vmatpush1.msra.mxu0 %v6808
        %6859 = vmatprep.subr.mxu0 0.0
        %6860 = vmatpush1.msra.mxu0 %v6809
        %6861 = vmatprep.subr.mxu0 0.0
        %6862 = vmatpush1.msra.mxu0 %v6810
        %6863 = vmatprep.subr.mxu0 0.0
        %6864 = vmatpush1.msra.mxu0 %v6811
        %6865 = vmatprep.subr.mxu0 0.0
        %6866 = vmatpush1.msra.mxu0 %v6812
        %6867 = vmatprep.subr.mxu0 0.0
        %6868 = vmatpush1.msra.mxu0 %v6813
        %6869 = vmatprep.subr.mxu0 0.0
        %6870 = vmatpush1.msra.mxu0 %v6814
        %6871 = vmatprep.subr.mxu0 0.0
        %6872 = vmatpush1.msra.mxu0 %v6815
        %6873 = vmatprep.subr.mxu0 0.0
        %6874 = vmatpush1.msra.mxu0 %v6816
        %6875 = vmatprep.subr.mxu0 0.0
        %6876 = vmatpush1.msra.mxu0 %v6817
        %6877 = vmatprep.subr.mxu0 0.0
        %6878 = vmatpush1.msra.mxu0 %v6818
        %6879 = vmatprep.subr.mxu0 0.0
        %6880 = vmatpush1.msra.mxu0 %v6819
        %6881 = vmatprep.subr.mxu0 0.0
        %6882 = vmatpush1.msra.mxu0 %v6820
        %6883 = vmatprep.subr.mxu0 0.0
        %6884 = vmatpush1.msra.mxu0 %v6821
        %6885 = vmatprep.subr.mxu0 0.0
        %6886 = vmatpush1.msra.mxu0 %v6822
        %6887 = vmatprep.mubr.f32.mxu0 %v6574
        %6888 = vmatmul.mubr.f32.gmra.mrb[0].mxu0 %v6573
        %v6889 = vpop.f32.mrb[0].mxu0
        %v6890 = vadd.f32 0.0, %v6889
        %v6891 = vpop.f32.mrb[0].mxu0
        %6892 = vmatprep.mubr.f32.mxu0 0.0
        %6893 = vmatmul.mubr.f32.gmra.mrb[0].mxu0 0.0
        %v6894 = vpop.f32.mrb[0].mxu0
        %v6895 = vadd.f32 0.0, %v6894
        %v6896 = vpop.f32.mrb[0].mxu0
        %6897 = vdwg.mxu0
        %v6898 = vadd.f32 %v6782, %v6890
        %v6899 = vadd.f32 %v6787, %v6895
        %v6900 = vld [vmem:[%s6] sm:$0x1]
        %v6902 = vlaneseq
        %v6903 = vshrl.u32 %v6902, 7
        %v6904 = vsub.s32 0, %v6903
        %v6905 = vrot.slane %v6900, %v6904
        %v6907 = vadd.f32 %v6898, %v6905
        %v6908 = vadd.f32 %v6899, %v6905
        %v6909 = vmax.f32 %v6907, 0.0
        %v6910 = vmax.f32 %v6908, 0.0
        %v6911 = vld [vmem:[%s7] sm:$0xff]
        %v6912 = vld [vmem:[%s7 + $0x8] sm:$0xff]
        %v6913 = vld [vmem:[%s7 + $0x10] sm:$0xff]
        %v6914 = vld [vmem:[%s7 + $0x18] sm:$0xff]
        %v6915 = vld [vmem:[%s7 + $0x20] sm:$0xff]
        %v6916 = vld [vmem:[%s7 + $0x28] sm:$0xff]
        %v6917 = vld [vmem:[%s7 + $0x30] sm:$0xff]
        %v6918 = vld [vmem:[%s7 + $0x38] sm:$0xff]
        %v6919 = vld [vmem:[%s7 + $0x40] sm:$0xff]
        %v6920 = vld [vmem:[%s7 + $0x48] sm:$0xff]
        %v6921 = vld [vmem:[%s7 + $0x50] sm:$0xff]
        %v6922 = vld [vmem:[%s7 + $0x58] sm:$0xff]
        %v6923 = vld [vmem:[%s7 + $0x60] sm:$0xff]
        %v6924 = vld [vmem:[%s7 + $0x68] sm:$0xff]
        %v6925 = vld [vmem:[%s7 + $0x70] sm:$0xff]
        %v6926 = vld [vmem:[%s7 + $0x78] sm:$0xff]
        %s6927 = scalar_lea.vmem %s7, 128
        %v6928 = vld [vmem:[%s6927] sm:$0xff]
        %v6929 = vld [vmem:[%s6927 + $0x8] sm:$0xff]
        %v6930 = vld [vmem:[%s6927 + $0x10] sm:$0xff]
        %v6931 = vld [vmem:[%s6927 + $0x18] sm:$0xff]
        %v6932 = vld [vmem:[%s6927 + $0x20] sm:$0xff]
        %v6933 = vld [vmem:[%s6927 + $0x28] sm:$0xff]
        %v6934 = vld [vmem:[%s6927 + $0x30] sm:$0xff]
        %v6935 = vld [vmem:[%s6927 + $0x38] sm:$0xff]
        %v6936 = vld [vmem:[%s6927 + $0x40] sm:$0xff]
        %v6937 = vld [vmem:[%s6927 + $0x48] sm:$0xff]
        %v6938 = vld [vmem:[%s6927 + $0x50] sm:$0xff]
        %v6939 = vld [vmem:[%s6927 + $0x58] sm:$0xff]
        %v6940 = vld [vmem:[%s6927 + $0x60] sm:$0xff]
        %v6941 = vld [vmem:[%s6927 + $0x68] sm:$0xff]
        %v6942 = vld [vmem:[%s6927 + $0x70] sm:$0xff]
        %v6943 = vld [vmem:[%s6927 + $0x78] sm:$0xff]
        %6944 = vmatprep.subr.mxu0 0.0
        %6945 = vmatpush1.msra.mxu0 %v6928
        %6946 = vmatprep.subr.mxu0 0.0
        %6947 = vmatpush1.msra.mxu0 %v6929
        %6948 = vmatprep.subr.mxu0 0.0
        %6949 = vmatpush1.msra.mxu0 %v6930
        %6950 = vmatprep.subr.mxu0 0.0
        %6951 = vmatpush1.msra.mxu0 %v6931
        %6952 = vmatprep.subr.mxu0 0.0
        %6953 = vmatpush1.msra.mxu0 %v6932
        %6954 = vmatprep.subr.mxu0 0.0
        %6955 = vmatpush1.msra.mxu0 %v6933
        %6956 = vmatprep.subr.mxu0 0.0
        %6957 = vmatpush1.msra.mxu0 %v6934
        %6958 = vmatprep.subr.mxu0 0.0
        %6959 = vmatpush1.msra.mxu0 %v6935
        %6960 = vmatprep.subr.mxu0 0.0
        %6961 = vmatpush1.msra.mxu0 %v6936
        %6962 = vmatprep.subr.mxu0 0.0
        %6963 = vmatpush1.msra.mxu0 %v6937
        %6964 = vmatprep.subr.mxu0 0.0
        %6965 = vmatpush1.msra.mxu0 %v6938
        %6966 = vmatprep.subr.mxu0 0.0
        %6967 = vmatpush1.msra.mxu0 %v6939
        %6968 = vmatprep.subr.mxu0 0.0
        %6969 = vmatpush1.msra.mxu0 %v6940
        %6970 = vmatprep.subr.mxu0 0.0
        %6971 = vmatpush1.msra.mxu0 %v6941
        %6972 = vmatprep.subr.mxu0 0.0
        %6973 = vmatpush1.msra.mxu0 %v6942
        %6974 = vmatprep.subr.mxu0 0.0
        %6975 = vmatpush1.msra.mxu0 %v6943
        %6976 = vmatprep.subr.mxu0 0.0
        %6977 = vmatpush1.msra.mxu0 0.0
        %6978 = vmatprep.subr.mxu0 0.0
        %6979 = vmatpush1.msra.mxu0 0.0
        %6980 = vmatprep.subr.mxu0 0.0
        %6981 = vmatpush1.msra.mxu0 0.0
        %6982 = vmatprep.subr.mxu0 0.0
        %6983 = vmatpush1.msra.mxu0 0.0
        %6984 = vmatprep.subr.mxu0 0.0
        %6985 = vmatpush1.msra.mxu0 0.0
        %6986 = vmatprep.subr.mxu0 0.0
        %6987 = vmatpush1.msra.mxu0 0.0
        %6988 = vmatprep.subr.mxu0 0.0
        %6989 = vmatpush1.msra.mxu0 0.0
        %6990 = vmatprep.subr.mxu0 0.0
        %6991 = vmatpush1.msra.mxu0 0.0
        %6992 = vmatprep.subr.mxu0 0.0
        %6993 = vmatpush1.msra.mxu0 0.0
        %6994 = vmatprep.subr.mxu0 0.0
        %6995 = vmatpush1.msra.mxu0 0.0
        %6996 = vmatprep.subr.mxu0 0.0
        %6997 = vmatpush1.msra.mxu0 0.0
        %6998 = vmatprep.subr.mxu0 0.0
        %6999 = vmatpush1.msra.mxu0 0.0
        %7000 = vmatprep.subr.mxu0 0.0
        %7001 = vmatpush1.msra.mxu0 0.0
        %7002 = vmatprep.subr.mxu0 0.0
        %7003 = vmatpush1.msra.mxu0 0.0
        %7004 = vmatprep.subr.mxu0 0.0
        %7005 = vmatpush1.msra.mxu0 0.0
        %7006 = vmatprep.subr.mxu0 0.0
        %7007 = vmatpush1.msra.mxu0 0.0
        %7008 = vmatprep.mubr.f32.mxu0 0.0
        %7009 = vmatmul.mubr.f32.gmra.mrb[0].mxu0 %v6909
        %v7010 = vpop.f32.mrb[0].mxu0
        %v7011 = vadd.f32 0.0, %v7010
        %v7012 = vpop.f32.mrb[0].mxu0
        %7013 = vmatprep.mubr.f32.mxu0 0.0
        %7014 = vmatmul.mubr.f32.gmra.mrb[0].mxu0 %v6910
        %v7015 = vpop.f32.mrb[0].mxu0
        %v7016 = vadd.f32 0.0, %v7015
        %v7017 = vpop.f32.mrb[0].mxu0
        %7018 = vdwg.mxu0
        %7019 = vmatprep.subr.mxu0 0.0
        %7020 = vmatpush1.msra.mxu0 %v6911
        %7021 = vmatprep.subr.mxu0 0.0
        %7022 = vmatpush1.msra.mxu0 %v6912
        %7023 = vmatprep.subr.mxu0 0.0
        %7024 = vmatpush1.msra.mxu0 %v6913
        %7025 = vmatprep.subr.mxu0 0.0
        %7026 = vmatpush1.msra.mxu0 %v6914
        %7027 = vmatprep.subr.mxu0 0.0
        %7028 = vmatpush1.msra.mxu0 %v6915
        %7029 = vmatprep.subr.mxu0 0.0
        %7030 = vmatpush1.msra.mxu0 %v6916
        %7031 = vmatprep.subr.mxu0 0.0
        %7032 = vmatpush1.msra.mxu0 %v6917
        %7033 = vmatprep.subr.mxu0 0.0
        %7034 = vmatpush1.msra.mxu0 %v6918
        %7035 = vmatprep.subr.mxu0 0.0
        %7036 = vmatpush1.msra.mxu0 %v6919
        %7037 = vmatprep.subr.mxu0 0.0
        %7038 = vmatpush1.msra.mxu0 %v6920
        %7039 = vmatprep.subr.mxu0 0.0
        %7040 = vmatpush1.msra.mxu0 %v6921
        %7041 = vmatprep.subr.mxu0 0.0
        %7042 = vmatpush1.msra.mxu0 %v6922
        %7043 = vmatprep.subr.mxu0 0.0
        %7044 = vmatpush1.msra.mxu0 %v6923
        %7045 = vmatprep.subr.mxu0 0.0
        %7046 = vmatpush1.msra.mxu0 %v6924
        %7047 = vmatprep.subr.mxu0 0.0
        %7048 = vmatpush1.msra.mxu0 %v6925
        %7049 = vmatprep.subr.mxu0 0.0
        %7050 = vmatpush1.msra.mxu0 %v6926
        %7051 = vmatprep.subr.mxu0 0.0
        %7052 = vmatpush1.msra.mxu0 0.0
        %7053 = vmatprep.subr.mxu0 0.0
        %7054 = vmatpush1.msra.mxu0 0.0
        %7055 = vmatprep.subr.mxu0 0.0
        %7056 = vmatpush1.msra.mxu0 0.0
        %7057 = vmatprep.subr.mxu0 0.0
        %7058 = vmatpush1.msra.mxu0 0.0
        %7059 = vmatprep.subr.mxu0 0.0
        %7060 = vmatpush1.msra.mxu0 0.0
        %7061 = vmatprep.subr.mxu0 0.0
        %7062 = vmatpush1.msra.mxu0 0.0
        %7063 = vmatprep.subr.mxu0 0.0
        %7064 = vmatpush1.msra.mxu0 0.0
        %7065 = vmatprep.subr.mxu0 0.0
        %7066 = vmatpush1.msra.mxu0 0.0
        %7067 = vmatprep.subr.mxu0 0.0
        %7068 = vmatpush1.msra.mxu0 0.0
        %7069 = vmatprep.subr.mxu0 0.0
        %7070 = vmatpush1.msra.mxu0 0.0
        %7071 = vmatprep.subr.mxu0 0.0
        %7072 = vmatpush1.msra.mxu0 0.0
        %7073 = vmatprep.subr.mxu0 0.0
        %7074 = vmatpush1.msra.mxu0 0.0
        %7075 = vmatprep.subr.mxu0 0.0
        %7076 = vmatpush1.msra.mxu0 0.0
        %7077 = vmatprep.subr.mxu0 0.0
        %7078 = vmatpush1.msra.mxu0 0.0
        %7079 = vmatprep.subr.mxu0 0.0
        %7080 = vmatpush1.msra.mxu0 0.0
        %7081 = vmatprep.subr.mxu0 0.0
        %7082 = vmatpush1.msra.mxu0 0.0
        %7083 = vmatprep.mubr.f32.mxu0 0.0
        %7084 = vmatmul.mubr.f32.gmra.mrb[0].mxu0 0.0
        %v7085 = vpop.f32.mrb[0].mxu0
        %v7086 = vadd.f32 %v7011, %v7085
        %v7087 = vpop.f32.mrb[0].mxu0
        %7088 = vmatprep.mubr.f32.mxu0 0.0
        %7089 = vmatmul.mubr.f32.gmra.mrb[0].mxu0 %v6909
        %v7090 = vpop.f32.mrb[0].mxu0
        %v7091 = vadd.f32 %v7016, %v7090
        %v7092 = vpop.f32.mrb[0].mxu0
        %7093 = vdwg.mxu0
        %s7094 = scalar_lea.vmem %s7, 256
        %v7095 = vld [vmem:[%s7094] sm:$0xff]
        %v7096 = vld [vmem:[%s7094 + $0x8] sm:$0xff]
        %v7097 = vld [vmem:[%s7094 + $0x10] sm:$0xff]
        %v7098 = vld [vmem:[%s7094 + $0x18] sm:$0xff]
        %v7099 = vld [vmem:[%s7094 + $0x20] sm:$0xff]
        %v7100 = vld [vmem:[%s7094 + $0x28] sm:$0xff]
        %v7101 = vld [vmem:[%s7094 + $0x30] sm:$0xff]
        %v7102 = vld [vmem:[%s7094 + $0x38] sm:$0xff]
        %v7103 = vld [vmem:[%s7094 + $0x40] sm:$0xff]
        %v7104 = vld [vmem:[%s7094 + $0x48] sm:$0xff]
        %v7105 = vld [vmem:[%s7094 + $0x50] sm:$0xff]
        %v7106 = vld [vmem:[%s7094 + $0x58] sm:$0xff]
        %v7107 = vld [vmem:[%s7094 + $0x60] sm:$0xff]
        %v7108 = vld [vmem:[%s7094 + $0x68] sm:$0xff]
        %v7109 = vld [vmem:[%s7094 + $0x70] sm:$0xff]
        %v7110 = vld [vmem:[%s7094 + $0x78] sm:$0xff]
        %7111 = vmatprep.subr.mxu0 0.0
        %7112 = vmatpush1.msra.mxu0 %v7095
        %7113 = vmatprep.subr.mxu0 0.0
        %7114 = vmatpush1.msra.mxu0 %v7096
        %7115 = vmatprep.subr.mxu0 0.0
        %7116 = vmatpush1.msra.mxu0 %v7097
        %7117 = vmatprep.subr.mxu0 0.0
        %7118 = vmatpush1.msra.mxu0 %v7098
        %7119 = vmatprep.subr.mxu0 0.0
        %7120 = vmatpush1.msra.mxu0 %v7099
        %7121 = vmatprep.subr.mxu0 0.0
        %7122 = vmatpush1.msra.mxu0 %v7100
        %7123 = vmatprep.subr.mxu0 0.0
        %7124 = vmatpush1.msra.mxu0 %v7101
        %7125 = vmatprep.subr.mxu0 0.0
        %7126 = vmatpush1.msra.mxu0 %v7102
        %7127 = vmatprep.subr.mxu0 0.0
        %7128 = vmatpush1.msra.mxu0 %v7103
        %7129 = vmatprep.subr.mxu0 0.0
        %7130 = vmatpush1.msra.mxu0 %v7104
        %7131 = vmatprep.subr.mxu0 0.0
        %7132 = vmatpush1.msra.mxu0 %v7105
        %7133 = vmatprep.subr.mxu0 0.0
        %7134 = vmatpush1.msra.mxu0 %v7106
        %7135 = vmatprep.subr.mxu0 0.0
        %7136 = vmatpush1.msra.mxu0 %v7107
        %7137 = vmatprep.subr.mxu0 0.0
        %7138 = vmatpush1.msra.mxu0 %v7108
        %7139 = vmatprep.subr.mxu0 0.0
        %7140 = vmatpush1.msra.mxu0 %v7109
        %7141 = vmatprep.subr.mxu0 0.0
        %7142 = vmatpush1.msra.mxu0 %v7110
        %7143 = vmatprep.subr.mxu0 0.0
        %7144 = vmatpush1.msra.mxu0 0.0
        %7145 = vmatprep.subr.mxu0 0.0
        %7146 = vmatpush1.msra.mxu0 0.0
        %7147 = vmatprep.subr.mxu0 0.0
        %7148 = vmatpush1.msra.mxu0 0.0
        %7149 = vmatprep.subr.mxu0 0.0
        %7150 = vmatpush1.msra.mxu0 0.0
        %7151 = vmatprep.subr.mxu0 0.0
        %7152 = vmatpush1.msra.mxu0 0.0
        %7153 = vmatprep.subr.mxu0 0.0
        %7154 = vmatpush1.msra.mxu0 0.0
        %7155 = vmatprep.subr.mxu0 0.0
        %7156 = vmatpush1.msra.mxu0 0.0
        %7157 = vmatprep.subr.mxu0 0.0
        %7158 = vmatpush1.msra.mxu0 0.0
        %7159 = vmatprep.subr.mxu0 0.0
        %7160 = vmatpush1.msra.mxu0 0.0
        %7161 = vmatprep.subr.mxu0 0.0
        %7162 = vmatpush1.msra.mxu0 0.0
        %7163 = vmatprep.subr.mxu0 0.0
        %7164 = vmatpush1.msra.mxu0 0.0
        %7165 = vmatprep.subr.mxu0 0.0
        %7166 = vmatpush1.msra.mxu0 0.0
        %7167 = vmatprep.subr.mxu0 0.0
        %7168 = vmatpush1.msra.mxu0 0.0
        %7169 = vmatprep.subr.mxu0 0.0
        %7170 = vmatpush1.msra.mxu0 0.0
        %7171 = vmatprep.subr.mxu0 0.0
        %7172 = vmatpush1.msra.mxu0 0.0
        %7173 = vmatprep.subr.mxu0 0.0
        %7174 = vmatpush1.msra.mxu0 0.0
        %7175 = vmatprep.mubr.f32.mxu0 0.0
        %7176 = vmatmul.mubr.f32.gmra.mrb[0].mxu0 %v6910
        %v7177 = vpop.f32.mrb[0].mxu0
        %v7178 = vadd.f32 0.0, %v7177
        %v7179 = vpop.f32.mrb[0].mxu0
        %7180 = vmatprep.mubr.f32.mxu0 0.0
        %7181 = vmatmul.mubr.f32.gmra.mrb[0].mxu0 0.0
        %v7182 = vpop.f32.mrb[0].mxu0
        %v7183 = vadd.f32 0.0, %v7182
        %v7184 = vpop.f32.mrb[0].mxu0
        %7185 = vdwg.mxu0
        %v7186 = vadd.f32 %v7086, %v7178
        %v7187 = vadd.f32 %v7091, %v7183
        %v7188 = vld [vmem:[%s8] sm:$0x1]
        %v7190 = vlaneseq
        %v7191 = vshrl.u32 %v7190, 7
        %v7192 = vsub.s32 0, %v7191
        %v7193 = vrot.slane %v7188, %v7192
        %v7195 = vadd.f32 %v7186, %v7193
        %v7196 = vadd.f32 %v7187, %v7193
        %v7197 = vmax.f32 %v7195, 0.0
        %v7198 = vmax.f32 %v7196, 0.0
        %7199 = vst [vmem:[%s420] sm:$0xff] %v7197
        %7200 = vst [vmem:[%s420 + $0x8] sm:$0xff] %v7198
        %s7201 = sand.u32 %s222, 1
        %s7202 = sand.u32 %s222, 1
        %s7203 = smul.addr %s7202, 16
        %s7204 = scalar_lea.vmem [#allocation3], %s7203
        // Predicated region
        $region95: #{relation_encoder.1} parent=89 // pred_check
          %p7205 = pneg %p232
        $region96: #{relation_encoder.1} parent=89 // pred_check_branch
          %7207 = sbr.rel (%p7205) target = $region98
        $region97: #{relation_encoder.1} parent=89 // pred_region
          %s7208 = smul.addr %s20, 8
          %s7209 = scalar_lea.vmem %s9, %s7208
          // Predicated region
          $region99: #{relation_encoder.1} parent=97 // pred_check
            _
          $region100: #{relation_encoder.1} parent=97 // pred_check_branch
            %7211 = sbr.rel (0) target = $region102
          $region101: #{relation_encoder.1} parent=97 // pred_region
            // Predicated region
            $region103: #{relation_encoder.1} parent=101 // pred_check
              _
            $region104: #{relation_encoder.1} parent=101 // pred_check_branch
              %7213 = sbr.rel (0) target = $region106
            $region105: #{relation_encoder.1} parent=101 // pred_region
              // Predicated region
              $region118: #{relation_encoder.1} parent=105 // pred_check
                _
              $region119: #{relation_encoder.1} parent=105 // pred_check_branch
                %7230 = sbr.rel (0) target = $region121
              $region120: #{relation_encoder.1} parent=105 // pred_region
                loop: start=0, step=1, limit=1
                $region122: #{relation_encoder.1} parent=120 // loop_pre_header
                  _
                $region123: #{relation_encoder.1} parent=120 // loop_header
                  %s7232 = sphi 0, %s7236
                  %p7233 = scmp.ge.s32.totalorder %s7232, 1
                  %s7237 = sphi %s7204, %s7204
                  %s7238 = sphi %s7209, %s7209
                $region124: #{relation_encoder.1} parent=120 // loop_header_branch
                  %7235 = sbr.rel (%p7233) target = $region128
                $region125: #{relation_encoder.1} parent=120 // loop_body
                  %v7239 = vld [vmem:[%s7237] sm:$0xff]
                  %7240 = vst [vmem:[%s7238] sm:$0xff] %v7239
                  %v7241 = vld [vmem:[%s7237 + $0x8] sm:$0xff]
                  %7242 = vst [vmem:[%s7238 + $0x10] sm:$0xff] %v7241
                $region126: #{relation_encoder.1} parent=120 // loop_footer
                  %s7236 = sadd.s32 1, %s7232
                $region127: #{relation_encoder.1} parent=120 // loop_footer_branch
                  %7231 = sbr.rel target = $region123
                $region128: #{relation_encoder.1} parent=120 // loop_exit
                  _
              $region121: #{relation_encoder.1} parent=105 // pred_fallthru
                _
              // Predicated region
              $region129: #{relation_encoder.1} parent=105 // pred_check
                _
              $region130: #{relation_encoder.1} parent=105 // pred_check_branch
                %7244 = sbr.rel target = $region132
              $region131: #{relation_encoder.1} parent=105 // pred_region
                _
              $region132: #{relation_encoder.1} parent=105 // pred_fallthru
                _
            $region106: #{relation_encoder.1} parent=101 // pred_fallthru
              _
            // Predicated region
            $region107: #{relation_encoder.1} parent=101 // pred_check
              _
            $region108: #{relation_encoder.1} parent=101 // pred_check_branch
              %7215 = sbr.rel target = $region110
            $region109: #{relation_encoder.1} parent=101 // pred_region
              loop: start=0, step=1, limit=1
              $region111: #{relation_encoder.1} parent=109 // loop_pre_header
                _
              $region112: #{relation_encoder.1} parent=109 // loop_header
                %s7218 = sphi 0, %s7222
                %p7219 = scmp.ge.s32.totalorder %s7218, 1
                %s7223 = sphi %s7204, %s7204
                %s7224 = sphi %s7209, %s7209
              $region113: #{relation_encoder.1} parent=109 // loop_header_branch
                %7221 = sbr.rel (%p7219) target = $region117
              $region114: #{relation_encoder.1} parent=109 // loop_body
                %v7225 = vld [vmem:[%s7223] sm:$0xff]
                %7226 = vst [vmem:[%s7224] sm:$0xff] %v7225
                %v7227 = vld [vmem:[%s7223 + $0x8] sm:$0xff]
                %7228 = vst [vmem:[%s7224 + $0x10] sm:$0xff] %v7227
              $region115: #{relation_encoder.1} parent=109 // loop_footer
                %s7222 = sadd.s32 1, %s7218
              $region116: #{relation_encoder.1} parent=109 // loop_footer_branch
                %7217 = sbr.rel target = $region112
              $region117: #{relation_encoder.1} parent=109 // loop_exit
                _
            $region110: #{relation_encoder.1} parent=101 // pred_fallthru
              _
          $region102: #{relation_encoder.1} parent=97 // pred_fallthru
            _
          %7245 = vnop
        $region98: #{relation_encoder.1} parent=89 // pred_fallthru
          _
      $region90: #{relation_encoder.1} parent=5 // pred_fallthru
        _
      %p7246 = scmp.le.s32.totalorder 2, %s15
      // Predicated region
      $region133: #{relation_encoder.1} parent=5 // pred_check
        %p7247 = pneg %p7246
      $region134: #{relation_encoder.1} parent=5 // pred_check_branch
        %7249 = sbr.rel (%p7247) target = $region136
      $region135: #{relation_encoder.1} parent=5 // pred_region
        %s7250 = ssub.s32 %s15, 2
        // Predicated region
        $region137: #{relation_encoder.1} parent=135 // pred_check
          %p7251 = pneg %p238
        $region138: #{relation_encoder.1} parent=135 // pred_check_branch
          %7253 = sbr.rel (%p7251) target = $region140
        $region139: #{relation_encoder.1} parent=135 // pred_region
          %s7254 = sand.u32 %s223, 1
          %s7255 = sand.u32 %s223, 1
          %s7256 = smul.addr %s7255, 16
          %s7257 = scalar_lea.vmem [#allocation3], %s7256
        $region140: #{relation_encoder.1} parent=135 // pred_fallthru
          _
      $region136: #{relation_encoder.1} parent=5 // pred_fallthru
        _
    $region6: #{relation_encoder.1} parent=1 // loop_footer
      %s19 = sadd.s32 1, %s15
    $region7: #{relation_encoder.1} parent=1 // loop_footer_branch
      %14 = sbr.rel target = $region3
    $region8: #{relation_encoder.1} parent=1 // loop_exit
      _

</llo_original>
